<compile_context>
chip_gen: v7x
topology: tpu7x:2x2x1
jax: 0.10.0
libtpu: 0.0.40
codegen_flags: <defaults>
</compile_context>

<pallas_src>
import math
import functools

import jax
import jax.numpy as jnp
from jax.experimental import pallas as pl
from jax.experimental.pallas import tpu as pltpu


# ---------------------------------------------------------------------------
# In-kernel helpers
# ---------------------------------------------------------------------------
def _layernorm(x, gamma, beta, eps=1e-5):
    # PyTorch LayerNorm: biased variance over last dim, eps=1e-5. All f32.
    mu = jnp.mean(x, axis=-1, keepdims=True)
    var = jnp.mean((x - mu) ** 2, axis=-1, keepdims=True)
    return (x - mu) * jax.lax.rsqrt(var + eps) * gamma + beta


# ---------------------------------------------------------------------------
# Fused kernel: embed gather + pos-enc + N x TransformerEncoderLayer (post-norm,
# ReLU FFN) + MLP head. Single program (no grid); everything VMEM-resident.
# ---------------------------------------------------------------------------
def fused_transformer_kernel(B, T, D, nhead, nlayers,
                             tok_ref, emb_ref, pe_ref,
                             wqkv_ref, bqkv_ref, wo_ref, bo_ref,
                             w1_ref, b1_ref, w2_ref, b2_ref,
                             g1_ref, be1_ref, g2_ref, be2_ref,
                             mw1_ref, mb1_ref, mw2_ref, mb2_ref, mw3_ref, mb3_ref,
                             o_ref,
                             x_scr, flat_scr):
    hd = D // nhead
    scale = 1.0 / math.sqrt(hd)

    # ---- fused embedding gather + positional encoding (dropout = identity) -------
    for b in range(B):
        for t in range(T):
            tok = tok_ref[b, t]                                   # scalar from SMEM
            row = emb_ref[pl.ds(tok, 1), :] + pe_ref[t:t + 1, :]  # (1, D) f32
            x_scr[b * T + t:b * T + t + 1, :] = row
    x2 = x_scr[...]                                               # (B*T, D) f32 slab

    for l in range(nlayers):                 # static unroll; weights stay in VMEM
        # ---- fused QKV projection (bf16 weights, f32 accumulation) --------------
        qkv = jnp.dot(x2.astype(jnp.bfloat16), wqkv_ref[l],
                      preferred_element_type=jnp.float32) + bqkv_ref[l]   # (B*T, 3D)
        q = qkv[:, 0:D] * scale              # scale folded into q once per layer
        k = qkv[:, D:2 * D]
        v = qkv[:, 2 * D:3 * D]
        q3 = q.reshape(B, T, D)              # minor dim preserved (safe reshape)
        k3 = k.reshape(B, T, D)
        v3 = v.reshape(B, T, D)

        heads = []
        for h in range(nhead):               # static loop; einsums batched over B
            lo = h * hd
            qh = q3[:, :, lo:lo + hd]
            kh = k3[:, :, lo:lo + hd]
            vh = v3[:, :, lo:lo + hd]
            s = jnp.einsum('bqh,bkh->bqk', qh, kh,
                           preferred_element_type=jnp.float32)            # (B,T,T)
            s = s - jnp.max(s, axis=-1, keepdims=True)
            p = jnp.exp(s)
            p = p * pl.reciprocal(jnp.sum(p, axis=-1, keepdims=True), approx=True)
            heads.append(jnp.einsum('bqk,bkh->bqh', p, vh,
                                    preferred_element_type=jnp.float32))  # (B,T,hd)
        attn = jnp.concatenate(heads, axis=-1).reshape(B * T, D)
        attn = jnp.dot(attn.astype(jnp.bfloat16), wo_ref[l],
                       preferred_element_type=jnp.float32) + bo_ref[l]

        # ---- post-norm residual + FFN (f32 elementwise) --------------------------
        x2 = _layernorm(x2 + attn, g1_ref[l], be1_ref[l])
        ff = jnp.dot(x2.astype(jnp.bfloat16), w1_ref[l],
                     preferred_element_type=jnp.float32) + b1_ref[l]
        ff = jnp.maximum(ff, 0.0)
        ff = jnp.dot(ff.astype(jnp.bfloat16), w2_ref[l],
                     preferred_element_type=jnp.float32) + b2_ref[l]
        x2 = _layernorm(x2 + ff, g2_ref[l], be2_ref[l])

    # ---- MLP head: Linear(T*D,512) -> ReLU -> Linear(512,512) -> ReLU -> Linear(512,NC)
    # The (B, T*D) flatten is assembled in a VMEM scratch slab (T lane-offset stores),
    # then the first Linear is a single K=T*D contraction.
    x3 = x2.reshape(B, T, D)
    for t in range(T):
        flat_scr[:, t * D:(t + 1) * D] = x3[:, t, :]
    flat = flat_scr[...]                                           # (B, T*D) f32
    h1 = jnp.dot(flat.astype(jnp.bfloat16), mw1_ref[...],
                 preferred_element_type=jnp.float32) + mb1_ref[...]
    h1 = jnp.maximum(h1, 0.0)
    h2 = jnp.dot(h1.astype(jnp.bfloat16), mw2_ref[...],
                 preferred_element_type=jnp.float32) + mb2_ref[...]
    h2 = jnp.maximum(h2, 0.0)
    o_ref[...] = jnp.dot(h2.astype(jnp.bfloat16), mw3_ref[...],
                         preferred_element_type=jnp.float32) + mb3_ref[...]


# ---------------------------------------------------------------------------
# Wrapper: everything (including the embedding gather) runs inside one pallas_call.
# ---------------------------------------------------------------------------
def transformer_model_forward(tokens, params, nhead):
    B, T = tokens.shape
    D = params["embed"].shape[-1]
    nlayers = params["wqkv_t"].shape[0]
    numclass = params["mw3_t"].shape[-1]

    args = (tokens.astype(jnp.int32),
            params["embed"], params["pe"],
            params["wqkv_t"], params["bqkv"], params["wo_t"], params["bo"],
            params["w1_t"], params["b1"], params["w2_t"], params["b2"],
            params["g1"], params["be1"], params["g2"], params["be2"],
            params["mw1_t"], params["mb1"], params["mw2_t"], params["mb2"],
            params["mw3_t"], params["mb3"])

    in_specs = ([pl.BlockSpec(memory_space=pltpu.MemorySpace.SMEM)]       # tokens
                + [pl.BlockSpec(memory_space=pltpu.MemorySpace.VMEM)] * (len(args) - 1))

    kernel = functools.partial(fused_transformer_kernel, B, T, D, nhead, nlayers)
    return pl.pallas_call(
        kernel,
        out_shape=jax.ShapeDtypeStruct((B, numclass), jnp.float32),
        in_specs=in_specs,
        out_specs=pl.BlockSpec(memory_space=pltpu.MemorySpace.VMEM),
        scratch_shapes=[pltpu.VMEM((B * T, D), jnp.float32),    # activation slab
                        pltpu.VMEM((B, T * D), jnp.float32)],   # MLP-head flatten slab
        # No grid: one program, whole net (<1 MB bf16 weights) resident in VMEM.
        compiler_params=pltpu.CompilerParams(vmem_limit_bytes=32 * 1024 * 1024),
    )(*args)


# ---------------------------------------------------------------------------
# Parameter construction (deterministic). Matmul weights pre-transposed to (in, out)
# and stored in bf16; biases / LayerNorm params / embed / pe stay f32.
# ---------------------------------------------------------------------------
def positional_encoding(T, D):
    position = jnp.arange(T, dtype=jnp.float32)[:, None]
    div_term = jnp.exp(jnp.arange(0, D, 2, dtype=jnp.float32) * (-math.log(10000.0) / D))
    pe = jnp.zeros((T, D), jnp.float32)
    pe = pe.at[:, 0::2].set(jnp.sin(position * div_term))
    pe = pe.at[:, 1::2].set(jnp.cos(position * div_term))
    return pe


def init_params(key, vocab, T, D, d_hid, nlayers, numclass):
    def nrm(k, shape, scale=0.05):
        return (scale * jax.random.normal(k, shape)).astype(jnp.float32)

    keys = iter(jax.random.split(key, 20))
    wq = nrm(next(keys), (nlayers, D, D))
    wk = nrm(next(keys), (nlayers, D, D))
    wv = nrm(next(keys), (nlayers, D, D))
    wqkv = jnp.concatenate([wq, wk, wv], axis=-1)              # (nlayers, D, 3D)

    params = {
        "embed": nrm(next(keys), (vocab, D)),
        "pe": positional_encoding(T, D),
        # Per-layer encoder weights, stacked over layers, pre-transposed (in, out), bf16.
        "wqkv_t": wqkv.astype(jnp.bfloat16),
        "bqkv": jnp.zeros((nlayers, 1, 3 * D), jnp.float32),
        "wo_t": nrm(next(keys), (nlayers, D, D)).astype(jnp.bfloat16),
        "bo": jnp.zeros((nlayers, 1, D), jnp.float32),
        "w1_t": nrm(next(keys), (nlayers, D, d_hid)).astype(jnp.bfloat16),
        "b1": jnp.zeros((nlayers, 1, d_hid), jnp.float32),
        "w2_t": nrm(next(keys), (nlayers, d_hid, D)).astype(jnp.bfloat16),
        "b2": jnp.zeros((nlayers, 1, D), jnp.float32),
        "g1": jnp.ones((nlayers, 1, D), jnp.float32),
        "be1": jnp.zeros((nlayers, 1, D), jnp.float32),
        "g2": jnp.ones((nlayers, 1, D), jnp.float32),
        "be2": jnp.zeros((nlayers, 1, D), jnp.float32),
        # MLP head (pre-transposed, bf16). mw1 is flattened to (T*D, 512) so the kernel's
        # (B, T*D) slab feeds one K=256 matmul; column order t*D+d matches torch's
        # reshape(-1, ntoken*d_emb).
        "mw1_t": nrm(next(keys), (T * D, 512)).astype(jnp.bfloat16),
        "mb1": jnp.zeros((1, 512), jnp.float32),
        "mw2_t": nrm(next(keys), (512, 512)).astype(jnp.bfloat16),
        "mb2": jnp.zeros((1, 512), jnp.float32),
        "mw3_t": nrm(next(keys), (512, numclass)).astype(jnp.bfloat16),
        "mb3": jnp.zeros((1, numclass), jnp.float32),
    }
    return params


# ---------------------------------------------------------------------------
if __name__ == "__main__":
    # Small shapes consistent with the module:
    # vocab_size=50, ntoken(T)=8, d_emb(D)=32, d_hid=64, nhead=4, nlayers=2, numclass=15
    B, T, D, NHEAD, D_HID, NLAYERS, VOCAB, NUMCLASS = 2, 8, 32, 4, 64, 2, 50, 15

    key = jax.random.PRNGKey(0)
    k_params, k_tok = jax.random.split(key)
    params = init_params(k_params, VOCAB, T, D, D_HID, NLAYERS, NUMCLASS)

    tokens = jax.random.randint(k_tok, (B, T), 0, VOCAB, dtype=jnp.int32)

    out = transformer_model_forward(tokens, params, NHEAD)
    out = jax.block_until_ready(out)

    assert out.shape == (B, NUMCLASS), out.shape
    assert bool(jnp.all(jnp.isfinite(out)))
    print("KERNEL_OK")
</pallas_src>

<mosaic_0001>
module attributes {stable_mosaic.version = 11 : i64} {
  func.func @fused_transformer_kernel(%arg0: memref<2x8xi32, #tpu.memory_space<smem>>, %arg1: memref<50x32xf32, #tpu.memory_space<vmem>>, %arg2: memref<8x32xf32, #tpu.memory_space<vmem>>, %arg3: memref<2x32x96xbf16, #tpu.memory_space<vmem>>, %arg4: memref<2x1x96xf32, #tpu.memory_space<vmem>>, %arg5: memref<2x32x32xbf16, #tpu.memory_space<vmem>>, %arg6: memref<2x1x32xf32, #tpu.memory_space<vmem>>, %arg7: memref<2x32x64xbf16, #tpu.memory_space<vmem>>, %arg8: memref<2x1x64xf32, #tpu.memory_space<vmem>>, %arg9: memref<2x64x32xbf16, #tpu.memory_space<vmem>>, %arg10: memref<2x1x32xf32, #tpu.memory_space<vmem>>, %arg11: memref<2x1x32xf32, #tpu.memory_space<vmem>>, %arg12: memref<2x1x32xf32, #tpu.memory_space<vmem>>, %arg13: memref<2x1x32xf32, #tpu.memory_space<vmem>>, %arg14: memref<2x1x32xf32, #tpu.memory_space<vmem>>, %arg15: memref<256x512xbf16, #tpu.memory_space<vmem>>, %arg16: memref<1x512xf32, #tpu.memory_space<vmem>>, %arg17: memref<512x512xbf16, #tpu.memory_space<vmem>>, %arg18: memref<1x512xf32, #tpu.memory_space<vmem>>, %arg19: memref<512x15xbf16, #tpu.memory_space<vmem>>, %arg20: memref<1x15xf32, #tpu.memory_space<vmem>>, %arg21: memref<2x15xf32, #tpu.memory_space<vmem>>, %arg22: memref<16x32xf32, #tpu.memory_space<vmem>>, %arg23: memref<2x256xf32, #tpu.memory_space<vmem>>) attributes {dimension_semantics = [], scalar_prefetch = 0 : i64, scratch_operands = 2 : i64, tpu.core_type = #tpu.core_type<tc>} {
    %c0 = arith.constant 0 : index
    %c0_0 = arith.constant 0 : index
    %0 = memref.load %arg0[%c0, %c0_0] : memref<2x8xi32, #tpu.memory_space<smem>>
    %1 = arith.index_cast %0 : i32 to index
    %c0_1 = arith.constant 0 : index
    %2 = vector.load %arg1[%1, %c0_1] : memref<50x32xf32, #tpu.memory_space<vmem>>, vector<1x32xf32>
    %c0_2 = arith.constant 0 : index
    %c0_3 = arith.constant 0 : index
    %3 = vector.load %arg2[%c0_2, %c0_3] : memref<8x32xf32, #tpu.memory_space<vmem>>, vector<1x32xf32>
    %4 = arith.addf %2, %3 : vector<1x32xf32>
    %c0_4 = arith.constant 0 : index
    %c0_5 = arith.constant 0 : index
    %5 = vector.load %arg22[%c0_4, %c0_5] : memref<16x32xf32, #tpu.memory_space<vmem>>, vector<1x32xf32>
    tpu.vector_store %arg22[%c0_4, %c0_5], %4 {strides = array<i32>} : memref<16x32xf32, #tpu.memory_space<vmem>>, vector<1x32xf32>,
    %c0_6 = arith.constant 0 : index
    %c1 = arith.constant 1 : index
    %6 = memref.load %arg0[%c0_6, %c1] : memref<2x8xi32, #tpu.memory_space<smem>>
    %7 = arith.index_cast %6 : i32 to index
    %c0_7 = arith.constant 0 : index
    %8 = vector.load %arg1[%7, %c0_7] : memref<50x32xf32, #tpu.memory_space<vmem>>, vector<1x32xf32>
    %c1_8 = arith.constant 1 : index
    %c0_9 = arith.constant 0 : index
    %9 = vector.load %arg2[%c1_8, %c0_9] : memref<8x32xf32, #tpu.memory_space<vmem>>, vector<1x32xf32>
    %10 = arith.addf %8, %9 : vector<1x32xf32>
    %c1_10 = arith.constant 1 : index
    %c0_11 = arith.constant 0 : index
    %11 = vector.load %arg22[%c1_10, %c0_11] : memref<16x32xf32, #tpu.memory_space<vmem>>, vector<1x32xf32>
    tpu.vector_store %arg22[%c1_10, %c0_11], %10 {strides = array<i32>} : memref<16x32xf32, #tpu.memory_space<vmem>>, vector<1x32xf32>,
    %c0_12 = arith.constant 0 : index
    %c2 = arith.constant 2 : index
    %12 = memref.load %arg0[%c0_12, %c2] : memref<2x8xi32, #tpu.memory_space<smem>>
    %13 = arith.index_cast %12 : i32 to index
    %c0_13 = arith.constant 0 : index
    %14 = vector.load %arg1[%13, %c0_13] : memref<50x32xf32, #tpu.memory_space<vmem>>, vector<1x32xf32>
    %c2_14 = arith.constant 2 : index
    %c0_15 = arith.constant 0 : index
    %15 = vector.load %arg2[%c2_14, %c0_15] : memref<8x32xf32, #tpu.memory_space<vmem>>, vector<1x32xf32>
    %16 = arith.addf %14, %15 : vector<1x32xf32>
    %c2_16 = arith.constant 2 : index
    %c0_17 = arith.constant 0 : index
    %17 = vector.load %arg22[%c2_16, %c0_17] : memref<16x32xf32, #tpu.memory_space<vmem>>, vector<1x32xf32>
    tpu.vector_store %arg22[%c2_16, %c0_17], %16 {strides = array<i32>} : memref<16x32xf32, #tpu.memory_space<vmem>>, vector<1x32xf32>,
    %c0_18 = arith.constant 0 : index
    %c3 = arith.constant 3 : index
    %18 = memref.load %arg0[%c0_18, %c3] : memref<2x8xi32, #tpu.memory_space<smem>>
    %19 = arith.index_cast %18 : i32 to index
    %c0_19 = arith.constant 0 : index
    %20 = vector.load %arg1[%19, %c0_19] : memref<50x32xf32, #tpu.memory_space<vmem>>, vector<1x32xf32>
    %c3_20 = arith.constant 3 : index
    %c0_21 = arith.constant 0 : index
    %21 = vector.load %arg2[%c3_20, %c0_21] : memref<8x32xf32, #tpu.memory_space<vmem>>, vector<1x32xf32>
    %22 = arith.addf %20, %21 : vector<1x32xf32>
    %c3_22 = arith.constant 3 : index
    %c0_23 = arith.constant 0 : index
    %23 = vector.load %arg22[%c3_22, %c0_23] : memref<16x32xf32, #tpu.memory_space<vmem>>, vector<1x32xf32>
    tpu.vector_store %arg22[%c3_22, %c0_23], %22 {strides = array<i32>} : memref<16x32xf32, #tpu.memory_space<vmem>>, vector<1x32xf32>,
    %c0_24 = arith.constant 0 : index
    %c4 = arith.constant 4 : index
    %24 = memref.load %arg0[%c0_24, %c4] : memref<2x8xi32, #tpu.memory_space<smem>>
    %25 = arith.index_cast %24 : i32 to index
    %c0_25 = arith.constant 0 : index
    %26 = vector.load %arg1[%25, %c0_25] : memref<50x32xf32, #tpu.memory_space<vmem>>, vector<1x32xf32>
    %c4_26 = arith.constant 4 : index
    %c0_27 = arith.constant 0 : index
    %27 = vector.load %arg2[%c4_26, %c0_27] : memref<8x32xf32, #tpu.memory_space<vmem>>, vector<1x32xf32>
    %28 = arith.addf %26, %27 : vector<1x32xf32>
    %c4_28 = arith.constant 4 : index
    %c0_29 = arith.constant 0 : index
    %29 = vector.load %arg22[%c4_28, %c0_29] : memref<16x32xf32, #tpu.memory_space<vmem>>, vector<1x32xf32>
    tpu.vector_store %arg22[%c4_28, %c0_29], %28 {strides = array<i32>} : memref<16x32xf32, #tpu.memory_space<vmem>>, vector<1x32xf32>,
    %c0_30 = arith.constant 0 : index
    %c5 = arith.constant 5 : index
    %30 = memref.load %arg0[%c0_30, %c5] : memref<2x8xi32, #tpu.memory_space<smem>>
    %31 = arith.index_cast %30 : i32 to index
    %c0_31 = arith.constant 0 : index
    %32 = vector.load %arg1[%31, %c0_31] : memref<50x32xf32, #tpu.memory_space<vmem>>, vector<1x32xf32>
    %c5_32 = arith.constant 5 : index
    %c0_33 = arith.constant 0 : index
    %33 = vector.load %arg2[%c5_32, %c0_33] : memref<8x32xf32, #tpu.memory_space<vmem>>, vector<1x32xf32>
    %34 = arith.addf %32, %33 : vector<1x32xf32>
    %c5_34 = arith.constant 5 : index
    %c0_35 = arith.constant 0 : index
    %35 = vector.load %arg22[%c5_34, %c0_35] : memref<16x32xf32, #tpu.memory_space<vmem>>, vector<1x32xf32>
    tpu.vector_store %arg22[%c5_34, %c0_35], %34 {strides = array<i32>} : memref<16x32xf32, #tpu.memory_space<vmem>>, vector<1x32xf32>,
    %c0_36 = arith.constant 0 : index
    %c6 = arith.constant 6 : index
    %36 = memref.load %arg0[%c0_36, %c6] : memref<2x8xi32, #tpu.memory_space<smem>>
    %37 = arith.index_cast %36 : i32 to index
    %c0_37 = arith.constant 0 : index
    %38 = vector.load %arg1[%37, %c0_37] : memref<50x32xf32, #tpu.memory_space<vmem>>, vector<1x32xf32>
    %c6_38 = arith.constant 6 : index
    %c0_39 = arith.constant 0 : index
    %39 = vector.load %arg2[%c6_38, %c0_39] : memref<8x32xf32, #tpu.memory_space<vmem>>, vector<1x32xf32>
    %40 = arith.addf %38, %39 : vector<1x32xf32>
    %c6_40 = arith.constant 6 : index
    %c0_41 = arith.constant 0 : index
    %41 = vector.load %arg22[%c6_40, %c0_41] : memref<16x32xf32, #tpu.memory_space<vmem>>, vector<1x32xf32>
    tpu.vector_store %arg22[%c6_40, %c0_41], %40 {strides = array<i32>} : memref<16x32xf32, #tpu.memory_space<vmem>>, vector<1x32xf32>,
    %c0_42 = arith.constant 0 : index
    %c7 = arith.constant 7 : index
    %42 = memref.load %arg0[%c0_42, %c7] : memref<2x8xi32, #tpu.memory_space<smem>>
    %43 = arith.index_cast %42 : i32 to index
    %c0_43 = arith.constant 0 : index
    %44 = vector.load %arg1[%43, %c0_43] : memref<50x32xf32, #tpu.memory_space<vmem>>, vector<1x32xf32>
    %c7_44 = arith.constant 7 : index
    %c0_45 = arith.constant 0 : index
    %45 = vector.load %arg2[%c7_44, %c0_45] : memref<8x32xf32, #tpu.memory_space<vmem>>, vector<1x32xf32>
    %46 = arith.addf %44, %45 : vector<1x32xf32>
    %c7_46 = arith.constant 7 : index
    %c0_47 = arith.constant 0 : index
    %47 = vector.load %arg22[%c7_46, %c0_47] : memref<16x32xf32, #tpu.memory_space<vmem>>, vector<1x32xf32>
    tpu.vector_store %arg22[%c7_46, %c0_47], %46 {strides = array<i32>} : memref<16x32xf32, #tpu.memory_space<vmem>>, vector<1x32xf32>,
    %c1_48 = arith.constant 1 : index
    %c0_49 = arith.constant 0 : index
    %48 = memref.load %arg0[%c1_48, %c0_49] : memref<2x8xi32, #tpu.memory_space<smem>>
    %49 = arith.index_cast %48 : i32 to index
    %c0_50 = arith.constant 0 : index
    %50 = vector.load %arg1[%49, %c0_50] : memref<50x32xf32, #tpu.memory_space<vmem>>, vector<1x32xf32>
    %c0_51 = arith.constant 0 : index
    %c0_52 = arith.constant 0 : index
    %51 = vector.load %arg2[%c0_51, %c0_52] : memref<8x32xf32, #tpu.memory_space<vmem>>, vector<1x32xf32>
    %52 = arith.addf %50, %51 : vector<1x32xf32>
    %c8 = arith.constant 8 : index
    %c0_53 = arith.constant 0 : index
    %53 = vector.load %arg22[%c8, %c0_53] : memref<16x32xf32, #tpu.memory_space<vmem>>, vector<1x32xf32>
    tpu.vector_store %arg22[%c8, %c0_53], %52 {strides = array<i32>} : memref<16x32xf32, #tpu.memory_space<vmem>>, vector<1x32xf32>,
    %c1_54 = arith.constant 1 : index
    %c1_55 = arith.constant 1 : index
    %54 = memref.load %arg0[%c1_54, %c1_55] : memref<2x8xi32, #tpu.memory_space<smem>>
    %55 = arith.index_cast %54 : i32 to index
    %c0_56 = arith.constant 0 : index
    %56 = vector.load %arg1[%55, %c0_56] : memref<50x32xf32, #tpu.memory_space<vmem>>, vector<1x32xf32>
    %c1_57 = arith.constant 1 : index
    %c0_58 = arith.constant 0 : index
    %57 = vector.load %arg2[%c1_57, %c0_58] : memref<8x32xf32, #tpu.memory_space<vmem>>, vector<1x32xf32>
    %58 = arith.addf %56, %57 : vector<1x32xf32>
    %c9 = arith.constant 9 : index
    %c0_59 = arith.constant 0 : index
    %59 = vector.load %arg22[%c9, %c0_59] : memref<16x32xf32, #tpu.memory_space<vmem>>, vector<1x32xf32>
    tpu.vector_store %arg22[%c9, %c0_59], %58 {strides = array<i32>} : memref<16x32xf32, #tpu.memory_space<vmem>>, vector<1x32xf32>,
    %c1_60 = arith.constant 1 : index
    %c2_61 = arith.constant 2 : index
    %60 = memref.load %arg0[%c1_60, %c2_61] : memref<2x8xi32, #tpu.memory_space<smem>>
    %61 = arith.index_cast %60 : i32 to index
    %c0_62 = arith.constant 0 : index
    %62 = vector.load %arg1[%61, %c0_62] : memref<50x32xf32, #tpu.memory_space<vmem>>, vector<1x32xf32>
    %c2_63 = arith.constant 2 : index
    %c0_64 = arith.constant 0 : index
    %63 = vector.load %arg2[%c2_63, %c0_64] : memref<8x32xf32, #tpu.memory_space<vmem>>, vector<1x32xf32>
    %64 = arith.addf %62, %63 : vector<1x32xf32>
    %c10 = arith.constant 10 : index
    %c0_65 = arith.constant 0 : index
    %65 = vector.load %arg22[%c10, %c0_65] : memref<16x32xf32, #tpu.memory_space<vmem>>, vector<1x32xf32>
    tpu.vector_store %arg22[%c10, %c0_65], %64 {strides = array<i32>} : memref<16x32xf32, #tpu.memory_space<vmem>>, vector<1x32xf32>,
    %c1_66 = arith.constant 1 : index
    %c3_67 = arith.constant 3 : index
    %66 = memref.load %arg0[%c1_66, %c3_67] : memref<2x8xi32, #tpu.memory_space<smem>>
    %67 = arith.index_cast %66 : i32 to index
    %c0_68 = arith.constant 0 : index
    %68 = vector.load %arg1[%67, %c0_68] : memref<50x32xf32, #tpu.memory_space<vmem>>, vector<1x32xf32>
    %c3_69 = arith.constant 3 : index
    %c0_70 = arith.constant 0 : index
    %69 = vector.load %arg2[%c3_69, %c0_70] : memref<8x32xf32, #tpu.memory_space<vmem>>, vector<1x32xf32>
    %70 = arith.addf %68, %69 : vector<1x32xf32>
    %c11 = arith.constant 11 : index
    %c0_71 = arith.constant 0 : index
    %71 = vector.load %arg22[%c11, %c0_71] : memref<16x32xf32, #tpu.memory_space<vmem>>, vector<1x32xf32>
    tpu.vector_store %arg22[%c11, %c0_71], %70 {strides = array<i32>} : memref<16x32xf32, #tpu.memory_space<vmem>>, vector<1x32xf32>,
    %c1_72 = arith.constant 1 : index
    %c4_73 = arith.constant 4 : index
    %72 = memref.load %arg0[%c1_72, %c4_73] : memref<2x8xi32, #tpu.memory_space<smem>>
    %73 = arith.index_cast %72 : i32 to index
    %c0_74 = arith.constant 0 : index
    %74 = vector.load %arg1[%73, %c0_74] : memref<50x32xf32, #tpu.memory_space<vmem>>, vector<1x32xf32>
    %c4_75 = arith.constant 4 : index
    %c0_76 = arith.constant 0 : index
    %75 = vector.load %arg2[%c4_75, %c0_76] : memref<8x32xf32, #tpu.memory_space<vmem>>, vector<1x32xf32>
    %76 = arith.addf %74, %75 : vector<1x32xf32>
    %c12 = arith.constant 12 : index
    %c0_77 = arith.constant 0 : index
    %77 = vector.load %arg22[%c12, %c0_77] : memref<16x32xf32, #tpu.memory_space<vmem>>, vector<1x32xf32>
    tpu.vector_store %arg22[%c12, %c0_77], %76 {strides = array<i32>} : memref<16x32xf32, #tpu.memory_space<vmem>>, vector<1x32xf32>,
    %c1_78 = arith.constant 1 : index
    %c5_79 = arith.constant 5 : index
    %78 = memref.load %arg0[%c1_78, %c5_79] : memref<2x8xi32, #tpu.memory_space<smem>>
    %79 = arith.index_cast %78 : i32 to index
    %c0_80 = arith.constant 0 : index
    %80 = vector.load %arg1[%79, %c0_80] : memref<50x32xf32, #tpu.memory_space<vmem>>, vector<1x32xf32>
    %c5_81 = arith.constant 5 : index
    %c0_82 = arith.constant 0 : index
    %81 = vector.load %arg2[%c5_81, %c0_82] : memref<8x32xf32, #tpu.memory_space<vmem>>, vector<1x32xf32>
    %82 = arith.addf %80, %81 : vector<1x32xf32>
    %c13 = arith.constant 13 : index
    %c0_83 = arith.constant 0 : index
    %83 = vector.load %arg22[%c13, %c0_83] : memref<16x32xf32, #tpu.memory_space<vmem>>, vector<1x32xf32>
    tpu.vector_store %arg22[%c13, %c0_83], %82 {strides = array<i32>} : memref<16x32xf32, #tpu.memory_space<vmem>>, vector<1x32xf32>,
    %c1_84 = arith.constant 1 : index
    %c6_85 = arith.constant 6 : index
    %84 = memref.load %arg0[%c1_84, %c6_85] : memref<2x8xi32, #tpu.memory_space<smem>>
    %85 = arith.index_cast %84 : i32 to index
    %c0_86 = arith.constant 0 : index
    %86 = vector.load %arg1[%85, %c0_86] : memref<50x32xf32, #tpu.memory_space<vmem>>, vector<1x32xf32>
    %c6_87 = arith.constant 6 : index
    %c0_88 = arith.constant 0 : index
    %87 = vector.load %arg2[%c6_87, %c0_88] : memref<8x32xf32, #tpu.memory_space<vmem>>, vector<1x32xf32>
    %88 = arith.addf %86, %87 : vector<1x32xf32>
    %c14 = arith.constant 14 : index
    %c0_89 = arith.constant 0 : index
    %89 = vector.load %arg22[%c14, %c0_89] : memref<16x32xf32, #tpu.memory_space<vmem>>, vector<1x32xf32>
    tpu.vector_store %arg22[%c14, %c0_89], %88 {strides = array<i32>} : memref<16x32xf32, #tpu.memory_space<vmem>>, vector<1x32xf32>,
    %c1_90 = arith.constant 1 : index
    %c7_91 = arith.constant 7 : index
    %90 = memref.load %arg0[%c1_90, %c7_91] : memref<2x8xi32, #tpu.memory_space<smem>>
    %91 = arith.index_cast %90 : i32 to index
    %c0_92 = arith.constant 0 : index
    %92 = vector.load %arg1[%91, %c0_92] : memref<50x32xf32, #tpu.memory_space<vmem>>, vector<1x32xf32>
    %c7_93 = arith.constant 7 : index
    %c0_94 = arith.constant 0 : index
    %93 = vector.load %arg2[%c7_93, %c0_94] : memref<8x32xf32, #tpu.memory_space<vmem>>, vector<1x32xf32>
    %94 = arith.addf %92, %93 : vector<1x32xf32>
    %c15 = arith.constant 15 : index
    %c0_95 = arith.constant 0 : index
    %95 = vector.load %arg22[%c15, %c0_95] : memref<16x32xf32, #tpu.memory_space<vmem>>, vector<1x32xf32>
    tpu.vector_store %arg22[%c15, %c0_95], %94 {strides = array<i32>} : memref<16x32xf32, #tpu.memory_space<vmem>>, vector<1x32xf32>,
    %c0_96 = arith.constant 0 : index
    %c0_97 = arith.constant 0 : index
    %96 = vector.load %arg22[%c0_96, %c0_97] : memref<16x32xf32, #tpu.memory_space<vmem>>, vector<16x32xf32>
    %97 = arith.truncf %96 : vector<16x32xf32> to vector<16x32xbf16>
    %c0_98 = arith.constant 0 : index
    %c0_99 = arith.constant 0 : index
    %c0_100 = arith.constant 0 : index
    %98 = vector.load %arg3[%c0_98, %c0_99, %c0_100] : memref<2x32x96xbf16, #tpu.memory_space<vmem>>, vector<1x32x96xbf16>
    %99 = vector.shape_cast %98 : vector<1x32x96xbf16> to vector<32x96xbf16>
    %cst = arith.constant dense<0.000000e+00> : vector<16x96xf32>
    %100 = tpu.matmul %97, %99, %cst {dimension_numbers = #tpu.dot_dimension_numbers<[1], [0], [0], [1], [0, 0, 1, 1], [], []>} : vector<16x32xbf16>, vector<32x96xbf16>, vector<16x96xf32> -> vector<16x96xf32>
    %c0_101 = arith.constant 0 : index
    %c0_102 = arith.constant 0 : index
    %c0_103 = arith.constant 0 : index
    %101 = vector.load %arg4[%c0_101, %c0_102, %c0_103] : memref<2x1x96xf32, #tpu.memory_space<vmem>>, vector<1x1x96xf32>
    %102 = vector.shape_cast %101 : vector<1x1x96xf32> to vector<1x96xf32>
    %103 = vector.broadcast %102 : vector<1x96xf32> to vector<16x96xf32>
    %104 = arith.addf %100, %103 : vector<16x96xf32>
    %105 = vector.extract_strided_slice %104 {offsets = [0, 0], sizes = [16, 32], strides = [1, 1]} : vector<16x96xf32> to vector<16x32xf32>
    %cst_104 = arith.constant 0.353553385 : f32
    %106 = vector.broadcast %cst_104 : f32 to vector<16x32xf32>
    %107 = arith.mulf %105, %106 : vector<16x32xf32>
    %108 = vector.extract_strided_slice %104 {offsets = [0, 32], sizes = [16, 32], strides = [1, 1]} : vector<16x96xf32> to vector<16x32xf32>
    %109 = vector.extract_strided_slice %104 {offsets = [0, 64], sizes = [16, 32], strides = [1, 1]} : vector<16x96xf32> to vector<16x32xf32>
    %110 = vector.shape_cast %107 : vector<16x32xf32> to vector<2x8x32xf32>
    %111 = vector.shape_cast %108 : vector<16x32xf32> to vector<2x8x32xf32>
    %112 = vector.shape_cast %109 : vector<16x32xf32> to vector<2x8x32xf32>
    %113 = vector.extract_strided_slice %110 {offsets = [0, 0, 0], sizes = [2, 8, 8], strides = [1, 1, 1]} : vector<2x8x32xf32> to vector<2x8x8xf32>
    %114 = vector.extract_strided_slice %111 {offsets = [0, 0, 0], sizes = [2, 8, 8], strides = [1, 1, 1]} : vector<2x8x32xf32> to vector<2x8x8xf32>
    %115 = vector.extract_strided_slice %112 {offsets = [0, 0, 0], sizes = [2, 8, 8], strides = [1, 1, 1]} : vector<2x8x32xf32> to vector<2x8x8xf32>
    "tpu.trace_start"() <{level = 10 : i32, message = "bqh,bkh->bqk"}> : () -> ()
    %cst_105 = arith.constant dense<0.000000e+00> : vector<2x8x8xf32>
    %116 = tpu.matmul %113, %114, %cst_105 {dimension_numbers = #tpu.dot_dimension_numbers<[2], [2], [1], [1], [0, 0, 0, 1, 1, 1], [0], [0]>} : vector<2x8x8xf32>, vector<2x8x8xf32>, vector<2x8x8xf32> -> vector<2x8x8xf32>
    "tpu.trace_stop"() : () -> ()
    %cst_106 = arith.constant dense<0xFF800000> : vector<2x8xf32>
    %117 = vector.multi_reduction <maximumf>, %116, %cst_106 [2] : vector<2x8x8xf32> to vector<2x8xf32>
    %118 = vector.shape_cast %117 : vector<2x8xf32> to vector<2x8x1xf32>
    %119 = vector.broadcast %118 : vector<2x8x1xf32> to vector<2x8x8xf32>
    %120 = arith.subf %116, %119 : vector<2x8x8xf32>
    %121 = math.exp %120 : vector<2x8x8xf32>
    %cst_107 = arith.constant dense<0.000000e+00> : vector<2x8xf32>
    %122 = vector.multi_reduction <add>, %121, %cst_107 [2] : vector<2x8x8xf32> to vector<2x8xf32>
    %123 = vector.shape_cast %122 : vector<2x8xf32> to vector<2x8x1xf32>
    %124 = tpu.reciprocal %123 {approx = true} : vector<2x8x1xf32> -> vector<2x8x1xf32>
    %125 = vector.broadcast %124 : vector<2x8x1xf32> to vector<2x8x8xf32>
    %126 = arith.mulf %121, %125 : vector<2x8x8xf32>
    "tpu.trace_start"() <{level = 10 : i32, message = "bqk,bkh->bqh"}> : () -> ()
    %cst_108 = arith.constant dense<0.000000e+00> : vector<2x8x8xf32>
    %127 = tpu.matmul %126, %115, %cst_108 {dimension_numbers = #tpu.dot_dimension_numbers<[2], [1], [1], [2], [0, 0, 0, 1, 1, 2], [0], [0]>} : vector<2x8x8xf32>, vector<2x8x8xf32>, vector<2x8x8xf32> -> vector<2x8x8xf32>
    "tpu.trace_stop"() : () -> ()
    %128 = vector.extract_strided_slice %110 {offsets = [0, 0, 8], sizes = [2, 8, 8], strides = [1, 1, 1]} : vector<2x8x32xf32> to vector<2x8x8xf32>
    %129 = vector.extract_strided_slice %111 {offsets = [0, 0, 8], sizes = [2, 8, 8], strides = [1, 1, 1]} : vector<2x8x32xf32> to vector<2x8x8xf32>
    %130 = vector.extract_strided_slice %112 {offsets = [0, 0, 8], sizes = [2, 8, 8], strides = [1, 1, 1]} : vector<2x8x32xf32> to vector<2x8x8xf32>
    "tpu.trace_start"() <{level = 10 : i32, message = "bqh,bkh->bqk"}> : () -> ()
    %cst_109 = arith.constant dense<0.000000e+00> : vector<2x8x8xf32>
    %131 = tpu.matmul %128, %129, %cst_109 {dimension_numbers = #tpu.dot_dimension_numbers<[2], [2], [1], [1], [0, 0, 0, 1, 1, 1], [0], [0]>} : vector<2x8x8xf32>, vector<2x8x8xf32>, vector<2x8x8xf32> -> vector<2x8x8xf32>
    "tpu.trace_stop"() : () -> ()
    %cst_110 = arith.constant dense<0xFF800000> : vector<2x8xf32>
    %132 = vector.multi_reduction <maximumf>, %131, %cst_110 [2] : vector<2x8x8xf32> to vector<2x8xf32>
    %133 = vector.shape_cast %132 : vector<2x8xf32> to vector<2x8x1xf32>
    %134 = vector.broadcast %133 : vector<2x8x1xf32> to vector<2x8x8xf32>
    %135 = arith.subf %131, %134 : vector<2x8x8xf32>
    %136 = math.exp %135 : vector<2x8x8xf32>
    %cst_111 = arith.constant dense<0.000000e+00> : vector<2x8xf32>
    %137 = vector.multi_reduction <add>, %136, %cst_111 [2] : vector<2x8x8xf32> to vector<2x8xf32>
    %138 = vector.shape_cast %137 : vector<2x8xf32> to vector<2x8x1xf32>
    %139 = tpu.reciprocal %138 {approx = true} : vector<2x8x1xf32> -> vector<2x8x1xf32>
    %140 = vector.broadcast %139 : vector<2x8x1xf32> to vector<2x8x8xf32>
    %141 = arith.mulf %136, %140 : vector<2x8x8xf32>
    "tpu.trace_start"() <{level = 10 : i32, message = "bqk,bkh->bqh"}> : () -> ()
    %cst_112 = arith.constant dense<0.000000e+00> : vector<2x8x8xf32>
    %142 = tpu.matmul %141, %130, %cst_112 {dimension_numbers = #tpu.dot_dimension_numbers<[2], [1], [1], [2], [0, 0, 0, 1, 1, 2], [0], [0]>} : vector<2x8x8xf32>, vector<2x8x8xf32>, vector<2x8x8xf32> -> vector<2x8x8xf32>
    "tpu.trace_stop"() : () -> ()
    %143 = vector.extract_strided_slice %110 {offsets = [0, 0, 16], sizes = [2, 8, 8], strides = [1, 1, 1]} : vector<2x8x32xf32> to vector<2x8x8xf32>
    %144 = vector.extract_strided_slice %111 {offsets = [0, 0, 16], sizes = [2, 8, 8], strides = [1, 1, 1]} : vector<2x8x32xf32> to vector<2x8x8xf32>
    %145 = vector.extract_strided_slice %112 {offsets = [0, 0, 16], sizes = [2, 8, 8], strides = [1, 1, 1]} : vector<2x8x32xf32> to vector<2x8x8xf32>
    "tpu.trace_start"() <{level = 10 : i32, message = "bqh,bkh->bqk"}> : () -> ()
    %cst_113 = arith.constant dense<0.000000e+00> : vector<2x8x8xf32>
    %146 = tpu.matmul %143, %144, %cst_113 {dimension_numbers = #tpu.dot_dimension_numbers<[2], [2], [1], [1], [0, 0, 0, 1, 1, 1], [0], [0]>} : vector<2x8x8xf32>, vector<2x8x8xf32>, vector<2x8x8xf32> -> vector<2x8x8xf32>
    "tpu.trace_stop"() : () -> ()
    %cst_114 = arith.constant dense<0xFF800000> : vector<2x8xf32>
    %147 = vector.multi_reduction <maximumf>, %146, %cst_114 [2] : vector<2x8x8xf32> to vector<2x8xf32>
    %148 = vector.shape_cast %147 : vector<2x8xf32> to vector<2x8x1xf32>
    %149 = vector.broadcast %148 : vector<2x8x1xf32> to vector<2x8x8xf32>
    %150 = arith.subf %146, %149 : vector<2x8x8xf32>
    %151 = math.exp %150 : vector<2x8x8xf32>
    %cst_115 = arith.constant dense<0.000000e+00> : vector<2x8xf32>
    %152 = vector.multi_reduction <add>, %151, %cst_115 [2] : vector<2x8x8xf32> to vector<2x8xf32>
    %153 = vector.shape_cast %152 : vector<2x8xf32> to vector<2x8x1xf32>
    %154 = tpu.reciprocal %153 {approx = true} : vector<2x8x1xf32> -> vector<2x8x1xf32>
    %155 = vector.broadcast %154 : vector<2x8x1xf32> to vector<2x8x8xf32>
    %156 = arith.mulf %151, %155 : vector<2x8x8xf32>
    "tpu.trace_start"() <{level = 10 : i32, message = "bqk,bkh->bqh"}> : () -> ()
    %cst_116 = arith.constant dense<0.000000e+00> : vector<2x8x8xf32>
    %157 = tpu.matmul %156, %145, %cst_116 {dimension_numbers = #tpu.dot_dimension_numbers<[2], [1], [1], [2], [0, 0, 0, 1, 1, 2], [0], [0]>} : vector<2x8x8xf32>, vector<2x8x8xf32>, vector<2x8x8xf32> -> vector<2x8x8xf32>
    "tpu.trace_stop"() : () -> ()
    %158 = vector.extract_strided_slice %110 {offsets = [0, 0, 24], sizes = [2, 8, 8], strides = [1, 1, 1]} : vector<2x8x32xf32> to vector<2x8x8xf32>
    %159 = vector.extract_strided_slice %111 {offsets = [0, 0, 24], sizes = [2, 8, 8], strides = [1, 1, 1]} : vector<2x8x32xf32> to vector<2x8x8xf32>
    %160 = vector.extract_strided_slice %112 {offsets = [0, 0, 24], sizes = [2, 8, 8], strides = [1, 1, 1]} : vector<2x8x32xf32> to vector<2x8x8xf32>
    "tpu.trace_start"() <{level = 10 : i32, message = "bqh,bkh->bqk"}> : () -> ()
    %cst_117 = arith.constant dense<0.000000e+00> : vector<2x8x8xf32>
    %161 = tpu.matmul %158, %159, %cst_117 {dimension_numbers = #tpu.dot_dimension_numbers<[2], [2], [1], [1], [0, 0, 0, 1, 1, 1], [0], [0]>} : vector<2x8x8xf32>, vector<2x8x8xf32>, vector<2x8x8xf32> -> vector<2x8x8xf32>
    "tpu.trace_stop"() : () -> ()
    %cst_118 = arith.constant dense<0xFF800000> : vector<2x8xf32>
    %162 = vector.multi_reduction <maximumf>, %161, %cst_118 [2] : vector<2x8x8xf32> to vector<2x8xf32>
    %163 = vector.shape_cast %162 : vector<2x8xf32> to vector<2x8x1xf32>
    %164 = vector.broadcast %163 : vector<2x8x1xf32> to vector<2x8x8xf32>
    %165 = arith.subf %161, %164 : vector<2x8x8xf32>
    %166 = math.exp %165 : vector<2x8x8xf32>
    %cst_119 = arith.constant dense<0.000000e+00> : vector<2x8xf32>
    %167 = vector.multi_reduction <add>, %166, %cst_119 [2] : vector<2x8x8xf32> to vector<2x8xf32>
    %168 = vector.shape_cast %167 : vector<2x8xf32> to vector<2x8x1xf32>
    %169 = tpu.reciprocal %168 {approx = true} : vector<2x8x1xf32> -> vector<2x8x1xf32>
    %170 = vector.broadcast %169 : vector<2x8x1xf32> to vector<2x8x8xf32>
    %171 = arith.mulf %166, %170 : vector<2x8x8xf32>
    "tpu.trace_start"() <{level = 10 : i32, message = "bqk,bkh->bqh"}> : () -> ()
    %cst_120 = arith.constant dense<0.000000e+00> : vector<2x8x8xf32>
    %172 = tpu.matmul %171, %160, %cst_120 {dimension_numbers = #tpu.dot_dimension_numbers<[2], [1], [1], [2], [0, 0, 0, 1, 1, 2], [0], [0]>} : vector<2x8x8xf32>, vector<2x8x8xf32>, vector<2x8x8xf32> -> vector<2x8x8xf32>
    "tpu.trace_stop"() : () -> ()
    %173 = tpu.concatenate %127, %142, %157, %172 in 2 : vector<2x8x8xf32>, vector<2x8x8xf32>, vector<2x8x8xf32>, vector<2x8x8xf32> -> vector<2x8x32xf32>
    %174 = vector.shape_cast %173 : vector<2x8x32xf32> to vector<16x32xf32>
    %175 = arith.truncf %174 : vector<16x32xf32> to vector<16x32xbf16>
    %c0_121 = arith.constant 0 : index
    %c0_122 = arith.constant 0 : index
    %c0_123 = arith.constant 0 : index
    %176 = vector.load %arg5[%c0_121, %c0_122, %c0_123] : memref<2x32x32xbf16, #tpu.memory_space<vmem>>, vector<1x32x32xbf16>
    %177 = vector.shape_cast %176 : vector<1x32x32xbf16> to vector<32x32xbf16>
    %cst_124 = arith.constant dense<0.000000e+00> : vector<16x32xf32>
    %178 = tpu.matmul %175, %177, %cst_124 {dimension_numbers = #tpu.dot_dimension_numbers<[1], [0], [0], [1], [0, 0, 1, 1], [], []>} : vector<16x32xbf16>, vector<32x32xbf16>, vector<16x32xf32> -> vector<16x32xf32>
    %c0_125 = arith.constant 0 : index
    %c0_126 = arith.constant 0 : index
    %c0_127 = arith.constant 0 : index
    %179 = vector.load %arg6[%c0_125, %c0_126, %c0_127] : memref<2x1x32xf32, #tpu.memory_space<vmem>>, vector<1x1x32xf32>
    %180 = vector.shape_cast %179 : vector<1x1x32xf32> to vector<1x32xf32>
    %181 = vector.broadcast %180 : vector<1x32xf32> to vector<16x32xf32>
    %182 = arith.addf %178, %181 : vector<16x32xf32>
    %183 = arith.addf %96, %182 : vector<16x32xf32>
    %c0_128 = arith.constant 0 : index
    %c0_129 = arith.constant 0 : index
    %c0_130 = arith.constant 0 : index
    %184 = vector.load %arg11[%c0_128, %c0_129, %c0_130] : memref<2x1x32xf32, #tpu.memory_space<vmem>>, vector<1x1x32xf32>
    %185 = vector.shape_cast %184 : vector<1x1x32xf32> to vector<1x32xf32>
    %c0_131 = arith.constant 0 : index
    %c0_132 = arith.constant 0 : index
    %c0_133 = arith.constant 0 : index
    %186 = vector.load %arg12[%c0_131, %c0_132, %c0_133] : memref<2x1x32xf32, #tpu.memory_space<vmem>>, vector<1x1x32xf32>
    %187 = vector.shape_cast %186 : vector<1x1x32xf32> to vector<1x32xf32>
    %cst_134 = arith.constant dense<0.000000e+00> : vector<16xf32>
    %188 = vector.multi_reduction <add>, %183, %cst_134 [1] : vector<16x32xf32> to vector<16xf32>
    %189 = vector.shape_cast %188 : vector<16xf32> to vector<16x1xf32>
    %cst_135 = arith.constant 3.200000e+01 : f32
    %190 = vector.broadcast %cst_135 : f32 to vector<16x1xf32>
    %191 = arith.divf %189, %190 : vector<16x1xf32>
    %192 = vector.broadcast %191 : vector<16x1xf32> to vector<16x32xf32>
    %193 = arith.subf %183, %192 : vector<16x32xf32>
    %194 = arith.mulf %193, %193 : vector<16x32xf32>
    %cst_136 = arith.constant dense<0.000000e+00> : vector<16xf32>
    %195 = vector.multi_reduction <add>, %194, %cst_136 [1] : vector<16x32xf32> to vector<16xf32>
    %196 = vector.shape_cast %195 : vector<16xf32> to vector<16x1xf32>
    %cst_137 = arith.constant 3.200000e+01 : f32
    %197 = vector.broadcast %cst_137 : f32 to vector<16x1xf32>
    %198 = arith.divf %196, %197 : vector<16x1xf32>
    %199 = vector.broadcast %191 : vector<16x1xf32> to vector<16x32xf32>
    %200 = arith.subf %183, %199 : vector<16x32xf32>
    %cst_138 = arith.constant 9.99999974E-6 : f32
    %201 = vector.broadcast %cst_138 : f32 to vector<16x1xf32>
    %202 = arith.addf %198, %201 : vector<16x1xf32>
    %203 = math.rsqrt %202 : vector<16x1xf32>
    %204 = vector.broadcast %203 : vector<16x1xf32> to vector<16x32xf32>
    %205 = arith.mulf %200, %204 : vector<16x32xf32>
    %206 = vector.broadcast %185 : vector<1x32xf32> to vector<16x32xf32>
    %207 = arith.mulf %205, %206 : vector<16x32xf32>
    %208 = vector.broadcast %187 : vector<1x32xf32> to vector<16x32xf32>
    %209 = arith.addf %207, %208 : vector<16x32xf32>
    %210 = arith.truncf %209 : vector<16x32xf32> to vector<16x32xbf16>
    %c0_139 = arith.constant 0 : index
    %c0_140 = arith.constant 0 : index
    %c0_141 = arith.constant 0 : index
    %211 = vector.load %arg7[%c0_139, %c0_140, %c0_141] : memref<2x32x64xbf16, #tpu.memory_space<vmem>>, vector<1x32x64xbf16>
    %212 = vector.shape_cast %211 : vector<1x32x64xbf16> to vector<32x64xbf16>
    %cst_142 = arith.constant dense<0.000000e+00> : vector<16x64xf32>
    %213 = tpu.matmul %210, %212, %cst_142 {dimension_numbers = #tpu.dot_dimension_numbers<[1], [0], [0], [1], [0, 0, 1, 1], [], []>} : vector<16x32xbf16>, vector<32x64xbf16>, vector<16x64xf32> -> vector<16x64xf32>
    %c0_143 = arith.constant 0 : index
    %c0_144 = arith.constant 0 : index
    %c0_145 = arith.constant 0 : index
    %214 = vector.load %arg8[%c0_143, %c0_144, %c0_145] : memref<2x1x64xf32, #tpu.memory_space<vmem>>, vector<1x1x64xf32>
    %215 = vector.shape_cast %214 : vector<1x1x64xf32> to vector<1x64xf32>
    %216 = vector.broadcast %215 : vector<1x64xf32> to vector<16x64xf32>
    %217 = arith.addf %213, %216 : vector<16x64xf32>
    %cst_146 = arith.constant 0.000000e+00 : f32
    %218 = vector.broadcast %cst_146 : f32 to vector<16x64xf32>
    %219 = arith.maximumf %217, %218 : vector<16x64xf32>
    %220 = arith.truncf %219 : vector<16x64xf32> to vector<16x64xbf16>
    %c0_147 = arith.constant 0 : index
    %c0_148 = arith.constant 0 : index
    %c0_149 = arith.constant 0 : index
    %221 = vector.load %arg9[%c0_147, %c0_148, %c0_149] : memref<2x64x32xbf16, #tpu.memory_space<vmem>>, vector<1x64x32xbf16>
    %222 = vector.shape_cast %221 : vector<1x64x32xbf16> to vector<64x32xbf16>
    %cst_150 = arith.constant dense<0.000000e+00> : vector<16x32xf32>
    %223 = tpu.matmul %220, %222, %cst_150 {dimension_numbers = #tpu.dot_dimension_numbers<[1], [0], [0], [1], [0, 0, 1, 1], [], []>} : vector<16x64xbf16>, vector<64x32xbf16>, vector<16x32xf32> -> vector<16x32xf32>
    %c0_151 = arith.constant 0 : index
    %c0_152 = arith.constant 0 : index
    %c0_153 = arith.constant 0 : index
    %224 = vector.load %arg10[%c0_151, %c0_152, %c0_153] : memref<2x1x32xf32, #tpu.memory_space<vmem>>, vector<1x1x32xf32>
    %225 = vector.shape_cast %224 : vector<1x1x32xf32> to vector<1x32xf32>
    %226 = vector.broadcast %225 : vector<1x32xf32> to vector<16x32xf32>
    %227 = arith.addf %223, %226 : vector<16x32xf32>
    %228 = arith.addf %209, %227 : vector<16x32xf32>
    %c0_154 = arith.constant 0 : index
    %c0_155 = arith.constant 0 : index
    %c0_156 = arith.constant 0 : index
    %229 = vector.load %arg13[%c0_154, %c0_155, %c0_156] : memref<2x1x32xf32, #tpu.memory_space<vmem>>, vector<1x1x32xf32>
    %230 = vector.shape_cast %229 : vector<1x1x32xf32> to vector<1x32xf32>
    %c0_157 = arith.constant 0 : index
    %c0_158 = arith.constant 0 : index
    %c0_159 = arith.constant 0 : index
    %231 = vector.load %arg14[%c0_157, %c0_158, %c0_159] : memref<2x1x32xf32, #tpu.memory_space<vmem>>, vector<1x1x32xf32>
    %232 = vector.shape_cast %231 : vector<1x1x32xf32> to vector<1x32xf32>
    %cst_160 = arith.constant dense<0.000000e+00> : vector<16xf32>
    %233 = vector.multi_reduction <add>, %228, %cst_160 [1] : vector<16x32xf32> to vector<16xf32>
    %234 = vector.shape_cast %233 : vector<16xf32> to vector<16x1xf32>
    %cst_161 = arith.constant 3.200000e+01 : f32
    %235 = vector.broadcast %cst_161 : f32 to vector<16x1xf32>
    %236 = arith.divf %234, %235 : vector<16x1xf32>
    %237 = vector.broadcast %236 : vector<16x1xf32> to vector<16x32xf32>
    %238 = arith.subf %228, %237 : vector<16x32xf32>
    %239 = arith.mulf %238, %238 : vector<16x32xf32>
    %cst_162 = arith.constant dense<0.000000e+00> : vector<16xf32>
    %240 = vector.multi_reduction <add>, %239, %cst_162 [1] : vector<16x32xf32> to vector<16xf32>
    %241 = vector.shape_cast %240 : vector<16xf32> to vector<16x1xf32>
    %cst_163 = arith.constant 3.200000e+01 : f32
    %242 = vector.broadcast %cst_163 : f32 to vector<16x1xf32>
    %243 = arith.divf %241, %242 : vector<16x1xf32>
    %244 = vector.broadcast %236 : vector<16x1xf32> to vector<16x32xf32>
    %245 = arith.subf %228, %244 : vector<16x32xf32>
    %cst_164 = arith.constant 9.99999974E-6 : f32
    %246 = vector.broadcast %cst_164 : f32 to vector<16x1xf32>
    %247 = arith.addf %243, %246 : vector<16x1xf32>
    %248 = math.rsqrt %247 : vector<16x1xf32>
    %249 = vector.broadcast %248 : vector<16x1xf32> to vector<16x32xf32>
    %250 = arith.mulf %245, %249 : vector<16x32xf32>
    %251 = vector.broadcast %230 : vector<1x32xf32> to vector<16x32xf32>
    %252 = arith.mulf %250, %251 : vector<16x32xf32>
    %253 = vector.broadcast %232 : vector<1x32xf32> to vector<16x32xf32>
    %254 = arith.addf %252, %253 : vector<16x32xf32>
    %255 = arith.truncf %254 : vector<16x32xf32> to vector<16x32xbf16>
    %c1_165 = arith.constant 1 : index
    %c0_166 = arith.constant 0 : index
    %c0_167 = arith.constant 0 : index
    %256 = vector.load %arg3[%c1_165, %c0_166, %c0_167] : memref<2x32x96xbf16, #tpu.memory_space<vmem>>, vector<1x32x96xbf16>
    %257 = vector.shape_cast %256 : vector<1x32x96xbf16> to vector<32x96xbf16>
    %cst_168 = arith.constant dense<0.000000e+00> : vector<16x96xf32>
    %258 = tpu.matmul %255, %257, %cst_168 {dimension_numbers = #tpu.dot_dimension_numbers<[1], [0], [0], [1], [0, 0, 1, 1], [], []>} : vector<16x32xbf16>, vector<32x96xbf16>, vector<16x96xf32> -> vector<16x96xf32>
    %c1_169 = arith.constant 1 : index
    %c0_170 = arith.constant 0 : index
    %c0_171 = arith.constant 0 : index
    %259 = vector.load %arg4[%c1_169, %c0_170, %c0_171] : memref<2x1x96xf32, #tpu.memory_space<vmem>>, vector<1x1x96xf32>
    %260 = vector.shape_cast %259 : vector<1x1x96xf32> to vector<1x96xf32>
    %261 = vector.broadcast %260 : vector<1x96xf32> to vector<16x96xf32>
    %262 = arith.addf %258, %261 : vector<16x96xf32>
    %263 = vector.extract_strided_slice %262 {offsets = [0, 0], sizes = [16, 32], strides = [1, 1]} : vector<16x96xf32> to vector<16x32xf32>
    %cst_172 = arith.constant 0.353553385 : f32
    %264 = vector.broadcast %cst_172 : f32 to vector<16x32xf32>
    %265 = arith.mulf %263, %264 : vector<16x32xf32>
    %266 = vector.extract_strided_slice %262 {offsets = [0, 32], sizes = [16, 32], strides = [1, 1]} : vector<16x96xf32> to vector<16x32xf32>
    %267 = vector.extract_strided_slice %262 {offsets = [0, 64], sizes = [16, 32], strides = [1, 1]} : vector<16x96xf32> to vector<16x32xf32>
    %268 = vector.shape_cast %265 : vector<16x32xf32> to vector<2x8x32xf32>
    %269 = vector.shape_cast %266 : vector<16x32xf32> to vector<2x8x32xf32>
    %270 = vector.shape_cast %267 : vector<16x32xf32> to vector<2x8x32xf32>
    %271 = vector.extract_strided_slice %268 {offsets = [0, 0, 0], sizes = [2, 8, 8], strides = [1, 1, 1]} : vector<2x8x32xf32> to vector<2x8x8xf32>
    %272 = vector.extract_strided_slice %269 {offsets = [0, 0, 0], sizes = [2, 8, 8], strides = [1, 1, 1]} : vector<2x8x32xf32> to vector<2x8x8xf32>
    %273 = vector.extract_strided_slice %270 {offsets = [0, 0, 0], sizes = [2, 8, 8], strides = [1, 1, 1]} : vector<2x8x32xf32> to vector<2x8x8xf32>
    "tpu.trace_start"() <{level = 10 : i32, message = "bqh,bkh->bqk"}> : () -> ()
    %cst_173 = arith.constant dense<0.000000e+00> : vector<2x8x8xf32>
    %274 = tpu.matmul %271, %272, %cst_173 {dimension_numbers = #tpu.dot_dimension_numbers<[2], [2], [1], [1], [0, 0, 0, 1, 1, 1], [0], [0]>} : vector<2x8x8xf32>, vector<2x8x8xf32>, vector<2x8x8xf32> -> vector<2x8x8xf32>
    "tpu.trace_stop"() : () -> ()
    %cst_174 = arith.constant dense<0xFF800000> : vector<2x8xf32>
    %275 = vector.multi_reduction <maximumf>, %274, %cst_174 [2] : vector<2x8x8xf32> to vector<2x8xf32>
    %276 = vector.shape_cast %275 : vector<2x8xf32> to vector<2x8x1xf32>
    %277 = vector.broadcast %276 : vector<2x8x1xf32> to vector<2x8x8xf32>
    %278 = arith.subf %274, %277 : vector<2x8x8xf32>
    %279 = math.exp %278 : vector<2x8x8xf32>
    %cst_175 = arith.constant dense<0.000000e+00> : vector<2x8xf32>
    %280 = vector.multi_reduction <add>, %279, %cst_175 [2] : vector<2x8x8xf32> to vector<2x8xf32>
    %281 = vector.shape_cast %280 : vector<2x8xf32> to vector<2x8x1xf32>
    %282 = tpu.reciprocal %281 {approx = true} : vector<2x8x1xf32> -> vector<2x8x1xf32>
    %283 = vector.broadcast %282 : vector<2x8x1xf32> to vector<2x8x8xf32>
    %284 = arith.mulf %279, %283 : vector<2x8x8xf32>
    "tpu.trace_start"() <{level = 10 : i32, message = "bqk,bkh->bqh"}> : () -> ()
    %cst_176 = arith.constant dense<0.000000e+00> : vector<2x8x8xf32>
    %285 = tpu.matmul %284, %273, %cst_176 {dimension_numbers = #tpu.dot_dimension_numbers<[2], [1], [1], [2], [0, 0, 0, 1, 1, 2], [0], [0]>} : vector<2x8x8xf32>, vector<2x8x8xf32>, vector<2x8x8xf32> -> vector<2x8x8xf32>
    "tpu.trace_stop"() : () -> ()
    %286 = vector.extract_strided_slice %268 {offsets = [0, 0, 8], sizes = [2, 8, 8], strides = [1, 1, 1]} : vector<2x8x32xf32> to vector<2x8x8xf32>
    %287 = vector.extract_strided_slice %269 {offsets = [0, 0, 8], sizes = [2, 8, 8], strides = [1, 1, 1]} : vector<2x8x32xf32> to vector<2x8x8xf32>
    %288 = vector.extract_strided_slice %270 {offsets = [0, 0, 8], sizes = [2, 8, 8], strides = [1, 1, 1]} : vector<2x8x32xf32> to vector<2x8x8xf32>
    "tpu.trace_start"() <{level = 10 : i32, message = "bqh,bkh->bqk"}> : () -> ()
    %cst_177 = arith.constant dense<0.000000e+00> : vector<2x8x8xf32>
    %289 = tpu.matmul %286, %287, %cst_177 {dimension_numbers = #tpu.dot_dimension_numbers<[2], [2], [1], [1], [0, 0, 0, 1, 1, 1], [0], [0]>} : vector<2x8x8xf32>, vector<2x8x8xf32>, vector<2x8x8xf32> -> vector<2x8x8xf32>
    "tpu.trace_stop"() : () -> ()
    %cst_178 = arith.constant dense<0xFF800000> : vector<2x8xf32>
    %290 = vector.multi_reduction <maximumf>, %289, %cst_178 [2] : vector<2x8x8xf32> to vector<2x8xf32>
    %291 = vector.shape_cast %290 : vector<2x8xf32> to vector<2x8x1xf32>
    %292 = vector.broadcast %291 : vector<2x8x1xf32> to vector<2x8x8xf32>
    %293 = arith.subf %289, %292 : vector<2x8x8xf32>
    %294 = math.exp %293 : vector<2x8x8xf32>
    %cst_179 = arith.constant dense<0.000000e+00> : vector<2x8xf32>
    %295 = vector.multi_reduction <add>, %294, %cst_179 [2] : vector<2x8x8xf32> to vector<2x8xf32>
    %296 = vector.shape_cast %295 : vector<2x8xf32> to vector<2x8x1xf32>
    %297 = tpu.reciprocal %296 {approx = true} : vector<2x8x1xf32> -> vector<2x8x1xf32>
    %298 = vector.broadcast %297 : vector<2x8x1xf32> to vector<2x8x8xf32>
    %299 = arith.mulf %294, %298 : vector<2x8x8xf32>
    "tpu.trace_start"() <{level = 10 : i32, message = "bqk,bkh->bqh"}> : () -> ()
    %cst_180 = arith.constant dense<0.000000e+00> : vector<2x8x8xf32>
    %300 = tpu.matmul %299, %288, %cst_180 {dimension_numbers = #tpu.dot_dimension_numbers<[2], [1], [1], [2], [0, 0, 0, 1, 1, 2], [0], [0]>} : vector<2x8x8xf32>, vector<2x8x8xf32>, vector<2x8x8xf32> -> vector<2x8x8xf32>
    "tpu.trace_stop"() : () -> ()
    %301 = vector.extract_strided_slice %268 {offsets = [0, 0, 16], sizes = [2, 8, 8], strides = [1, 1, 1]} : vector<2x8x32xf32> to vector<2x8x8xf32>
    %302 = vector.extract_strided_slice %269 {offsets = [0, 0, 16], sizes = [2, 8, 8], strides = [1, 1, 1]} : vector<2x8x32xf32> to vector<2x8x8xf32>
    %303 = vector.extract_strided_slice %270 {offsets = [0, 0, 16], sizes = [2, 8, 8], strides = [1, 1, 1]} : vector<2x8x32xf32> to vector<2x8x8xf32>
    "tpu.trace_start"() <{level = 10 : i32, message = "bqh,bkh->bqk"}> : () -> ()
    %cst_181 = arith.constant dense<0.000000e+00> : vector<2x8x8xf32>
    %304 = tpu.matmul %301, %302, %cst_181 {dimension_numbers = #tpu.dot_dimension_numbers<[2], [2], [1], [1], [0, 0, 0, 1, 1, 1], [0], [0]>} : vector<2x8x8xf32>, vector<2x8x8xf32>, vector<2x8x8xf32> -> vector<2x8x8xf32>
    "tpu.trace_stop"() : () -> ()
    %cst_182 = arith.constant dense<0xFF800000> : vector<2x8xf32>
    %305 = vector.multi_reduction <maximumf>, %304, %cst_182 [2] : vector<2x8x8xf32> to vector<2x8xf32>
    %306 = vector.shape_cast %305 : vector<2x8xf32> to vector<2x8x1xf32>
    %307 = vector.broadcast %306 : vector<2x8x1xf32> to vector<2x8x8xf32>
    %308 = arith.subf %304, %307 : vector<2x8x8xf32>
    %309 = math.exp %308 : vector<2x8x8xf32>
    %cst_183 = arith.constant dense<0.000000e+00> : vector<2x8xf32>
    %310 = vector.multi_reduction <add>, %309, %cst_183 [2] : vector<2x8x8xf32> to vector<2x8xf32>
    %311 = vector.shape_cast %310 : vector<2x8xf32> to vector<2x8x1xf32>
    %312 = tpu.reciprocal %311 {approx = true} : vector<2x8x1xf32> -> vector<2x8x1xf32>
    %313 = vector.broadcast %312 : vector<2x8x1xf32> to vector<2x8x8xf32>
    %314 = arith.mulf %309, %313 : vector<2x8x8xf32>
    "tpu.trace_start"() <{level = 10 : i32, message = "bqk,bkh->bqh"}> : () -> ()
    %cst_184 = arith.constant dense<0.000000e+00> : vector<2x8x8xf32>
    %315 = tpu.matmul %314, %303, %cst_184 {dimension_numbers = #tpu.dot_dimension_numbers<[2], [1], [1], [2], [0, 0, 0, 1, 1, 2], [0], [0]>} : vector<2x8x8xf32>, vector<2x8x8xf32>, vector<2x8x8xf32> -> vector<2x8x8xf32>
    "tpu.trace_stop"() : () -> ()
    %316 = vector.extract_strided_slice %268 {offsets = [0, 0, 24], sizes = [2, 8, 8], strides = [1, 1, 1]} : vector<2x8x32xf32> to vector<2x8x8xf32>
    %317 = vector.extract_strided_slice %269 {offsets = [0, 0, 24], sizes = [2, 8, 8], strides = [1, 1, 1]} : vector<2x8x32xf32> to vector<2x8x8xf32>
    %318 = vector.extract_strided_slice %270 {offsets = [0, 0, 24], sizes = [2, 8, 8], strides = [1, 1, 1]} : vector<2x8x32xf32> to vector<2x8x8xf32>
    "tpu.trace_start"() <{level = 10 : i32, message = "bqh,bkh->bqk"}> : () -> ()
    %cst_185 = arith.constant dense<0.000000e+00> : vector<2x8x8xf32>
    %319 = tpu.matmul %316, %317, %cst_185 {dimension_numbers = #tpu.dot_dimension_numbers<[2], [2], [1], [1], [0, 0, 0, 1, 1, 1], [0], [0]>} : vector<2x8x8xf32>, vector<2x8x8xf32>, vector<2x8x8xf32> -> vector<2x8x8xf32>
    "tpu.trace_stop"() : () -> ()
    %cst_186 = arith.constant dense<0xFF800000> : vector<2x8xf32>
    %320 = vector.multi_reduction <maximumf>, %319, %cst_186 [2] : vector<2x8x8xf32> to vector<2x8xf32>
    %321 = vector.shape_cast %320 : vector<2x8xf32> to vector<2x8x1xf32>
    %322 = vector.broadcast %321 : vector<2x8x1xf32> to vector<2x8x8xf32>
    %323 = arith.subf %319, %322 : vector<2x8x8xf32>
    %324 = math.exp %323 : vector<2x8x8xf32>
    %cst_187 = arith.constant dense<0.000000e+00> : vector<2x8xf32>
    %325 = vector.multi_reduction <add>, %324, %cst_187 [2] : vector<2x8x8xf32> to vector<2x8xf32>
    %326 = vector.shape_cast %325 : vector<2x8xf32> to vector<2x8x1xf32>
    %327 = tpu.reciprocal %326 {approx = true} : vector<2x8x1xf32> -> vector<2x8x1xf32>
    %328 = vector.broadcast %327 : vector<2x8x1xf32> to vector<2x8x8xf32>
    %329 = arith.mulf %324, %328 : vector<2x8x8xf32>
    "tpu.trace_start"() <{level = 10 : i32, message = "bqk,bkh->bqh"}> : () -> ()
    %cst_188 = arith.constant dense<0.000000e+00> : vector<2x8x8xf32>
    %330 = tpu.matmul %329, %318, %cst_188 {dimension_numbers = #tpu.dot_dimension_numbers<[2], [1], [1], [2], [0, 0, 0, 1, 1, 2], [0], [0]>} : vector<2x8x8xf32>, vector<2x8x8xf32>, vector<2x8x8xf32> -> vector<2x8x8xf32>
    "tpu.trace_stop"() : () -> ()
    %331 = tpu.concatenate %285, %300, %315, %330 in 2 : vector<2x8x8xf32>, vector<2x8x8xf32>, vector<2x8x8xf32>, vector<2x8x8xf32> -> vector<2x8x32xf32>
    %332 = vector.shape_cast %331 : vector<2x8x32xf32> to vector<16x32xf32>
    %333 = arith.truncf %332 : vector<16x32xf32> to vector<16x32xbf16>
    %c1_189 = arith.constant 1 : index
    %c0_190 = arith.constant 0 : index
    %c0_191 = arith.constant 0 : index
    %334 = vector.load %arg5[%c1_189, %c0_190, %c0_191] : memref<2x32x32xbf16, #tpu.memory_space<vmem>>, vector<1x32x32xbf16>
    %335 = vector.shape_cast %334 : vector<1x32x32xbf16> to vector<32x32xbf16>
    %cst_192 = arith.constant dense<0.000000e+00> : vector<16x32xf32>
    %336 = tpu.matmul %333, %335, %cst_192 {dimension_numbers = #tpu.dot_dimension_numbers<[1], [0], [0], [1], [0, 0, 1, 1], [], []>} : vector<16x32xbf16>, vector<32x32xbf16>, vector<16x32xf32> -> vector<16x32xf32>
    %c1_193 = arith.constant 1 : index
    %c0_194 = arith.constant 0 : index
    %c0_195 = arith.constant 0 : index
    %337 = vector.load %arg6[%c1_193, %c0_194, %c0_195] : memref<2x1x32xf32, #tpu.memory_space<vmem>>, vector<1x1x32xf32>
    %338 = vector.shape_cast %337 : vector<1x1x32xf32> to vector<1x32xf32>
    %339 = vector.broadcast %338 : vector<1x32xf32> to vector<16x32xf32>
    %340 = arith.addf %336, %339 : vector<16x32xf32>
    %341 = arith.addf %254, %340 : vector<16x32xf32>
    %c1_196 = arith.constant 1 : index
    %c0_197 = arith.constant 0 : index
    %c0_198 = arith.constant 0 : index
    %342 = vector.load %arg11[%c1_196, %c0_197, %c0_198] : memref<2x1x32xf32, #tpu.memory_space<vmem>>, vector<1x1x32xf32>
    %343 = vector.shape_cast %342 : vector<1x1x32xf32> to vector<1x32xf32>
    %c1_199 = arith.constant 1 : index
    %c0_200 = arith.constant 0 : index
    %c0_201 = arith.constant 0 : index
    %344 = vector.load %arg12[%c1_199, %c0_200, %c0_201] : memref<2x1x32xf32, #tpu.memory_space<vmem>>, vector<1x1x32xf32>
    %345 = vector.shape_cast %344 : vector<1x1x32xf32> to vector<1x32xf32>
    %cst_202 = arith.constant dense<0.000000e+00> : vector<16xf32>
    %346 = vector.multi_reduction <add>, %341, %cst_202 [1] : vector<16x32xf32> to vector<16xf32>
    %347 = vector.shape_cast %346 : vector<16xf32> to vector<16x1xf32>
    %cst_203 = arith.constant 3.200000e+01 : f32
    %348 = vector.broadcast %cst_203 : f32 to vector<16x1xf32>
    %349 = arith.divf %347, %348 : vector<16x1xf32>
    %350 = vector.broadcast %349 : vector<16x1xf32> to vector<16x32xf32>
    %351 = arith.subf %341, %350 : vector<16x32xf32>
    %352 = arith.mulf %351, %351 : vector<16x32xf32>
    %cst_204 = arith.constant dense<0.000000e+00> : vector<16xf32>
    %353 = vector.multi_reduction <add>, %352, %cst_204 [1] : vector<16x32xf32> to vector<16xf32>
    %354 = vector.shape_cast %353 : vector<16xf32> to vector<16x1xf32>
    %cst_205 = arith.constant 3.200000e+01 : f32
    %355 = vector.broadcast %cst_205 : f32 to vector<16x1xf32>
    %356 = arith.divf %354, %355 : vector<16x1xf32>
    %357 = vector.broadcast %349 : vector<16x1xf32> to vector<16x32xf32>
    %358 = arith.subf %341, %357 : vector<16x32xf32>
    %cst_206 = arith.constant 9.99999974E-6 : f32
    %359 = vector.broadcast %cst_206 : f32 to vector<16x1xf32>
    %360 = arith.addf %356, %359 : vector<16x1xf32>
    %361 = math.rsqrt %360 : vector<16x1xf32>
    %362 = vector.broadcast %361 : vector<16x1xf32> to vector<16x32xf32>
    %363 = arith.mulf %358, %362 : vector<16x32xf32>
    %364 = vector.broadcast %343 : vector<1x32xf32> to vector<16x32xf32>
    %365 = arith.mulf %363, %364 : vector<16x32xf32>
    %366 = vector.broadcast %345 : vector<1x32xf32> to vector<16x32xf32>
    %367 = arith.addf %365, %366 : vector<16x32xf32>
    %368 = arith.truncf %367 : vector<16x32xf32> to vector<16x32xbf16>
    %c1_207 = arith.constant 1 : index
    %c0_208 = arith.constant 0 : index
    %c0_209 = arith.constant 0 : index
    %369 = vector.load %arg7[%c1_207, %c0_208, %c0_209] : memref<2x32x64xbf16, #tpu.memory_space<vmem>>, vector<1x32x64xbf16>
    %370 = vector.shape_cast %369 : vector<1x32x64xbf16> to vector<32x64xbf16>
    %cst_210 = arith.constant dense<0.000000e+00> : vector<16x64xf32>
    %371 = tpu.matmul %368, %370, %cst_210 {dimension_numbers = #tpu.dot_dimension_numbers<[1], [0], [0], [1], [0, 0, 1, 1], [], []>} : vector<16x32xbf16>, vector<32x64xbf16>, vector<16x64xf32> -> vector<16x64xf32>
    %c1_211 = arith.constant 1 : index
    %c0_212 = arith.constant 0 : index
    %c0_213 = arith.constant 0 : index
    %372 = vector.load %arg8[%c1_211, %c0_212, %c0_213] : memref<2x1x64xf32, #tpu.memory_space<vmem>>, vector<1x1x64xf32>
    %373 = vector.shape_cast %372 : vector<1x1x64xf32> to vector<1x64xf32>
    %374 = vector.broadcast %373 : vector<1x64xf32> to vector<16x64xf32>
    %375 = arith.addf %371, %374 : vector<16x64xf32>
    %cst_214 = arith.constant 0.000000e+00 : f32
    %376 = vector.broadcast %cst_214 : f32 to vector<16x64xf32>
    %377 = arith.maximumf %375, %376 : vector<16x64xf32>
    %378 = arith.truncf %377 : vector<16x64xf32> to vector<16x64xbf16>
    %c1_215 = arith.constant 1 : index
    %c0_216 = arith.constant 0 : index
    %c0_217 = arith.constant 0 : index
    %379 = vector.load %arg9[%c1_215, %c0_216, %c0_217] : memref<2x64x32xbf16, #tpu.memory_space<vmem>>, vector<1x64x32xbf16>
    %380 = vector.shape_cast %379 : vector<1x64x32xbf16> to vector<64x32xbf16>
    %cst_218 = arith.constant dense<0.000000e+00> : vector<16x32xf32>
    %381 = tpu.matmul %378, %380, %cst_218 {dimension_numbers = #tpu.dot_dimension_numbers<[1], [0], [0], [1], [0, 0, 1, 1], [], []>} : vector<16x64xbf16>, vector<64x32xbf16>, vector<16x32xf32> -> vector<16x32xf32>
    %c1_219 = arith.constant 1 : index
    %c0_220 = arith.constant 0 : index
    %c0_221 = arith.constant 0 : index
    %382 = vector.load %arg10[%c1_219, %c0_220, %c0_221] : memref<2x1x32xf32, #tpu.memory_space<vmem>>, vector<1x1x32xf32>
    %383 = vector.shape_cast %382 : vector<1x1x32xf32> to vector<1x32xf32>
    %384 = vector.broadcast %383 : vector<1x32xf32> to vector<16x32xf32>
    %385 = arith.addf %381, %384 : vector<16x32xf32>
    %386 = arith.addf %367, %385 : vector<16x32xf32>
    %c1_222 = arith.constant 1 : index
    %c0_223 = arith.constant 0 : index
    %c0_224 = arith.constant 0 : index
    %387 = vector.load %arg13[%c1_222, %c0_223, %c0_224] : memref<2x1x32xf32, #tpu.memory_space<vmem>>, vector<1x1x32xf32>
    %388 = vector.shape_cast %387 : vector<1x1x32xf32> to vector<1x32xf32>
    %c1_225 = arith.constant 1 : index
    %c0_226 = arith.constant 0 : index
    %c0_227 = arith.constant 0 : index
    %389 = vector.load %arg14[%c1_225, %c0_226, %c0_227] : memref<2x1x32xf32, #tpu.memory_space<vmem>>, vector<1x1x32xf32>
    %390 = vector.shape_cast %389 : vector<1x1x32xf32> to vector<1x32xf32>
    %cst_228 = arith.constant dense<0.000000e+00> : vector<16xf32>
    %391 = vector.multi_reduction <add>, %386, %cst_228 [1] : vector<16x32xf32> to vector<16xf32>
    %392 = vector.shape_cast %391 : vector<16xf32> to vector<16x1xf32>
    %cst_229 = arith.constant 3.200000e+01 : f32
    %393 = vector.broadcast %cst_229 : f32 to vector<16x1xf32>
    %394 = arith.divf %392, %393 : vector<16x1xf32>
    %395 = vector.broadcast %394 : vector<16x1xf32> to vector<16x32xf32>
    %396 = arith.subf %386, %395 : vector<16x32xf32>
    %397 = arith.mulf %396, %396 : vector<16x32xf32>
    %cst_230 = arith.constant dense<0.000000e+00> : vector<16xf32>
    %398 = vector.multi_reduction <add>, %397, %cst_230 [1] : vector<16x32xf32> to vector<16xf32>
    %399 = vector.shape_cast %398 : vector<16xf32> to vector<16x1xf32>
    %cst_231 = arith.constant 3.200000e+01 : f32
    %400 = vector.broadcast %cst_231 : f32 to vector<16x1xf32>
    %401 = arith.divf %399, %400 : vector<16x1xf32>
    %402 = vector.broadcast %394 : vector<16x1xf32> to vector<16x32xf32>
    %403 = arith.subf %386, %402 : vector<16x32xf32>
    %cst_232 = arith.constant 9.99999974E-6 : f32
    %404 = vector.broadcast %cst_232 : f32 to vector<16x1xf32>
    %405 = arith.addf %401, %404 : vector<16x1xf32>
    %406 = math.rsqrt %405 : vector<16x1xf32>
    %407 = vector.broadcast %406 : vector<16x1xf32> to vector<16x32xf32>
    %408 = arith.mulf %403, %407 : vector<16x32xf32>
    %409 = vector.broadcast %388 : vector<1x32xf32> to vector<16x32xf32>
    %410 = arith.mulf %408, %409 : vector<16x32xf32>
    %411 = vector.broadcast %390 : vector<1x32xf32> to vector<16x32xf32>
    %412 = arith.addf %410, %411 : vector<16x32xf32>
    %413 = vector.shape_cast %412 : vector<16x32xf32> to vector<2x8x32xf32>
    %414 = vector.extract_strided_slice %413 {offsets = [0, 0, 0], sizes = [2, 1, 32], strides = [1, 1, 1]} : vector<2x8x32xf32> to vector<2x1x32xf32>
    %415 = vector.shape_cast %414 : vector<2x1x32xf32> to vector<2x32xf32>
    %c0_233 = arith.constant 0 : index
    %c0_234 = arith.constant 0 : index
    %416 = vector.load %arg23[%c0_233, %c0_234] : memref<2x256xf32, #tpu.memory_space<vmem>>, vector<2x32xf32>
    tpu.vector_store %arg23[%c0_233, %c0_234], %415 {strides = array<i32>} : memref<2x256xf32, #tpu.memory_space<vmem>>, vector<2x32xf32>,
    %417 = vector.extract_strided_slice %413 {offsets = [0, 1, 0], sizes = [2, 1, 32], strides = [1, 1, 1]} : vector<2x8x32xf32> to vector<2x1x32xf32>
    %418 = vector.shape_cast %417 : vector<2x1x32xf32> to vector<2x32xf32>
    %c0_235 = arith.constant 0 : index
    %c32 = arith.constant 32 : index
    %419 = vector.load %arg23[%c0_235, %c32] : memref<2x256xf32, #tpu.memory_space<vmem>>, vector<2x32xf32>
    tpu.vector_store %arg23[%c0_235, %c32], %418 {strides = array<i32>} : memref<2x256xf32, #tpu.memory_space<vmem>>, vector<2x32xf32>,
    %420 = vector.extract_strided_slice %413 {offsets = [0, 2, 0], sizes = [2, 1, 32], strides = [1, 1, 1]} : vector<2x8x32xf32> to vector<2x1x32xf32>
    %421 = vector.shape_cast %420 : vector<2x1x32xf32> to vector<2x32xf32>
    %c0_236 = arith.constant 0 : index
    %c64 = arith.constant 64 : index
    %422 = vector.load %arg23[%c0_236, %c64] : memref<2x256xf32, #tpu.memory_space<vmem>>, vector<2x32xf32>
    tpu.vector_store %arg23[%c0_236, %c64], %421 {strides = array<i32>} : memref<2x256xf32, #tpu.memory_space<vmem>>, vector<2x32xf32>,
    %423 = vector.extract_strided_slice %413 {offsets = [0, 3, 0], sizes = [2, 1, 32], strides = [1, 1, 1]} : vector<2x8x32xf32> to vector<2x1x32xf32>
    %424 = vector.shape_cast %423 : vector<2x1x32xf32> to vector<2x32xf32>
    %c0_237 = arith.constant 0 : index
    %c96 = arith.constant 96 : index
    %425 = vector.load %arg23[%c0_237, %c96] : memref<2x256xf32, #tpu.memory_space<vmem>>, vector<2x32xf32>
    tpu.vector_store %arg23[%c0_237, %c96], %424 {strides = array<i32>} : memref<2x256xf32, #tpu.memory_space<vmem>>, vector<2x32xf32>,
    %426 = vector.extract_strided_slice %413 {offsets = [0, 4, 0], sizes = [2, 1, 32], strides = [1, 1, 1]} : vector<2x8x32xf32> to vector<2x1x32xf32>
    %427 = vector.shape_cast %426 : vector<2x1x32xf32> to vector<2x32xf32>
    %c0_238 = arith.constant 0 : index
    %c128 = arith.constant 128 : index
    %428 = vector.load %arg23[%c0_238, %c128] : memref<2x256xf32, #tpu.memory_space<vmem>>, vector<2x32xf32>
    tpu.vector_store %arg23[%c0_238, %c128], %427 {strides = array<i32>} : memref<2x256xf32, #tpu.memory_space<vmem>>, vector<2x32xf32>,
    %429 = vector.extract_strided_slice %413 {offsets = [0, 5, 0], sizes = [2, 1, 32], strides = [1, 1, 1]} : vector<2x8x32xf32> to vector<2x1x32xf32>
    %430 = vector.shape_cast %429 : vector<2x1x32xf32> to vector<2x32xf32>
    %c0_239 = arith.constant 0 : index
    %c160 = arith.constant 160 : index
    %431 = vector.load %arg23[%c0_239, %c160] : memref<2x256xf32, #tpu.memory_space<vmem>>, vector<2x32xf32>
    tpu.vector_store %arg23[%c0_239, %c160], %430 {strides = array<i32>} : memref<2x256xf32, #tpu.memory_space<vmem>>, vector<2x32xf32>,
    %432 = vector.extract_strided_slice %413 {offsets = [0, 6, 0], sizes = [2, 1, 32], strides = [1, 1, 1]} : vector<2x8x32xf32> to vector<2x1x32xf32>
    %433 = vector.shape_cast %432 : vector<2x1x32xf32> to vector<2x32xf32>
    %c0_240 = arith.constant 0 : index
    %c192 = arith.constant 192 : index
    %434 = vector.load %arg23[%c0_240, %c192] : memref<2x256xf32, #tpu.memory_space<vmem>>, vector<2x32xf32>
    tpu.vector_store %arg23[%c0_240, %c192], %433 {strides = array<i32>} : memref<2x256xf32, #tpu.memory_space<vmem>>, vector<2x32xf32>,
    %435 = vector.extract_strided_slice %413 {offsets = [0, 7, 0], sizes = [2, 1, 32], strides = [1, 1, 1]} : vector<2x8x32xf32> to vector<2x1x32xf32>
    %436 = vector.shape_cast %435 : vector<2x1x32xf32> to vector<2x32xf32>
    %c0_241 = arith.constant 0 : index
    %c224 = arith.constant 224 : index
    %437 = vector.load %arg23[%c0_241, %c224] : memref<2x256xf32, #tpu.memory_space<vmem>>, vector<2x32xf32>
    tpu.vector_store %arg23[%c0_241, %c224], %436 {strides = array<i32>} : memref<2x256xf32, #tpu.memory_space<vmem>>, vector<2x32xf32>,
    %c0_242 = arith.constant 0 : index
    %c0_243 = arith.constant 0 : index
    %438 = vector.load %arg23[%c0_242, %c0_243] : memref<2x256xf32, #tpu.memory_space<vmem>>, vector<2x256xf32>
    %439 = arith.truncf %438 : vector<2x256xf32> to vector<2x256xbf16>
    %c0_244 = arith.constant 0 : index
    %c0_245 = arith.constant 0 : index
    %440 = vector.load %arg15[%c0_244, %c0_245] : memref<256x512xbf16, #tpu.memory_space<vmem>>, vector<256x512xbf16>
    %cst_246 = arith.constant dense<0.000000e+00> : vector<2x512xf32>
    %441 = tpu.matmul %439, %440, %cst_246 {dimension_numbers = #tpu.dot_dimension_numbers<[1], [0], [0], [1], [0, 0, 1, 1], [], []>} : vector<2x256xbf16>, vector<256x512xbf16>, vector<2x512xf32> -> vector<2x512xf32>
    %c0_247 = arith.constant 0 : index
    %c0_248 = arith.constant 0 : index
    %442 = vector.load %arg16[%c0_247, %c0_248] : memref<1x512xf32, #tpu.memory_space<vmem>>, vector<1x512xf32>
    %443 = vector.broadcast %442 : vector<1x512xf32> to vector<2x512xf32>
    %444 = arith.addf %441, %443 : vector<2x512xf32>
    %cst_249 = arith.constant 0.000000e+00 : f32
    %445 = vector.broadcast %cst_249 : f32 to vector<2x512xf32>
    %446 = arith.maximumf %444, %445 : vector<2x512xf32>
    %447 = arith.truncf %446 : vector<2x512xf32> to vector<2x512xbf16>
    %c0_250 = arith.constant 0 : index
    %c0_251 = arith.constant 0 : index
    %448 = vector.load %arg17[%c0_250, %c0_251] : memref<512x512xbf16, #tpu.memory_space<vmem>>, vector<512x512xbf16>
    %cst_252 = arith.constant dense<0.000000e+00> : vector<2x512xf32>
    %449 = tpu.matmul %447, %448, %cst_252 {dimension_numbers = #tpu.dot_dimension_numbers<[1], [0], [0], [1], [0, 0, 1, 1], [], []>} : vector<2x512xbf16>, vector<512x512xbf16>, vector<2x512xf32> -> vector<2x512xf32>
    %c0_253 = arith.constant 0 : index
    %c0_254 = arith.constant 0 : index
    %450 = vector.load %arg18[%c0_253, %c0_254] : memref<1x512xf32, #tpu.memory_space<vmem>>, vector<1x512xf32>
    %451 = vector.broadcast %450 : vector<1x512xf32> to vector<2x512xf32>
    %452 = arith.addf %449, %451 : vector<2x512xf32>
    %cst_255 = arith.constant 0.000000e+00 : f32
    %453 = vector.broadcast %cst_255 : f32 to vector<2x512xf32>
    %454 = arith.maximumf %452, %453 : vector<2x512xf32>
    %455 = arith.truncf %454 : vector<2x512xf32> to vector<2x512xbf16>
    %c0_256 = arith.constant 0 : index
    %c0_257 = arith.constant 0 : index
    %456 = vector.load %arg19[%c0_256, %c0_257] : memref<512x15xbf16, #tpu.memory_space<vmem>>, vector<512x15xbf16>
    %cst_258 = arith.constant dense<0.000000e+00> : vector<2x15xf32>
    %457 = tpu.matmul %455, %456, %cst_258 {dimension_numbers = #tpu.dot_dimension_numbers<[1], [0], [0], [1], [0, 0, 1, 1], [], []>} : vector<2x512xbf16>, vector<512x15xbf16>, vector<2x15xf32> -> vector<2x15xf32>
    %c0_259 = arith.constant 0 : index
    %c0_260 = arith.constant 0 : index
    %458 = vector.load %arg20[%c0_259, %c0_260] : memref<1x15xf32, #tpu.memory_space<vmem>>, vector<1x15xf32>
    %459 = vector.broadcast %458 : vector<1x15xf32> to vector<2x15xf32>
    %460 = arith.addf %457, %459 : vector<2x15xf32>
    %c0_261 = arith.constant 0 : index
    %c0_262 = arith.constant 0 : index
    %461 = vector.load %arg21[%c0_261, %c0_262] : memref<2x15xf32, #tpu.memory_space<vmem>>, vector<2x15xf32>
    tpu.vector_store %arg21[%c0_261, %c0_262], %460 {strides = array<i32>} : memref<2x15xf32, #tpu.memory_space<vmem>>, vector<2x15xf32>,
    return
  }
}

</mosaic_0001>

<llo_original>
// kernel: tpu_custom_call.1
$region0: #{tpu_custom_call.1}
  #allocation0 [shape = 'u32[]', space=smem, size = 0x4, offset = 0x4, fixed_abs, tag = 'smem constant byte address 0x4 - core index']
  #allocation1 [shape = 'u32[144,128]{1,0:T(1,128)}', space=vmem, size = 0x12000, scoped, tag = 'internal scratch']
  #allocation2 [shape = 'f32[16,32]{1,0:T(8,128)}', space=vmem, size = 0x2000, scoped, tag = 'scratch operand']
  #allocation3 [shape = 'f32[2,256]{1,0:T(2,128)}', space=vmem, size = 0x800, scoped, tag = 'scratch operand']
  %s0 = inlined_call_operand.hbm [shape: s32[2,8], index: 0, kind: input, shape index: {}]
  %s1 = inlined_call_operand.vmem [shape: f32[50,32], index: 1, kind: input, shape index: {}]
  %s2 = inlined_call_operand.vmem [shape: f32[8,32], index: 2, kind: input, shape index: {}]
  %s3 = inlined_call_operand.hbm [shape: bf16[2,32,96], index: 3, kind: input, shape index: {}]
  %s4 = inlined_call_operand.hbm [shape: f32[2,1,96], index: 4, kind: input, shape index: {}]
  %s5 = inlined_call_operand.hbm [shape: bf16[2,32,32], index: 5, kind: input, shape index: {}]
  %s6 = inlined_call_operand.hbm [shape: f32[2,1,32], index: 6, kind: input, shape index: {}]
  %s7 = inlined_call_operand.hbm [shape: bf16[2,32,64], index: 7, kind: input, shape index: {}]
  %s8 = inlined_call_operand.hbm [shape: f32[2,1,64], index: 8, kind: input, shape index: {}]
  %s9 = inlined_call_operand.vmem [shape: bf16[2,64,32], index: 9, kind: input, shape index: {}]
  %s10 = inlined_call_operand.hbm [shape: f32[2,1,32], index: 10, kind: input, shape index: {}]
  %s11 = inlined_call_operand.hbm [shape: f32[2,1,32], index: 11, kind: input, shape index: {}]
  %s12 = inlined_call_operand.hbm [shape: f32[2,1,32], index: 12, kind: input, shape index: {}]
  %s13 = inlined_call_operand.hbm [shape: f32[2,1,32], index: 13, kind: input, shape index: {}]
  %s14 = inlined_call_operand.hbm [shape: f32[2,1,32], index: 14, kind: input, shape index: {}]
  %s15 = inlined_call_operand.vmem [shape: bf16[256,512], index: 15, kind: input, shape index: {}]
  %s16 = inlined_call_operand.vmem [shape: f32[1,512], index: 16, kind: input, shape index: {}]
  %s17 = inlined_call_operand.hbm [shape: bf16[512,512], index: 17, kind: input, shape index: {}]
  %s18 = inlined_call_operand.vmem [shape: f32[1,512], index: 18, kind: input, shape index: {}]
  %s19 = inlined_call_operand.vmem [shape: bf16[512,15], index: 19, kind: input, shape index: {}]
  %s20 = inlined_call_operand.vmem [shape: f32[1,15], index: 20, kind: input, shape index: {}]
  %s21 = inlined_call_operand.hbm [shape: f32[2,15], index: 21, kind: output, shape index: {}]
  %s22 = sld [smem:[#allocation0]]
  $region146: #{tpu_custom_call.1} parent=0
    _
  %s24 = ssub.s32 1, %s22
  %s25 = scalar_select 0, %s24, %s22
  $region1: #{tpu_custom_call.1} parent=0
    #allocation4 [shape = 'u8[1024]{0}', space=smem, size = 0x400, scoped, tag = 'input window, operand 0, single buffered']
    #allocation5 [shape = 's32[1]{0}', space=sflag, size = 0x4, scoped, tag = 'scoped memory for tpu_custom_call.1']
    #allocation6 [shape = 's32[1]{0}', space=sflag, size = 0x4, scoped, tag = 'scoped memory for tpu_custom_call.1']
    #allocation7 [shape = 's32[1]{0}', space=sflag, size = 0x4, scoped, tag = 'scoped memory for tpu_custom_call.1']
    #allocation8 [shape = 'u8[16384]{0}', space=vmem, size = 0x4000, scoped, tag = 'input window, operand 3, single buffered']
    #allocation9 [shape = 'u8[1024]{0}', space=vmem, size = 0x400, scoped, tag = 'input window, operand 4, single buffered']
    #allocation10 [shape = 's32[1]{0}', space=sflag, size = 0x4, scoped, tag = 'scoped memory for tpu_custom_call.1']
    #allocation11 [shape = 'u8[16384]{0}', space=vmem, size = 0x4000, scoped, tag = 'input window, operand 5, single buffered']
    #allocation12 [shape = 'u8[1024]{0}', space=vmem, size = 0x400, scoped, tag = 'input window, operand 6, single buffered']
    #allocation13 [shape = 's32[1]{0}', space=sflag, size = 0x4, scoped, tag = 'scoped memory for tpu_custom_call.1']
    #allocation14 [shape = 'u8[16384]{0}', space=vmem, size = 0x4000, scoped, tag = 'input window, operand 7, single buffered']
    #allocation15 [shape = 'u8[1024]{0}', space=vmem, size = 0x400, scoped, tag = 'input window, operand 8, single buffered']
    #allocation16 [shape = 's32[1]{0}', space=sflag, size = 0x4, scoped, tag = 'scoped memory for tpu_custom_call.1']
    #allocation17 [shape = 'u8[1024]{0}', space=vmem, size = 0x400, scoped, tag = 'input window, operand 10, single buffered']
    #allocation18 [shape = 'u8[1024]{0}', space=vmem, size = 0x400, scoped, tag = 'input window, operand 11, single buffered']
    #allocation19 [shape = 's32[1]{0}', space=sflag, size = 0x4, scoped, tag = 'scoped memory for tpu_custom_call.1']
    #allocation20 [shape = 'u8[1024]{0}', space=vmem, size = 0x400, scoped, tag = 'input window, operand 12, single buffered']
    #allocation21 [shape = 'u8[1024]{0}', space=vmem, size = 0x400, scoped, tag = 'input window, operand 13, single buffered']
    #allocation22 [shape = 's32[1]{0}', space=sflag, size = 0x4, scoped, tag = 'scoped memory for tpu_custom_call.1']
    #allocation23 [shape = 'u8[1024]{0}', space=vmem, size = 0x400, scoped, tag = 'input window, operand 14, single buffered']
    #allocation24 [shape = 'u8[524288]{0}', space=vmem, size = 0x80000, scoped, tag = 'input window, operand 17, single buffered']
    #allocation25 [shape = 's32[1]{0}', space=sflag, size = 0x4, scoped, tag = 'scoped memory for tpu_custom_call.1']
    #allocation26 [shape = 'u8[1024]{0}', space=vmem, size = 0x400, scoped, tag = 'output window, operand 0, single buffered']
    %26 = vsyncpa [#allocation7], 0
    %27 = vsyncpa [#allocation5], 0
    %28 = vsyncpa [#allocation10], 0
    %29 = vsyncpa [#allocation13], 0
    %30 = vsyncpa [#allocation16], 0
    %31 = vsyncpa [#allocation19], 0
    %32 = vsyncpa [#allocation22], 0
    %33 = vsyncpa [#allocation25], 0
    %34 = vsyncpa [#allocation6], 0
    // Predicated region
    $region2: #{tpu_custom_call.1} parent=1 // pred_check
      _
    $region3: #{tpu_custom_call.1} parent=1 // pred_check_branch
      %36 = sbr.rel (0) target = $region5
    $region4: #{tpu_custom_call.1} parent=1 // pred_region
      %s38 = ssub.s32 32, 32
      %39 = vsyncadd [#allocation7], %s38
      %42 = dma.hbm_to_smem %s0, 32, [#allocation4], [#allocation7]
    $region5: #{tpu_custom_call.1} parent=1 // pred_fallthru
      _
    // Predicated region
    $region6: #{tpu_custom_call.1} parent=1 // pred_check
      _
    $region7: #{tpu_custom_call.1} parent=1 // pred_check_branch
      %44 = sbr.rel (0) target = $region9
    $region8: #{tpu_custom_call.1} parent=1 // pred_region
      _
    $region9: #{tpu_custom_call.1} parent=1 // pred_fallthru
      _
    // Predicated region
    $region10: #{tpu_custom_call.1} parent=1 // pred_check
      _
    $region11: #{tpu_custom_call.1} parent=1 // pred_check_branch
      %46 = sbr.rel (0) target = $region13
    $region12: #{tpu_custom_call.1} parent=1 // pred_region
      _
    $region13: #{tpu_custom_call.1} parent=1 // pred_fallthru
      _
    // Predicated region
    $region14: #{tpu_custom_call.1} parent=1 // pred_check
      _
    $region15: #{tpu_custom_call.1} parent=1 // pred_check_branch
      %48 = sbr.rel (0) target = $region17
    $region16: #{tpu_custom_call.1} parent=1 // pred_region
      %s50 = ssub.s32 512, 512
      %51 = vsyncadd [#allocation5], %s50
      %s52 = sshll.u32 [#allocation8], 4
      %s53 = int_to_ptr.vmem [resolvable:$true] %s52
      %58 = dma.hbm_to_vmem [thread:$0]  %s3, 512, %s53, [#allocation5], 64, 64, 4
    $region17: #{tpu_custom_call.1} parent=1 // pred_fallthru
      _
    // Predicated region
    $region18: #{tpu_custom_call.1} parent=1 // pred_check
      _
    $region19: #{tpu_custom_call.1} parent=1 // pred_check_branch
      %60 = sbr.rel (0) target = $region21
    $region20: #{tpu_custom_call.1} parent=1 // pred_region
      %s62 = ssub.s32 32, 32
      %63 = vsyncadd [#allocation10], %s62
      %s64 = sshll.u32 [#allocation9], 4
      %s65 = int_to_ptr.vmem [resolvable:$true] %s64
      %70 = dma.hbm_to_vmem [thread:$0]  %s4, 32, %s65, [#allocation10], 16, 16, 1
    $region21: #{tpu_custom_call.1} parent=1 // pred_fallthru
      _
    // Predicated region
    $region22: #{tpu_custom_call.1} parent=1 // pred_check
      _
    $region23: #{tpu_custom_call.1} parent=1 // pred_check_branch
      %72 = sbr.rel (0) target = $region25
    $region24: #{tpu_custom_call.1} parent=1 // pred_region
      %s74 = ssub.s32 512, 512
      %75 = vsyncadd [#allocation10], %s74
      %s76 = sshll.u32 [#allocation11], 4
      %s77 = int_to_ptr.vmem [resolvable:$true] %s76
      %82 = dma.hbm_to_vmem [thread:$0]  %s5, 512, %s77, [#allocation10], 64, 64, 4
    $region25: #{tpu_custom_call.1} parent=1 // pred_fallthru
      _
    // Predicated region
    $region26: #{tpu_custom_call.1} parent=1 // pred_check
      _
    $region27: #{tpu_custom_call.1} parent=1 // pred_check_branch
      %84 = sbr.rel (0) target = $region29
    $region28: #{tpu_custom_call.1} parent=1 // pred_region
      %s86 = ssub.s32 32, 32
      %87 = vsyncadd [#allocation13], %s86
      %s88 = sshll.u32 [#allocation12], 4
      %s89 = int_to_ptr.vmem [resolvable:$true] %s88
      %94 = dma.hbm_to_vmem [thread:$0]  %s6, 32, %s89, [#allocation13], 16, 16, 1
    $region29: #{tpu_custom_call.1} parent=1 // pred_fallthru
      _
    // Predicated region
    $region30: #{tpu_custom_call.1} parent=1 // pred_check
      _
    $region31: #{tpu_custom_call.1} parent=1 // pred_check_branch
      %96 = sbr.rel (0) target = $region33
    $region32: #{tpu_custom_call.1} parent=1 // pred_region
      %s98 = ssub.s32 512, 512
      %99 = vsyncadd [#allocation13], %s98
      %s100 = sshll.u32 [#allocation14], 4
      %s101 = int_to_ptr.vmem [resolvable:$true] %s100
      %106 = dma.hbm_to_vmem [thread:$0]  %s7, 512, %s101, [#allocation13], 64, 64, 4
    $region33: #{tpu_custom_call.1} parent=1 // pred_fallthru
      _
    // Predicated region
    $region34: #{tpu_custom_call.1} parent=1 // pred_check
      _
    $region35: #{tpu_custom_call.1} parent=1 // pred_check_branch
      %108 = sbr.rel (0) target = $region37
    $region36: #{tpu_custom_call.1} parent=1 // pred_region
      %s110 = ssub.s32 32, 32
      %111 = vsyncadd [#allocation16], %s110
      %s112 = sshll.u32 [#allocation15], 4
      %s113 = int_to_ptr.vmem [resolvable:$true] %s112
      %118 = dma.hbm_to_vmem [thread:$0]  %s8, 32, %s113, [#allocation16], 16, 16, 1
    $region37: #{tpu_custom_call.1} parent=1 // pred_fallthru
      _
    // Predicated region
    $region38: #{tpu_custom_call.1} parent=1 // pred_check
      _
    $region39: #{tpu_custom_call.1} parent=1 // pred_check_branch
      %120 = sbr.rel (0) target = $region41
    $region40: #{tpu_custom_call.1} parent=1 // pred_region
      _
    $region41: #{tpu_custom_call.1} parent=1 // pred_fallthru
      _
    // Predicated region
    $region42: #{tpu_custom_call.1} parent=1 // pred_check
      _
    $region43: #{tpu_custom_call.1} parent=1 // pred_check_branch
      %122 = sbr.rel (0) target = $region45
    $region44: #{tpu_custom_call.1} parent=1 // pred_region
      %s124 = ssub.s32 32, 32
      %125 = vsyncadd [#allocation16], %s124
      %s126 = sshll.u32 [#allocation17], 4
      %s127 = int_to_ptr.vmem [resolvable:$true] %s126
      %132 = dma.hbm_to_vmem [thread:$0]  %s10, 32, %s127, [#allocation16], 16, 16, 1
    $region45: #{tpu_custom_call.1} parent=1 // pred_fallthru
      _
    // Predicated region
    $region46: #{tpu_custom_call.1} parent=1 // pred_check
      _
    $region47: #{tpu_custom_call.1} parent=1 // pred_check_branch
      %134 = sbr.rel (0) target = $region49
    $region48: #{tpu_custom_call.1} parent=1 // pred_region
      %s136 = ssub.s32 32, 32
      %137 = vsyncadd [#allocation19], %s136
      %s138 = sshll.u32 [#allocation18], 4
      %s139 = int_to_ptr.vmem [resolvable:$true] %s138
      %144 = dma.hbm_to_vmem [thread:$0]  %s11, 32, %s139, [#allocation19], 16, 16, 1
    $region49: #{tpu_custom_call.1} parent=1 // pred_fallthru
      _
    // Predicated region
    $region50: #{tpu_custom_call.1} parent=1 // pred_check
      _
    $region51: #{tpu_custom_call.1} parent=1 // pred_check_branch
      %146 = sbr.rel (0) target = $region53
    $region52: #{tpu_custom_call.1} parent=1 // pred_region
      %s148 = ssub.s32 32, 32
      %149 = vsyncadd [#allocation19], %s148
      %s150 = sshll.u32 [#allocation20], 4
      %s151 = int_to_ptr.vmem [resolvable:$true] %s150
      %156 = dma.hbm_to_vmem [thread:$0]  %s12, 32, %s151, [#allocation19], 16, 16, 1
    $region53: #{tpu_custom_call.1} parent=1 // pred_fallthru
      _
    // Predicated region
    $region54: #{tpu_custom_call.1} parent=1 // pred_check
      _
    $region55: #{tpu_custom_call.1} parent=1 // pred_check_branch
      %158 = sbr.rel (0) target = $region57
    $region56: #{tpu_custom_call.1} parent=1 // pred_region
      %s160 = ssub.s32 32, 32
      %161 = vsyncadd [#allocation22], %s160
      %s162 = sshll.u32 [#allocation21], 4
      %s163 = int_to_ptr.vmem [resolvable:$true] %s162
      %168 = dma.hbm_to_vmem [thread:$0]  %s13, 32, %s163, [#allocation22], 16, 16, 1
    $region57: #{tpu_custom_call.1} parent=1 // pred_fallthru
      _
    // Predicated region
    $region58: #{tpu_custom_call.1} parent=1 // pred_check
      _
    $region59: #{tpu_custom_call.1} parent=1 // pred_check_branch
      %170 = sbr.rel (0) target = $region61
    $region60: #{tpu_custom_call.1} parent=1 // pred_region
      %s172 = ssub.s32 32, 32
      %173 = vsyncadd [#allocation22], %s172
      %s174 = sshll.u32 [#allocation23], 4
      %s175 = int_to_ptr.vmem [resolvable:$true] %s174
      %180 = dma.hbm_to_vmem [thread:$0]  %s14, 32, %s175, [#allocation22], 16, 16, 1
    $region61: #{tpu_custom_call.1} parent=1 // pred_fallthru
      _
    // Predicated region
    $region62: #{tpu_custom_call.1} parent=1 // pred_check
      _
    $region63: #{tpu_custom_call.1} parent=1 // pred_check_branch
      %182 = sbr.rel (0) target = $region65
    $region64: #{tpu_custom_call.1} parent=1 // pred_region
      _
    $region65: #{tpu_custom_call.1} parent=1 // pred_fallthru
      _
    // Predicated region
    $region66: #{tpu_custom_call.1} parent=1 // pred_check
      _
    $region67: #{tpu_custom_call.1} parent=1 // pred_check_branch
      %184 = sbr.rel (0) target = $region69
    $region68: #{tpu_custom_call.1} parent=1 // pred_region
      _
    $region69: #{tpu_custom_call.1} parent=1 // pred_fallthru
      _
    // Predicated region
    $region70: #{tpu_custom_call.1} parent=1 // pred_check
      _
    $region71: #{tpu_custom_call.1} parent=1 // pred_check_branch
      %186 = sbr.rel (0) target = $region73
    $region72: #{tpu_custom_call.1} parent=1 // pred_region
      %s188 = ssub.s32 16384, 16384
      %189 = vsyncadd [#allocation25], %s188
      %s190 = sshll.u32 [#allocation24], 4
      %s191 = int_to_ptr.vmem [resolvable:$true] %s190
      %196 = dma.hbm_to_vmem [thread:$0]  %s17, 16384, %s191, [#allocation25], 256, 256, 16
    $region73: #{tpu_custom_call.1} parent=1 // pred_fallthru
      _
    // Predicated region
    $region74: #{tpu_custom_call.1} parent=1 // pred_check
      _
    $region75: #{tpu_custom_call.1} parent=1 // pred_check_branch
      %198 = sbr.rel (0) target = $region77
    $region76: #{tpu_custom_call.1} parent=1 // pred_region
      _
    $region77: #{tpu_custom_call.1} parent=1 // pred_fallthru
      _
    // Predicated region
    $region78: #{tpu_custom_call.1} parent=1 // pred_check
      _
    $region79: #{tpu_custom_call.1} parent=1 // pred_check_branch
      %200 = sbr.rel (0) target = $region81
    $region80: #{tpu_custom_call.1} parent=1 // pred_region
      _
    $region81: #{tpu_custom_call.1} parent=1 // pred_fallthru
      _
    // Predicated region
    $region82: #{tpu_custom_call.1} parent=1 // pred_check
      _
    $region83: #{tpu_custom_call.1} parent=1 // pred_check_branch
      %202 = sbr.rel (0) target = $region85
    $region84: #{tpu_custom_call.1} parent=1 // pred_region
      _
    $region85: #{tpu_custom_call.1} parent=1 // pred_fallthru
      _
    // Predicated region
    $region86: #{tpu_custom_call.1} parent=1 // pred_check
      _
    $region87: #{tpu_custom_call.1} parent=1 // pred_check_branch
      %204 = sbr.rel (0) target = $region89
    $region88: #{tpu_custom_call.1} parent=1 // pred_region
      %205 = dma.done [#allocation7], 32
    $region89: #{tpu_custom_call.1} parent=1 // pred_fallthru
      _
    // Predicated region
    $region90: #{tpu_custom_call.1} parent=1 // pred_check
      _
    $region91: #{tpu_custom_call.1} parent=1 // pred_check_branch
      %207 = sbr.rel (0) target = $region93
    $region92: #{tpu_custom_call.1} parent=1 // pred_region
      %208 = dma.done [#allocation5], 512
    $region93: #{tpu_custom_call.1} parent=1 // pred_fallthru
      _
    // Predicated region
    $region94: #{tpu_custom_call.1} parent=1 // pred_check
      _
    $region95: #{tpu_custom_call.1} parent=1 // pred_check_branch
      %210 = sbr.rel (0) target = $region97
    $region96: #{tpu_custom_call.1} parent=1 // pred_region
      %211 = dma.done [#allocation10], 32
    $region97: #{tpu_custom_call.1} parent=1 // pred_fallthru
      _
    // Predicated region
    $region98: #{tpu_custom_call.1} parent=1 // pred_check
      _
    $region99: #{tpu_custom_call.1} parent=1 // pred_check_branch
      %213 = sbr.rel (0) target = $region101
    $region100: #{tpu_custom_call.1} parent=1 // pred_region
      %214 = dma.done [#allocation10], 512
    $region101: #{tpu_custom_call.1} parent=1 // pred_fallthru
      _
    // Predicated region
    $region102: #{tpu_custom_call.1} parent=1 // pred_check
      _
    $region103: #{tpu_custom_call.1} parent=1 // pred_check_branch
      %216 = sbr.rel (0) target = $region105
    $region104: #{tpu_custom_call.1} parent=1 // pred_region
      %217 = dma.done [#allocation13], 32
    $region105: #{tpu_custom_call.1} parent=1 // pred_fallthru
      _
    // Predicated region
    $region106: #{tpu_custom_call.1} parent=1 // pred_check
      _
    $region107: #{tpu_custom_call.1} parent=1 // pred_check_branch
      %219 = sbr.rel (0) target = $region109
    $region108: #{tpu_custom_call.1} parent=1 // pred_region
      %220 = dma.done [#allocation13], 512
    $region109: #{tpu_custom_call.1} parent=1 // pred_fallthru
      _
    // Predicated region
    $region110: #{tpu_custom_call.1} parent=1 // pred_check
      _
    $region111: #{tpu_custom_call.1} parent=1 // pred_check_branch
      %222 = sbr.rel (0) target = $region113
    $region112: #{tpu_custom_call.1} parent=1 // pred_region
      %223 = dma.done [#allocation16], 32
    $region113: #{tpu_custom_call.1} parent=1 // pred_fallthru
      _
    // Predicated region
    $region114: #{tpu_custom_call.1} parent=1 // pred_check
      _
    $region115: #{tpu_custom_call.1} parent=1 // pred_check_branch
      %225 = sbr.rel (0) target = $region117
    $region116: #{tpu_custom_call.1} parent=1 // pred_region
      %226 = dma.done [#allocation16], 32
    $region117: #{tpu_custom_call.1} parent=1 // pred_fallthru
      _
    // Predicated region
    $region118: #{tpu_custom_call.1} parent=1 // pred_check
      _
    $region119: #{tpu_custom_call.1} parent=1 // pred_check_branch
      %228 = sbr.rel (0) target = $region121
    $region120: #{tpu_custom_call.1} parent=1 // pred_region
      %229 = dma.done [#allocation19], 32
    $region121: #{tpu_custom_call.1} parent=1 // pred_fallthru
      _
    // Predicated region
    $region122: #{tpu_custom_call.1} parent=1 // pred_check
      _
    $region123: #{tpu_custom_call.1} parent=1 // pred_check_branch
      %231 = sbr.rel (0) target = $region125
    $region124: #{tpu_custom_call.1} parent=1 // pred_region
      %232 = dma.done [#allocation19], 32
    $region125: #{tpu_custom_call.1} parent=1 // pred_fallthru
      _
    // Predicated region
    $region126: #{tpu_custom_call.1} parent=1 // pred_check
      _
    $region127: #{tpu_custom_call.1} parent=1 // pred_check_branch
      %234 = sbr.rel (0) target = $region129
    $region128: #{tpu_custom_call.1} parent=1 // pred_region
      %235 = dma.done [#allocation22], 32
    $region129: #{tpu_custom_call.1} parent=1 // pred_fallthru
      _
    // Predicated region
    $region130: #{tpu_custom_call.1} parent=1 // pred_check
      _
    $region131: #{tpu_custom_call.1} parent=1 // pred_check_branch
      %237 = sbr.rel (0) target = $region133
    $region132: #{tpu_custom_call.1} parent=1 // pred_region
      %238 = dma.done [#allocation22], 32
    $region133: #{tpu_custom_call.1} parent=1 // pred_fallthru
      _
    // Predicated region
    $region134: #{tpu_custom_call.1} parent=1 // pred_check
      _
    $region135: #{tpu_custom_call.1} parent=1 // pred_check_branch
      %240 = sbr.rel (0) target = $region137
    $region136: #{tpu_custom_call.1} parent=1 // pred_region
      %241 = dma.done [#allocation25], 16384
    $region137: #{tpu_custom_call.1} parent=1 // pred_fallthru
      _
    %242 = sfence
    %s244 = sld [smem:[#allocation4]]
    %s245 = scalar_lea.vmem %s1, %s244
    %v246 = vld [vmem:[%s245] sm:$0x1]
    %v247 = vld [vmem:[%s2] sm:$0x1]
    %v248 = vadd.f32 %v246, %v247
    %vm249 = vcmask 253952
    %250 = vst.msk [vmem:[#allocation2] sm:$0x1] %vm249, %v248
    %s251 = sld [smem:[#allocation4 + $0x1]]
    %s252 = scalar_lea.vmem %s1, %s251
    %v253 = vld [vmem:[%s252] sm:$0x1]
    %v254 = vld [vmem:[%s2 + $0x1] sm:$0x1]
    %v255 = vadd.f32 %v253, %v254
    %256 = vst.msk [vmem:[#allocation2 + $0x1] sm:$0x1] %vm249, %v255
    %s257 = sld [smem:[#allocation4 + $0x2]]
    %s258 = scalar_lea.vmem %s1, %s257
    %v259 = vld [vmem:[%s258] sm:$0x1]
    %v260 = vld [vmem:[%s2 + $0x2] sm:$0x1]
    %v261 = vadd.f32 %v259, %v260
    %262 = vst.msk [vmem:[#allocation2 + $0x2] sm:$0x1] %vm249, %v261
    %s263 = sld [smem:[#allocation4 + $0x3]]
    %s264 = scalar_lea.vmem %s1, %s263
    %v265 = vld [vmem:[%s264] sm:$0x1]
    %v266 = vld [vmem:[%s2 + $0x3] sm:$0x1]
    %v267 = vadd.f32 %v265, %v266
    %268 = vst.msk [vmem:[#allocation2 + $0x3] sm:$0x1] %vm249, %v267
    %s269 = sld [smem:[#allocation4 + $0x4]]
    %s270 = scalar_lea.vmem %s1, %s269
    %v271 = vld [vmem:[%s270] sm:$0x1]
    %v272 = vld [vmem:[%s2 + $0x4] sm:$0x1]
    %v273 = vadd.f32 %v271, %v272
    %274 = vst.msk [vmem:[#allocation2 + $0x4] sm:$0x1] %vm249, %v273
    %s275 = sld [smem:[#allocation4 + $0x5]]
    %s276 = scalar_lea.vmem %s1, %s275
    %v277 = vld [vmem:[%s276] sm:$0x1]
    %v278 = vld [vmem:[%s2 + $0x5] sm:$0x1]
    %v279 = vadd.f32 %v277, %v278
    %280 = vst.msk [vmem:[#allocation2 + $0x5] sm:$0x1] %vm249, %v279
    %s281 = sld [smem:[#allocation4 + $0x6]]
    %s282 = scalar_lea.vmem %s1, %s281
    %v283 = vld [vmem:[%s282] sm:$0x1]
    %v284 = vld [vmem:[%s2 + $0x6] sm:$0x1]
    %v285 = vadd.f32 %v283, %v284
    %286 = vst.msk [vmem:[#allocation2 + $0x6] sm:$0x1] %vm249, %v285
    %s287 = sld [smem:[#allocation4 + $0x7]]
    %s288 = scalar_lea.vmem %s1, %s287
    %v289 = vld [vmem:[%s288] sm:$0x1]
    %v290 = vld [vmem:[%s2 + $0x7] sm:$0x1]
    %v291 = vadd.f32 %v289, %v290
    %292 = vst.msk [vmem:[#allocation2 + $0x7] sm:$0x1] %vm249, %v291
    %s293 = sld [smem:[#allocation4 + $0x80]]
    %s294 = scalar_lea.vmem %s1, %s293
    %v295 = vld [vmem:[%s294] sm:$0x1]
    %v296 = vld [vmem:[%s2] sm:$0x1]
    %v297 = vadd.f32 %v295, %v296
    %298 = vst.msk [vmem:[#allocation2 + $0x8] sm:$0x1] %vm249, %v297
    %s299 = sld [smem:[#allocation4 + $0x81]]
    %s300 = scalar_lea.vmem %s1, %s299
    %v301 = vld [vmem:[%s300] sm:$0x1]
    %v302 = vld [vmem:[%s2 + $0x1] sm:$0x1]
    %v303 = vadd.f32 %v301, %v302
    %304 = vst.msk [vmem:[#allocation2 + $0x9] sm:$0x1] %vm249, %v303
    %s305 = sld [smem:[#allocation4 + $0x82]]
    %s306 = scalar_lea.vmem %s1, %s305
    %v307 = vld [vmem:[%s306] sm:$0x1]
    %v308 = vld [vmem:[%s2 + $0x2] sm:$0x1]
    %v309 = vadd.f32 %v307, %v308
    %310 = vst.msk [vmem:[#allocation2 + $0xa] sm:$0x1] %vm249, %v309
    %s311 = sld [smem:[#allocation4 + $0x83]]
    %s312 = scalar_lea.vmem %s1, %s311
    %v313 = vld [vmem:[%s312] sm:$0x1]
    %v314 = vld [vmem:[%s2 + $0x3] sm:$0x1]
    %v315 = vadd.f32 %v313, %v314
    %316 = vst.msk [vmem:[#allocation2 + $0xb] sm:$0x1] %vm249, %v315
    %s317 = sld [smem:[#allocation4 + $0x84]]
    %s318 = scalar_lea.vmem %s1, %s317
    %v319 = vld [vmem:[%s318] sm:$0x1]
    %v320 = vld [vmem:[%s2 + $0x4] sm:$0x1]
    %v321 = vadd.f32 %v319, %v320
    %322 = vst.msk [vmem:[#allocation2 + $0xc] sm:$0x1] %vm249, %v321
    %s323 = sld [smem:[#allocation4 + $0x85]]
    %s324 = scalar_lea.vmem %s1, %s323
    %v325 = vld [vmem:[%s324] sm:$0x1]
    %v326 = vld [vmem:[%s2 + $0x5] sm:$0x1]
    %v327 = vadd.f32 %v325, %v326
    %328 = vst.msk [vmem:[#allocation2 + $0xd] sm:$0x1] %vm249, %v327
    %s329 = sld [smem:[#allocation4 + $0x86]]
    %s330 = scalar_lea.vmem %s1, %s329
    %v331 = vld [vmem:[%s330] sm:$0x1]
    %v332 = vld [vmem:[%s2 + $0x6] sm:$0x1]
    %v333 = vadd.f32 %v331, %v332
    %334 = vst.msk [vmem:[#allocation2 + $0xe] sm:$0x1] %vm249, %v333
    %s335 = sld [smem:[#allocation4 + $0x87]]
    %s336 = scalar_lea.vmem %s1, %s335
    %v337 = vld [vmem:[%s336] sm:$0x1]
    %v338 = vld [vmem:[%s2 + $0x7] sm:$0x1]
    %v339 = vadd.f32 %v337, %v338
    %340 = vst.msk [vmem:[#allocation2 + $0xf] sm:$0x1] %vm249, %v339
    %v341 = vld [vmem:[#allocation2] sm:$0xff]
    %v342 = vld [vmem:[#allocation2 + $0x8] sm:$0xff]
    %v343 = vpack.c.bf16 %v342, %v341
    %v344 = vld [vmem:[#allocation8] sm:$0xf]
    %v345 = vld [vmem:[#allocation8 + $0x4] sm:$0xf]
    %v346 = vld [vmem:[#allocation8 + $0x8] sm:$0xf]
    %v347 = vld [vmem:[#allocation8 + $0xc] sm:$0xf]
    %v348 = vld [vmem:[#allocation9] sm:$0x1]
    %v350 = vlaneseq
    %v351 = vshrl.u32 %v350, 7
    %v352 = vsub.s32 0, %v351
    %v353 = vrot.slane %v348, %v352
    %v359 = vunpack.c.l.b16 %v344
    %v360 = vunpack.c.l.b16 %v345
    %v361 = vunpack.c.l.b16 %v346
    %v362 = vunpack.c.l.b16 %v347
    %v363 = vpack.c.b16 %v360, %v359
    %v364 = vpack.c.b16 %v362, %v361
    %vm367 = vcmask 261120
    %v369 = vsel %vm367, %v343, 0
    %371 = vmatprep.subr.bf16.mxu0 0
    %372 = vmatpush1.bf16.msra.mxu0 %v363
    %373 = vmatprep.subr.bf16.mxu0 0
    %374 = vmatpush1.bf16.msra.mxu0 %v364
    %375 = vmatprep.subr.bf16.mxu0 0
    %376 = vmatpush1.bf16.msra.mxu0 0
    %377 = vmatprep.subr.bf16.mxu0 0
    %378 = vmatpush1.bf16.msra.mxu0 0
    %379 = vmatprep.subr.bf16.mxu0 0
    %380 = vmatpush1.bf16.msra.mxu0 0
    %381 = vmatprep.subr.bf16.mxu0 0
    %382 = vmatpush1.bf16.msra.mxu0 0
    %383 = vmatprep.subr.bf16.mxu0 0
    %384 = vmatpush1.bf16.msra.mxu0 0
    %385 = vmatprep.subr.bf16.mxu0 0
    %386 = vmatpush1.bf16.msra.mxu0 0
    %387 = vmatprep.subr.bf16.mxu0 0
    %388 = vmatpush1.bf16.msra.mxu0 0
    %389 = vmatprep.subr.bf16.mxu0 0
    %390 = vmatpush1.bf16.msra.mxu0 0
    %391 = vmatprep.subr.bf16.mxu0 0
    %392 = vmatpush1.bf16.msra.mxu0 0
    %393 = vmatprep.subr.bf16.mxu0 0
    %394 = vmatpush1.bf16.msra.mxu0 0
    %395 = vmatprep.subr.bf16.mxu0 0
    %396 = vmatpush1.bf16.msra.mxu0 0
    %397 = vmatprep.subr.bf16.mxu0 0
    %398 = vmatpush1.bf16.msra.mxu0 0
    %399 = vmatprep.subr.bf16.mxu0 0
    %400 = vmatpush1.bf16.msra.mxu0 0
    %401 = vmatprep.subr.bf16.mxu0 0
    %402 = vmatpush1.bf16.msra.mxu0 0
    %403 = vmatprep.mubr.bf16.mxu0 0
    %404 = vmatmul.mubr.bf16.gmra.mrb[0].mxu0 %v369
    %v405 = vpop.f32.mrb[0].mxu0
    %v406 = vadd.f32 %v353, %v405
    %v407 = vpop.f32.mrb[0].mxu0
    %v408 = vpop.f32.mrb[0].mxu0
    %v409 = vadd.f32 %v353, %v408
    %v410 = vpop.f32.mrb[0].mxu0
    %411 = vdwg.mxu0
    %v412 = vmul.f32 %v406, 0.35355338
    %v413 = vmul.f32 %v409, 0.35355338
    %415 = vrot.lane.b32.xlu0 %v406, 96
    %v416 = vpop.permute.xlu0 %415
    %vm417 = vcmask 64512
    %v419 = vsel %vm417, %v412, 0
    %v421 = vsel %vm417, %v416, 0
    %423 = vmatprep.subr.mxu0 0.0
    %424 = vmatpush1.xpose.msra.mxu0 %v421
    %425 = vmatprep.subr.mxu0 0.0
    %426 = vmatpush1.xpose.msra.mxu0 0.0
    %427 = vmatprep.subr.mxu0 0.0
    %428 = vmatpush1.xpose.msra.mxu0 0.0
    %429 = vmatprep.subr.mxu0 0.0
    %430 = vmatpush1.xpose.msra.mxu0 0.0
    %431 = vmatprep.subr.mxu0 0.0
    %432 = vmatpush1.xpose.msra.mxu0 0.0
    %433 = vmatprep.subr.mxu0 0.0
    %434 = vmatpush1.xpose.msra.mxu0 0.0
    %435 = vmatprep.subr.mxu0 0.0
    %436 = vmatpush1.xpose.msra.mxu0 0.0
    %437 = vmatprep.subr.mxu0 0.0
    %438 = vmatpush1.xpose.msra.mxu0 0.0
    %439 = vmatprep.subr.mxu0 0.0
    %440 = vmatpush1.xpose.msra.mxu0 0.0
    %441 = vmatprep.subr.mxu0 0.0
    %442 = vmatpush1.xpose.msra.mxu0 0.0
    %443 = vmatprep.subr.mxu0 0.0
    %444 = vmatpush1.xpose.msra.mxu0 0.0
    %445 = vmatprep.subr.mxu0 0.0
    %446 = vmatpush1.xpose.msra.mxu0 0.0
    %447 = vmatprep.subr.mxu0 0.0
    %448 = vmatpush1.xpose.msra.mxu0 0.0
    %449 = vmatprep.subr.mxu0 0.0
    %450 = vmatpush1.xpose.msra.mxu0 0.0
    %451 = vmatprep.subr.mxu0 0.0
    %452 = vmatpush1.xpose.msra.mxu0 0.0
    %453 = vmatprep.subr.mxu0 0.0
    %454 = vmatpush1.xpose.msra.mxu0 0.0
    %455 = vmatprep.subr.mxu0 0.0
    %456 = vmatpush1.xpose.msra.mxu0 0.0
    %457 = vmatprep.subr.mxu0 0.0
    %458 = vmatpush1.xpose.msra.mxu0 0.0
    %459 = vmatprep.subr.mxu0 0.0
    %460 = vmatpush1.xpose.msra.mxu0 0.0
    %461 = vmatprep.subr.mxu0 0.0
    %462 = vmatpush1.xpose.msra.mxu0 0.0
    %463 = vmatprep.subr.mxu0 0.0
    %464 = vmatpush1.xpose.msra.mxu0 0.0
    %465 = vmatprep.subr.mxu0 0.0
    %466 = vmatpush1.xpose.msra.mxu0 0.0
    %467 = vmatprep.subr.mxu0 0.0
    %468 = vmatpush1.xpose.msra.mxu0 0.0
    %469 = vmatprep.subr.mxu0 0.0
    %470 = vmatpush1.xpose.msra.mxu0 0.0
    %471 = vmatprep.subr.mxu0 0.0
    %472 = vmatpush1.xpose.msra.mxu0 0.0
    %473 = vmatprep.subr.mxu0 0.0
    %474 = vmatpush1.xpose.msra.mxu0 0.0
    %475 = vmatprep.subr.mxu0 0.0
    %476 = vmatpush1.xpose.msra.mxu0 0.0
    %477 = vmatprep.subr.mxu0 0.0
    %478 = vmatpush1.xpose.msra.mxu0 0.0
    %479 = vmatprep.subr.mxu0 0.0
    %480 = vmatpush1.xpose.msra.mxu0 0.0
    %481 = vmatprep.subr.mxu0 0.0
    %482 = vmatpush1.xpose.msra.mxu0 0.0
    %483 = vmatprep.subr.mxu0 0.0
    %484 = vmatpush1.xpose.msra.mxu0 0.0
    %485 = vmatprep.subr.mxu0 0.0
    %486 = vmatpush1.xpose.msra.mxu0 0.0
    %487 = vmatprep.mubr.f32.mxu0 0.0
    %488 = vmatmul.mubr.f32.gmra.mrb[0].mxu0 %v419
    %v489 = vpop.f32.mrb[0].mxu0
    %v490 = vadd.f32 0.0, %v489
    %v491 = vpop.f32.mrb[0].mxu0
    %492 = vdwg.mxu0
    %494 = vrot.lane.b32.xlu0 %v409, 96
    %v495 = vpop.permute.xlu0 %494
    %v497 = vsel %vm417, %v413, 0
    %v499 = vsel %vm417, %v495, 0
    %501 = vmatprep.subr.mxu0 0.0
    %502 = vmatpush1.xpose.msra.mxu0 %v499
    %503 = vmatprep.subr.mxu0 0.0
    %504 = vmatpush1.xpose.msra.mxu0 0.0
    %505 = vmatprep.subr.mxu0 0.0
    %506 = vmatpush1.xpose.msra.mxu0 0.0
    %507 = vmatprep.subr.mxu0 0.0
    %508 = vmatpush1.xpose.msra.mxu0 0.0
    %509 = vmatprep.subr.mxu0 0.0
    %510 = vmatpush1.xpose.msra.mxu0 0.0
    %511 = vmatprep.subr.mxu0 0.0
    %512 = vmatpush1.xpose.msra.mxu0 0.0
    %513 = vmatprep.subr.mxu0 0.0
    %514 = vmatpush1.xpose.msra.mxu0 0.0
    %515 = vmatprep.subr.mxu0 0.0
    %516 = vmatpush1.xpose.msra.mxu0 0.0
    %517 = vmatprep.subr.mxu0 0.0
    %518 = vmatpush1.xpose.msra.mxu0 0.0
    %519 = vmatprep.subr.mxu0 0.0
    %520 = vmatpush1.xpose.msra.mxu0 0.0
    %521 = vmatprep.subr.mxu0 0.0
    %522 = vmatpush1.xpose.msra.mxu0 0.0
    %523 = vmatprep.subr.mxu0 0.0
    %524 = vmatpush1.xpose.msra.mxu0 0.0
    %525 = vmatprep.subr.mxu0 0.0
    %526 = vmatpush1.xpose.msra.mxu0 0.0
    %527 = vmatprep.subr.mxu0 0.0
    %528 = vmatpush1.xpose.msra.mxu0 0.0
    %529 = vmatprep.subr.mxu0 0.0
    %530 = vmatpush1.xpose.msra.mxu0 0.0
    %531 = vmatprep.subr.mxu0 0.0
    %532 = vmatpush1.xpose.msra.mxu0 0.0
    %533 = vmatprep.subr.mxu0 0.0
    %534 = vmatpush1.xpose.msra.mxu0 0.0
    %535 = vmatprep.subr.mxu0 0.0
    %536 = vmatpush1.xpose.msra.mxu0 0.0
    %537 = vmatprep.subr.mxu0 0.0
    %538 = vmatpush1.xpose.msra.mxu0 0.0
    %539 = vmatprep.subr.mxu0 0.0
    %540 = vmatpush1.xpose.msra.mxu0 0.0
    %541 = vmatprep.subr.mxu0 0.0
    %542 = vmatpush1.xpose.msra.mxu0 0.0
    %543 = vmatprep.subr.mxu0 0.0
    %544 = vmatpush1.xpose.msra.mxu0 0.0
    %545 = vmatprep.subr.mxu0 0.0
    %546 = vmatpush1.xpose.msra.mxu0 0.0
    %547 = vmatprep.subr.mxu0 0.0
    %548 = vmatpush1.xpose.msra.mxu0 0.0
    %549 = vmatprep.subr.mxu0 0.0
    %550 = vmatpush1.xpose.msra.mxu0 0.0
    %551 = vmatprep.subr.mxu0 0.0
    %552 = vmatpush1.xpose.msra.mxu0 0.0
    %553 = vmatprep.subr.mxu0 0.0
    %554 = vmatpush1.xpose.msra.mxu0 0.0
    %555 = vmatprep.subr.mxu0 0.0
    %556 = vmatpush1.xpose.msra.mxu0 0.0
    %557 = vmatprep.subr.mxu0 0.0
    %558 = vmatpush1.xpose.msra.mxu0 0.0
    %559 = vmatprep.subr.mxu0 0.0
    %560 = vmatpush1.xpose.msra.mxu0 0.0
    %561 = vmatprep.subr.mxu0 0.0
    %562 = vmatpush1.xpose.msra.mxu0 0.0
    %563 = vmatprep.subr.mxu0 0.0
    %564 = vmatpush1.xpose.msra.mxu0 0.0
    %565 = vmatprep.mubr.f32.mxu0 0.0
    %566 = vmatmul.mubr.f32.gmra.mrb[0].mxu0 %v497
    %v567 = vpop.f32.mrb[0].mxu0
    %v568 = vadd.f32 0.0, %v567
    %v569 = vpop.f32.mrb[0].mxu0
    %570 = vdwg.mxu0
    %v571 = vsel %vm417, %v490, -inf
    %572 = vmax.xlane.f32.xlu0 %v571
    %v573 = vpop.xlane.xlu0 %572
    %v574 = vsel %vm417, %v568, -inf
    %575 = vmax.xlane.f32.xlu0 %v574
    %v576 = vpop.xlane.xlu0 %575
    %v577 = vsub.f32 %v490, %v573
    %v578 = vsub.f32 %v568, %v576
    %v579 = vmul.f32 %v577, 1.442695
    %v580 = vpow.pop %v579
    %v581 = vmul.f32 %v578, 1.442695
    %v582 = vpow.pop %v581
    %v583 = vsel %vm417, %v580, 0.0
    %584 = vadd.xlane.f32.xlu0 %v583
    %v585 = vpop.xlane.xlu0 %584
    %v586 = vsel %vm417, %v582, 0.0
    %587 = vadd.xlane.f32.xlu0 %v586
    %v588 = vpop.xlane.xlu0 %587
    %v589 = vrcp.pop %v585
    %v590 = vrcp.pop %v588
    %v591 = vmul.f32 %v580, %v589
    %v592 = vmul.f32 %v582, %v590
    %593 = vrot.lane.b32.xlu0 %v406, 64
    %v594 = vpop.permute.xlu0 %593
    %v597 = vsel %vm417, %v591, 0
    %599 = vmatprep.subr.mxu0 0.0
    %600 = vmatpush1.msra.mxu0 %v594
    %601 = vmatprep.subr.mxu0 0.0
    %602 = vmatpush1.msra.mxu0 0.0
    %603 = vmatprep.subr.mxu0 0.0
    %604 = vmatpush1.msra.mxu0 0.0
    %605 = vmatprep.subr.mxu0 0.0
    %606 = vmatpush1.msra.mxu0 0.0
    %607 = vmatprep.subr.mxu0 0.0
    %608 = vmatpush1.msra.mxu0 0.0
    %609 = vmatprep.subr.mxu0 0.0
    %610 = vmatpush1.msra.mxu0 0.0
    %611 = vmatprep.subr.mxu0 0.0
    %612 = vmatpush1.msra.mxu0 0.0
    %613 = vmatprep.subr.mxu0 0.0
    %614 = vmatpush1.msra.mxu0 0.0
    %615 = vmatprep.subr.mxu0 0.0
    %616 = vmatpush1.msra.mxu0 0.0
    %617 = vmatprep.subr.mxu0 0.0
    %618 = vmatpush1.msra.mxu0 0.0
    %619 = vmatprep.subr.mxu0 0.0
    %620 = vmatpush1.msra.mxu0 0.0
    %621 = vmatprep.subr.mxu0 0.0
    %622 = vmatpush1.msra.mxu0 0.0
    %623 = vmatprep.subr.mxu0 0.0
    %624 = vmatpush1.msra.mxu0 0.0
    %625 = vmatprep.subr.mxu0 0.0
    %626 = vmatpush1.msra.mxu0 0.0
    %627 = vmatprep.subr.mxu0 0.0
    %628 = vmatpush1.msra.mxu0 0.0
    %629 = vmatprep.subr.mxu0 0.0
    %630 = vmatpush1.msra.mxu0 0.0
    %631 = vmatprep.subr.mxu0 0.0
    %632 = vmatpush1.msra.mxu0 0.0
    %633 = vmatprep.subr.mxu0 0.0
    %634 = vmatpush1.msra.mxu0 0.0
    %635 = vmatprep.subr.mxu0 0.0
    %636 = vmatpush1.msra.mxu0 0.0
    %637 = vmatprep.subr.mxu0 0.0
    %638 = vmatpush1.msra.mxu0 0.0
    %639 = vmatprep.subr.mxu0 0.0
    %640 = vmatpush1.msra.mxu0 0.0
    %641 = vmatprep.subr.mxu0 0.0
    %642 = vmatpush1.msra.mxu0 0.0
    %643 = vmatprep.subr.mxu0 0.0
    %644 = vmatpush1.msra.mxu0 0.0
    %645 = vmatprep.subr.mxu0 0.0
    %646 = vmatpush1.msra.mxu0 0.0
    %647 = vmatprep.subr.mxu0 0.0
    %648 = vmatpush1.msra.mxu0 0.0
    %649 = vmatprep.subr.mxu0 0.0
    %650 = vmatpush1.msra.mxu0 0.0
    %651 = vmatprep.subr.mxu0 0.0
    %652 = vmatpush1.msra.mxu0 0.0
    %653 = vmatprep.subr.mxu0 0.0
    %654 = vmatpush1.msra.mxu0 0.0
    %655 = vmatprep.subr.mxu0 0.0
    %656 = vmatpush1.msra.mxu0 0.0
    %657 = vmatprep.subr.mxu0 0.0
    %658 = vmatpush1.msra.mxu0 0.0
    %659 = vmatprep.subr.mxu0 0.0
    %660 = vmatpush1.msra.mxu0 0.0
    %661 = vmatprep.subr.mxu0 0.0
    %662 = vmatpush1.msra.mxu0 0.0
    %663 = vmatprep.mubr.f32.mxu0 0.0
    %664 = vmatmul.mubr.f32.gmra.mrb[0].mxu0 %v597
    %v665 = vpop.f32.mrb[0].mxu0
    %v666 = vadd.f32 0.0, %v665
    %v667 = vpop.f32.mrb[0].mxu0
    %668 = vdwg.mxu0
    %669 = vrot.lane.b32.xlu0 %v409, 64
    %v670 = vpop.permute.xlu0 %669
    %v673 = vsel %vm417, %v592, 0
    %675 = vmatprep.subr.mxu0 0.0
    %676 = vmatpush1.msra.mxu0 %v670
    %677 = vmatprep.subr.mxu0 0.0
    %678 = vmatpush1.msra.mxu0 0.0
    %679 = vmatprep.subr.mxu0 0.0
    %680 = vmatpush1.msra.mxu0 0.0
    %681 = vmatprep.subr.mxu0 0.0
    %682 = vmatpush1.msra.mxu0 0.0
    %683 = vmatprep.subr.mxu0 0.0
    %684 = vmatpush1.msra.mxu0 0.0
    %685 = vmatprep.subr.mxu0 0.0
    %686 = vmatpush1.msra.mxu0 0.0
    %687 = vmatprep.subr.mxu0 0.0
    %688 = vmatpush1.msra.mxu0 0.0
    %689 = vmatprep.subr.mxu0 0.0
    %690 = vmatpush1.msra.mxu0 0.0
    %691 = vmatprep.subr.mxu0 0.0
    %692 = vmatpush1.msra.mxu0 0.0
    %693 = vmatprep.subr.mxu0 0.0
    %694 = vmatpush1.msra.mxu0 0.0
    %695 = vmatprep.subr.mxu0 0.0
    %696 = vmatpush1.msra.mxu0 0.0
    %697 = vmatprep.subr.mxu0 0.0
    %698 = vmatpush1.msra.mxu0 0.0
    %699 = vmatprep.subr.mxu0 0.0
    %700 = vmatpush1.msra.mxu0 0.0
    %701 = vmatprep.subr.mxu0 0.0
    %702 = vmatpush1.msra.mxu0 0.0
    %703 = vmatprep.subr.mxu0 0.0
    %704 = vmatpush1.msra.mxu0 0.0
    %705 = vmatprep.subr.mxu0 0.0
    %706 = vmatpush1.msra.mxu0 0.0
    %707 = vmatprep.subr.mxu0 0.0
    %708 = vmatpush1.msra.mxu0 0.0
    %709 = vmatprep.subr.mxu0 0.0
    %710 = vmatpush1.msra.mxu0 0.0
    %711 = vmatprep.subr.mxu0 0.0
    %712 = vmatpush1.msra.mxu0 0.0
    %713 = vmatprep.subr.mxu0 0.0
    %714 = vmatpush1.msra.mxu0 0.0
    %715 = vmatprep.subr.mxu0 0.0
    %716 = vmatpush1.msra.mxu0 0.0
    %717 = vmatprep.subr.mxu0 0.0
    %718 = vmatpush1.msra.mxu0 0.0
    %719 = vmatprep.subr.mxu0 0.0
    %720 = vmatpush1.msra.mxu0 0.0
    %721 = vmatprep.subr.mxu0 0.0
    %722 = vmatpush1.msra.mxu0 0.0
    %723 = vmatprep.subr.mxu0 0.0
    %724 = vmatpush1.msra.mxu0 0.0
    %725 = vmatprep.subr.mxu0 0.0
    %726 = vmatpush1.msra.mxu0 0.0
    %727 = vmatprep.subr.mxu0 0.0
    %728 = vmatpush1.msra.mxu0 0.0
    %729 = vmatprep.subr.mxu0 0.0
    %730 = vmatpush1.msra.mxu0 0.0
    %731 = vmatprep.subr.mxu0 0.0
    %732 = vmatpush1.msra.mxu0 0.0
    %733 = vmatprep.subr.mxu0 0.0
    %734 = vmatpush1.msra.mxu0 0.0
    %735 = vmatprep.subr.mxu0 0.0
    %736 = vmatpush1.msra.mxu0 0.0
    %737 = vmatprep.subr.mxu0 0.0
    %738 = vmatpush1.msra.mxu0 0.0
    %739 = vmatprep.mubr.f32.mxu0 0.0
    %740 = vmatmul.mubr.f32.gmra.mrb[0].mxu0 %v673
    %v741 = vpop.f32.mrb[0].mxu0
    %v742 = vadd.f32 0.0, %v741
    %v743 = vpop.f32.mrb[0].mxu0
    %744 = vdwg.mxu0
    %745 = vrot.lane.b32.xlu0 %v412, 120
    %v746 = vpop.permute.xlu0 %745
    %747 = vrot.lane.b32.xlu0 %v406, 88
    %v748 = vpop.permute.xlu0 %747
    %v749 = vsel %vm417, %v746, 0
    %v751 = vsel %vm417, %v748, 0
    %753 = vmatprep.subr.mxu0 0.0
    %754 = vmatpush1.xpose.msra.mxu0 %v751
    %755 = vmatprep.subr.mxu0 0.0
    %756 = vmatpush1.xpose.msra.mxu0 0.0
    %757 = vmatprep.subr.mxu0 0.0
    %758 = vmatpush1.xpose.msra.mxu0 0.0
    %759 = vmatprep.subr.mxu0 0.0
    %760 = vmatpush1.xpose.msra.mxu0 0.0
    %761 = vmatprep.subr.mxu0 0.0
    %762 = vmatpush1.xpose.msra.mxu0 0.0
    %763 = vmatprep.subr.mxu0 0.0
    %764 = vmatpush1.xpose.msra.mxu0 0.0
    %765 = vmatprep.subr.mxu0 0.0
    %766 = vmatpush1.xpose.msra.mxu0 0.0
    %767 = vmatprep.subr.mxu0 0.0
    %768 = vmatpush1.xpose.msra.mxu0 0.0
    %769 = vmatprep.subr.mxu0 0.0
    %770 = vmatpush1.xpose.msra.mxu0 0.0
    %771 = vmatprep.subr.mxu0 0.0
    %772 = vmatpush1.xpose.msra.mxu0 0.0
    %773 = vmatprep.subr.mxu0 0.0
    %774 = vmatpush1.xpose.msra.mxu0 0.0
    %775 = vmatprep.subr.mxu0 0.0
    %776 = vmatpush1.xpose.msra.mxu0 0.0
    %777 = vmatprep.subr.mxu0 0.0
    %778 = vmatpush1.xpose.msra.mxu0 0.0
    %779 = vmatprep.subr.mxu0 0.0
    %780 = vmatpush1.xpose.msra.mxu0 0.0
    %781 = vmatprep.subr.mxu0 0.0
    %782 = vmatpush1.xpose.msra.mxu0 0.0
    %783 = vmatprep.subr.mxu0 0.0
    %784 = vmatpush1.xpose.msra.mxu0 0.0
    %785 = vmatprep.subr.mxu0 0.0
    %786 = vmatpush1.xpose.msra.mxu0 0.0
    %787 = vmatprep.subr.mxu0 0.0
    %788 = vmatpush1.xpose.msra.mxu0 0.0
    %789 = vmatprep.subr.mxu0 0.0
    %790 = vmatpush1.xpose.msra.mxu0 0.0
    %791 = vmatprep.subr.mxu0 0.0
    %792 = vmatpush1.xpose.msra.mxu0 0.0
    %793 = vmatprep.subr.mxu0 0.0
    %794 = vmatpush1.xpose.msra.mxu0 0.0
    %795 = vmatprep.subr.mxu0 0.0
    %796 = vmatpush1.xpose.msra.mxu0 0.0
    %797 = vmatprep.subr.mxu0 0.0
    %798 = vmatpush1.xpose.msra.mxu0 0.0
    %799 = vmatprep.subr.mxu0 0.0
    %800 = vmatpush1.xpose.msra.mxu0 0.0
    %801 = vmatprep.subr.mxu0 0.0
    %802 = vmatpush1.xpose.msra.mxu0 0.0
    %803 = vmatprep.subr.mxu0 0.0
    %804 = vmatpush1.xpose.msra.mxu0 0.0
    %805 = vmatprep.subr.mxu0 0.0
    %806 = vmatpush1.xpose.msra.mxu0 0.0
    %807 = vmatprep.subr.mxu0 0.0
    %808 = vmatpush1.xpose.msra.mxu0 0.0
    %809 = vmatprep.subr.mxu0 0.0
    %810 = vmatpush1.xpose.msra.mxu0 0.0
    %811 = vmatprep.subr.mxu0 0.0
    %812 = vmatpush1.xpose.msra.mxu0 0.0
    %813 = vmatprep.subr.mxu0 0.0
    %814 = vmatpush1.xpose.msra.mxu0 0.0
    %815 = vmatprep.subr.mxu0 0.0
    %816 = vmatpush1.xpose.msra.mxu0 0.0
    %817 = vmatprep.mubr.f32.mxu0 0.0
    %818 = vmatmul.mubr.f32.gmra.mrb[0].mxu0 %v749
    %v819 = vpop.f32.mrb[0].mxu0
    %v820 = vadd.f32 0.0, %v819
    %v821 = vpop.f32.mrb[0].mxu0
    %822 = vdwg.mxu0
    %823 = vrot.lane.b32.xlu0 %v413, 120
    %v824 = vpop.permute.xlu0 %823
    %825 = vrot.lane.b32.xlu0 %v409, 88
    %v826 = vpop.permute.xlu0 %825
    %v827 = vsel %vm417, %v824, 0
    %v829 = vsel %vm417, %v826, 0
    %831 = vmatprep.subr.mxu0 0.0
    %832 = vmatpush1.xpose.msra.mxu0 %v829
    %833 = vmatprep.subr.mxu0 0.0
    %834 = vmatpush1.xpose.msra.mxu0 0.0
    %835 = vmatprep.subr.mxu0 0.0
    %836 = vmatpush1.xpose.msra.mxu0 0.0
    %837 = vmatprep.subr.mxu0 0.0
    %838 = vmatpush1.xpose.msra.mxu0 0.0
    %839 = vmatprep.subr.mxu0 0.0
    %840 = vmatpush1.xpose.msra.mxu0 0.0
    %841 = vmatprep.subr.mxu0 0.0
    %842 = vmatpush1.xpose.msra.mxu0 0.0
    %843 = vmatprep.subr.mxu0 0.0
    %844 = vmatpush1.xpose.msra.mxu0 0.0
    %845 = vmatprep.subr.mxu0 0.0
    %846 = vmatpush1.xpose.msra.mxu0 0.0
    %847 = vmatprep.subr.mxu0 0.0
    %848 = vmatpush1.xpose.msra.mxu0 0.0
    %849 = vmatprep.subr.mxu0 0.0
    %850 = vmatpush1.xpose.msra.mxu0 0.0
    %851 = vmatprep.subr.mxu0 0.0
    %852 = vmatpush1.xpose.msra.mxu0 0.0
    %853 = vmatprep.subr.mxu0 0.0
    %854 = vmatpush1.xpose.msra.mxu0 0.0
    %855 = vmatprep.subr.mxu0 0.0
    %856 = vmatpush1.xpose.msra.mxu0 0.0
    %857 = vmatprep.subr.mxu0 0.0
    %858 = vmatpush1.xpose.msra.mxu0 0.0
    %859 = vmatprep.subr.mxu0 0.0
    %860 = vmatpush1.xpose.msra.mxu0 0.0
    %861 = vmatprep.subr.mxu0 0.0
    %862 = vmatpush1.xpose.msra.mxu0 0.0
    %863 = vmatprep.subr.mxu0 0.0
    %864 = vmatpush1.xpose.msra.mxu0 0.0
    %865 = vmatprep.subr.mxu0 0.0
    %866 = vmatpush1.xpose.msra.mxu0 0.0
    %867 = vmatprep.subr.mxu0 0.0
    %868 = vmatpush1.xpose.msra.mxu0 0.0
    %869 = vmatprep.subr.mxu0 0.0
    %870 = vmatpush1.xpose.msra.mxu0 0.0
    %871 = vmatprep.subr.mxu0 0.0
    %872 = vmatpush1.xpose.msra.mxu0 0.0
    %873 = vmatprep.subr.mxu0 0.0
    %874 = vmatpush1.xpose.msra.mxu0 0.0
    %875 = vmatprep.subr.mxu0 0.0
    %876 = vmatpush1.xpose.msra.mxu0 0.0
    %877 = vmatprep.subr.mxu0 0.0
    %878 = vmatpush1.xpose.msra.mxu0 0.0
    %879 = vmatprep.subr.mxu0 0.0
    %880 = vmatpush1.xpose.msra.mxu0 0.0
    %881 = vmatprep.subr.mxu0 0.0
    %882 = vmatpush1.xpose.msra.mxu0 0.0
    %883 = vmatprep.subr.mxu0 0.0
    %884 = vmatpush1.xpose.msra.mxu0 0.0
    %885 = vmatprep.subr.mxu0 0.0
    %886 = vmatpush1.xpose.msra.mxu0 0.0
    %887 = vmatprep.subr.mxu0 0.0
    %888 = vmatpush1.xpose.msra.mxu0 0.0
    %889 = vmatprep.subr.mxu0 0.0
    %890 = vmatpush1.xpose.msra.mxu0 0.0
    %891 = vmatprep.subr.mxu0 0.0
    %892 = vmatpush1.xpose.msra.mxu0 0.0
    %893 = vmatprep.subr.mxu0 0.0
    %894 = vmatpush1.xpose.msra.mxu0 0.0
    %895 = vmatprep.mubr.f32.mxu0 0.0
    %896 = vmatmul.mubr.f32.gmra.mrb[0].mxu0 %v827
    %v897 = vpop.f32.mrb[0].mxu0
    %v898 = vadd.f32 0.0, %v897
    %v899 = vpop.f32.mrb[0].mxu0
    %900 = vdwg.mxu0
    %v901 = vsel %vm417, %v820, -inf
    %902 = vmax.xlane.f32.xlu0 %v901
    %v903 = vpop.xlane.xlu0 %902
    %v904 = vsel %vm417, %v898, -inf
    %905 = vmax.xlane.f32.xlu0 %v904
    %v906 = vpop.xlane.xlu0 %905
    %v907 = vsub.f32 %v820, %v903
    %v908 = vsub.f32 %v898, %v906
    %v909 = vmul.f32 %v907, 1.442695
    %v910 = vpow.pop %v909
    %v911 = vmul.f32 %v908, 1.442695
    %v912 = vpow.pop %v911
    %v913 = vsel %vm417, %v910, 0.0
    %914 = vadd.xlane.f32.xlu0 %v913
    %v915 = vpop.xlane.xlu0 %914
    %v916 = vsel %vm417, %v912, 0.0
    %917 = vadd.xlane.f32.xlu0 %v916
    %v918 = vpop.xlane.xlu0 %917
    %v919 = vrcp.pop %v915
    %v920 = vrcp.pop %v918
    %v921 = vmul.f32 %v910, %v919
    %v922 = vmul.f32 %v912, %v920
    %923 = vrot.lane.b32.xlu0 %v406, 56
    %v924 = vpop.permute.xlu0 %923
    %v927 = vsel %vm417, %v921, 0
    %929 = vmatprep.subr.mxu0 0.0
    %930 = vmatpush1.msra.mxu0 %v924
    %931 = vmatprep.subr.mxu0 0.0
    %932 = vmatpush1.msra.mxu0 0.0
    %933 = vmatprep.subr.mxu0 0.0
    %934 = vmatpush1.msra.mxu0 0.0
    %935 = vmatprep.subr.mxu0 0.0
    %936 = vmatpush1.msra.mxu0 0.0
    %937 = vmatprep.subr.mxu0 0.0
    %938 = vmatpush1.msra.mxu0 0.0
    %939 = vmatprep.subr.mxu0 0.0
    %940 = vmatpush1.msra.mxu0 0.0
    %941 = vmatprep.subr.mxu0 0.0
    %942 = vmatpush1.msra.mxu0 0.0
    %943 = vmatprep.subr.mxu0 0.0
    %944 = vmatpush1.msra.mxu0 0.0
    %945 = vmatprep.subr.mxu0 0.0
    %946 = vmatpush1.msra.mxu0 0.0
    %947 = vmatprep.subr.mxu0 0.0
    %948 = vmatpush1.msra.mxu0 0.0
    %949 = vmatprep.subr.mxu0 0.0
    %950 = vmatpush1.msra.mxu0 0.0
    %951 = vmatprep.subr.mxu0 0.0
    %952 = vmatpush1.msra.mxu0 0.0
    %953 = vmatprep.subr.mxu0 0.0
    %954 = vmatpush1.msra.mxu0 0.0
    %955 = vmatprep.subr.mxu0 0.0
    %956 = vmatpush1.msra.mxu0 0.0
    %957 = vmatprep.subr.mxu0 0.0
    %958 = vmatpush1.msra.mxu0 0.0
    %959 = vmatprep.subr.mxu0 0.0
    %960 = vmatpush1.msra.mxu0 0.0
    %961 = vmatprep.subr.mxu0 0.0
    %962 = vmatpush1.msra.mxu0 0.0
    %963 = vmatprep.subr.mxu0 0.0
    %964 = vmatpush1.msra.mxu0 0.0
    %965 = vmatprep.subr.mxu0 0.0
    %966 = vmatpush1.msra.mxu0 0.0
    %967 = vmatprep.subr.mxu0 0.0
    %968 = vmatpush1.msra.mxu0 0.0
    %969 = vmatprep.subr.mxu0 0.0
    %970 = vmatpush1.msra.mxu0 0.0
    %971 = vmatprep.subr.mxu0 0.0
    %972 = vmatpush1.msra.mxu0 0.0
    %973 = vmatprep.subr.mxu0 0.0
    %974 = vmatpush1.msra.mxu0 0.0
    %975 = vmatprep.subr.mxu0 0.0
    %976 = vmatpush1.msra.mxu0 0.0
    %977 = vmatprep.subr.mxu0 0.0
    %978 = vmatpush1.msra.mxu0 0.0
    %979 = vmatprep.subr.mxu0 0.0
    %980 = vmatpush1.msra.mxu0 0.0
    %981 = vmatprep.subr.mxu0 0.0
    %982 = vmatpush1.msra.mxu0 0.0
    %983 = vmatprep.subr.mxu0 0.0
    %984 = vmatpush1.msra.mxu0 0.0
    %985 = vmatprep.subr.mxu0 0.0
    %986 = vmatpush1.msra.mxu0 0.0
    %987 = vmatprep.subr.mxu0 0.0
    %988 = vmatpush1.msra.mxu0 0.0
    %989 = vmatprep.subr.mxu0 0.0
    %990 = vmatpush1.msra.mxu0 0.0
    %991 = vmatprep.subr.mxu0 0.0
    %992 = vmatpush1.msra.mxu0 0.0
    %993 = vmatprep.mubr.f32.mxu0 0.0
    %994 = vmatmul.mubr.f32.gmra.mrb[0].mxu0 %v927
    %v995 = vpop.f32.mrb[0].mxu0
    %v996 = vadd.f32 0.0, %v995
    %v997 = vpop.f32.mrb[0].mxu0
    %998 = vdwg.mxu0
    %999 = vrot.lane.b32.xlu0 %v409, 56
    %v1000 = vpop.permute.xlu0 %999
    %v1003 = vsel %vm417, %v922, 0
    %1005 = vmatprep.subr.mxu0 0.0
    %1006 = vmatpush1.msra.mxu0 %v1000
    %1007 = vmatprep.subr.mxu0 0.0
    %1008 = vmatpush1.msra.mxu0 0.0
    %1009 = vmatprep.subr.mxu0 0.0
    %1010 = vmatpush1.msra.mxu0 0.0
    %1011 = vmatprep.subr.mxu0 0.0
    %1012 = vmatpush1.msra.mxu0 0.0
    %1013 = vmatprep.subr.mxu0 0.0
    %1014 = vmatpush1.msra.mxu0 0.0
    %1015 = vmatprep.subr.mxu0 0.0
    %1016 = vmatpush1.msra.mxu0 0.0
    %1017 = vmatprep.subr.mxu0 0.0
    %1018 = vmatpush1.msra.mxu0 0.0
    %1019 = vmatprep.subr.mxu0 0.0
    %1020 = vmatpush1.msra.mxu0 0.0
    %1021 = vmatprep.subr.mxu0 0.0
    %1022 = vmatpush1.msra.mxu0 0.0
    %1023 = vmatprep.subr.mxu0 0.0
    %1024 = vmatpush1.msra.mxu0 0.0
    %1025 = vmatprep.subr.mxu0 0.0
    %1026 = vmatpush1.msra.mxu0 0.0
    %1027 = vmatprep.subr.mxu0 0.0
    %1028 = vmatpush1.msra.mxu0 0.0
    %1029 = vmatprep.subr.mxu0 0.0
    %1030 = vmatpush1.msra.mxu0 0.0
    %1031 = vmatprep.subr.mxu0 0.0
    %1032 = vmatpush1.msra.mxu0 0.0
    %1033 = vmatprep.subr.mxu0 0.0
    %1034 = vmatpush1.msra.mxu0 0.0
    %1035 = vmatprep.subr.mxu0 0.0
    %1036 = vmatpush1.msra.mxu0 0.0
    %1037 = vmatprep.subr.mxu0 0.0
    %1038 = vmatpush1.msra.mxu0 0.0
    %1039 = vmatprep.subr.mxu0 0.0
    %1040 = vmatpush1.msra.mxu0 0.0
    %1041 = vmatprep.subr.mxu0 0.0
    %1042 = vmatpush1.msra.mxu0 0.0
    %1043 = vmatprep.subr.mxu0 0.0
    %1044 = vmatpush1.msra.mxu0 0.0
    %1045 = vmatprep.subr.mxu0 0.0
    %1046 = vmatpush1.msra.mxu0 0.0
    %1047 = vmatprep.subr.mxu0 0.0
    %1048 = vmatpush1.msra.mxu0 0.0
    %1049 = vmatprep.subr.mxu0 0.0
    %1050 = vmatpush1.msra.mxu0 0.0
    %1051 = vmatprep.subr.mxu0 0.0
    %1052 = vmatpush1.msra.mxu0 0.0
    %1053 = vmatprep.subr.mxu0 0.0
    %1054 = vmatpush1.msra.mxu0 0.0
    %1055 = vmatprep.subr.mxu0 0.0
    %1056 = vmatpush1.msra.mxu0 0.0
    %1057 = vmatprep.subr.mxu0 0.0
    %1058 = vmatpush1.msra.mxu0 0.0
    %1059 = vmatprep.subr.mxu0 0.0
    %1060 = vmatpush1.msra.mxu0 0.0
    %1061 = vmatprep.subr.mxu0 0.0
    %1062 = vmatpush1.msra.mxu0 0.0
    %1063 = vmatprep.subr.mxu0 0.0
    %1064 = vmatpush1.msra.mxu0 0.0
    %1065 = vmatprep.subr.mxu0 0.0
    %1066 = vmatpush1.msra.mxu0 0.0
    %1067 = vmatprep.subr.mxu0 0.0
    %1068 = vmatpush1.msra.mxu0 0.0
    %1069 = vmatprep.mubr.f32.mxu0 0.0
    %1070 = vmatmul.mubr.f32.gmra.mrb[0].mxu0 %v1003
    %v1071 = vpop.f32.mrb[0].mxu0
    %v1072 = vadd.f32 0.0, %v1071
    %v1073 = vpop.f32.mrb[0].mxu0
    %1074 = vdwg.mxu0
    %1075 = vrot.lane.b32.xlu0 %v412, 112
    %v1076 = vpop.permute.xlu0 %1075
    %1077 = vrot.lane.b32.xlu0 %v406, 80
    %v1078 = vpop.permute.xlu0 %1077
    %v1079 = vsel %vm417, %v1076, 0
    %v1081 = vsel %vm417, %v1078, 0
    %1083 = vmatprep.subr.mxu0 0.0
    %1084 = vmatpush1.xpose.msra.mxu0 %v1081
    %1085 = vmatprep.subr.mxu0 0.0
    %1086 = vmatpush1.xpose.msra.mxu0 0.0
    %1087 = vmatprep.subr.mxu0 0.0
    %1088 = vmatpush1.xpose.msra.mxu0 0.0
    %1089 = vmatprep.subr.mxu0 0.0
    %1090 = vmatpush1.xpose.msra.mxu0 0.0
    %1091 = vmatprep.subr.mxu0 0.0
    %1092 = vmatpush1.xpose.msra.mxu0 0.0
    %1093 = vmatprep.subr.mxu0 0.0
    %1094 = vmatpush1.xpose.msra.mxu0 0.0
    %1095 = vmatprep.subr.mxu0 0.0
    %1096 = vmatpush1.xpose.msra.mxu0 0.0
    %1097 = vmatprep.subr.mxu0 0.0
    %1098 = vmatpush1.xpose.msra.mxu0 0.0
    %1099 = vmatprep.subr.mxu0 0.0
    %1100 = vmatpush1.xpose.msra.mxu0 0.0
    %1101 = vmatprep.subr.mxu0 0.0
    %1102 = vmatpush1.xpose.msra.mxu0 0.0
    %1103 = vmatprep.subr.mxu0 0.0
    %1104 = vmatpush1.xpose.msra.mxu0 0.0
    %1105 = vmatprep.subr.mxu0 0.0
    %1106 = vmatpush1.xpose.msra.mxu0 0.0
    %1107 = vmatprep.subr.mxu0 0.0
    %1108 = vmatpush1.xpose.msra.mxu0 0.0
    %1109 = vmatprep.subr.mxu0 0.0
    %1110 = vmatpush1.xpose.msra.mxu0 0.0
    %1111 = vmatprep.subr.mxu0 0.0
    %1112 = vmatpush1.xpose.msra.mxu0 0.0
    %1113 = vmatprep.subr.mxu0 0.0
    %1114 = vmatpush1.xpose.msra.mxu0 0.0
    %1115 = vmatprep.subr.mxu0 0.0
    %1116 = vmatpush1.xpose.msra.mxu0 0.0
    %1117 = vmatprep.subr.mxu0 0.0
    %1118 = vmatpush1.xpose.msra.mxu0 0.0
    %1119 = vmatprep.subr.mxu0 0.0
    %1120 = vmatpush1.xpose.msra.mxu0 0.0
    %1121 = vmatprep.subr.mxu0 0.0
    %1122 = vmatpush1.xpose.msra.mxu0 0.0
    %1123 = vmatprep.subr.mxu0 0.0
    %1124 = vmatpush1.xpose.msra.mxu0 0.0
    %1125 = vmatprep.subr.mxu0 0.0
    %1126 = vmatpush1.xpose.msra.mxu0 0.0
    %1127 = vmatprep.subr.mxu0 0.0
    %1128 = vmatpush1.xpose.msra.mxu0 0.0
    %1129 = vmatprep.subr.mxu0 0.0
    %1130 = vmatpush1.xpose.msra.mxu0 0.0
    %1131 = vmatprep.subr.mxu0 0.0
    %1132 = vmatpush1.xpose.msra.mxu0 0.0
    %1133 = vmatprep.subr.mxu0 0.0
    %1134 = vmatpush1.xpose.msra.mxu0 0.0
    %1135 = vmatprep.subr.mxu0 0.0
    %1136 = vmatpush1.xpose.msra.mxu0 0.0
    %1137 = vmatprep.subr.mxu0 0.0
    %1138 = vmatpush1.xpose.msra.mxu0 0.0
    %1139 = vmatprep.subr.mxu0 0.0
    %1140 = vmatpush1.xpose.msra.mxu0 0.0
    %1141 = vmatprep.subr.mxu0 0.0
    %1142 = vmatpush1.xpose.msra.mxu0 0.0
    %1143 = vmatprep.subr.mxu0 0.0
    %1144 = vmatpush1.xpose.msra.mxu0 0.0
    %1145 = vmatprep.subr.mxu0 0.0
    %1146 = vmatpush1.xpose.msra.mxu0 0.0
    %1147 = vmatprep.mubr.f32.mxu0 0.0
    %1148 = vmatmul.mubr.f32.gmra.mrb[0].mxu0 %v1079
    %v1149 = vpop.f32.mrb[0].mxu0
    %v1150 = vadd.f32 0.0, %v1149
    %v1151 = vpop.f32.mrb[0].mxu0
    %1152 = vdwg.mxu0
    %1153 = vrot.lane.b32.xlu0 %v413, 112
    %v1154 = vpop.permute.xlu0 %1153
    %1155 = vrot.lane.b32.xlu0 %v409, 80
    %v1156 = vpop.permute.xlu0 %1155
    %v1157 = vsel %vm417, %v1154, 0
    %v1159 = vsel %vm417, %v1156, 0
    %1161 = vmatprep.subr.mxu0 0.0
    %1162 = vmatpush1.xpose.msra.mxu0 %v1159
    %1163 = vmatprep.subr.mxu0 0.0
    %1164 = vmatpush1.xpose.msra.mxu0 0.0
    %1165 = vmatprep.subr.mxu0 0.0
    %1166 = vmatpush1.xpose.msra.mxu0 0.0
    %1167 = vmatprep.subr.mxu0 0.0
    %1168 = vmatpush1.xpose.msra.mxu0 0.0
    %1169 = vmatprep.subr.mxu0 0.0
    %1170 = vmatpush1.xpose.msra.mxu0 0.0
    %1171 = vmatprep.subr.mxu0 0.0
    %1172 = vmatpush1.xpose.msra.mxu0 0.0
    %1173 = vmatprep.subr.mxu0 0.0
    %1174 = vmatpush1.xpose.msra.mxu0 0.0
    %1175 = vmatprep.subr.mxu0 0.0
    %1176 = vmatpush1.xpose.msra.mxu0 0.0
    %1177 = vmatprep.subr.mxu0 0.0
    %1178 = vmatpush1.xpose.msra.mxu0 0.0
    %1179 = vmatprep.subr.mxu0 0.0
    %1180 = vmatpush1.xpose.msra.mxu0 0.0
    %1181 = vmatprep.subr.mxu0 0.0
    %1182 = vmatpush1.xpose.msra.mxu0 0.0
    %1183 = vmatprep.subr.mxu0 0.0
    %1184 = vmatpush1.xpose.msra.mxu0 0.0
    %1185 = vmatprep.subr.mxu0 0.0
    %1186 = vmatpush1.xpose.msra.mxu0 0.0
    %1187 = vmatprep.subr.mxu0 0.0
    %1188 = vmatpush1.xpose.msra.mxu0 0.0
    %1189 = vmatprep.subr.mxu0 0.0
    %1190 = vmatpush1.xpose.msra.mxu0 0.0
    %1191 = vmatprep.subr.mxu0 0.0
    %1192 = vmatpush1.xpose.msra.mxu0 0.0
    %1193 = vmatprep.subr.mxu0 0.0
    %1194 = vmatpush1.xpose.msra.mxu0 0.0
    %1195 = vmatprep.subr.mxu0 0.0
    %1196 = vmatpush1.xpose.msra.mxu0 0.0
    %1197 = vmatprep.subr.mxu0 0.0
    %1198 = vmatpush1.xpose.msra.mxu0 0.0
    %1199 = vmatprep.subr.mxu0 0.0
    %1200 = vmatpush1.xpose.msra.mxu0 0.0
    %1201 = vmatprep.subr.mxu0 0.0
    %1202 = vmatpush1.xpose.msra.mxu0 0.0
    %1203 = vmatprep.subr.mxu0 0.0
    %1204 = vmatpush1.xpose.msra.mxu0 0.0
    %1205 = vmatprep.subr.mxu0 0.0
    %1206 = vmatpush1.xpose.msra.mxu0 0.0
    %1207 = vmatprep.subr.mxu0 0.0
    %1208 = vmatpush1.xpose.msra.mxu0 0.0
    %1209 = vmatprep.subr.mxu0 0.0
    %1210 = vmatpush1.xpose.msra.mxu0 0.0
    %1211 = vmatprep.subr.mxu0 0.0
    %1212 = vmatpush1.xpose.msra.mxu0 0.0
    %1213 = vmatprep.subr.mxu0 0.0
    %1214 = vmatpush1.xpose.msra.mxu0 0.0
    %1215 = vmatprep.subr.mxu0 0.0
    %1216 = vmatpush1.xpose.msra.mxu0 0.0
    %1217 = vmatprep.subr.mxu0 0.0
    %1218 = vmatpush1.xpose.msra.mxu0 0.0
    %1219 = vmatprep.subr.mxu0 0.0
    %1220 = vmatpush1.xpose.msra.mxu0 0.0
    %1221 = vmatprep.subr.mxu0 0.0
    %1222 = vmatpush1.xpose.msra.mxu0 0.0
    %1223 = vmatprep.subr.mxu0 0.0
    %1224 = vmatpush1.xpose.msra.mxu0 0.0
    %1225 = vmatprep.mubr.f32.mxu0 0.0
    %1226 = vmatmul.mubr.f32.gmra.mrb[0].mxu0 %v1157
    %v1227 = vpop.f32.mrb[0].mxu0
    %v1228 = vadd.f32 0.0, %v1227
    %v1229 = vpop.f32.mrb[0].mxu0
    %1230 = vdwg.mxu0
    %v1231 = vsel %vm417, %v1150, -inf
    %1232 = vmax.xlane.f32.xlu0 %v1231
    %v1233 = vpop.xlane.xlu0 %1232
    %v1234 = vsel %vm417, %v1228, -inf
    %1235 = vmax.xlane.f32.xlu0 %v1234
    %v1236 = vpop.xlane.xlu0 %1235
    %v1237 = vsub.f32 %v1150, %v1233
    %v1238 = vsub.f32 %v1228, %v1236
    %v1239 = vmul.f32 %v1237, 1.442695
    %v1240 = vpow.pop %v1239
    %v1241 = vmul.f32 %v1238, 1.442695
    %v1242 = vpow.pop %v1241
    %v1243 = vsel %vm417, %v1240, 0.0
    %1244 = vadd.xlane.f32.xlu0 %v1243
    %v1245 = vpop.xlane.xlu0 %1244
    %v1246 = vsel %vm417, %v1242, 0.0
    %1247 = vadd.xlane.f32.xlu0 %v1246
    %v1248 = vpop.xlane.xlu0 %1247
    %v1249 = vrcp.pop %v1245
    %v1250 = vrcp.pop %v1248
    %v1251 = vmul.f32 %v1240, %v1249
    %v1252 = vmul.f32 %v1242, %v1250
    %1253 = vrot.lane.b32.xlu0 %v406, 48
    %v1254 = vpop.permute.xlu0 %1253
    %v1257 = vsel %vm417, %v1251, 0
    %1259 = vmatprep.subr.mxu0 0.0
    %1260 = vmatpush1.msra.mxu0 %v1254
    %1261 = vmatprep.subr.mxu0 0.0
    %1262 = vmatpush1.msra.mxu0 0.0
    %1263 = vmatprep.subr.mxu0 0.0
    %1264 = vmatpush1.msra.mxu0 0.0
    %1265 = vmatprep.subr.mxu0 0.0
    %1266 = vmatpush1.msra.mxu0 0.0
    %1267 = vmatprep.subr.mxu0 0.0
    %1268 = vmatpush1.msra.mxu0 0.0
    %1269 = vmatprep.subr.mxu0 0.0
    %1270 = vmatpush1.msra.mxu0 0.0
    %1271 = vmatprep.subr.mxu0 0.0
    %1272 = vmatpush1.msra.mxu0 0.0
    %1273 = vmatprep.subr.mxu0 0.0
    %1274 = vmatpush1.msra.mxu0 0.0
    %1275 = vmatprep.subr.mxu0 0.0
    %1276 = vmatpush1.msra.mxu0 0.0
    %1277 = vmatprep.subr.mxu0 0.0
    %1278 = vmatpush1.msra.mxu0 0.0
    %1279 = vmatprep.subr.mxu0 0.0
    %1280 = vmatpush1.msra.mxu0 0.0
    %1281 = vmatprep.subr.mxu0 0.0
    %1282 = vmatpush1.msra.mxu0 0.0
    %1283 = vmatprep.subr.mxu0 0.0
    %1284 = vmatpush1.msra.mxu0 0.0
    %1285 = vmatprep.subr.mxu0 0.0
    %1286 = vmatpush1.msra.mxu0 0.0
    %1287 = vmatprep.subr.mxu0 0.0
    %1288 = vmatpush1.msra.mxu0 0.0
    %1289 = vmatprep.subr.mxu0 0.0
    %1290 = vmatpush1.msra.mxu0 0.0
    %1291 = vmatprep.subr.mxu0 0.0
    %1292 = vmatpush1.msra.mxu0 0.0
    %1293 = vmatprep.subr.mxu0 0.0
    %1294 = vmatpush1.msra.mxu0 0.0
    %1295 = vmatprep.subr.mxu0 0.0
    %1296 = vmatpush1.msra.mxu0 0.0
    %1297 = vmatprep.subr.mxu0 0.0
    %1298 = vmatpush1.msra.mxu0 0.0
    %1299 = vmatprep.subr.mxu0 0.0
    %1300 = vmatpush1.msra.mxu0 0.0
    %1301 = vmatprep.subr.mxu0 0.0
    %1302 = vmatpush1.msra.mxu0 0.0
    %1303 = vmatprep.subr.mxu0 0.0
    %1304 = vmatpush1.msra.mxu0 0.0
    %1305 = vmatprep.subr.mxu0 0.0
    %1306 = vmatpush1.msra.mxu0 0.0
    %1307 = vmatprep.subr.mxu0 0.0
    %1308 = vmatpush1.msra.mxu0 0.0
    %1309 = vmatprep.subr.mxu0 0.0
    %1310 = vmatpush1.msra.mxu0 0.0
    %1311 = vmatprep.subr.mxu0 0.0
    %1312 = vmatpush1.msra.mxu0 0.0
    %1313 = vmatprep.subr.mxu0 0.0
    %1314 = vmatpush1.msra.mxu0 0.0
    %1315 = vmatprep.subr.mxu0 0.0
    %1316 = vmatpush1.msra.mxu0 0.0
    %1317 = vmatprep.subr.mxu0 0.0
    %1318 = vmatpush1.msra.mxu0 0.0
    %1319 = vmatprep.subr.mxu0 0.0
    %1320 = vmatpush1.msra.mxu0 0.0
    %1321 = vmatprep.subr.mxu0 0.0
    %1322 = vmatpush1.msra.mxu0 0.0
    %1323 = vmatprep.mubr.f32.mxu0 0.0
    %1324 = vmatmul.mubr.f32.gmra.mrb[0].mxu0 %v1257
    %v1325 = vpop.f32.mrb[0].mxu0
    %v1326 = vadd.f32 0.0, %v1325
    %v1327 = vpop.f32.mrb[0].mxu0
    %1328 = vdwg.mxu0
    %1329 = vrot.lane.b32.xlu0 %v409, 48
    %v1330 = vpop.permute.xlu0 %1329
    %v1333 = vsel %vm417, %v1252, 0
    %1335 = vmatprep.subr.mxu0 0.0
    %1336 = vmatpush1.msra.mxu0 %v1330
    %1337 = vmatprep.subr.mxu0 0.0
    %1338 = vmatpush1.msra.mxu0 0.0
    %1339 = vmatprep.subr.mxu0 0.0
    %1340 = vmatpush1.msra.mxu0 0.0
    %1341 = vmatprep.subr.mxu0 0.0
    %1342 = vmatpush1.msra.mxu0 0.0
    %1343 = vmatprep.subr.mxu0 0.0
    %1344 = vmatpush1.msra.mxu0 0.0
    %1345 = vmatprep.subr.mxu0 0.0
    %1346 = vmatpush1.msra.mxu0 0.0
    %1347 = vmatprep.subr.mxu0 0.0
    %1348 = vmatpush1.msra.mxu0 0.0
    %1349 = vmatprep.subr.mxu0 0.0
    %1350 = vmatpush1.msra.mxu0 0.0
    %1351 = vmatprep.subr.mxu0 0.0
    %1352 = vmatpush1.msra.mxu0 0.0
    %1353 = vmatprep.subr.mxu0 0.0
    %1354 = vmatpush1.msra.mxu0 0.0
    %1355 = vmatprep.subr.mxu0 0.0
    %1356 = vmatpush1.msra.mxu0 0.0
    %1357 = vmatprep.subr.mxu0 0.0
    %1358 = vmatpush1.msra.mxu0 0.0
    %1359 = vmatprep.subr.mxu0 0.0
    %1360 = vmatpush1.msra.mxu0 0.0
    %1361 = vmatprep.subr.mxu0 0.0
    %1362 = vmatpush1.msra.mxu0 0.0
    %1363 = vmatprep.subr.mxu0 0.0
    %1364 = vmatpush1.msra.mxu0 0.0
    %1365 = vmatprep.subr.mxu0 0.0
    %1366 = vmatpush1.msra.mxu0 0.0
    %1367 = vmatprep.subr.mxu0 0.0
    %1368 = vmatpush1.msra.mxu0 0.0
    %1369 = vmatprep.subr.mxu0 0.0
    %1370 = vmatpush1.msra.mxu0 0.0
    %1371 = vmatprep.subr.mxu0 0.0
    %1372 = vmatpush1.msra.mxu0 0.0
    %1373 = vmatprep.subr.mxu0 0.0
    %1374 = vmatpush1.msra.mxu0 0.0
    %1375 = vmatprep.subr.mxu0 0.0
    %1376 = vmatpush1.msra.mxu0 0.0
    %1377 = vmatprep.subr.mxu0 0.0
    %1378 = vmatpush1.msra.mxu0 0.0
    %1379 = vmatprep.subr.mxu0 0.0
    %1380 = vmatpush1.msra.mxu0 0.0
    %1381 = vmatprep.subr.mxu0 0.0
    %1382 = vmatpush1.msra.mxu0 0.0
    %1383 = vmatprep.subr.mxu0 0.0
    %1384 = vmatpush1.msra.mxu0 0.0
    %1385 = vmatprep.subr.mxu0 0.0
    %1386 = vmatpush1.msra.mxu0 0.0
    %1387 = vmatprep.subr.mxu0 0.0
    %1388 = vmatpush1.msra.mxu0 0.0
    %1389 = vmatprep.subr.mxu0 0.0
    %1390 = vmatpush1.msra.mxu0 0.0
    %1391 = vmatprep.subr.mxu0 0.0
    %1392 = vmatpush1.msra.mxu0 0.0
    %1393 = vmatprep.subr.mxu0 0.0
    %1394 = vmatpush1.msra.mxu0 0.0
    %1395 = vmatprep.subr.mxu0 0.0
    %1396 = vmatpush1.msra.mxu0 0.0
    %1397 = vmatprep.subr.mxu0 0.0
    %1398 = vmatpush1.msra.mxu0 0.0
    %1399 = vmatprep.mubr.f32.mxu0 0.0
    %1400 = vmatmul.mubr.f32.gmra.mrb[0].mxu0 %v1333
    %v1401 = vpop.f32.mrb[0].mxu0
    %v1402 = vadd.f32 0.0, %v1401
    %v1403 = vpop.f32.mrb[0].mxu0
    %1404 = vdwg.mxu0
    %1405 = vrot.lane.b32.xlu0 %v412, 104
    %v1406 = vpop.permute.xlu0 %1405
    %1407 = vrot.lane.b32.xlu0 %v406, 72
    %v1408 = vpop.permute.xlu0 %1407
    %v1409 = vsel %vm417, %v1406, 0
    %v1411 = vsel %vm417, %v1408, 0
    %1413 = vmatprep.subr.mxu0 0.0
    %1414 = vmatpush1.xpose.msra.mxu0 %v1411
    %1415 = vmatprep.subr.mxu0 0.0
    %1416 = vmatpush1.xpose.msra.mxu0 0.0
    %1417 = vmatprep.subr.mxu0 0.0
    %1418 = vmatpush1.xpose.msra.mxu0 0.0
    %1419 = vmatprep.subr.mxu0 0.0
    %1420 = vmatpush1.xpose.msra.mxu0 0.0
    %1421 = vmatprep.subr.mxu0 0.0
    %1422 = vmatpush1.xpose.msra.mxu0 0.0
    %1423 = vmatprep.subr.mxu0 0.0
    %1424 = vmatpush1.xpose.msra.mxu0 0.0
    %1425 = vmatprep.subr.mxu0 0.0
    %1426 = vmatpush1.xpose.msra.mxu0 0.0
    %1427 = vmatprep.subr.mxu0 0.0
    %1428 = vmatpush1.xpose.msra.mxu0 0.0
    %1429 = vmatprep.subr.mxu0 0.0
    %1430 = vmatpush1.xpose.msra.mxu0 0.0
    %1431 = vmatprep.subr.mxu0 0.0
    %1432 = vmatpush1.xpose.msra.mxu0 0.0
    %1433 = vmatprep.subr.mxu0 0.0
    %1434 = vmatpush1.xpose.msra.mxu0 0.0
    %1435 = vmatprep.subr.mxu0 0.0
    %1436 = vmatpush1.xpose.msra.mxu0 0.0
    %1437 = vmatprep.subr.mxu0 0.0
    %1438 = vmatpush1.xpose.msra.mxu0 0.0
    %1439 = vmatprep.subr.mxu0 0.0
    %1440 = vmatpush1.xpose.msra.mxu0 0.0
    %1441 = vmatprep.subr.mxu0 0.0
    %1442 = vmatpush1.xpose.msra.mxu0 0.0
    %1443 = vmatprep.subr.mxu0 0.0
    %1444 = vmatpush1.xpose.msra.mxu0 0.0
    %1445 = vmatprep.subr.mxu0 0.0
    %1446 = vmatpush1.xpose.msra.mxu0 0.0
    %1447 = vmatprep.subr.mxu0 0.0
    %1448 = vmatpush1.xpose.msra.mxu0 0.0
    %1449 = vmatprep.subr.mxu0 0.0
    %1450 = vmatpush1.xpose.msra.mxu0 0.0
    %1451 = vmatprep.subr.mxu0 0.0
    %1452 = vmatpush1.xpose.msra.mxu0 0.0
    %1453 = vmatprep.subr.mxu0 0.0
    %1454 = vmatpush1.xpose.msra.mxu0 0.0
    %1455 = vmatprep.subr.mxu0 0.0
    %1456 = vmatpush1.xpose.msra.mxu0 0.0
    %1457 = vmatprep.subr.mxu0 0.0
    %1458 = vmatpush1.xpose.msra.mxu0 0.0
    %1459 = vmatprep.subr.mxu0 0.0
    %1460 = vmatpush1.xpose.msra.mxu0 0.0
    %1461 = vmatprep.subr.mxu0 0.0
    %1462 = vmatpush1.xpose.msra.mxu0 0.0
    %1463 = vmatprep.subr.mxu0 0.0
    %1464 = vmatpush1.xpose.msra.mxu0 0.0
    %1465 = vmatprep.subr.mxu0 0.0
    %1466 = vmatpush1.xpose.msra.mxu0 0.0
    %1467 = vmatprep.subr.mxu0 0.0
    %1468 = vmatpush1.xpose.msra.mxu0 0.0
    %1469 = vmatprep.subr.mxu0 0.0
    %1470 = vmatpush1.xpose.msra.mxu0 0.0
    %1471 = vmatprep.subr.mxu0 0.0
    %1472 = vmatpush1.xpose.msra.mxu0 0.0
    %1473 = vmatprep.subr.mxu0 0.0
    %1474 = vmatpush1.xpose.msra.mxu0 0.0
    %1475 = vmatprep.subr.mxu0 0.0
    %1476 = vmatpush1.xpose.msra.mxu0 0.0
    %1477 = vmatprep.mubr.f32.mxu0 0.0
    %1478 = vmatmul.mubr.f32.gmra.mrb[0].mxu0 %v1409
    %v1479 = vpop.f32.mrb[0].mxu0
    %v1480 = vadd.f32 0.0, %v1479
    %v1481 = vpop.f32.mrb[0].mxu0
    %1482 = vdwg.mxu0
    %1483 = vrot.lane.b32.xlu0 %v413, 104
    %v1484 = vpop.permute.xlu0 %1483
    %1485 = vrot.lane.b32.xlu0 %v409, 72
    %v1486 = vpop.permute.xlu0 %1485
    %v1487 = vsel %vm417, %v1484, 0
    %v1489 = vsel %vm417, %v1486, 0
    %1491 = vmatprep.subr.mxu0 0.0
    %1492 = vmatpush1.xpose.msra.mxu0 %v1489
    %1493 = vmatprep.subr.mxu0 0.0
    %1494 = vmatpush1.xpose.msra.mxu0 0.0
    %1495 = vmatprep.subr.mxu0 0.0
    %1496 = vmatpush1.xpose.msra.mxu0 0.0
    %1497 = vmatprep.subr.mxu0 0.0
    %1498 = vmatpush1.xpose.msra.mxu0 0.0
    %1499 = vmatprep.subr.mxu0 0.0
    %1500 = vmatpush1.xpose.msra.mxu0 0.0
    %1501 = vmatprep.subr.mxu0 0.0
    %1502 = vmatpush1.xpose.msra.mxu0 0.0
    %1503 = vmatprep.subr.mxu0 0.0
    %1504 = vmatpush1.xpose.msra.mxu0 0.0
    %1505 = vmatprep.subr.mxu0 0.0
    %1506 = vmatpush1.xpose.msra.mxu0 0.0
    %1507 = vmatprep.subr.mxu0 0.0
    %1508 = vmatpush1.xpose.msra.mxu0 0.0
    %1509 = vmatprep.subr.mxu0 0.0
    %1510 = vmatpush1.xpose.msra.mxu0 0.0
    %1511 = vmatprep.subr.mxu0 0.0
    %1512 = vmatpush1.xpose.msra.mxu0 0.0
    %1513 = vmatprep.subr.mxu0 0.0
    %1514 = vmatpush1.xpose.msra.mxu0 0.0
    %1515 = vmatprep.subr.mxu0 0.0
    %1516 = vmatpush1.xpose.msra.mxu0 0.0
    %1517 = vmatprep.subr.mxu0 0.0
    %1518 = vmatpush1.xpose.msra.mxu0 0.0
    %1519 = vmatprep.subr.mxu0 0.0
    %1520 = vmatpush1.xpose.msra.mxu0 0.0
    %1521 = vmatprep.subr.mxu0 0.0
    %1522 = vmatpush1.xpose.msra.mxu0 0.0
    %1523 = vmatprep.subr.mxu0 0.0
    %1524 = vmatpush1.xpose.msra.mxu0 0.0
    %1525 = vmatprep.subr.mxu0 0.0
    %1526 = vmatpush1.xpose.msra.mxu0 0.0
    %1527 = vmatprep.subr.mxu0 0.0
    %1528 = vmatpush1.xpose.msra.mxu0 0.0
    %1529 = vmatprep.subr.mxu0 0.0
    %1530 = vmatpush1.xpose.msra.mxu0 0.0
    %1531 = vmatprep.subr.mxu0 0.0
    %1532 = vmatpush1.xpose.msra.mxu0 0.0
    %1533 = vmatprep.subr.mxu0 0.0
    %1534 = vmatpush1.xpose.msra.mxu0 0.0
    %1535 = vmatprep.subr.mxu0 0.0
    %1536 = vmatpush1.xpose.msra.mxu0 0.0
    %1537 = vmatprep.subr.mxu0 0.0
    %1538 = vmatpush1.xpose.msra.mxu0 0.0
    %1539 = vmatprep.subr.mxu0 0.0
    %1540 = vmatpush1.xpose.msra.mxu0 0.0
    %1541 = vmatprep.subr.mxu0 0.0
    %1542 = vmatpush1.xpose.msra.mxu0 0.0
    %1543 = vmatprep.subr.mxu0 0.0
    %1544 = vmatpush1.xpose.msra.mxu0 0.0
    %1545 = vmatprep.subr.mxu0 0.0
    %1546 = vmatpush1.xpose.msra.mxu0 0.0
    %1547 = vmatprep.subr.mxu0 0.0
    %1548 = vmatpush1.xpose.msra.mxu0 0.0
    %1549 = vmatprep.subr.mxu0 0.0
    %1550 = vmatpush1.xpose.msra.mxu0 0.0
    %1551 = vmatprep.subr.mxu0 0.0
    %1552 = vmatpush1.xpose.msra.mxu0 0.0
    %1553 = vmatprep.subr.mxu0 0.0
    %1554 = vmatpush1.xpose.msra.mxu0 0.0
    %1555 = vmatprep.mubr.f32.mxu0 0.0
    %1556 = vmatmul.mubr.f32.gmra.mrb[0].mxu0 %v1487
    %v1557 = vpop.f32.mrb[0].mxu0
    %v1558 = vadd.f32 0.0, %v1557
    %v1559 = vpop.f32.mrb[0].mxu0
    %1560 = vdwg.mxu0
    %v1561 = vsel %vm417, %v1480, -inf
    %1562 = vmax.xlane.f32.xlu0 %v1561
    %v1563 = vpop.xlane.xlu0 %1562
    %v1564 = vsel %vm417, %v1558, -inf
    %1565 = vmax.xlane.f32.xlu0 %v1564
    %v1566 = vpop.xlane.xlu0 %1565
    %v1567 = vsub.f32 %v1480, %v1563
    %v1568 = vsub.f32 %v1558, %v1566
    %v1569 = vmul.f32 %v1567, 1.442695
    %v1570 = vpow.pop %v1569
    %v1571 = vmul.f32 %v1568, 1.442695
    %v1572 = vpow.pop %v1571
    %v1573 = vsel %vm417, %v1570, 0.0
    %1574 = vadd.xlane.f32.xlu0 %v1573
    %v1575 = vpop.xlane.xlu0 %1574
    %v1576 = vsel %vm417, %v1572, 0.0
    %1577 = vadd.xlane.f32.xlu0 %v1576
    %v1578 = vpop.xlane.xlu0 %1577
    %v1579 = vrcp.pop %v1575
    %v1580 = vrcp.pop %v1578
    %v1581 = vmul.f32 %v1570, %v1579
    %v1582 = vmul.f32 %v1572, %v1580
    %1583 = vrot.lane.b32.xlu0 %v406, 40
    %v1584 = vpop.permute.xlu0 %1583
    %v1587 = vsel %vm417, %v1581, 0
    %1589 = vmatprep.subr.mxu0 0.0
    %1590 = vmatpush1.msra.mxu0 %v1584
    %1591 = vmatprep.subr.mxu0 0.0
    %1592 = vmatpush1.msra.mxu0 0.0
    %1593 = vmatprep.subr.mxu0 0.0
    %1594 = vmatpush1.msra.mxu0 0.0
    %1595 = vmatprep.subr.mxu0 0.0
    %1596 = vmatpush1.msra.mxu0 0.0
    %1597 = vmatprep.subr.mxu0 0.0
    %1598 = vmatpush1.msra.mxu0 0.0
    %1599 = vmatprep.subr.mxu0 0.0
    %1600 = vmatpush1.msra.mxu0 0.0
    %1601 = vmatprep.subr.mxu0 0.0
    %1602 = vmatpush1.msra.mxu0 0.0
    %1603 = vmatprep.subr.mxu0 0.0
    %1604 = vmatpush1.msra.mxu0 0.0
    %1605 = vmatprep.subr.mxu0 0.0
    %1606 = vmatpush1.msra.mxu0 0.0
    %1607 = vmatprep.subr.mxu0 0.0
    %1608 = vmatpush1.msra.mxu0 0.0
    %1609 = vmatprep.subr.mxu0 0.0
    %1610 = vmatpush1.msra.mxu0 0.0
    %1611 = vmatprep.subr.mxu0 0.0
    %1612 = vmatpush1.msra.mxu0 0.0
    %1613 = vmatprep.subr.mxu0 0.0
    %1614 = vmatpush1.msra.mxu0 0.0
    %1615 = vmatprep.subr.mxu0 0.0
    %1616 = vmatpush1.msra.mxu0 0.0
    %1617 = vmatprep.subr.mxu0 0.0
    %1618 = vmatpush1.msra.mxu0 0.0
    %1619 = vmatprep.subr.mxu0 0.0
    %1620 = vmatpush1.msra.mxu0 0.0
    %1621 = vmatprep.subr.mxu0 0.0
    %1622 = vmatpush1.msra.mxu0 0.0
    %1623 = vmatprep.subr.mxu0 0.0
    %1624 = vmatpush1.msra.mxu0 0.0
    %1625 = vmatprep.subr.mxu0 0.0
    %1626 = vmatpush1.msra.mxu0 0.0
    %1627 = vmatprep.subr.mxu0 0.0
    %1628 = vmatpush1.msra.mxu0 0.0
    %1629 = vmatprep.subr.mxu0 0.0
    %1630 = vmatpush1.msra.mxu0 0.0
    %1631 = vmatprep.subr.mxu0 0.0
    %1632 = vmatpush1.msra.mxu0 0.0
    %1633 = vmatprep.subr.mxu0 0.0
    %1634 = vmatpush1.msra.mxu0 0.0
    %1635 = vmatprep.subr.mxu0 0.0
    %1636 = vmatpush1.msra.mxu0 0.0
    %1637 = vmatprep.subr.mxu0 0.0
    %1638 = vmatpush1.msra.mxu0 0.0
    %1639 = vmatprep.subr.mxu0 0.0
    %1640 = vmatpush1.msra.mxu0 0.0
    %1641 = vmatprep.subr.mxu0 0.0
    %1642 = vmatpush1.msra.mxu0 0.0
    %1643 = vmatprep.subr.mxu0 0.0
    %1644 = vmatpush1.msra.mxu0 0.0
    %1645 = vmatprep.subr.mxu0 0.0
    %1646 = vmatpush1.msra.mxu0 0.0
    %1647 = vmatprep.subr.mxu0 0.0
    %1648 = vmatpush1.msra.mxu0 0.0
    %1649 = vmatprep.subr.mxu0 0.0
    %1650 = vmatpush1.msra.mxu0 0.0
    %1651 = vmatprep.subr.mxu0 0.0
    %1652 = vmatpush1.msra.mxu0 0.0
    %1653 = vmatprep.mubr.f32.mxu0 0.0
    %1654 = vmatmul.mubr.f32.gmra.mrb[0].mxu0 %v1587
    %v1655 = vpop.f32.mrb[0].mxu0
    %v1656 = vadd.f32 0.0, %v1655
    %v1657 = vpop.f32.mrb[0].mxu0
    %1658 = vdwg.mxu0
    %1659 = vrot.lane.b32.xlu0 %v409, 40
    %v1660 = vpop.permute.xlu0 %1659
    %v1663 = vsel %vm417, %v1582, 0
    %1665 = vmatprep.subr.mxu0 0.0
    %1666 = vmatpush1.msra.mxu0 %v1660
    %1667 = vmatprep.subr.mxu0 0.0
    %1668 = vmatpush1.msra.mxu0 0.0
    %1669 = vmatprep.subr.mxu0 0.0
    %1670 = vmatpush1.msra.mxu0 0.0
    %1671 = vmatprep.subr.mxu0 0.0
    %1672 = vmatpush1.msra.mxu0 0.0
    %1673 = vmatprep.subr.mxu0 0.0
    %1674 = vmatpush1.msra.mxu0 0.0
    %1675 = vmatprep.subr.mxu0 0.0
    %1676 = vmatpush1.msra.mxu0 0.0
    %1677 = vmatprep.subr.mxu0 0.0
    %1678 = vmatpush1.msra.mxu0 0.0
    %1679 = vmatprep.subr.mxu0 0.0
    %1680 = vmatpush1.msra.mxu0 0.0
    %1681 = vmatprep.subr.mxu0 0.0
    %1682 = vmatpush1.msra.mxu0 0.0
    %1683 = vmatprep.subr.mxu0 0.0
    %1684 = vmatpush1.msra.mxu0 0.0
    %1685 = vmatprep.subr.mxu0 0.0
    %1686 = vmatpush1.msra.mxu0 0.0
    %1687 = vmatprep.subr.mxu0 0.0
    %1688 = vmatpush1.msra.mxu0 0.0
    %1689 = vmatprep.subr.mxu0 0.0
    %1690 = vmatpush1.msra.mxu0 0.0
    %1691 = vmatprep.subr.mxu0 0.0
    %1692 = vmatpush1.msra.mxu0 0.0
    %1693 = vmatprep.subr.mxu0 0.0
    %1694 = vmatpush1.msra.mxu0 0.0
    %1695 = vmatprep.subr.mxu0 0.0
    %1696 = vmatpush1.msra.mxu0 0.0
    %1697 = vmatprep.subr.mxu0 0.0
    %1698 = vmatpush1.msra.mxu0 0.0
    %1699 = vmatprep.subr.mxu0 0.0
    %1700 = vmatpush1.msra.mxu0 0.0
    %1701 = vmatprep.subr.mxu0 0.0
    %1702 = vmatpush1.msra.mxu0 0.0
    %1703 = vmatprep.subr.mxu0 0.0
    %1704 = vmatpush1.msra.mxu0 0.0
    %1705 = vmatprep.subr.mxu0 0.0
    %1706 = vmatpush1.msra.mxu0 0.0
    %1707 = vmatprep.subr.mxu0 0.0
    %1708 = vmatpush1.msra.mxu0 0.0
    %1709 = vmatprep.subr.mxu0 0.0
    %1710 = vmatpush1.msra.mxu0 0.0
    %1711 = vmatprep.subr.mxu0 0.0
    %1712 = vmatpush1.msra.mxu0 0.0
    %1713 = vmatprep.subr.mxu0 0.0
    %1714 = vmatpush1.msra.mxu0 0.0
    %1715 = vmatprep.subr.mxu0 0.0
    %1716 = vmatpush1.msra.mxu0 0.0
    %1717 = vmatprep.subr.mxu0 0.0
    %1718 = vmatpush1.msra.mxu0 0.0
    %1719 = vmatprep.subr.mxu0 0.0
    %1720 = vmatpush1.msra.mxu0 0.0
    %1721 = vmatprep.subr.mxu0 0.0
    %1722 = vmatpush1.msra.mxu0 0.0
    %1723 = vmatprep.subr.mxu0 0.0
    %1724 = vmatpush1.msra.mxu0 0.0
    %1725 = vmatprep.subr.mxu0 0.0
    %1726 = vmatpush1.msra.mxu0 0.0
    %1727 = vmatprep.subr.mxu0 0.0
    %1728 = vmatpush1.msra.mxu0 0.0
    %1729 = vmatprep.mubr.f32.mxu0 0.0
    %1730 = vmatmul.mubr.f32.gmra.mrb[0].mxu0 %v1663
    %v1731 = vpop.f32.mrb[0].mxu0
    %v1732 = vadd.f32 0.0, %v1731
    %v1733 = vpop.f32.mrb[0].mxu0
    %1734 = vdwg.mxu0
    %1737 = vrot.lane.b32.xlu0 %v996, 8
    %v1738 = vpop.permute.xlu0 %1737
    %1739 = vrot.lane.b32.xlu0 %v1072, 8
    %v1740 = vpop.permute.xlu0 %1739
    %1745 = vrot.lane.b32.xlu0 %v1326, 16
    %v1746 = vpop.permute.xlu0 %1745
    %1747 = vrot.lane.b32.xlu0 %v1402, 16
    %v1748 = vpop.permute.xlu0 %1747
    %1753 = vrot.lane.b32.xlu0 %v1656, 24
    %v1754 = vpop.permute.xlu0 %1753
    %1755 = vrot.lane.b32.xlu0 %v1732, 24
    %v1756 = vpop.permute.xlu0 %1755
    %v1759 = vsel %vm417, %v666, %v1738
    %v1760 = vsel %vm417, %v742, %v1740
    %vm1761 = vcmask 130048
    %v1762 = vsel %vm1761, %v1759, %v1746
    %v1763 = vsel %vm1761, %v1760, %v1748
    %vm1764 = vcmask 195584
    %v1765 = vsel %vm1764, %v1762, %v1754
    %v1766 = vsel %vm1764, %v1763, %v1756
    %v1767 = vpack.c.bf16 %v1766, %v1765
    %v1768 = vld [vmem:[#allocation11] sm:$0xf]
    %v1769 = vld [vmem:[#allocation11 + $0x4] sm:$0xf]
    %v1770 = vld [vmem:[#allocation11 + $0x8] sm:$0xf]
    %v1771 = vld [vmem:[#allocation11 + $0xc] sm:$0xf]
    %v1772 = vld [vmem:[#allocation12] sm:$0x1]
    %v1774 = vlaneseq
    %v1775 = vshrl.u32 %v1774, 7
    %v1776 = vsub.s32 0, %v1775
    %v1777 = vrot.slane %v1772, %v1776
    %v1783 = vunpack.c.l.b16 %v1768
    %v1784 = vunpack.c.l.b16 %v1769
    %v1785 = vunpack.c.l.b16 %v1770
    %v1786 = vunpack.c.l.b16 %v1771
    %v1787 = vpack.c.b16 %v1784, %v1783
    %v1788 = vpack.c.b16 %v1786, %v1785
    %v1792 = vsel %vm367, %v1767, 0
    %1794 = vmatprep.subr.bf16.mxu0 0
    %1795 = vmatpush1.bf16.msra.mxu0 %v1787
    %1796 = vmatprep.subr.bf16.mxu0 0
    %1797 = vmatpush1.bf16.msra.mxu0 %v1788
    %1798 = vmatprep.subr.bf16.mxu0 0
    %1799 = vmatpush1.bf16.msra.mxu0 0
    %1800 = vmatprep.subr.bf16.mxu0 0
    %1801 = vmatpush1.bf16.msra.mxu0 0
    %1802 = vmatprep.subr.bf16.mxu0 0
    %1803 = vmatpush1.bf16.msra.mxu0 0
    %1804 = vmatprep.subr.bf16.mxu0 0
    %1805 = vmatpush1.bf16.msra.mxu0 0
    %1806 = vmatprep.subr.bf16.mxu0 0
    %1807 = vmatpush1.bf16.msra.mxu0 0
    %1808 = vmatprep.subr.bf16.mxu0 0
    %1809 = vmatpush1.bf16.msra.mxu0 0
    %1810 = vmatprep.subr.bf16.mxu0 0
    %1811 = vmatpush1.bf16.msra.mxu0 0
    %1812 = vmatprep.subr.bf16.mxu0 0
    %1813 = vmatpush1.bf16.msra.mxu0 0
    %1814 = vmatprep.subr.bf16.mxu0 0
    %1815 = vmatpush1.bf16.msra.mxu0 0
    %1816 = vmatprep.subr.bf16.mxu0 0
    %1817 = vmatpush1.bf16.msra.mxu0 0
    %1818 = vmatprep.subr.bf16.mxu0 0
    %1819 = vmatpush1.bf16.msra.mxu0 0
    %1820 = vmatprep.subr.bf16.mxu0 0
    %1821 = vmatpush1.bf16.msra.mxu0 0
    %1822 = vmatprep.subr.bf16.mxu0 0
    %1823 = vmatpush1.bf16.msra.mxu0 0
    %1824 = vmatprep.subr.bf16.mxu0 0
    %1825 = vmatpush1.bf16.msra.mxu0 0
    %1826 = vmatprep.mubr.bf16.mxu0 0
    %1827 = vmatmul.mubr.bf16.gmra.mrb[0].mxu0 %v1792
    %v1828 = vpop.f32.mrb[0].mxu0
    %v1829 = vadd.f32 %v1777, %v1828
    %v1830 = vpop.f32.mrb[0].mxu0
    %v1831 = vpop.f32.mrb[0].mxu0
    %v1832 = vadd.f32 %v1777, %v1831
    %v1833 = vpop.f32.mrb[0].mxu0
    %1834 = vdwg.mxu0
    %v1835 = vadd.f32 %v341, %v1829
    %v1836 = vadd.f32 %v342, %v1832
    %v1837 = vld [vmem:[#allocation18] sm:$0x1]
    %v1838 = vld [vmem:[#allocation20] sm:$0x1]
    %v1839 = vsel %vm367, %v1835, 0.0
    %1840 = vadd.xlane.f32.xlu0 %v1839
    %v1841 = vpop.xlane.xlu0 %1840
    %v1842 = vsel %vm367, %v1836, 0.0
    %1843 = vadd.xlane.f32.xlu0 %v1842
    %v1844 = vpop.xlane.xlu0 %1843
    %v1845 = vrcp.pop 32.0
    %v1846 = vmul.f32 %v1841, %v1845
    %v1847 = vmul.f32 %v1844, %v1845
    %v1848 = vsub.f32 %v1835, %v1846
    %v1849 = vsub.f32 %v1836, %v1847
    %v1850 = vmul.f32 %v1848, %v1848
    %v1851 = vmul.f32 %v1849, %v1849
    %v1852 = vsel %vm367, %v1850, 0.0
    %1853 = vadd.xlane.f32.xlu0 %v1852
    %v1854 = vpop.xlane.xlu0 %1853
    %v1855 = vsel %vm367, %v1851, 0.0
    %1856 = vadd.xlane.f32.xlu0 %v1855
    %v1857 = vpop.xlane.xlu0 %1856
    %v1858 = vmul.f32 %v1854, %v1845
    %v1859 = vmul.f32 %v1857, %v1845
    %v1860 = vadd.f32 %v1858, 1e-05
    %v1861 = vadd.f32 %v1859, 1e-05
    %v1862 = vrsqrt.pop %v1860
    %v1863 = vrsqrt.pop %v1861
    %v1864 = vmul.f32 %v1848, %v1862
    %v1865 = vmul.f32 %v1849, %v1863
    %v1867 = vlaneseq
    %v1868 = vshrl.u32 %v1867, 7
    %v1869 = vsub.s32 0, %v1868
    %v1870 = vrot.slane %v1837, %v1869
    %v1872 = vmul.f32 %v1864, %v1870
    %v1873 = vmul.f32 %v1865, %v1870
    %v1875 = vlaneseq
    %v1876 = vshrl.u32 %v1875, 7
    %v1877 = vsub.s32 0, %v1876
    %v1878 = vrot.slane %v1838, %v1877
    %v1880 = vadd.f32 %v1872, %v1878
    %v1881 = vadd.f32 %v1873, %v1878
    %v1882 = vpack.c.bf16 %v1881, %v1880
    %v1883 = vld [vmem:[#allocation14] sm:$0xf]
    %v1884 = vld [vmem:[#allocation14 + $0x4] sm:$0xf]
    %v1885 = vld [vmem:[#allocation14 + $0x8] sm:$0xf]
    %v1886 = vld [vmem:[#allocation14 + $0xc] sm:$0xf]
    %v1887 = vld [vmem:[#allocation15] sm:$0x1]
    %v1889 = vlaneseq
    %v1890 = vshrl.u32 %v1889, 7
    %v1891 = vsub.s32 0, %v1890
    %v1892 = vrot.slane %v1887, %v1891
    %v1898 = vunpack.c.l.b16 %v1883
    %v1899 = vunpack.c.l.b16 %v1884
    %v1900 = vunpack.c.l.b16 %v1885
    %v1901 = vunpack.c.l.b16 %v1886
    %v1902 = vpack.c.b16 %v1899, %v1898
    %v1903 = vpack.c.b16 %v1901, %v1900
    %v1907 = vsel %vm367, %v1882, 0
    %1909 = vmatprep.subr.bf16.mxu0 0
    %1910 = vmatpush1.bf16.msra.mxu0 %v1902
    %1911 = vmatprep.subr.bf16.mxu0 0
    %1912 = vmatpush1.bf16.msra.mxu0 %v1903
    %1913 = vmatprep.subr.bf16.mxu0 0
    %1914 = vmatpush1.bf16.msra.mxu0 0
    %1915 = vmatprep.subr.bf16.mxu0 0
    %1916 = vmatpush1.bf16.msra.mxu0 0
    %1917 = vmatprep.subr.bf16.mxu0 0
    %1918 = vmatpush1.bf16.msra.mxu0 0
    %1919 = vmatprep.subr.bf16.mxu0 0
    %1920 = vmatpush1.bf16.msra.mxu0 0
    %1921 = vmatprep.subr.bf16.mxu0 0
    %1922 = vmatpush1.bf16.msra.mxu0 0
    %1923 = vmatprep.subr.bf16.mxu0 0
    %1924 = vmatpush1.bf16.msra.mxu0 0
    %1925 = vmatprep.subr.bf16.mxu0 0
    %1926 = vmatpush1.bf16.msra.mxu0 0
    %1927 = vmatprep.subr.bf16.mxu0 0
    %1928 = vmatpush1.bf16.msra.mxu0 0
    %1929 = vmatprep.subr.bf16.mxu0 0
    %1930 = vmatpush1.bf16.msra.mxu0 0
    %1931 = vmatprep.subr.bf16.mxu0 0
    %1932 = vmatpush1.bf16.msra.mxu0 0
    %1933 = vmatprep.subr.bf16.mxu0 0
    %1934 = vmatpush1.bf16.msra.mxu0 0
    %1935 = vmatprep.subr.bf16.mxu0 0
    %1936 = vmatpush1.bf16.msra.mxu0 0
    %1937 = vmatprep.subr.bf16.mxu0 0
    %1938 = vmatpush1.bf16.msra.mxu0 0
    %1939 = vmatprep.subr.bf16.mxu0 0
    %1940 = vmatpush1.bf16.msra.mxu0 0
    %1941 = vmatprep.mubr.bf16.mxu0 0
    %1942 = vmatmul.mubr.bf16.gmra.mrb[0].mxu0 %v1907
    %v1943 = vpop.f32.mrb[0].mxu0
    %v1944 = vadd.f32 %v1892, %v1943
    %v1945 = vpop.f32.mrb[0].mxu0
    %v1946 = vpop.f32.mrb[0].mxu0
    %v1947 = vadd.f32 %v1892, %v1946
    %v1948 = vpop.f32.mrb[0].mxu0
    %1949 = vdwg.mxu0
    %v1950 = vmax.f32 %v1944, 0.0
    %v1951 = vmax.f32 %v1947, 0.0
    %v1952 = vpack.c.bf16 %v1951, %v1950
    %v1953 = vld [vmem:[%s9] sm:$0xf]
    %v1954 = vld [vmem:[%s9 + $0x4] sm:$0xf]
    %v1955 = vld [vmem:[%s9 + $0x8] sm:$0xf]
    %v1956 = vld [vmem:[%s9 + $0xc] sm:$0xf]
    %v1957 = vld [vmem:[%s9 + $0x10] sm:$0xf]
    %v1958 = vld [vmem:[%s9 + $0x14] sm:$0xf]
    %v1959 = vld [vmem:[%s9 + $0x18] sm:$0xf]
    %v1960 = vld [vmem:[%s9 + $0x1c] sm:$0xf]
    %v1961 = vld [vmem:[#allocation17] sm:$0x1]
    %v1963 = vlaneseq
    %v1964 = vshrl.u32 %v1963, 7
    %v1965 = vsub.s32 0, %v1964
    %v1966 = vrot.slane %v1961, %v1965
    %v1976 = vunpack.c.l.b16 %v1953
    %v1977 = vunpack.c.l.b16 %v1954
    %v1978 = vunpack.c.l.b16 %v1955
    %v1979 = vunpack.c.l.b16 %v1956
    %v1980 = vunpack.c.l.b16 %v1957
    %v1981 = vunpack.c.l.b16 %v1958
    %v1982 = vunpack.c.l.b16 %v1959
    %v1983 = vunpack.c.l.b16 %v1960
    %v1984 = vpack.c.b16 %v1977, %v1976
    %v1985 = vpack.c.b16 %v1979, %v1978
    %v1986 = vpack.c.b16 %v1981, %v1980
    %v1987 = vpack.c.b16 %v1983, %v1982
    %vm1992 = vcmask 523264
    %v1994 = vsel %vm1992, %v1952, 0
    %1996 = vmatprep.subr.bf16.mxu0 0
    %1997 = vmatpush1.bf16.msra.mxu0 %v1984
    %1998 = vmatprep.subr.bf16.mxu0 0
    %1999 = vmatpush1.bf16.msra.mxu0 %v1985
    %2000 = vmatprep.subr.bf16.mxu0 0
    %2001 = vmatpush1.bf16.msra.mxu0 %v1986
    %2002 = vmatprep.subr.bf16.mxu0 0
    %2003 = vmatpush1.bf16.msra.mxu0 %v1987
    %2004 = vmatprep.subr.bf16.mxu0 0
    %2005 = vmatpush1.bf16.msra.mxu0 0
    %2006 = vmatprep.subr.bf16.mxu0 0
    %2007 = vmatpush1.bf16.msra.mxu0 0
    %2008 = vmatprep.subr.bf16.mxu0 0
    %2009 = vmatpush1.bf16.msra.mxu0 0
    %2010 = vmatprep.subr.bf16.mxu0 0
    %2011 = vmatpush1.bf16.msra.mxu0 0
    %2012 = vmatprep.subr.bf16.mxu0 0
    %2013 = vmatpush1.bf16.msra.mxu0 0
    %2014 = vmatprep.subr.bf16.mxu0 0
    %2015 = vmatpush1.bf16.msra.mxu0 0
    %2016 = vmatprep.subr.bf16.mxu0 0
    %2017 = vmatpush1.bf16.msra.mxu0 0
    %2018 = vmatprep.subr.bf16.mxu0 0
    %2019 = vmatpush1.bf16.msra.mxu0 0
    %2020 = vmatprep.subr.bf16.mxu0 0
    %2021 = vmatpush1.bf16.msra.mxu0 0
    %2022 = vmatprep.subr.bf16.mxu0 0
    %2023 = vmatpush1.bf16.msra.mxu0 0
    %2024 = vmatprep.subr.bf16.mxu0 0
    %2025 = vmatpush1.bf16.msra.mxu0 0
    %2026 = vmatprep.subr.bf16.mxu0 0
    %2027 = vmatpush1.bf16.msra.mxu0 0
    %2028 = vmatprep.mubr.bf16.mxu0 0
    %2029 = vmatmul.mubr.bf16.gmra.mrb[0].mxu0 %v1994
    %v2030 = vpop.f32.mrb[0].mxu0
    %v2031 = vadd.f32 %v1966, %v2030
    %v2032 = vpop.f32.mrb[0].mxu0
    %v2033 = vpop.f32.mrb[0].mxu0
    %v2034 = vadd.f32 %v1966, %v2033
    %v2035 = vpop.f32.mrb[0].mxu0
    %2036 = vdwg.mxu0
    %v2037 = vadd.f32 %v1880, %v2031
    %v2038 = vadd.f32 %v1881, %v2034
    %v2039 = vld [vmem:[#allocation21] sm:$0x1]
    %v2040 = vld [vmem:[#allocation23] sm:$0x1]
    %v2041 = vsel %vm367, %v2037, 0.0
    %2042 = vadd.xlane.f32.xlu0 %v2041
    %v2043 = vpop.xlane.xlu0 %2042
    %v2044 = vsel %vm367, %v2038, 0.0
    %2045 = vadd.xlane.f32.xlu0 %v2044
    %v2046 = vpop.xlane.xlu0 %2045
    %v2047 = vmul.f32 %v2043, %v1845
    %v2048 = vmul.f32 %v2046, %v1845
    %v2049 = vsub.f32 %v2037, %v2047
    %v2050 = vsub.f32 %v2038, %v2048
    %v2051 = vmul.f32 %v2049, %v2049
    %v2052 = vmul.f32 %v2050, %v2050
    %v2053 = vsel %vm367, %v2051, 0.0
    %2054 = vadd.xlane.f32.xlu0 %v2053
    %v2055 = vpop.xlane.xlu0 %2054
    %v2056 = vsel %vm367, %v2052, 0.0
    %2057 = vadd.xlane.f32.xlu0 %v2056
    %v2058 = vpop.xlane.xlu0 %2057
    %v2059 = vmul.f32 %v2055, %v1845
    %v2060 = vmul.f32 %v2058, %v1845
    %v2061 = vadd.f32 %v2059, 1e-05
    %v2062 = vadd.f32 %v2060, 1e-05
    %v2063 = vrsqrt.pop %v2061
    %v2064 = vrsqrt.pop %v2062
    %v2065 = vmul.f32 %v2049, %v2063
    %v2066 = vmul.f32 %v2050, %v2064
    %v2068 = vlaneseq
    %v2069 = vshrl.u32 %v2068, 7
    %v2070 = vsub.s32 0, %v2069
    %v2071 = vrot.slane %v2039, %v2070
    %v2073 = vmul.f32 %v2065, %v2071
    %v2074 = vmul.f32 %v2066, %v2071
    %v2076 = vlaneseq
    %v2077 = vshrl.u32 %v2076, 7
    %v2078 = vsub.s32 0, %v2077
    %v2079 = vrot.slane %v2040, %v2078
    %v2081 = vadd.f32 %v2073, %v2079
    %v2082 = vadd.f32 %v2074, %v2079
    %v2083 = vpack.c.bf16 %v2082, %v2081
    %s2084 = scalar_lea.vmem [#allocation8], 16
    %v2085 = vld [vmem:[%s2084] sm:$0xf]
    %v2086 = vld [vmem:[%s2084 + $0x4] sm:$0xf]
    %v2087 = vld [vmem:[%s2084 + $0x8] sm:$0xf]
    %v2088 = vld [vmem:[%s2084 + $0xc] sm:$0xf]
    %s2089 = scalar_lea.vmem [#allocation9], 1
    %v2090 = vld [vmem:[%s2089] sm:$0x1]
    %v2092 = vlaneseq
    %v2093 = vshrl.u32 %v2092, 7
    %v2094 = vsub.s32 0, %v2093
    %v2095 = vrot.slane %v2090, %v2094
    %v2101 = vunpack.c.l.b16 %v2085
    %v2102 = vunpack.c.l.b16 %v2086
    %v2103 = vunpack.c.l.b16 %v2087
    %v2104 = vunpack.c.l.b16 %v2088
    %v2105 = vpack.c.b16 %v2102, %v2101
    %v2106 = vpack.c.b16 %v2104, %v2103
    %v2110 = vsel %vm367, %v2083, 0
    %2112 = vmatprep.subr.bf16.mxu0 0
    %2113 = vmatpush1.bf16.msra.mxu0 %v2105
    %2114 = vmatprep.subr.bf16.mxu0 0
    %2115 = vmatpush1.bf16.msra.mxu0 %v2106
    %2116 = vmatprep.subr.bf16.mxu0 0
    %2117 = vmatpush1.bf16.msra.mxu0 0
    %2118 = vmatprep.subr.bf16.mxu0 0
    %2119 = vmatpush1.bf16.msra.mxu0 0
    %2120 = vmatprep.subr.bf16.mxu0 0
    %2121 = vmatpush1.bf16.msra.mxu0 0
    %2122 = vmatprep.subr.bf16.mxu0 0
    %2123 = vmatpush1.bf16.msra.mxu0 0
    %2124 = vmatprep.subr.bf16.mxu0 0
    %2125 = vmatpush1.bf16.msra.mxu0 0
    %2126 = vmatprep.subr.bf16.mxu0 0
    %2127 = vmatpush1.bf16.msra.mxu0 0
    %2128 = vmatprep.subr.bf16.mxu0 0
    %2129 = vmatpush1.bf16.msra.mxu0 0
    %2130 = vmatprep.subr.bf16.mxu0 0
    %2131 = vmatpush1.bf16.msra.mxu0 0
    %2132 = vmatprep.subr.bf16.mxu0 0
    %2133 = vmatpush1.bf16.msra.mxu0 0
    %2134 = vmatprep.subr.bf16.mxu0 0
    %2135 = vmatpush1.bf16.msra.mxu0 0
    %2136 = vmatprep.subr.bf16.mxu0 0
    %2137 = vmatpush1.bf16.msra.mxu0 0
    %2138 = vmatprep.subr.bf16.mxu0 0
    %2139 = vmatpush1.bf16.msra.mxu0 0
    %2140 = vmatprep.subr.bf16.mxu0 0
    %2141 = vmatpush1.bf16.msra.mxu0 0
    %2142 = vmatprep.subr.bf16.mxu0 0
    %2143 = vmatpush1.bf16.msra.mxu0 0
    %2144 = vmatprep.mubr.bf16.mxu0 0
    %2145 = vmatmul.mubr.bf16.gmra.mrb[0].mxu0 %v2110
    %v2146 = vpop.f32.mrb[0].mxu0
    %v2147 = vadd.f32 %v2095, %v2146
    %v2148 = vpop.f32.mrb[0].mxu0
    %v2149 = vpop.f32.mrb[0].mxu0
    %v2150 = vadd.f32 %v2095, %v2149
    %v2151 = vpop.f32.mrb[0].mxu0
    %2152 = vdwg.mxu0
    %v2153 = vmul.f32 %v2147, 0.35355338
    %v2154 = vmul.f32 %v2150, 0.35355338
    %2156 = vrot.lane.b32.xlu0 %v2147, 96
    %v2157 = vpop.permute.xlu0 %2156
    %v2159 = vsel %vm417, %v2153, 0
    %v2161 = vsel %vm417, %v2157, 0
    %2163 = vmatprep.subr.mxu0 0.0
    %2164 = vmatpush1.xpose.msra.mxu0 %v2161
    %2165 = vmatprep.subr.mxu0 0.0
    %2166 = vmatpush1.xpose.msra.mxu0 0.0
    %2167 = vmatprep.subr.mxu0 0.0
    %2168 = vmatpush1.xpose.msra.mxu0 0.0
    %2169 = vmatprep.subr.mxu0 0.0
    %2170 = vmatpush1.xpose.msra.mxu0 0.0
    %2171 = vmatprep.subr.mxu0 0.0
    %2172 = vmatpush1.xpose.msra.mxu0 0.0
    %2173 = vmatprep.subr.mxu0 0.0
    %2174 = vmatpush1.xpose.msra.mxu0 0.0
    %2175 = vmatprep.subr.mxu0 0.0
    %2176 = vmatpush1.xpose.msra.mxu0 0.0
    %2177 = vmatprep.subr.mxu0 0.0
    %2178 = vmatpush1.xpose.msra.mxu0 0.0
    %2179 = vmatprep.subr.mxu0 0.0
    %2180 = vmatpush1.xpose.msra.mxu0 0.0
    %2181 = vmatprep.subr.mxu0 0.0
    %2182 = vmatpush1.xpose.msra.mxu0 0.0
    %2183 = vmatprep.subr.mxu0 0.0
    %2184 = vmatpush1.xpose.msra.mxu0 0.0
    %2185 = vmatprep.subr.mxu0 0.0
    %2186 = vmatpush1.xpose.msra.mxu0 0.0
    %2187 = vmatprep.subr.mxu0 0.0
    %2188 = vmatpush1.xpose.msra.mxu0 0.0
    %2189 = vmatprep.subr.mxu0 0.0
    %2190 = vmatpush1.xpose.msra.mxu0 0.0
    %2191 = vmatprep.subr.mxu0 0.0
    %2192 = vmatpush1.xpose.msra.mxu0 0.0
    %2193 = vmatprep.subr.mxu0 0.0
    %2194 = vmatpush1.xpose.msra.mxu0 0.0
    %2195 = vmatprep.subr.mxu0 0.0
    %2196 = vmatpush1.xpose.msra.mxu0 0.0
    %2197 = vmatprep.subr.mxu0 0.0
    %2198 = vmatpush1.xpose.msra.mxu0 0.0
    %2199 = vmatprep.subr.mxu0 0.0
    %2200 = vmatpush1.xpose.msra.mxu0 0.0
    %2201 = vmatprep.subr.mxu0 0.0
    %2202 = vmatpush1.xpose.msra.mxu0 0.0
    %2203 = vmatprep.subr.mxu0 0.0
    %2204 = vmatpush1.xpose.msra.mxu0 0.0
    %2205 = vmatprep.subr.mxu0 0.0
    %2206 = vmatpush1.xpose.msra.mxu0 0.0
    %2207 = vmatprep.subr.mxu0 0.0
    %2208 = vmatpush1.xpose.msra.mxu0 0.0
    %2209 = vmatprep.subr.mxu0 0.0
    %2210 = vmatpush1.xpose.msra.mxu0 0.0
    %2211 = vmatprep.subr.mxu0 0.0
    %2212 = vmatpush1.xpose.msra.mxu0 0.0
    %2213 = vmatprep.subr.mxu0 0.0
    %2214 = vmatpush1.xpose.msra.mxu0 0.0
    %2215 = vmatprep.subr.mxu0 0.0
    %2216 = vmatpush1.xpose.msra.mxu0 0.0
    %2217 = vmatprep.subr.mxu0 0.0
    %2218 = vmatpush1.xpose.msra.mxu0 0.0
    %2219 = vmatprep.subr.mxu0 0.0
    %2220 = vmatpush1.xpose.msra.mxu0 0.0
    %2221 = vmatprep.subr.mxu0 0.0
    %2222 = vmatpush1.xpose.msra.mxu0 0.0
    %2223 = vmatprep.subr.mxu0 0.0
    %2224 = vmatpush1.xpose.msra.mxu0 0.0
    %2225 = vmatprep.subr.mxu0 0.0
    %2226 = vmatpush1.xpose.msra.mxu0 0.0
    %2227 = vmatprep.mubr.f32.mxu0 0.0
    %2228 = vmatmul.mubr.f32.gmra.mrb[0].mxu0 %v2159
    %v2229 = vpop.f32.mrb[0].mxu0
    %v2230 = vadd.f32 0.0, %v2229
    %v2231 = vpop.f32.mrb[0].mxu0
    %2232 = vdwg.mxu0
    %2234 = vrot.lane.b32.xlu0 %v2150, 96
    %v2235 = vpop.permute.xlu0 %2234
    %v2237 = vsel %vm417, %v2154, 0
    %v2239 = vsel %vm417, %v2235, 0
    %2241 = vmatprep.subr.mxu0 0.0
    %2242 = vmatpush1.xpose.msra.mxu0 %v2239
    %2243 = vmatprep.subr.mxu0 0.0
    %2244 = vmatpush1.xpose.msra.mxu0 0.0
    %2245 = vmatprep.subr.mxu0 0.0
    %2246 = vmatpush1.xpose.msra.mxu0 0.0
    %2247 = vmatprep.subr.mxu0 0.0
    %2248 = vmatpush1.xpose.msra.mxu0 0.0
    %2249 = vmatprep.subr.mxu0 0.0
    %2250 = vmatpush1.xpose.msra.mxu0 0.0
    %2251 = vmatprep.subr.mxu0 0.0
    %2252 = vmatpush1.xpose.msra.mxu0 0.0
    %2253 = vmatprep.subr.mxu0 0.0
    %2254 = vmatpush1.xpose.msra.mxu0 0.0
    %2255 = vmatprep.subr.mxu0 0.0
    %2256 = vmatpush1.xpose.msra.mxu0 0.0
    %2257 = vmatprep.subr.mxu0 0.0
    %2258 = vmatpush1.xpose.msra.mxu0 0.0
    %2259 = vmatprep.subr.mxu0 0.0
    %2260 = vmatpush1.xpose.msra.mxu0 0.0
    %2261 = vmatprep.subr.mxu0 0.0
    %2262 = vmatpush1.xpose.msra.mxu0 0.0
    %2263 = vmatprep.subr.mxu0 0.0
    %2264 = vmatpush1.xpose.msra.mxu0 0.0
    %2265 = vmatprep.subr.mxu0 0.0
    %2266 = vmatpush1.xpose.msra.mxu0 0.0
    %2267 = vmatprep.subr.mxu0 0.0
    %2268 = vmatpush1.xpose.msra.mxu0 0.0
    %2269 = vmatprep.subr.mxu0 0.0
    %2270 = vmatpush1.xpose.msra.mxu0 0.0
    %2271 = vmatprep.subr.mxu0 0.0
    %2272 = vmatpush1.xpose.msra.mxu0 0.0
    %2273 = vmatprep.subr.mxu0 0.0
    %2274 = vmatpush1.xpose.msra.mxu0 0.0
    %2275 = vmatprep.subr.mxu0 0.0
    %2276 = vmatpush1.xpose.msra.mxu0 0.0
    %2277 = vmatprep.subr.mxu0 0.0
    %2278 = vmatpush1.xpose.msra.mxu0 0.0
    %2279 = vmatprep.subr.mxu0 0.0
    %2280 = vmatpush1.xpose.msra.mxu0 0.0
    %2281 = vmatprep.subr.mxu0 0.0
    %2282 = vmatpush1.xpose.msra.mxu0 0.0
    %2283 = vmatprep.subr.mxu0 0.0
    %2284 = vmatpush1.xpose.msra.mxu0 0.0
    %2285 = vmatprep.subr.mxu0 0.0
    %2286 = vmatpush1.xpose.msra.mxu0 0.0
    %2287 = vmatprep.subr.mxu0 0.0
    %2288 = vmatpush1.xpose.msra.mxu0 0.0
    %2289 = vmatprep.subr.mxu0 0.0
    %2290 = vmatpush1.xpose.msra.mxu0 0.0
    %2291 = vmatprep.subr.mxu0 0.0
    %2292 = vmatpush1.xpose.msra.mxu0 0.0
    %2293 = vmatprep.subr.mxu0 0.0
    %2294 = vmatpush1.xpose.msra.mxu0 0.0
    %2295 = vmatprep.subr.mxu0 0.0
    %2296 = vmatpush1.xpose.msra.mxu0 0.0
    %2297 = vmatprep.subr.mxu0 0.0
    %2298 = vmatpush1.xpose.msra.mxu0 0.0
    %2299 = vmatprep.subr.mxu0 0.0
    %2300 = vmatpush1.xpose.msra.mxu0 0.0
    %2301 = vmatprep.subr.mxu0 0.0
    %2302 = vmatpush1.xpose.msra.mxu0 0.0
    %2303 = vmatprep.subr.mxu0 0.0
    %2304 = vmatpush1.xpose.msra.mxu0 0.0
    %2305 = vmatprep.mubr.f32.mxu0 0.0
    %2306 = vmatmul.mubr.f32.gmra.mrb[0].mxu0 %v2237
    %v2307 = vpop.f32.mrb[0].mxu0
    %v2308 = vadd.f32 0.0, %v2307
    %v2309 = vpop.f32.mrb[0].mxu0
    %2310 = vdwg.mxu0
    %v2311 = vsel %vm417, %v2230, -inf
    %2312 = vmax.xlane.f32.xlu0 %v2311
    %v2313 = vpop.xlane.xlu0 %2312
    %v2314 = vsel %vm417, %v2308, -inf
    %2315 = vmax.xlane.f32.xlu0 %v2314
    %v2316 = vpop.xlane.xlu0 %2315
    %v2317 = vsub.f32 %v2230, %v2313
    %v2318 = vsub.f32 %v2308, %v2316
    %v2319 = vmul.f32 %v2317, 1.442695
    %v2320 = vpow.pop %v2319
    %v2321 = vmul.f32 %v2318, 1.442695
    %v2322 = vpow.pop %v2321
    %v2323 = vsel %vm417, %v2320, 0.0
    %2324 = vadd.xlane.f32.xlu0 %v2323
    %v2325 = vpop.xlane.xlu0 %2324
    %v2326 = vsel %vm417, %v2322, 0.0
    %2327 = vadd.xlane.f32.xlu0 %v2326
    %v2328 = vpop.xlane.xlu0 %2327
    %v2329 = vrcp.pop %v2325
    %v2330 = vrcp.pop %v2328
    %v2331 = vmul.f32 %v2320, %v2329
    %v2332 = vmul.f32 %v2322, %v2330
    %2333 = vrot.lane.b32.xlu0 %v2147, 64
    %v2334 = vpop.permute.xlu0 %2333
    %v2337 = vsel %vm417, %v2331, 0
    %2339 = vmatprep.subr.mxu0 0.0
    %2340 = vmatpush1.msra.mxu0 %v2334
    %2341 = vmatprep.subr.mxu0 0.0
    %2342 = vmatpush1.msra.mxu0 0.0
    %2343 = vmatprep.subr.mxu0 0.0
    %2344 = vmatpush1.msra.mxu0 0.0
    %2345 = vmatprep.subr.mxu0 0.0
    %2346 = vmatpush1.msra.mxu0 0.0
    %2347 = vmatprep.subr.mxu0 0.0
    %2348 = vmatpush1.msra.mxu0 0.0
    %2349 = vmatprep.subr.mxu0 0.0
    %2350 = vmatpush1.msra.mxu0 0.0
    %2351 = vmatprep.subr.mxu0 0.0
    %2352 = vmatpush1.msra.mxu0 0.0
    %2353 = vmatprep.subr.mxu0 0.0
    %2354 = vmatpush1.msra.mxu0 0.0
    %2355 = vmatprep.subr.mxu0 0.0
    %2356 = vmatpush1.msra.mxu0 0.0
    %2357 = vmatprep.subr.mxu0 0.0
    %2358 = vmatpush1.msra.mxu0 0.0
    %2359 = vmatprep.subr.mxu0 0.0
    %2360 = vmatpush1.msra.mxu0 0.0
    %2361 = vmatprep.subr.mxu0 0.0
    %2362 = vmatpush1.msra.mxu0 0.0
    %2363 = vmatprep.subr.mxu0 0.0
    %2364 = vmatpush1.msra.mxu0 0.0
    %2365 = vmatprep.subr.mxu0 0.0
    %2366 = vmatpush1.msra.mxu0 0.0
    %2367 = vmatprep.subr.mxu0 0.0
    %2368 = vmatpush1.msra.mxu0 0.0
    %2369 = vmatprep.subr.mxu0 0.0
    %2370 = vmatpush1.msra.mxu0 0.0
    %2371 = vmatprep.subr.mxu0 0.0
    %2372 = vmatpush1.msra.mxu0 0.0
    %2373 = vmatprep.subr.mxu0 0.0
    %2374 = vmatpush1.msra.mxu0 0.0
    %2375 = vmatprep.subr.mxu0 0.0
    %2376 = vmatpush1.msra.mxu0 0.0
    %2377 = vmatprep.subr.mxu0 0.0
    %2378 = vmatpush1.msra.mxu0 0.0
    %2379 = vmatprep.subr.mxu0 0.0
    %2380 = vmatpush1.msra.mxu0 0.0
    %2381 = vmatprep.subr.mxu0 0.0
    %2382 = vmatpush1.msra.mxu0 0.0
    %2383 = vmatprep.subr.mxu0 0.0
    %2384 = vmatpush1.msra.mxu0 0.0
    %2385 = vmatprep.subr.mxu0 0.0
    %2386 = vmatpush1.msra.mxu0 0.0
    %2387 = vmatprep.subr.mxu0 0.0
    %2388 = vmatpush1.msra.mxu0 0.0
    %2389 = vmatprep.subr.mxu0 0.0
    %2390 = vmatpush1.msra.mxu0 0.0
    %2391 = vmatprep.subr.mxu0 0.0
    %2392 = vmatpush1.msra.mxu0 0.0
    %2393 = vmatprep.subr.mxu0 0.0
    %2394 = vmatpush1.msra.mxu0 0.0
    %2395 = vmatprep.subr.mxu0 0.0
    %2396 = vmatpush1.msra.mxu0 0.0
    %2397 = vmatprep.subr.mxu0 0.0
    %2398 = vmatpush1.msra.mxu0 0.0
    %2399 = vmatprep.subr.mxu0 0.0
    %2400 = vmatpush1.msra.mxu0 0.0
    %2401 = vmatprep.subr.mxu0 0.0
    %2402 = vmatpush1.msra.mxu0 0.0
    %2403 = vmatprep.mubr.f32.mxu0 0.0
    %2404 = vmatmul.mubr.f32.gmra.mrb[0].mxu0 %v2337
    %v2405 = vpop.f32.mrb[0].mxu0
    %v2406 = vadd.f32 0.0, %v2405
    %v2407 = vpop.f32.mrb[0].mxu0
    %2408 = vdwg.mxu0
    %2409 = vrot.lane.b32.xlu0 %v2150, 64
    %v2410 = vpop.permute.xlu0 %2409
    %v2413 = vsel %vm417, %v2332, 0
    %2415 = vmatprep.subr.mxu0 0.0
    %2416 = vmatpush1.msra.mxu0 %v2410
    %2417 = vmatprep.subr.mxu0 0.0
    %2418 = vmatpush1.msra.mxu0 0.0
    %2419 = vmatprep.subr.mxu0 0.0
    %2420 = vmatpush1.msra.mxu0 0.0
    %2421 = vmatprep.subr.mxu0 0.0
    %2422 = vmatpush1.msra.mxu0 0.0
    %2423 = vmatprep.subr.mxu0 0.0
    %2424 = vmatpush1.msra.mxu0 0.0
    %2425 = vmatprep.subr.mxu0 0.0
    %2426 = vmatpush1.msra.mxu0 0.0
    %2427 = vmatprep.subr.mxu0 0.0
    %2428 = vmatpush1.msra.mxu0 0.0
    %2429 = vmatprep.subr.mxu0 0.0
    %2430 = vmatpush1.msra.mxu0 0.0
    %2431 = vmatprep.subr.mxu0 0.0
    %2432 = vmatpush1.msra.mxu0 0.0
    %2433 = vmatprep.subr.mxu0 0.0
    %2434 = vmatpush1.msra.mxu0 0.0
    %2435 = vmatprep.subr.mxu0 0.0
    %2436 = vmatpush1.msra.mxu0 0.0
    %2437 = vmatprep.subr.mxu0 0.0
    %2438 = vmatpush1.msra.mxu0 0.0
    %2439 = vmatprep.subr.mxu0 0.0
    %2440 = vmatpush1.msra.mxu0 0.0
    %2441 = vmatprep.subr.mxu0 0.0
    %2442 = vmatpush1.msra.mxu0 0.0
    %2443 = vmatprep.subr.mxu0 0.0
    %2444 = vmatpush1.msra.mxu0 0.0
    %2445 = vmatprep.subr.mxu0 0.0
    %2446 = vmatpush1.msra.mxu0 0.0
    %2447 = vmatprep.subr.mxu0 0.0
    %2448 = vmatpush1.msra.mxu0 0.0
    %2449 = vmatprep.subr.mxu0 0.0
    %2450 = vmatpush1.msra.mxu0 0.0
    %2451 = vmatprep.subr.mxu0 0.0
    %2452 = vmatpush1.msra.mxu0 0.0
    %2453 = vmatprep.subr.mxu0 0.0
    %2454 = vmatpush1.msra.mxu0 0.0
    %2455 = vmatprep.subr.mxu0 0.0
    %2456 = vmatpush1.msra.mxu0 0.0
    %2457 = vmatprep.subr.mxu0 0.0
    %2458 = vmatpush1.msra.mxu0 0.0
    %2459 = vmatprep.subr.mxu0 0.0
    %2460 = vmatpush1.msra.mxu0 0.0
    %2461 = vmatprep.subr.mxu0 0.0
    %2462 = vmatpush1.msra.mxu0 0.0
    %2463 = vmatprep.subr.mxu0 0.0
    %2464 = vmatpush1.msra.mxu0 0.0
    %2465 = vmatprep.subr.mxu0 0.0
    %2466 = vmatpush1.msra.mxu0 0.0
    %2467 = vmatprep.subr.mxu0 0.0
    %2468 = vmatpush1.msra.mxu0 0.0
    %2469 = vmatprep.subr.mxu0 0.0
    %2470 = vmatpush1.msra.mxu0 0.0
    %2471 = vmatprep.subr.mxu0 0.0
    %2472 = vmatpush1.msra.mxu0 0.0
    %2473 = vmatprep.subr.mxu0 0.0
    %2474 = vmatpush1.msra.mxu0 0.0
    %2475 = vmatprep.subr.mxu0 0.0
    %2476 = vmatpush1.msra.mxu0 0.0
    %2477 = vmatprep.subr.mxu0 0.0
    %2478 = vmatpush1.msra.mxu0 0.0
    %2479 = vmatprep.mubr.f32.mxu0 0.0
    %2480 = vmatmul.mubr.f32.gmra.mrb[0].mxu0 %v2413
    %v2481 = vpop.f32.mrb[0].mxu0
    %v2482 = vadd.f32 0.0, %v2481
    %v2483 = vpop.f32.mrb[0].mxu0
    %2484 = vdwg.mxu0
    %2485 = vrot.lane.b32.xlu0 %v2153, 120
    %v2486 = vpop.permute.xlu0 %2485
    %2487 = vrot.lane.b32.xlu0 %v2147, 88
    %v2488 = vpop.permute.xlu0 %2487
    %v2489 = vsel %vm417, %v2486, 0
    %v2491 = vsel %vm417, %v2488, 0
    %2493 = vmatprep.subr.mxu0 0.0
    %2494 = vmatpush1.xpose.msra.mxu0 %v2491
    %2495 = vmatprep.subr.mxu0 0.0
    %2496 = vmatpush1.xpose.msra.mxu0 0.0
    %2497 = vmatprep.subr.mxu0 0.0
    %2498 = vmatpush1.xpose.msra.mxu0 0.0
    %2499 = vmatprep.subr.mxu0 0.0
    %2500 = vmatpush1.xpose.msra.mxu0 0.0
    %2501 = vmatprep.subr.mxu0 0.0
    %2502 = vmatpush1.xpose.msra.mxu0 0.0
    %2503 = vmatprep.subr.mxu0 0.0
    %2504 = vmatpush1.xpose.msra.mxu0 0.0
    %2505 = vmatprep.subr.mxu0 0.0
    %2506 = vmatpush1.xpose.msra.mxu0 0.0
    %2507 = vmatprep.subr.mxu0 0.0
    %2508 = vmatpush1.xpose.msra.mxu0 0.0
    %2509 = vmatprep.subr.mxu0 0.0
    %2510 = vmatpush1.xpose.msra.mxu0 0.0
    %2511 = vmatprep.subr.mxu0 0.0
    %2512 = vmatpush1.xpose.msra.mxu0 0.0
    %2513 = vmatprep.subr.mxu0 0.0
    %2514 = vmatpush1.xpose.msra.mxu0 0.0
    %2515 = vmatprep.subr.mxu0 0.0
    %2516 = vmatpush1.xpose.msra.mxu0 0.0
    %2517 = vmatprep.subr.mxu0 0.0
    %2518 = vmatpush1.xpose.msra.mxu0 0.0
    %2519 = vmatprep.subr.mxu0 0.0
    %2520 = vmatpush1.xpose.msra.mxu0 0.0
    %2521 = vmatprep.subr.mxu0 0.0
    %2522 = vmatpush1.xpose.msra.mxu0 0.0
    %2523 = vmatprep.subr.mxu0 0.0
    %2524 = vmatpush1.xpose.msra.mxu0 0.0
    %2525 = vmatprep.subr.mxu0 0.0
    %2526 = vmatpush1.xpose.msra.mxu0 0.0
    %2527 = vmatprep.subr.mxu0 0.0
    %2528 = vmatpush1.xpose.msra.mxu0 0.0
    %2529 = vmatprep.subr.mxu0 0.0
    %2530 = vmatpush1.xpose.msra.mxu0 0.0
    %2531 = vmatprep.subr.mxu0 0.0
    %2532 = vmatpush1.xpose.msra.mxu0 0.0
    %2533 = vmatprep.subr.mxu0 0.0
    %2534 = vmatpush1.xpose.msra.mxu0 0.0
    %2535 = vmatprep.subr.mxu0 0.0
    %2536 = vmatpush1.xpose.msra.mxu0 0.0
    %2537 = vmatprep.subr.mxu0 0.0
    %2538 = vmatpush1.xpose.msra.mxu0 0.0
    %2539 = vmatprep.subr.mxu0 0.0
    %2540 = vmatpush1.xpose.msra.mxu0 0.0
    %2541 = vmatprep.subr.mxu0 0.0
    %2542 = vmatpush1.xpose.msra.mxu0 0.0
    %2543 = vmatprep.subr.mxu0 0.0
    %2544 = vmatpush1.xpose.msra.mxu0 0.0
    %2545 = vmatprep.subr.mxu0 0.0
    %2546 = vmatpush1.xpose.msra.mxu0 0.0
    %2547 = vmatprep.subr.mxu0 0.0
    %2548 = vmatpush1.xpose.msra.mxu0 0.0
    %2549 = vmatprep.subr.mxu0 0.0
    %2550 = vmatpush1.xpose.msra.mxu0 0.0
    %2551 = vmatprep.subr.mxu0 0.0
    %2552 = vmatpush1.xpose.msra.mxu0 0.0
    %2553 = vmatprep.subr.mxu0 0.0
    %2554 = vmatpush1.xpose.msra.mxu0 0.0
    %2555 = vmatprep.subr.mxu0 0.0
    %2556 = vmatpush1.xpose.msra.mxu0 0.0
    %2557 = vmatprep.mubr.f32.mxu0 0.0
    %2558 = vmatmul.mubr.f32.gmra.mrb[0].mxu0 %v2489
    %v2559 = vpop.f32.mrb[0].mxu0
    %v2560 = vadd.f32 0.0, %v2559
    %v2561 = vpop.f32.mrb[0].mxu0
    %2562 = vdwg.mxu0
    %2563 = vrot.lane.b32.xlu0 %v2154, 120
    %v2564 = vpop.permute.xlu0 %2563
    %2565 = vrot.lane.b32.xlu0 %v2150, 88
    %v2566 = vpop.permute.xlu0 %2565
    %v2567 = vsel %vm417, %v2564, 0
    %v2569 = vsel %vm417, %v2566, 0
    %2571 = vmatprep.subr.mxu0 0.0
    %2572 = vmatpush1.xpose.msra.mxu0 %v2569
    %2573 = vmatprep.subr.mxu0 0.0
    %2574 = vmatpush1.xpose.msra.mxu0 0.0
    %2575 = vmatprep.subr.mxu0 0.0
    %2576 = vmatpush1.xpose.msra.mxu0 0.0
    %2577 = vmatprep.subr.mxu0 0.0
    %2578 = vmatpush1.xpose.msra.mxu0 0.0
    %2579 = vmatprep.subr.mxu0 0.0
    %2580 = vmatpush1.xpose.msra.mxu0 0.0
    %2581 = vmatprep.subr.mxu0 0.0
    %2582 = vmatpush1.xpose.msra.mxu0 0.0
    %2583 = vmatprep.subr.mxu0 0.0
    %2584 = vmatpush1.xpose.msra.mxu0 0.0
    %2585 = vmatprep.subr.mxu0 0.0
    %2586 = vmatpush1.xpose.msra.mxu0 0.0
    %2587 = vmatprep.subr.mxu0 0.0
    %2588 = vmatpush1.xpose.msra.mxu0 0.0
    %2589 = vmatprep.subr.mxu0 0.0
    %2590 = vmatpush1.xpose.msra.mxu0 0.0
    %2591 = vmatprep.subr.mxu0 0.0
    %2592 = vmatpush1.xpose.msra.mxu0 0.0
    %2593 = vmatprep.subr.mxu0 0.0
    %2594 = vmatpush1.xpose.msra.mxu0 0.0
    %2595 = vmatprep.subr.mxu0 0.0
    %2596 = vmatpush1.xpose.msra.mxu0 0.0
    %2597 = vmatprep.subr.mxu0 0.0
    %2598 = vmatpush1.xpose.msra.mxu0 0.0
    %2599 = vmatprep.subr.mxu0 0.0
    %2600 = vmatpush1.xpose.msra.mxu0 0.0
    %2601 = vmatprep.subr.mxu0 0.0
    %2602 = vmatpush1.xpose.msra.mxu0 0.0
    %2603 = vmatprep.subr.mxu0 0.0
    %2604 = vmatpush1.xpose.msra.mxu0 0.0
    %2605 = vmatprep.subr.mxu0 0.0
    %2606 = vmatpush1.xpose.msra.mxu0 0.0
    %2607 = vmatprep.subr.mxu0 0.0
    %2608 = vmatpush1.xpose.msra.mxu0 0.0
    %2609 = vmatprep.subr.mxu0 0.0
    %2610 = vmatpush1.xpose.msra.mxu0 0.0
    %2611 = vmatprep.subr.mxu0 0.0
    %2612 = vmatpush1.xpose.msra.mxu0 0.0
    %2613 = vmatprep.subr.mxu0 0.0
    %2614 = vmatpush1.xpose.msra.mxu0 0.0
    %2615 = vmatprep.subr.mxu0 0.0
    %2616 = vmatpush1.xpose.msra.mxu0 0.0
    %2617 = vmatprep.subr.mxu0 0.0
    %2618 = vmatpush1.xpose.msra.mxu0 0.0
    %2619 = vmatprep.subr.mxu0 0.0
    %2620 = vmatpush1.xpose.msra.mxu0 0.0
    %2621 = vmatprep.subr.mxu0 0.0
    %2622 = vmatpush1.xpose.msra.mxu0 0.0
    %2623 = vmatprep.subr.mxu0 0.0
    %2624 = vmatpush1.xpose.msra.mxu0 0.0
    %2625 = vmatprep.subr.mxu0 0.0
    %2626 = vmatpush1.xpose.msra.mxu0 0.0
    %2627 = vmatprep.subr.mxu0 0.0
    %2628 = vmatpush1.xpose.msra.mxu0 0.0
    %2629 = vmatprep.subr.mxu0 0.0
    %2630 = vmatpush1.xpose.msra.mxu0 0.0
    %2631 = vmatprep.subr.mxu0 0.0
    %2632 = vmatpush1.xpose.msra.mxu0 0.0
    %2633 = vmatprep.subr.mxu0 0.0
    %2634 = vmatpush1.xpose.msra.mxu0 0.0
    %2635 = vmatprep.mubr.f32.mxu0 0.0
    %2636 = vmatmul.mubr.f32.gmra.mrb[0].mxu0 %v2567
    %v2637 = vpop.f32.mrb[0].mxu0
    %v2638 = vadd.f32 0.0, %v2637
    %v2639 = vpop.f32.mrb[0].mxu0
    %2640 = vdwg.mxu0
    %v2641 = vsel %vm417, %v2560, -inf
    %2642 = vmax.xlane.f32.xlu0 %v2641
    %v2643 = vpop.xlane.xlu0 %2642
    %v2644 = vsel %vm417, %v2638, -inf
    %2645 = vmax.xlane.f32.xlu0 %v2644
    %v2646 = vpop.xlane.xlu0 %2645
    %v2647 = vsub.f32 %v2560, %v2643
    %v2648 = vsub.f32 %v2638, %v2646
    %v2649 = vmul.f32 %v2647, 1.442695
    %v2650 = vpow.pop %v2649
    %v2651 = vmul.f32 %v2648, 1.442695
    %v2652 = vpow.pop %v2651
    %v2653 = vsel %vm417, %v2650, 0.0
    %2654 = vadd.xlane.f32.xlu0 %v2653
    %v2655 = vpop.xlane.xlu0 %2654
    %v2656 = vsel %vm417, %v2652, 0.0
    %2657 = vadd.xlane.f32.xlu0 %v2656
    %v2658 = vpop.xlane.xlu0 %2657
    %v2659 = vrcp.pop %v2655
    %v2660 = vrcp.pop %v2658
    %v2661 = vmul.f32 %v2650, %v2659
    %v2662 = vmul.f32 %v2652, %v2660
    %2663 = vrot.lane.b32.xlu0 %v2147, 56
    %v2664 = vpop.permute.xlu0 %2663
    %v2667 = vsel %vm417, %v2661, 0
    %2669 = vmatprep.subr.mxu0 0.0
    %2670 = vmatpush1.msra.mxu0 %v2664
    %2671 = vmatprep.subr.mxu0 0.0
    %2672 = vmatpush1.msra.mxu0 0.0
    %2673 = vmatprep.subr.mxu0 0.0
    %2674 = vmatpush1.msra.mxu0 0.0
    %2675 = vmatprep.subr.mxu0 0.0
    %2676 = vmatpush1.msra.mxu0 0.0
    %2677 = vmatprep.subr.mxu0 0.0
    %2678 = vmatpush1.msra.mxu0 0.0
    %2679 = vmatprep.subr.mxu0 0.0
    %2680 = vmatpush1.msra.mxu0 0.0
    %2681 = vmatprep.subr.mxu0 0.0
    %2682 = vmatpush1.msra.mxu0 0.0
    %2683 = vmatprep.subr.mxu0 0.0
    %2684 = vmatpush1.msra.mxu0 0.0
    %2685 = vmatprep.subr.mxu0 0.0
    %2686 = vmatpush1.msra.mxu0 0.0
    %2687 = vmatprep.subr.mxu0 0.0
    %2688 = vmatpush1.msra.mxu0 0.0
    %2689 = vmatprep.subr.mxu0 0.0
    %2690 = vmatpush1.msra.mxu0 0.0
    %2691 = vmatprep.subr.mxu0 0.0
    %2692 = vmatpush1.msra.mxu0 0.0
    %2693 = vmatprep.subr.mxu0 0.0
    %2694 = vmatpush1.msra.mxu0 0.0
    %2695 = vmatprep.subr.mxu0 0.0
    %2696 = vmatpush1.msra.mxu0 0.0
    %2697 = vmatprep.subr.mxu0 0.0
    %2698 = vmatpush1.msra.mxu0 0.0
    %2699 = vmatprep.subr.mxu0 0.0
    %2700 = vmatpush1.msra.mxu0 0.0
    %2701 = vmatprep.subr.mxu0 0.0
    %2702 = vmatpush1.msra.mxu0 0.0
    %2703 = vmatprep.subr.mxu0 0.0
    %2704 = vmatpush1.msra.mxu0 0.0
    %2705 = vmatprep.subr.mxu0 0.0
    %2706 = vmatpush1.msra.mxu0 0.0
    %2707 = vmatprep.subr.mxu0 0.0
    %2708 = vmatpush1.msra.mxu0 0.0
    %2709 = vmatprep.subr.mxu0 0.0
    %2710 = vmatpush1.msra.mxu0 0.0
    %2711 = vmatprep.subr.mxu0 0.0
    %2712 = vmatpush1.msra.mxu0 0.0
    %2713 = vmatprep.subr.mxu0 0.0
    %2714 = vmatpush1.msra.mxu0 0.0
    %2715 = vmatprep.subr.mxu0 0.0
    %2716 = vmatpush1.msra.mxu0 0.0
    %2717 = vmatprep.subr.mxu0 0.0
    %2718 = vmatpush1.msra.mxu0 0.0
    %2719 = vmatprep.subr.mxu0 0.0
    %2720 = vmatpush1.msra.mxu0 0.0
    %2721 = vmatprep.subr.mxu0 0.0
    %2722 = vmatpush1.msra.mxu0 0.0
    %2723 = vmatprep.subr.mxu0 0.0
    %2724 = vmatpush1.msra.mxu0 0.0
    %2725 = vmatprep.subr.mxu0 0.0
    %2726 = vmatpush1.msra.mxu0 0.0
    %2727 = vmatprep.subr.mxu0 0.0
    %2728 = vmatpush1.msra.mxu0 0.0
    %2729 = vmatprep.subr.mxu0 0.0
    %2730 = vmatpush1.msra.mxu0 0.0
    %2731 = vmatprep.subr.mxu0 0.0
    %2732 = vmatpush1.msra.mxu0 0.0
    %2733 = vmatprep.mubr.f32.mxu0 0.0
    %2734 = vmatmul.mubr.f32.gmra.mrb[0].mxu0 %v2667
    %v2735 = vpop.f32.mrb[0].mxu0
    %v2736 = vadd.f32 0.0, %v2735
    %v2737 = vpop.f32.mrb[0].mxu0
    %2738 = vdwg.mxu0
    %2739 = vrot.lane.b32.xlu0 %v2150, 56
    %v2740 = vpop.permute.xlu0 %2739
    %v2743 = vsel %vm417, %v2662, 0
    %2745 = vmatprep.subr.mxu0 0.0
    %2746 = vmatpush1.msra.mxu0 %v2740
    %2747 = vmatprep.subr.mxu0 0.0
    %2748 = vmatpush1.msra.mxu0 0.0
    %2749 = vmatprep.subr.mxu0 0.0
    %2750 = vmatpush1.msra.mxu0 0.0
    %2751 = vmatprep.subr.mxu0 0.0
    %2752 = vmatpush1.msra.mxu0 0.0
    %2753 = vmatprep.subr.mxu0 0.0
    %2754 = vmatpush1.msra.mxu0 0.0
    %2755 = vmatprep.subr.mxu0 0.0
    %2756 = vmatpush1.msra.mxu0 0.0
    %2757 = vmatprep.subr.mxu0 0.0
    %2758 = vmatpush1.msra.mxu0 0.0
    %2759 = vmatprep.subr.mxu0 0.0
    %2760 = vmatpush1.msra.mxu0 0.0
    %2761 = vmatprep.subr.mxu0 0.0
    %2762 = vmatpush1.msra.mxu0 0.0
    %2763 = vmatprep.subr.mxu0 0.0
    %2764 = vmatpush1.msra.mxu0 0.0
    %2765 = vmatprep.subr.mxu0 0.0
    %2766 = vmatpush1.msra.mxu0 0.0
    %2767 = vmatprep.subr.mxu0 0.0
    %2768 = vmatpush1.msra.mxu0 0.0
    %2769 = vmatprep.subr.mxu0 0.0
    %2770 = vmatpush1.msra.mxu0 0.0
    %2771 = vmatprep.subr.mxu0 0.0
    %2772 = vmatpush1.msra.mxu0 0.0
    %2773 = vmatprep.subr.mxu0 0.0
    %2774 = vmatpush1.msra.mxu0 0.0
    %2775 = vmatprep.subr.mxu0 0.0
    %2776 = vmatpush1.msra.mxu0 0.0
    %2777 = vmatprep.subr.mxu0 0.0
    %2778 = vmatpush1.msra.mxu0 0.0
    %2779 = vmatprep.subr.mxu0 0.0
    %2780 = vmatpush1.msra.mxu0 0.0
    %2781 = vmatprep.subr.mxu0 0.0
    %2782 = vmatpush1.msra.mxu0 0.0
    %2783 = vmatprep.subr.mxu0 0.0
    %2784 = vmatpush1.msra.mxu0 0.0
    %2785 = vmatprep.subr.mxu0 0.0
    %2786 = vmatpush1.msra.mxu0 0.0
    %2787 = vmatprep.subr.mxu0 0.0
    %2788 = vmatpush1.msra.mxu0 0.0
    %2789 = vmatprep.subr.mxu0 0.0
    %2790 = vmatpush1.msra.mxu0 0.0
    %2791 = vmatprep.subr.mxu0 0.0
    %2792 = vmatpush1.msra.mxu0 0.0
    %2793 = vmatprep.subr.mxu0 0.0
    %2794 = vmatpush1.msra.mxu0 0.0
    %2795 = vmatprep.subr.mxu0 0.0
    %2796 = vmatpush1.msra.mxu0 0.0
    %2797 = vmatprep.subr.mxu0 0.0
    %2798 = vmatpush1.msra.mxu0 0.0
    %2799 = vmatprep.subr.mxu0 0.0
    %2800 = vmatpush1.msra.mxu0 0.0
    %2801 = vmatprep.subr.mxu0 0.0
    %2802 = vmatpush1.msra.mxu0 0.0
    %2803 = vmatprep.subr.mxu0 0.0
    %2804 = vmatpush1.msra.mxu0 0.0
    %2805 = vmatprep.subr.mxu0 0.0
    %2806 = vmatpush1.msra.mxu0 0.0
    %2807 = vmatprep.subr.mxu0 0.0
    %2808 = vmatpush1.msra.mxu0 0.0
    %2809 = vmatprep.mubr.f32.mxu0 0.0
    %2810 = vmatmul.mubr.f32.gmra.mrb[0].mxu0 %v2743
    %v2811 = vpop.f32.mrb[0].mxu0
    %v2812 = vadd.f32 0.0, %v2811
    %v2813 = vpop.f32.mrb[0].mxu0
    %2814 = vdwg.mxu0
    %2815 = vrot.lane.b32.xlu0 %v2153, 112
    %v2816 = vpop.permute.xlu0 %2815
    %2817 = vrot.lane.b32.xlu0 %v2147, 80
    %v2818 = vpop.permute.xlu0 %2817
    %v2819 = vsel %vm417, %v2816, 0
    %v2821 = vsel %vm417, %v2818, 0
    %2823 = vmatprep.subr.mxu0 0.0
    %2824 = vmatpush1.xpose.msra.mxu0 %v2821
    %2825 = vmatprep.subr.mxu0 0.0
    %2826 = vmatpush1.xpose.msra.mxu0 0.0
    %2827 = vmatprep.subr.mxu0 0.0
    %2828 = vmatpush1.xpose.msra.mxu0 0.0
    %2829 = vmatprep.subr.mxu0 0.0
    %2830 = vmatpush1.xpose.msra.mxu0 0.0
    %2831 = vmatprep.subr.mxu0 0.0
    %2832 = vmatpush1.xpose.msra.mxu0 0.0
    %2833 = vmatprep.subr.mxu0 0.0
    %2834 = vmatpush1.xpose.msra.mxu0 0.0
    %2835 = vmatprep.subr.mxu0 0.0
    %2836 = vmatpush1.xpose.msra.mxu0 0.0
    %2837 = vmatprep.subr.mxu0 0.0
    %2838 = vmatpush1.xpose.msra.mxu0 0.0
    %2839 = vmatprep.subr.mxu0 0.0
    %2840 = vmatpush1.xpose.msra.mxu0 0.0
    %2841 = vmatprep.subr.mxu0 0.0
    %2842 = vmatpush1.xpose.msra.mxu0 0.0
    %2843 = vmatprep.subr.mxu0 0.0
    %2844 = vmatpush1.xpose.msra.mxu0 0.0
    %2845 = vmatprep.subr.mxu0 0.0
    %2846 = vmatpush1.xpose.msra.mxu0 0.0
    %2847 = vmatprep.subr.mxu0 0.0
    %2848 = vmatpush1.xpose.msra.mxu0 0.0
    %2849 = vmatprep.subr.mxu0 0.0
    %2850 = vmatpush1.xpose.msra.mxu0 0.0
    %2851 = vmatprep.subr.mxu0 0.0
    %2852 = vmatpush1.xpose.msra.mxu0 0.0
    %2853 = vmatprep.subr.mxu0 0.0
    %2854 = vmatpush1.xpose.msra.mxu0 0.0
    %2855 = vmatprep.subr.mxu0 0.0
    %2856 = vmatpush1.xpose.msra.mxu0 0.0
    %2857 = vmatprep.subr.mxu0 0.0
    %2858 = vmatpush1.xpose.msra.mxu0 0.0
    %2859 = vmatprep.subr.mxu0 0.0
    %2860 = vmatpush1.xpose.msra.mxu0 0.0
    %2861 = vmatprep.subr.mxu0 0.0
    %2862 = vmatpush1.xpose.msra.mxu0 0.0
    %2863 = vmatprep.subr.mxu0 0.0
    %2864 = vmatpush1.xpose.msra.mxu0 0.0
    %2865 = vmatprep.subr.mxu0 0.0
    %2866 = vmatpush1.xpose.msra.mxu0 0.0
    %2867 = vmatprep.subr.mxu0 0.0
    %2868 = vmatpush1.xpose.msra.mxu0 0.0
    %2869 = vmatprep.subr.mxu0 0.0
    %2870 = vmatpush1.xpose.msra.mxu0 0.0
    %2871 = vmatprep.subr.mxu0 0.0
    %2872 = vmatpush1.xpose.msra.mxu0 0.0
    %2873 = vmatprep.subr.mxu0 0.0
    %2874 = vmatpush1.xpose.msra.mxu0 0.0
    %2875 = vmatprep.subr.mxu0 0.0
    %2876 = vmatpush1.xpose.msra.mxu0 0.0
    %2877 = vmatprep.subr.mxu0 0.0
    %2878 = vmatpush1.xpose.msra.mxu0 0.0
    %2879 = vmatprep.subr.mxu0 0.0
    %2880 = vmatpush1.xpose.msra.mxu0 0.0
    %2881 = vmatprep.subr.mxu0 0.0
    %2882 = vmatpush1.xpose.msra.mxu0 0.0
    %2883 = vmatprep.subr.mxu0 0.0
    %2884 = vmatpush1.xpose.msra.mxu0 0.0
    %2885 = vmatprep.subr.mxu0 0.0
    %2886 = vmatpush1.xpose.msra.mxu0 0.0
    %2887 = vmatprep.mubr.f32.mxu0 0.0
    %2888 = vmatmul.mubr.f32.gmra.mrb[0].mxu0 %v2819
    %v2889 = vpop.f32.mrb[0].mxu0
    %v2890 = vadd.f32 0.0, %v2889
    %v2891 = vpop.f32.mrb[0].mxu0
    %2892 = vdwg.mxu0
    %2893 = vrot.lane.b32.xlu0 %v2154, 112
    %v2894 = vpop.permute.xlu0 %2893
    %2895 = vrot.lane.b32.xlu0 %v2150, 80
    %v2896 = vpop.permute.xlu0 %2895
    %v2897 = vsel %vm417, %v2894, 0
    %v2899 = vsel %vm417, %v2896, 0
    %2901 = vmatprep.subr.mxu0 0.0
    %2902 = vmatpush1.xpose.msra.mxu0 %v2899
    %2903 = vmatprep.subr.mxu0 0.0
    %2904 = vmatpush1.xpose.msra.mxu0 0.0
    %2905 = vmatprep.subr.mxu0 0.0
    %2906 = vmatpush1.xpose.msra.mxu0 0.0
    %2907 = vmatprep.subr.mxu0 0.0
    %2908 = vmatpush1.xpose.msra.mxu0 0.0
    %2909 = vmatprep.subr.mxu0 0.0
    %2910 = vmatpush1.xpose.msra.mxu0 0.0
    %2911 = vmatprep.subr.mxu0 0.0
    %2912 = vmatpush1.xpose.msra.mxu0 0.0
    %2913 = vmatprep.subr.mxu0 0.0
    %2914 = vmatpush1.xpose.msra.mxu0 0.0
    %2915 = vmatprep.subr.mxu0 0.0
    %2916 = vmatpush1.xpose.msra.mxu0 0.0
    %2917 = vmatprep.subr.mxu0 0.0
    %2918 = vmatpush1.xpose.msra.mxu0 0.0
    %2919 = vmatprep.subr.mxu0 0.0
    %2920 = vmatpush1.xpose.msra.mxu0 0.0
    %2921 = vmatprep.subr.mxu0 0.0
    %2922 = vmatpush1.xpose.msra.mxu0 0.0
    %2923 = vmatprep.subr.mxu0 0.0
    %2924 = vmatpush1.xpose.msra.mxu0 0.0
    %2925 = vmatprep.subr.mxu0 0.0
    %2926 = vmatpush1.xpose.msra.mxu0 0.0
    %2927 = vmatprep.subr.mxu0 0.0
    %2928 = vmatpush1.xpose.msra.mxu0 0.0
    %2929 = vmatprep.subr.mxu0 0.0
    %2930 = vmatpush1.xpose.msra.mxu0 0.0
    %2931 = vmatprep.subr.mxu0 0.0
    %2932 = vmatpush1.xpose.msra.mxu0 0.0
    %2933 = vmatprep.subr.mxu0 0.0
    %2934 = vmatpush1.xpose.msra.mxu0 0.0
    %2935 = vmatprep.subr.mxu0 0.0
    %2936 = vmatpush1.xpose.msra.mxu0 0.0
    %2937 = vmatprep.subr.mxu0 0.0
    %2938 = vmatpush1.xpose.msra.mxu0 0.0
    %2939 = vmatprep.subr.mxu0 0.0
    %2940 = vmatpush1.xpose.msra.mxu0 0.0
    %2941 = vmatprep.subr.mxu0 0.0
    %2942 = vmatpush1.xpose.msra.mxu0 0.0
    %2943 = vmatprep.subr.mxu0 0.0
    %2944 = vmatpush1.xpose.msra.mxu0 0.0
    %2945 = vmatprep.subr.mxu0 0.0
    %2946 = vmatpush1.xpose.msra.mxu0 0.0
    %2947 = vmatprep.subr.mxu0 0.0
    %2948 = vmatpush1.xpose.msra.mxu0 0.0
    %2949 = vmatprep.subr.mxu0 0.0
    %2950 = vmatpush1.xpose.msra.mxu0 0.0
    %2951 = vmatprep.subr.mxu0 0.0
    %2952 = vmatpush1.xpose.msra.mxu0 0.0
    %2953 = vmatprep.subr.mxu0 0.0
    %2954 = vmatpush1.xpose.msra.mxu0 0.0
    %2955 = vmatprep.subr.mxu0 0.0
    %2956 = vmatpush1.xpose.msra.mxu0 0.0
    %2957 = vmatprep.subr.mxu0 0.0
    %2958 = vmatpush1.xpose.msra.mxu0 0.0
    %2959 = vmatprep.subr.mxu0 0.0
    %2960 = vmatpush1.xpose.msra.mxu0 0.0
    %2961 = vmatprep.subr.mxu0 0.0
    %2962 = vmatpush1.xpose.msra.mxu0 0.0
    %2963 = vmatprep.subr.mxu0 0.0
    %2964 = vmatpush1.xpose.msra.mxu0 0.0
    %2965 = vmatprep.mubr.f32.mxu0 0.0
    %2966 = vmatmul.mubr.f32.gmra.mrb[0].mxu0 %v2897
    %v2967 = vpop.f32.mrb[0].mxu0
    %v2968 = vadd.f32 0.0, %v2967
    %v2969 = vpop.f32.mrb[0].mxu0
    %2970 = vdwg.mxu0
    %v2971 = vsel %vm417, %v2890, -inf
    %2972 = vmax.xlane.f32.xlu0 %v2971
    %v2973 = vpop.xlane.xlu0 %2972
    %v2974 = vsel %vm417, %v2968, -inf
    %2975 = vmax.xlane.f32.xlu0 %v2974
    %v2976 = vpop.xlane.xlu0 %2975
    %v2977 = vsub.f32 %v2890, %v2973
    %v2978 = vsub.f32 %v2968, %v2976
    %v2979 = vmul.f32 %v2977, 1.442695
    %v2980 = vpow.pop %v2979
    %v2981 = vmul.f32 %v2978, 1.442695
    %v2982 = vpow.pop %v2981
    %v2983 = vsel %vm417, %v2980, 0.0
    %2984 = vadd.xlane.f32.xlu0 %v2983
    %v2985 = vpop.xlane.xlu0 %2984
    %v2986 = vsel %vm417, %v2982, 0.0
    %2987 = vadd.xlane.f32.xlu0 %v2986
    %v2988 = vpop.xlane.xlu0 %2987
    %v2989 = vrcp.pop %v2985
    %v2990 = vrcp.pop %v2988
    %v2991 = vmul.f32 %v2980, %v2989
    %v2992 = vmul.f32 %v2982, %v2990
    %2993 = vrot.lane.b32.xlu0 %v2147, 48
    %v2994 = vpop.permute.xlu0 %2993
    %v2997 = vsel %vm417, %v2991, 0
    %2999 = vmatprep.subr.mxu0 0.0
    %3000 = vmatpush1.msra.mxu0 %v2994
    %3001 = vmatprep.subr.mxu0 0.0
    %3002 = vmatpush1.msra.mxu0 0.0
    %3003 = vmatprep.subr.mxu0 0.0
    %3004 = vmatpush1.msra.mxu0 0.0
    %3005 = vmatprep.subr.mxu0 0.0
    %3006 = vmatpush1.msra.mxu0 0.0
    %3007 = vmatprep.subr.mxu0 0.0
    %3008 = vmatpush1.msra.mxu0 0.0
    %3009 = vmatprep.subr.mxu0 0.0
    %3010 = vmatpush1.msra.mxu0 0.0
    %3011 = vmatprep.subr.mxu0 0.0
    %3012 = vmatpush1.msra.mxu0 0.0
    %3013 = vmatprep.subr.mxu0 0.0
    %3014 = vmatpush1.msra.mxu0 0.0
    %3015 = vmatprep.subr.mxu0 0.0
    %3016 = vmatpush1.msra.mxu0 0.0
    %3017 = vmatprep.subr.mxu0 0.0
    %3018 = vmatpush1.msra.mxu0 0.0
    %3019 = vmatprep.subr.mxu0 0.0
    %3020 = vmatpush1.msra.mxu0 0.0
    %3021 = vmatprep.subr.mxu0 0.0
    %3022 = vmatpush1.msra.mxu0 0.0
    %3023 = vmatprep.subr.mxu0 0.0
    %3024 = vmatpush1.msra.mxu0 0.0
    %3025 = vmatprep.subr.mxu0 0.0
    %3026 = vmatpush1.msra.mxu0 0.0
    %3027 = vmatprep.subr.mxu0 0.0
    %3028 = vmatpush1.msra.mxu0 0.0
    %3029 = vmatprep.subr.mxu0 0.0
    %3030 = vmatpush1.msra.mxu0 0.0
    %3031 = vmatprep.subr.mxu0 0.0
    %3032 = vmatpush1.msra.mxu0 0.0
    %3033 = vmatprep.subr.mxu0 0.0
    %3034 = vmatpush1.msra.mxu0 0.0
    %3035 = vmatprep.subr.mxu0 0.0
    %3036 = vmatpush1.msra.mxu0 0.0
    %3037 = vmatprep.subr.mxu0 0.0
    %3038 = vmatpush1.msra.mxu0 0.0
    %3039 = vmatprep.subr.mxu0 0.0
    %3040 = vmatpush1.msra.mxu0 0.0
    %3041 = vmatprep.subr.mxu0 0.0
    %3042 = vmatpush1.msra.mxu0 0.0
    %3043 = vmatprep.subr.mxu0 0.0
    %3044 = vmatpush1.msra.mxu0 0.0
    %3045 = vmatprep.subr.mxu0 0.0
    %3046 = vmatpush1.msra.mxu0 0.0
    %3047 = vmatprep.subr.mxu0 0.0
    %3048 = vmatpush1.msra.mxu0 0.0
    %3049 = vmatprep.subr.mxu0 0.0
    %3050 = vmatpush1.msra.mxu0 0.0
    %3051 = vmatprep.subr.mxu0 0.0
    %3052 = vmatpush1.msra.mxu0 0.0
    %3053 = vmatprep.subr.mxu0 0.0
    %3054 = vmatpush1.msra.mxu0 0.0
    %3055 = vmatprep.subr.mxu0 0.0
    %3056 = vmatpush1.msra.mxu0 0.0
    %3057 = vmatprep.subr.mxu0 0.0
    %3058 = vmatpush1.msra.mxu0 0.0
    %3059 = vmatprep.subr.mxu0 0.0
    %3060 = vmatpush1.msra.mxu0 0.0
    %3061 = vmatprep.subr.mxu0 0.0
    %3062 = vmatpush1.msra.mxu0 0.0
    %3063 = vmatprep.mubr.f32.mxu0 0.0
    %3064 = vmatmul.mubr.f32.gmra.mrb[0].mxu0 %v2997
    %v3065 = vpop.f32.mrb[0].mxu0
    %v3066 = vadd.f32 0.0, %v3065
    %v3067 = vpop.f32.mrb[0].mxu0
    %3068 = vdwg.mxu0
    %3069 = vrot.lane.b32.xlu0 %v2150, 48
    %v3070 = vpop.permute.xlu0 %3069
    %v3073 = vsel %vm417, %v2992, 0
    %3075 = vmatprep.subr.mxu0 0.0
    %3076 = vmatpush1.msra.mxu0 %v3070
    %3077 = vmatprep.subr.mxu0 0.0
    %3078 = vmatpush1.msra.mxu0 0.0
    %3079 = vmatprep.subr.mxu0 0.0
    %3080 = vmatpush1.msra.mxu0 0.0
    %3081 = vmatprep.subr.mxu0 0.0
    %3082 = vmatpush1.msra.mxu0 0.0
    %3083 = vmatprep.subr.mxu0 0.0
    %3084 = vmatpush1.msra.mxu0 0.0
    %3085 = vmatprep.subr.mxu0 0.0
    %3086 = vmatpush1.msra.mxu0 0.0
    %3087 = vmatprep.subr.mxu0 0.0
    %3088 = vmatpush1.msra.mxu0 0.0
    %3089 = vmatprep.subr.mxu0 0.0
    %3090 = vmatpush1.msra.mxu0 0.0
    %3091 = vmatprep.subr.mxu0 0.0
    %3092 = vmatpush1.msra.mxu0 0.0
    %3093 = vmatprep.subr.mxu0 0.0
    %3094 = vmatpush1.msra.mxu0 0.0
    %3095 = vmatprep.subr.mxu0 0.0
    %3096 = vmatpush1.msra.mxu0 0.0
    %3097 = vmatprep.subr.mxu0 0.0
    %3098 = vmatpush1.msra.mxu0 0.0
    %3099 = vmatprep.subr.mxu0 0.0
    %3100 = vmatpush1.msra.mxu0 0.0
    %3101 = vmatprep.subr.mxu0 0.0
    %3102 = vmatpush1.msra.mxu0 0.0
    %3103 = vmatprep.subr.mxu0 0.0
    %3104 = vmatpush1.msra.mxu0 0.0
    %3105 = vmatprep.subr.mxu0 0.0
    %3106 = vmatpush1.msra.mxu0 0.0
    %3107 = vmatprep.subr.mxu0 0.0
    %3108 = vmatpush1.msra.mxu0 0.0
    %3109 = vmatprep.subr.mxu0 0.0
    %3110 = vmatpush1.msra.mxu0 0.0
    %3111 = vmatprep.subr.mxu0 0.0
    %3112 = vmatpush1.msra.mxu0 0.0
    %3113 = vmatprep.subr.mxu0 0.0
    %3114 = vmatpush1.msra.mxu0 0.0
    %3115 = vmatprep.subr.mxu0 0.0
    %3116 = vmatpush1.msra.mxu0 0.0
    %3117 = vmatprep.subr.mxu0 0.0
    %3118 = vmatpush1.msra.mxu0 0.0
    %3119 = vmatprep.subr.mxu0 0.0
    %3120 = vmatpush1.msra.mxu0 0.0
    %3121 = vmatprep.subr.mxu0 0.0
    %3122 = vmatpush1.msra.mxu0 0.0
    %3123 = vmatprep.subr.mxu0 0.0
    %3124 = vmatpush1.msra.mxu0 0.0
    %3125 = vmatprep.subr.mxu0 0.0
    %3126 = vmatpush1.msra.mxu0 0.0
    %3127 = vmatprep.subr.mxu0 0.0
    %3128 = vmatpush1.msra.mxu0 0.0
    %3129 = vmatprep.subr.mxu0 0.0
    %3130 = vmatpush1.msra.mxu0 0.0
    %3131 = vmatprep.subr.mxu0 0.0
    %3132 = vmatpush1.msra.mxu0 0.0
    %3133 = vmatprep.subr.mxu0 0.0
    %3134 = vmatpush1.msra.mxu0 0.0
    %3135 = vmatprep.subr.mxu0 0.0
    %3136 = vmatpush1.msra.mxu0 0.0
    %3137 = vmatprep.subr.mxu0 0.0
    %3138 = vmatpush1.msra.mxu0 0.0
    %3139 = vmatprep.mubr.f32.mxu0 0.0
    %3140 = vmatmul.mubr.f32.gmra.mrb[0].mxu0 %v3073
    %v3141 = vpop.f32.mrb[0].mxu0
    %v3142 = vadd.f32 0.0, %v3141
    %v3143 = vpop.f32.mrb[0].mxu0
    %3144 = vdwg.mxu0
    %3145 = vrot.lane.b32.xlu0 %v2153, 104
    %v3146 = vpop.permute.xlu0 %3145
    %3147 = vrot.lane.b32.xlu0 %v2147, 72
    %v3148 = vpop.permute.xlu0 %3147
    %v3149 = vsel %vm417, %v3146, 0
    %v3151 = vsel %vm417, %v3148, 0
    %3153 = vmatprep.subr.mxu0 0.0
    %3154 = vmatpush1.xpose.msra.mxu0 %v3151
    %3155 = vmatprep.subr.mxu0 0.0
    %3156 = vmatpush1.xpose.msra.mxu0 0.0
    %3157 = vmatprep.subr.mxu0 0.0
    %3158 = vmatpush1.xpose.msra.mxu0 0.0
    %3159 = vmatprep.subr.mxu0 0.0
    %3160 = vmatpush1.xpose.msra.mxu0 0.0
    %3161 = vmatprep.subr.mxu0 0.0
    %3162 = vmatpush1.xpose.msra.mxu0 0.0
    %3163 = vmatprep.subr.mxu0 0.0
    %3164 = vmatpush1.xpose.msra.mxu0 0.0
    %3165 = vmatprep.subr.mxu0 0.0
    %3166 = vmatpush1.xpose.msra.mxu0 0.0
    %3167 = vmatprep.subr.mxu0 0.0
    %3168 = vmatpush1.xpose.msra.mxu0 0.0
    %3169 = vmatprep.subr.mxu0 0.0
    %3170 = vmatpush1.xpose.msra.mxu0 0.0
    %3171 = vmatprep.subr.mxu0 0.0
    %3172 = vmatpush1.xpose.msra.mxu0 0.0
    %3173 = vmatprep.subr.mxu0 0.0
    %3174 = vmatpush1.xpose.msra.mxu0 0.0
    %3175 = vmatprep.subr.mxu0 0.0
    %3176 = vmatpush1.xpose.msra.mxu0 0.0
    %3177 = vmatprep.subr.mxu0 0.0
    %3178 = vmatpush1.xpose.msra.mxu0 0.0
    %3179 = vmatprep.subr.mxu0 0.0
    %3180 = vmatpush1.xpose.msra.mxu0 0.0
    %3181 = vmatprep.subr.mxu0 0.0
    %3182 = vmatpush1.xpose.msra.mxu0 0.0
    %3183 = vmatprep.subr.mxu0 0.0
    %3184 = vmatpush1.xpose.msra.mxu0 0.0
    %3185 = vmatprep.subr.mxu0 0.0
    %3186 = vmatpush1.xpose.msra.mxu0 0.0
    %3187 = vmatprep.subr.mxu0 0.0
    %3188 = vmatpush1.xpose.msra.mxu0 0.0
    %3189 = vmatprep.subr.mxu0 0.0
    %3190 = vmatpush1.xpose.msra.mxu0 0.0
    %3191 = vmatprep.subr.mxu0 0.0
    %3192 = vmatpush1.xpose.msra.mxu0 0.0
    %3193 = vmatprep.subr.mxu0 0.0
    %3194 = vmatpush1.xpose.msra.mxu0 0.0
    %3195 = vmatprep.subr.mxu0 0.0
    %3196 = vmatpush1.xpose.msra.mxu0 0.0
    %3197 = vmatprep.subr.mxu0 0.0
    %3198 = vmatpush1.xpose.msra.mxu0 0.0
    %3199 = vmatprep.subr.mxu0 0.0
    %3200 = vmatpush1.xpose.msra.mxu0 0.0
    %3201 = vmatprep.subr.mxu0 0.0
    %3202 = vmatpush1.xpose.msra.mxu0 0.0
    %3203 = vmatprep.subr.mxu0 0.0
    %3204 = vmatpush1.xpose.msra.mxu0 0.0
    %3205 = vmatprep.subr.mxu0 0.0
    %3206 = vmatpush1.xpose.msra.mxu0 0.0
    %3207 = vmatprep.subr.mxu0 0.0
    %3208 = vmatpush1.xpose.msra.mxu0 0.0
    %3209 = vmatprep.subr.mxu0 0.0
    %3210 = vmatpush1.xpose.msra.mxu0 0.0
    %3211 = vmatprep.subr.mxu0 0.0
    %3212 = vmatpush1.xpose.msra.mxu0 0.0
    %3213 = vmatprep.subr.mxu0 0.0
    %3214 = vmatpush1.xpose.msra.mxu0 0.0
    %3215 = vmatprep.subr.mxu0 0.0
    %3216 = vmatpush1.xpose.msra.mxu0 0.0
    %3217 = vmatprep.mubr.f32.mxu0 0.0
    %3218 = vmatmul.mubr.f32.gmra.mrb[0].mxu0 %v3149
    %v3219 = vpop.f32.mrb[0].mxu0
    %v3220 = vadd.f32 0.0, %v3219
    %v3221 = vpop.f32.mrb[0].mxu0
    %3222 = vdwg.mxu0
    %3223 = vrot.lane.b32.xlu0 %v2154, 104
    %v3224 = vpop.permute.xlu0 %3223
    %3225 = vrot.lane.b32.xlu0 %v2150, 72
    %v3226 = vpop.permute.xlu0 %3225
    %v3227 = vsel %vm417, %v3224, 0
    %v3229 = vsel %vm417, %v3226, 0
    %3231 = vmatprep.subr.mxu0 0.0
    %3232 = vmatpush1.xpose.msra.mxu0 %v3229
    %3233 = vmatprep.subr.mxu0 0.0
    %3234 = vmatpush1.xpose.msra.mxu0 0.0
    %3235 = vmatprep.subr.mxu0 0.0
    %3236 = vmatpush1.xpose.msra.mxu0 0.0
    %3237 = vmatprep.subr.mxu0 0.0
    %3238 = vmatpush1.xpose.msra.mxu0 0.0
    %3239 = vmatprep.subr.mxu0 0.0
    %3240 = vmatpush1.xpose.msra.mxu0 0.0
    %3241 = vmatprep.subr.mxu0 0.0
    %3242 = vmatpush1.xpose.msra.mxu0 0.0
    %3243 = vmatprep.subr.mxu0 0.0
    %3244 = vmatpush1.xpose.msra.mxu0 0.0
    %3245 = vmatprep.subr.mxu0 0.0
    %3246 = vmatpush1.xpose.msra.mxu0 0.0
    %3247 = vmatprep.subr.mxu0 0.0
    %3248 = vmatpush1.xpose.msra.mxu0 0.0
    %3249 = vmatprep.subr.mxu0 0.0
    %3250 = vmatpush1.xpose.msra.mxu0 0.0
    %3251 = vmatprep.subr.mxu0 0.0
    %3252 = vmatpush1.xpose.msra.mxu0 0.0
    %3253 = vmatprep.subr.mxu0 0.0
    %3254 = vmatpush1.xpose.msra.mxu0 0.0
    %3255 = vmatprep.subr.mxu0 0.0
    %3256 = vmatpush1.xpose.msra.mxu0 0.0
    %3257 = vmatprep.subr.mxu0 0.0
    %3258 = vmatpush1.xpose.msra.mxu0 0.0
    %3259 = vmatprep.subr.mxu0 0.0
    %3260 = vmatpush1.xpose.msra.mxu0 0.0
    %3261 = vmatprep.subr.mxu0 0.0
    %3262 = vmatpush1.xpose.msra.mxu0 0.0
    %3263 = vmatprep.subr.mxu0 0.0
    %3264 = vmatpush1.xpose.msra.mxu0 0.0
    %3265 = vmatprep.subr.mxu0 0.0
    %3266 = vmatpush1.xpose.msra.mxu0 0.0
    %3267 = vmatprep.subr.mxu0 0.0
    %3268 = vmatpush1.xpose.msra.mxu0 0.0
    %3269 = vmatprep.subr.mxu0 0.0
    %3270 = vmatpush1.xpose.msra.mxu0 0.0
    %3271 = vmatprep.subr.mxu0 0.0
    %3272 = vmatpush1.xpose.msra.mxu0 0.0
    %3273 = vmatprep.subr.mxu0 0.0
    %3274 = vmatpush1.xpose.msra.mxu0 0.0
    %3275 = vmatprep.subr.mxu0 0.0
    %3276 = vmatpush1.xpose.msra.mxu0 0.0
    %3277 = vmatprep.subr.mxu0 0.0
    %3278 = vmatpush1.xpose.msra.mxu0 0.0
    %3279 = vmatprep.subr.mxu0 0.0
    %3280 = vmatpush1.xpose.msra.mxu0 0.0
    %3281 = vmatprep.subr.mxu0 0.0
    %3282 = vmatpush1.xpose.msra.mxu0 0.0
    %3283 = vmatprep.subr.mxu0 0.0
    %3284 = vmatpush1.xpose.msra.mxu0 0.0
    %3285 = vmatprep.subr.mxu0 0.0
    %3286 = vmatpush1.xpose.msra.mxu0 0.0
    %3287 = vmatprep.subr.mxu0 0.0
    %3288 = vmatpush1.xpose.msra.mxu0 0.0
    %3289 = vmatprep.subr.mxu0 0.0
    %3290 = vmatpush1.xpose.msra.mxu0 0.0
    %3291 = vmatprep.subr.mxu0 0.0
    %3292 = vmatpush1.xpose.msra.mxu0 0.0
    %3293 = vmatprep.subr.mxu0 0.0
    %3294 = vmatpush1.xpose.msra.mxu0 0.0
    %3295 = vmatprep.mubr.f32.mxu0 0.0
    %3296 = vmatmul.mubr.f32.gmra.mrb[0].mxu0 %v3227
    %v3297 = vpop.f32.mrb[0].mxu0
    %v3298 = vadd.f32 0.0, %v3297
    %v3299 = vpop.f32.mrb[0].mxu0
    %3300 = vdwg.mxu0
    %v3301 = vsel %vm417, %v3220, -inf
    %3302 = vmax.xlane.f32.xlu0 %v3301
    %v3303 = vpop.xlane.xlu0 %3302
    %v3304 = vsel %vm417, %v3298, -inf
    %3305 = vmax.xlane.f32.xlu0 %v3304
    %v3306 = vpop.xlane.xlu0 %3305
    %v3307 = vsub.f32 %v3220, %v3303
    %v3308 = vsub.f32 %v3298, %v3306
    %v3309 = vmul.f32 %v3307, 1.442695
    %v3310 = vpow.pop %v3309
    %v3311 = vmul.f32 %v3308, 1.442695
    %v3312 = vpow.pop %v3311
    %v3313 = vsel %vm417, %v3310, 0.0
    %3314 = vadd.xlane.f32.xlu0 %v3313
    %v3315 = vpop.xlane.xlu0 %3314
    %v3316 = vsel %vm417, %v3312, 0.0
    %3317 = vadd.xlane.f32.xlu0 %v3316
    %v3318 = vpop.xlane.xlu0 %3317
    %v3319 = vrcp.pop %v3315
    %v3320 = vrcp.pop %v3318
    %v3321 = vmul.f32 %v3310, %v3319
    %v3322 = vmul.f32 %v3312, %v3320
    %3323 = vrot.lane.b32.xlu0 %v2147, 40
    %v3324 = vpop.permute.xlu0 %3323
    %v3327 = vsel %vm417, %v3321, 0
    %3329 = vmatprep.subr.mxu0 0.0
    %3330 = vmatpush1.msra.mxu0 %v3324
    %3331 = vmatprep.subr.mxu0 0.0
    %3332 = vmatpush1.msra.mxu0 0.0
    %3333 = vmatprep.subr.mxu0 0.0
    %3334 = vmatpush1.msra.mxu0 0.0
    %3335 = vmatprep.subr.mxu0 0.0
    %3336 = vmatpush1.msra.mxu0 0.0
    %3337 = vmatprep.subr.mxu0 0.0
    %3338 = vmatpush1.msra.mxu0 0.0
    %3339 = vmatprep.subr.mxu0 0.0
    %3340 = vmatpush1.msra.mxu0 0.0
    %3341 = vmatprep.subr.mxu0 0.0
    %3342 = vmatpush1.msra.mxu0 0.0
    %3343 = vmatprep.subr.mxu0 0.0
    %3344 = vmatpush1.msra.mxu0 0.0
    %3345 = vmatprep.subr.mxu0 0.0
    %3346 = vmatpush1.msra.mxu0 0.0
    %3347 = vmatprep.subr.mxu0 0.0
    %3348 = vmatpush1.msra.mxu0 0.0
    %3349 = vmatprep.subr.mxu0 0.0
    %3350 = vmatpush1.msra.mxu0 0.0
    %3351 = vmatprep.subr.mxu0 0.0
    %3352 = vmatpush1.msra.mxu0 0.0
    %3353 = vmatprep.subr.mxu0 0.0
    %3354 = vmatpush1.msra.mxu0 0.0
    %3355 = vmatprep.subr.mxu0 0.0
    %3356 = vmatpush1.msra.mxu0 0.0
    %3357 = vmatprep.subr.mxu0 0.0
    %3358 = vmatpush1.msra.mxu0 0.0
    %3359 = vmatprep.subr.mxu0 0.0
    %3360 = vmatpush1.msra.mxu0 0.0
    %3361 = vmatprep.subr.mxu0 0.0
    %3362 = vmatpush1.msra.mxu0 0.0
    %3363 = vmatprep.subr.mxu0 0.0
    %3364 = vmatpush1.msra.mxu0 0.0
    %3365 = vmatprep.subr.mxu0 0.0
    %3366 = vmatpush1.msra.mxu0 0.0
    %3367 = vmatprep.subr.mxu0 0.0
    %3368 = vmatpush1.msra.mxu0 0.0
    %3369 = vmatprep.subr.mxu0 0.0
    %3370 = vmatpush1.msra.mxu0 0.0
    %3371 = vmatprep.subr.mxu0 0.0
    %3372 = vmatpush1.msra.mxu0 0.0
    %3373 = vmatprep.subr.mxu0 0.0
    %3374 = vmatpush1.msra.mxu0 0.0
    %3375 = vmatprep.subr.mxu0 0.0
    %3376 = vmatpush1.msra.mxu0 0.0
    %3377 = vmatprep.subr.mxu0 0.0
    %3378 = vmatpush1.msra.mxu0 0.0
    %3379 = vmatprep.subr.mxu0 0.0
    %3380 = vmatpush1.msra.mxu0 0.0
    %3381 = vmatprep.subr.mxu0 0.0
    %3382 = vmatpush1.msra.mxu0 0.0
    %3383 = vmatprep.subr.mxu0 0.0
    %3384 = vmatpush1.msra.mxu0 0.0
    %3385 = vmatprep.subr.mxu0 0.0
    %3386 = vmatpush1.msra.mxu0 0.0
    %3387 = vmatprep.subr.mxu0 0.0
    %3388 = vmatpush1.msra.mxu0 0.0
    %3389 = vmatprep.subr.mxu0 0.0
    %3390 = vmatpush1.msra.mxu0 0.0
    %3391 = vmatprep.subr.mxu0 0.0
    %3392 = vmatpush1.msra.mxu0 0.0
    %3393 = vmatprep.mubr.f32.mxu0 0.0
    %3394 = vmatmul.mubr.f32.gmra.mrb[0].mxu0 %v3327
    %v3395 = vpop.f32.mrb[0].mxu0
    %v3396 = vadd.f32 0.0, %v3395
    %v3397 = vpop.f32.mrb[0].mxu0
    %3398 = vdwg.mxu0
    %3399 = vrot.lane.b32.xlu0 %v2150, 40
    %v3400 = vpop.permute.xlu0 %3399
    %v3403 = vsel %vm417, %v3322, 0
    %3405 = vmatprep.subr.mxu0 0.0
    %3406 = vmatpush1.msra.mxu0 %v3400
    %3407 = vmatprep.subr.mxu0 0.0
    %3408 = vmatpush1.msra.mxu0 0.0
    %3409 = vmatprep.subr.mxu0 0.0
    %3410 = vmatpush1.msra.mxu0 0.0
    %3411 = vmatprep.subr.mxu0 0.0
    %3412 = vmatpush1.msra.mxu0 0.0
    %3413 = vmatprep.subr.mxu0 0.0
    %3414 = vmatpush1.msra.mxu0 0.0
    %3415 = vmatprep.subr.mxu0 0.0
    %3416 = vmatpush1.msra.mxu0 0.0
    %3417 = vmatprep.subr.mxu0 0.0
    %3418 = vmatpush1.msra.mxu0 0.0
    %3419 = vmatprep.subr.mxu0 0.0
    %3420 = vmatpush1.msra.mxu0 0.0
    %3421 = vmatprep.subr.mxu0 0.0
    %3422 = vmatpush1.msra.mxu0 0.0
    %3423 = vmatprep.subr.mxu0 0.0
    %3424 = vmatpush1.msra.mxu0 0.0
    %3425 = vmatprep.subr.mxu0 0.0
    %3426 = vmatpush1.msra.mxu0 0.0
    %3427 = vmatprep.subr.mxu0 0.0
    %3428 = vmatpush1.msra.mxu0 0.0
    %3429 = vmatprep.subr.mxu0 0.0
    %3430 = vmatpush1.msra.mxu0 0.0
    %3431 = vmatprep.subr.mxu0 0.0
    %3432 = vmatpush1.msra.mxu0 0.0
    %3433 = vmatprep.subr.mxu0 0.0
    %3434 = vmatpush1.msra.mxu0 0.0
    %3435 = vmatprep.subr.mxu0 0.0
    %3436 = vmatpush1.msra.mxu0 0.0
    %3437 = vmatprep.subr.mxu0 0.0
    %3438 = vmatpush1.msra.mxu0 0.0
    %3439 = vmatprep.subr.mxu0 0.0
    %3440 = vmatpush1.msra.mxu0 0.0
    %3441 = vmatprep.subr.mxu0 0.0
    %3442 = vmatpush1.msra.mxu0 0.0
    %3443 = vmatprep.subr.mxu0 0.0
    %3444 = vmatpush1.msra.mxu0 0.0
    %3445 = vmatprep.subr.mxu0 0.0
    %3446 = vmatpush1.msra.mxu0 0.0
    %3447 = vmatprep.subr.mxu0 0.0
    %3448 = vmatpush1.msra.mxu0 0.0
    %3449 = vmatprep.subr.mxu0 0.0
    %3450 = vmatpush1.msra.mxu0 0.0
    %3451 = vmatprep.subr.mxu0 0.0
    %3452 = vmatpush1.msra.mxu0 0.0
    %3453 = vmatprep.subr.mxu0 0.0
    %3454 = vmatpush1.msra.mxu0 0.0
    %3455 = vmatprep.subr.mxu0 0.0
    %3456 = vmatpush1.msra.mxu0 0.0
    %3457 = vmatprep.subr.mxu0 0.0
    %3458 = vmatpush1.msra.mxu0 0.0
    %3459 = vmatprep.subr.mxu0 0.0
    %3460 = vmatpush1.msra.mxu0 0.0
    %3461 = vmatprep.subr.mxu0 0.0
    %3462 = vmatpush1.msra.mxu0 0.0
    %3463 = vmatprep.subr.mxu0 0.0
    %3464 = vmatpush1.msra.mxu0 0.0
    %3465 = vmatprep.subr.mxu0 0.0
    %3466 = vmatpush1.msra.mxu0 0.0
    %3467 = vmatprep.subr.mxu0 0.0
    %3468 = vmatpush1.msra.mxu0 0.0
    %3469 = vmatprep.mubr.f32.mxu0 0.0
    %3470 = vmatmul.mubr.f32.gmra.mrb[0].mxu0 %v3403
    %v3471 = vpop.f32.mrb[0].mxu0
    %v3472 = vadd.f32 0.0, %v3471
    %v3473 = vpop.f32.mrb[0].mxu0
    %3474 = vdwg.mxu0
    %3477 = vrot.lane.b32.xlu0 %v2736, 8
    %v3478 = vpop.permute.xlu0 %3477
    %3479 = vrot.lane.b32.xlu0 %v2812, 8
    %v3480 = vpop.permute.xlu0 %3479
    %3485 = vrot.lane.b32.xlu0 %v3066, 16
    %v3486 = vpop.permute.xlu0 %3485
    %3487 = vrot.lane.b32.xlu0 %v3142, 16
    %v3488 = vpop.permute.xlu0 %3487
    %3493 = vrot.lane.b32.xlu0 %v3396, 24
    %v3494 = vpop.permute.xlu0 %3493
    %3495 = vrot.lane.b32.xlu0 %v3472, 24
    %v3496 = vpop.permute.xlu0 %3495
    %v3499 = vsel %vm417, %v2406, %v3478
    %v3500 = vsel %vm417, %v2482, %v3480
    %v3501 = vsel %vm1761, %v3499, %v3486
    %v3502 = vsel %vm1761, %v3500, %v3488
    %v3503 = vsel %vm1764, %v3501, %v3494
    %v3504 = vsel %vm1764, %v3502, %v3496
    %v3505 = vpack.c.bf16 %v3504, %v3503
    %s3506 = scalar_lea.vmem [#allocation11], 16
    %v3507 = vld [vmem:[%s3506] sm:$0xf]
    %v3508 = vld [vmem:[%s3506 + $0x4] sm:$0xf]
    %v3509 = vld [vmem:[%s3506 + $0x8] sm:$0xf]
    %v3510 = vld [vmem:[%s3506 + $0xc] sm:$0xf]
    %s3511 = scalar_lea.vmem [#allocation12], 1
    %v3512 = vld [vmem:[%s3511] sm:$0x1]
    %v3514 = vlaneseq
    %v3515 = vshrl.u32 %v3514, 7
    %v3516 = vsub.s32 0, %v3515
    %v3517 = vrot.slane %v3512, %v3516
    %v3523 = vunpack.c.l.b16 %v3507
    %v3524 = vunpack.c.l.b16 %v3508
    %v3525 = vunpack.c.l.b16 %v3509
    %v3526 = vunpack.c.l.b16 %v3510
    %v3527 = vpack.c.b16 %v3524, %v3523
    %v3528 = vpack.c.b16 %v3526, %v3525
    %v3532 = vsel %vm367, %v3505, 0
    %3534 = vmatprep.subr.bf16.mxu0 0
    %3535 = vmatpush1.bf16.msra.mxu0 %v3527
    %3536 = vmatprep.subr.bf16.mxu0 0
    %3537 = vmatpush1.bf16.msra.mxu0 %v3528
    %3538 = vmatprep.subr.bf16.mxu0 0
    %3539 = vmatpush1.bf16.msra.mxu0 0
    %3540 = vmatprep.subr.bf16.mxu0 0
    %3541 = vmatpush1.bf16.msra.mxu0 0
    %3542 = vmatprep.subr.bf16.mxu0 0
    %3543 = vmatpush1.bf16.msra.mxu0 0
    %3544 = vmatprep.subr.bf16.mxu0 0
    %3545 = vmatpush1.bf16.msra.mxu0 0
    %3546 = vmatprep.subr.bf16.mxu0 0
    %3547 = vmatpush1.bf16.msra.mxu0 0
    %3548 = vmatprep.subr.bf16.mxu0 0
    %3549 = vmatpush1.bf16.msra.mxu0 0
    %3550 = vmatprep.subr.bf16.mxu0 0
    %3551 = vmatpush1.bf16.msra.mxu0 0
    %3552 = vmatprep.subr.bf16.mxu0 0
    %3553 = vmatpush1.bf16.msra.mxu0 0
    %3554 = vmatprep.subr.bf16.mxu0 0
    %3555 = vmatpush1.bf16.msra.mxu0 0
    %3556 = vmatprep.subr.bf16.mxu0 0
    %3557 = vmatpush1.bf16.msra.mxu0 0
    %3558 = vmatprep.subr.bf16.mxu0 0
    %3559 = vmatpush1.bf16.msra.mxu0 0
    %3560 = vmatprep.subr.bf16.mxu0 0
    %3561 = vmatpush1.bf16.msra.mxu0 0
    %3562 = vmatprep.subr.bf16.mxu0 0
    %3563 = vmatpush1.bf16.msra.mxu0 0
    %3564 = vmatprep.subr.bf16.mxu0 0
    %3565 = vmatpush1.bf16.msra.mxu0 0
    %3566 = vmatprep.mubr.bf16.mxu0 0
    %3567 = vmatmul.mubr.bf16.gmra.mrb[0].mxu0 %v3532
    %v3568 = vpop.f32.mrb[0].mxu0
    %v3569 = vadd.f32 %v3517, %v3568
    %v3570 = vpop.f32.mrb[0].mxu0
    %v3571 = vpop.f32.mrb[0].mxu0
    %v3572 = vadd.f32 %v3517, %v3571
    %v3573 = vpop.f32.mrb[0].mxu0
    %3574 = vdwg.mxu0
    %v3575 = vadd.f32 %v2081, %v3569
    %v3576 = vadd.f32 %v2082, %v3572
    %s3577 = scalar_lea.vmem [#allocation18], 1
    %v3578 = vld [vmem:[%s3577] sm:$0x1]
    %s3579 = scalar_lea.vmem [#allocation20], 1
    %v3580 = vld [vmem:[%s3579] sm:$0x1]
    %v3581 = vsel %vm367, %v3575, 0.0
    %3582 = vadd.xlane.f32.xlu0 %v3581
    %v3583 = vpop.xlane.xlu0 %3582
    %v3584 = vsel %vm367, %v3576, 0.0
    %3585 = vadd.xlane.f32.xlu0 %v3584
    %v3586 = vpop.xlane.xlu0 %3585
    %v3587 = vmul.f32 %v3583, %v1845
    %v3588 = vmul.f32 %v3586, %v1845
    %v3589 = vsub.f32 %v3575, %v3587
    %v3590 = vsub.f32 %v3576, %v3588
    %v3591 = vmul.f32 %v3589, %v3589
    %v3592 = vmul.f32 %v3590, %v3590
    %v3593 = vsel %vm367, %v3591, 0.0
    %3594 = vadd.xlane.f32.xlu0 %v3593
    %v3595 = vpop.xlane.xlu0 %3594
    %v3596 = vsel %vm367, %v3592, 0.0
    %3597 = vadd.xlane.f32.xlu0 %v3596
    %v3598 = vpop.xlane.xlu0 %3597
    %v3599 = vmul.f32 %v3595, %v1845
    %v3600 = vmul.f32 %v3598, %v1845
    %v3601 = vadd.f32 %v3599, 1e-05
    %v3602 = vadd.f32 %v3600, 1e-05
    %v3603 = vrsqrt.pop %v3601
    %v3604 = vrsqrt.pop %v3602
    %v3605 = vmul.f32 %v3589, %v3603
    %v3606 = vmul.f32 %v3590, %v3604
    %v3608 = vlaneseq
    %v3609 = vshrl.u32 %v3608, 7
    %v3610 = vsub.s32 0, %v3609
    %v3611 = vrot.slane %v3578, %v3610
    %v3613 = vmul.f32 %v3605, %v3611
    %v3614 = vmul.f32 %v3606, %v3611
    %v3616 = vlaneseq
    %v3617 = vshrl.u32 %v3616, 7
    %v3618 = vsub.s32 0, %v3617
    %v3619 = vrot.slane %v3580, %v3618
    %v3621 = vadd.f32 %v3613, %v3619
    %v3622 = vadd.f32 %v3614, %v3619
    %v3623 = vpack.c.bf16 %v3622, %v3621
    %s3624 = scalar_lea.vmem [#allocation14], 16
    %v3625 = vld [vmem:[%s3624] sm:$0xf]
    %v3626 = vld [vmem:[%s3624 + $0x4] sm:$0xf]
    %v3627 = vld [vmem:[%s3624 + $0x8] sm:$0xf]
    %v3628 = vld [vmem:[%s3624 + $0xc] sm:$0xf]
    %s3629 = scalar_lea.vmem [#allocation15], 1
    %v3630 = vld [vmem:[%s3629] sm:$0x1]
    %v3632 = vlaneseq
    %v3633 = vshrl.u32 %v3632, 7
    %v3634 = vsub.s32 0, %v3633
    %v3635 = vrot.slane %v3630, %v3634
    %v3641 = vunpack.c.l.b16 %v3625
    %v3642 = vunpack.c.l.b16 %v3626
    %v3643 = vunpack.c.l.b16 %v3627
    %v3644 = vunpack.c.l.b16 %v3628
    %v3645 = vpack.c.b16 %v3642, %v3641
    %v3646 = vpack.c.b16 %v3644, %v3643
    %v3650 = vsel %vm367, %v3623, 0
    %3652 = vmatprep.subr.bf16.mxu0 0
    %3653 = vmatpush1.bf16.msra.mxu0 %v3645
    %3654 = vmatprep.subr.bf16.mxu0 0
    %3655 = vmatpush1.bf16.msra.mxu0 %v3646
    %3656 = vmatprep.subr.bf16.mxu0 0
    %3657 = vmatpush1.bf16.msra.mxu0 0
    %3658 = vmatprep.subr.bf16.mxu0 0
    %3659 = vmatpush1.bf16.msra.mxu0 0
    %3660 = vmatprep.subr.bf16.mxu0 0
    %3661 = vmatpush1.bf16.msra.mxu0 0
    %3662 = vmatprep.subr.bf16.mxu0 0
    %3663 = vmatpush1.bf16.msra.mxu0 0
    %3664 = vmatprep.subr.bf16.mxu0 0
    %3665 = vmatpush1.bf16.msra.mxu0 0
    %3666 = vmatprep.subr.bf16.mxu0 0
    %3667 = vmatpush1.bf16.msra.mxu0 0
    %3668 = vmatprep.subr.bf16.mxu0 0
    %3669 = vmatpush1.bf16.msra.mxu0 0
    %3670 = vmatprep.subr.bf16.mxu0 0
    %3671 = vmatpush1.bf16.msra.mxu0 0
    %3672 = vmatprep.subr.bf16.mxu0 0
    %3673 = vmatpush1.bf16.msra.mxu0 0
    %3674 = vmatprep.subr.bf16.mxu0 0
    %3675 = vmatpush1.bf16.msra.mxu0 0
    %3676 = vmatprep.subr.bf16.mxu0 0
    %3677 = vmatpush1.bf16.msra.mxu0 0
    %3678 = vmatprep.subr.bf16.mxu0 0
    %3679 = vmatpush1.bf16.msra.mxu0 0
    %3680 = vmatprep.subr.bf16.mxu0 0
    %3681 = vmatpush1.bf16.msra.mxu0 0
    %3682 = vmatprep.subr.bf16.mxu0 0
    %3683 = vmatpush1.bf16.msra.mxu0 0
    %3684 = vmatprep.mubr.bf16.mxu0 0
    %3685 = vmatmul.mubr.bf16.gmra.mrb[0].mxu0 %v3650
    %v3686 = vpop.f32.mrb[0].mxu0
    %v3687 = vadd.f32 %v3635, %v3686
    %v3688 = vpop.f32.mrb[0].mxu0
    %v3689 = vpop.f32.mrb[0].mxu0
    %v3690 = vadd.f32 %v3635, %v3689
    %v3691 = vpop.f32.mrb[0].mxu0
    %3692 = vdwg.mxu0
    %v3693 = vmax.f32 %v3687, 0.0
    %v3694 = vmax.f32 %v3690, 0.0
    %v3695 = vpack.c.bf16 %v3694, %v3693
    %s3696 = scalar_lea.vmem %s9, 32
    %v3697 = vld [vmem:[%s3696] sm:$0xf]
    %v3698 = vld [vmem:[%s3696 + $0x4] sm:$0xf]
    %v3699 = vld [vmem:[%s3696 + $0x8] sm:$0xf]
    %v3700 = vld [vmem:[%s3696 + $0xc] sm:$0xf]
    %v3701 = vld [vmem:[%s3696 + $0x10] sm:$0xf]
    %v3702 = vld [vmem:[%s3696 + $0x14] sm:$0xf]
    %v3703 = vld [vmem:[%s3696 + $0x18] sm:$0xf]
    %v3704 = vld [vmem:[%s3696 + $0x1c] sm:$0xf]
    %s3705 = scalar_lea.vmem [#allocation17], 1
    %v3706 = vld [vmem:[%s3705] sm:$0x1]
    %v3708 = vlaneseq
    %v3709 = vshrl.u32 %v3708, 7
    %v3710 = vsub.s32 0, %v3709
    %v3711 = vrot.slane %v3706, %v3710
    %v3721 = vunpack.c.l.b16 %v3697
    %v3722 = vunpack.c.l.b16 %v3698
    %v3723 = vunpack.c.l.b16 %v3699
    %v3724 = vunpack.c.l.b16 %v3700
    %v3725 = vunpack.c.l.b16 %v3701
    %v3726 = vunpack.c.l.b16 %v3702
    %v3727 = vunpack.c.l.b16 %v3703
    %v3728 = vunpack.c.l.b16 %v3704
    %v3729 = vpack.c.b16 %v3722, %v3721
    %v3730 = vpack.c.b16 %v3724, %v3723
    %v3731 = vpack.c.b16 %v3726, %v3725
    %v3732 = vpack.c.b16 %v3728, %v3727
    %v3738 = vsel %vm1992, %v3695, 0
    %3740 = vmatprep.subr.bf16.mxu0 0
    %3741 = vmatpush1.bf16.msra.mxu0 %v3729
    %3742 = vmatprep.subr.bf16.mxu0 0
    %3743 = vmatpush1.bf16.msra.mxu0 %v3730
    %3744 = vmatprep.subr.bf16.mxu0 0
    %3745 = vmatpush1.bf16.msra.mxu0 %v3731
    %3746 = vmatprep.subr.bf16.mxu0 0
    %3747 = vmatpush1.bf16.msra.mxu0 %v3732
    %3748 = vmatprep.subr.bf16.mxu0 0
    %3749 = vmatpush1.bf16.msra.mxu0 0
    %3750 = vmatprep.subr.bf16.mxu0 0
    %3751 = vmatpush1.bf16.msra.mxu0 0
    %3752 = vmatprep.subr.bf16.mxu0 0
    %3753 = vmatpush1.bf16.msra.mxu0 0
    %3754 = vmatprep.subr.bf16.mxu0 0
    %3755 = vmatpush1.bf16.msra.mxu0 0
    %3756 = vmatprep.subr.bf16.mxu0 0
    %3757 = vmatpush1.bf16.msra.mxu0 0
    %3758 = vmatprep.subr.bf16.mxu0 0
    %3759 = vmatpush1.bf16.msra.mxu0 0
    %3760 = vmatprep.subr.bf16.mxu0 0
    %3761 = vmatpush1.bf16.msra.mxu0 0
    %3762 = vmatprep.subr.bf16.mxu0 0
    %3763 = vmatpush1.bf16.msra.mxu0 0
    %3764 = vmatprep.subr.bf16.mxu0 0
    %3765 = vmatpush1.bf16.msra.mxu0 0
    %3766 = vmatprep.subr.bf16.mxu0 0
    %3767 = vmatpush1.bf16.msra.mxu0 0
    %3768 = vmatprep.subr.bf16.mxu0 0
    %3769 = vmatpush1.bf16.msra.mxu0 0
    %3770 = vmatprep.subr.bf16.mxu0 0
    %3771 = vmatpush1.bf16.msra.mxu0 0
    %3772 = vmatprep.mubr.bf16.mxu0 0
    %3773 = vmatmul.mubr.bf16.gmra.mrb[0].mxu0 %v3738
    %v3774 = vpop.f32.mrb[0].mxu0
    %v3775 = vadd.f32 %v3711, %v3774
    %v3776 = vpop.f32.mrb[0].mxu0
    %v3777 = vpop.f32.mrb[0].mxu0
    %v3778 = vadd.f32 %v3711, %v3777
    %v3779 = vpop.f32.mrb[0].mxu0
    %3780 = vdwg.mxu0
    %v3781 = vadd.f32 %v3621, %v3775
    %v3782 = vadd.f32 %v3622, %v3778
    %s3783 = scalar_lea.vmem [#allocation21], 1
    %v3784 = vld [vmem:[%s3783] sm:$0x1]
    %s3785 = scalar_lea.vmem [#allocation23], 1
    %v3786 = vld [vmem:[%s3785] sm:$0x1]
    %v3787 = vsel %vm367, %v3781, 0.0
    %3788 = vadd.xlane.f32.xlu0 %v3787
    %v3789 = vpop.xlane.xlu0 %3788
    %v3790 = vsel %vm367, %v3782, 0.0
    %3791 = vadd.xlane.f32.xlu0 %v3790
    %v3792 = vpop.xlane.xlu0 %3791
    %v3793 = vmul.f32 %v3789, %v1845
    %v3794 = vmul.f32 %v3792, %v1845
    %v3795 = vsub.f32 %v3781, %v3793
    %v3796 = vsub.f32 %v3782, %v3794
    %v3797 = vmul.f32 %v3795, %v3795
    %v3798 = vmul.f32 %v3796, %v3796
    %v3799 = vsel %vm367, %v3797, 0.0
    %3800 = vadd.xlane.f32.xlu0 %v3799
    %v3801 = vpop.xlane.xlu0 %3800
    %v3802 = vsel %vm367, %v3798, 0.0
    %3803 = vadd.xlane.f32.xlu0 %v3802
    %v3804 = vpop.xlane.xlu0 %3803
    %v3805 = vmul.f32 %v3801, %v1845
    %v3806 = vmul.f32 %v3804, %v1845
    %v3807 = vadd.f32 %v3805, 1e-05
    %v3808 = vadd.f32 %v3806, 1e-05
    %v3809 = vrsqrt.pop %v3807
    %v3810 = vrsqrt.pop %v3808
    %v3811 = vmul.f32 %v3795, %v3809
    %v3812 = vmul.f32 %v3796, %v3810
    %v3814 = vlaneseq
    %v3815 = vshrl.u32 %v3814, 7
    %v3816 = vsub.s32 0, %v3815
    %v3817 = vrot.slane %v3784, %v3816
    %v3819 = vmul.f32 %v3811, %v3817
    %v3820 = vmul.f32 %v3812, %v3817
    %v3822 = vlaneseq
    %v3823 = vshrl.u32 %v3822, 7
    %v3824 = vsub.s32 0, %v3823
    %v3825 = vrot.slane %v3786, %v3824
    %v3827 = vadd.f32 %v3819, %v3825
    %v3828 = vadd.f32 %v3820, %v3825
    %v3832 = vunpack.c.l.s4 1983009808
    %v3833 = vunpack.c.0.s8 %v3832
    %v3834 = vlaneseq
    %v3835 = vshrl.u32 %v3834, 7
    %v3836 = vsub.s32 %v3833, %v3835
    %v3837 = vrot.slane %v3827, %v3836
    %v3839 = vunpack.c.l.s4 1983009808
    %v3840 = vunpack.c.0.s8 %v3839
    %v3841 = vlaneseq
    %v3842 = vshrl.u32 %v3841, 7
    %v3843 = vsub.s32 %v3840, %v3842
    %v3844 = vrot.slane %v3828, %v3843
    %vm3845 = vcmask 1044484
    %v3846 = vsel %vm3845, %v3837, %v3837
    %vm3847 = vcmask 1046534
    %v3848 = vsel %vm3847, %v3837, %v3846
    %v3849 = vrot.slane %v3844, 7
    %vm3850 = vcmask 1041409
    %v3851 = vsel %vm3850, %v3849, %v3848
    %vm3852 = vcmask 1043459
    %v3853 = vsel %vm3852, %v3849, %v3851
    %vm3854 = vcmask 1045509
    %v3855 = vsel %vm3854, %v3849, %v3853
    %vm3856 = vcmask 1047559
    %v3857 = vsel %vm3856, %v3849, %v3855
    %vm3859 = vcmask 254976
    %3860 = vst.msk [vmem:[#allocation3] sm:$0x3] %vm3859, %v3857
    %v3861 = vrot.slane %v3837, 1
    %v3862 = vsel %vm3845, %v3861, %v3861
    %v3863 = vsel %vm3847, %v3861, %v3862
    %v3864 = vsel %vm3850, %v3844, %v3863
    %v3865 = vsel %vm3852, %v3844, %v3864
    %v3866 = vsel %vm3854, %v3844, %v3865
    %v3867 = vsel %vm3856, %v3844, %v3866
    %3868 = vrot.lane.b32.xlu0 %v3867, 32
    %v3869 = vpop.permute.xlu0 %3868
    %vm3871 = vcmask 517376
    %3872 = vst.msk [vmem:[#allocation3] sm:$0x3] %vm3871, %v3869
    %v3873 = vcombine.high %v3837, %v3837
    %v3874 = vcombine.high %v3844, %v3844
    %v3875 = vsel %vm3845, %v3873, %v3873
    %v3876 = vsel %vm3847, %v3873, %v3875
    %v3877 = vrot.slane %v3874, 7
    %v3878 = vsel %vm3850, %v3877, %v3876
    %v3879 = vsel %vm3852, %v3877, %v3878
    %v3880 = vsel %vm3854, %v3877, %v3879
    %v3881 = vsel %vm3856, %v3877, %v3880
    %3882 = vrot.lane.b32.xlu0 %v3881, 64
    %v3883 = vpop.permute.xlu0 %3882
    %vm3885 = vcmask 779776
    %3886 = vst.msk [vmem:[#allocation3] sm:$0x3] %vm3885, %v3883
    %v3887 = vrot.slane %v3873, 1
    %v3888 = vsel %vm3845, %v3887, %v3887
    %v3889 = vsel %vm3847, %v3887, %v3888
    %v3890 = vsel %vm3850, %v3874, %v3889
    %v3891 = vsel %vm3852, %v3874, %v3890
    %v3892 = vsel %vm3854, %v3874, %v3891
    %v3893 = vsel %vm3856, %v3874, %v3892
    %3894 = vrot.lane.b32.xlu0 %v3893, 96
    %v3895 = vpop.permute.xlu0 %3894
    %vm3897 = vcmask 1042176
    %3898 = vst.msk [vmem:[#allocation3] sm:$0x3] %vm3897, %v3895
    %v3899 = vcombine.high %v3827, %v3827
    %v3901 = vunpack.c.l.s4 1983009808
    %v3902 = vunpack.c.0.s8 %v3901
    %v3903 = vlaneseq
    %v3904 = vshrl.u32 %v3903, 7
    %v3905 = vsub.s32 %v3902, %v3904
    %v3906 = vrot.slane %v3899, %v3905
    %v3907 = vcombine.high %v3828, %v3828
    %v3909 = vunpack.c.l.s4 1983009808
    %v3910 = vunpack.c.0.s8 %v3909
    %v3911 = vlaneseq
    %v3912 = vshrl.u32 %v3911, 7
    %v3913 = vsub.s32 %v3910, %v3912
    %v3914 = vrot.slane %v3907, %v3913
    %v3915 = vsel %vm3845, %v3906, %v3906
    %v3916 = vsel %vm3847, %v3906, %v3915
    %v3917 = vrot.slane %v3914, 7
    %v3918 = vsel %vm3850, %v3917, %v3916
    %v3919 = vsel %vm3852, %v3917, %v3918
    %v3920 = vsel %vm3854, %v3917, %v3919
    %v3921 = vsel %vm3856, %v3917, %v3920
    %3923 = vst.msk [vmem:[#allocation3 + $0x2] sm:$0x3] %vm3859, %v3921
    %v3924 = vrot.slane %v3906, 1
    %v3925 = vsel %vm3845, %v3924, %v3924
    %v3926 = vsel %vm3847, %v3924, %v3925
    %v3927 = vsel %vm3850, %v3914, %v3926
    %v3928 = vsel %vm3852, %v3914, %v3927
    %v3929 = vsel %vm3854, %v3914, %v3928
    %v3930 = vsel %vm3856, %v3914, %v3929
    %3931 = vrot.lane.b32.xlu0 %v3930, 32
    %v3932 = vpop.permute.xlu0 %3931
    %3934 = vst.msk [vmem:[#allocation3 + $0x2] sm:$0x3] %vm3871, %v3932
    %v3935 = vcombine.high %v3906, %v3906
    %v3936 = vcombine.high %v3914, %v3914
    %v3937 = vsel %vm3845, %v3935, %v3935
    %v3938 = vsel %vm3847, %v3935, %v3937
    %v3939 = vrot.slane %v3936, 7
    %v3940 = vsel %vm3850, %v3939, %v3938
    %v3941 = vsel %vm3852, %v3939, %v3940
    %v3942 = vsel %vm3854, %v3939, %v3941
    %v3943 = vsel %vm3856, %v3939, %v3942
    %3944 = vrot.lane.b32.xlu0 %v3943, 64
    %v3945 = vpop.permute.xlu0 %3944
    %3947 = vst.msk [vmem:[#allocation3 + $0x2] sm:$0x3] %vm3885, %v3945
    %v3948 = vrot.slane %v3935, 1
    %v3949 = vsel %vm3845, %v3948, %v3948
    %v3950 = vsel %vm3847, %v3948, %v3949
    %v3951 = vsel %vm3850, %v3936, %v3950
    %v3952 = vsel %vm3852, %v3936, %v3951
    %v3953 = vsel %vm3854, %v3936, %v3952
    %v3954 = vsel %vm3856, %v3936, %v3953
    %3955 = vrot.lane.b32.xlu0 %v3954, 96
    %v3956 = vpop.permute.xlu0 %3955
    %3958 = vst.msk [vmem:[#allocation3 + $0x2] sm:$0x3] %vm3897, %v3956
    %v3959 = vld [vmem:[#allocation3] sm:$0xf]
    %v3962 = vunpack.c.l.s4 1983009808
    %v3963 = vunpack.c.0.s8 %v3962
    %v3964 = vlaneseq
    %v3965 = vshrl.u32 %v3964, 7
    %v3966 = vsub.s32 %v3963, %v3965
    %v3967 = vrot.slane %v3959, %v3966
    %v3968 = vcombine.high %v3967, %v3967
    %v3971 = vpack.c.bf16 %v3967, %v3967
    %v3972 = vpack.c.bf16 %v3968, %v3968
    %v3973 = vld [vmem:[%s15] sm:$0xff]
    %v3974 = vld [vmem:[%s15 + $0x8] sm:$0xff]
    %v3975 = vld [vmem:[%s15 + $0x10] sm:$0xff]
    %v3976 = vld [vmem:[%s15 + $0x18] sm:$0xff]
    %v3977 = vld [vmem:[%s15 + $0x20] sm:$0xff]
    %v3978 = vld [vmem:[%s15 + $0x28] sm:$0xff]
    %v3979 = vld [vmem:[%s15 + $0x30] sm:$0xff]
    %v3980 = vld [vmem:[%s15 + $0x38] sm:$0xff]
    %v3981 = vld [vmem:[%s15 + $0x40] sm:$0xff]
    %v3982 = vld [vmem:[%s15 + $0x48] sm:$0xff]
    %v3983 = vld [vmem:[%s15 + $0x50] sm:$0xff]
    %v3984 = vld [vmem:[%s15 + $0x58] sm:$0xff]
    %v3985 = vld [vmem:[%s15 + $0x60] sm:$0xff]
    %v3986 = vld [vmem:[%s15 + $0x68] sm:$0xff]
    %v3987 = vld [vmem:[%s15 + $0x70] sm:$0xff]
    %v3988 = vld [vmem:[%s15 + $0x78] sm:$0xff]
    %v3989 = vld [vmem:[%s15 + $0x80] sm:$0xff]
    %v3990 = vld [vmem:[%s15 + $0x88] sm:$0xff]
    %v3991 = vld [vmem:[%s15 + $0x90] sm:$0xff]
    %v3992 = vld [vmem:[%s15 + $0x98] sm:$0xff]
    %v3993 = vld [vmem:[%s15 + $0xa0] sm:$0xff]
    %v3994 = vld [vmem:[%s15 + $0xa8] sm:$0xff]
    %v3995 = vld [vmem:[%s15 + $0xb0] sm:$0xff]
    %v3996 = vld [vmem:[%s15 + $0xb8] sm:$0xff]
    %v3997 = vld [vmem:[%s15 + $0xc0] sm:$0xff]
    %v3998 = vld [vmem:[%s15 + $0xc8] sm:$0xff]
    %v3999 = vld [vmem:[%s15 + $0xd0] sm:$0xff]
    %v4000 = vld [vmem:[%s15 + $0xd8] sm:$0xff]
    %v4001 = vld [vmem:[%s15 + $0xe0] sm:$0xff]
    %v4002 = vld [vmem:[%s15 + $0xe8] sm:$0xff]
    %v4003 = vld [vmem:[%s15 + $0xf0] sm:$0xff]
    %v4004 = vld [vmem:[%s15 + $0xf8] sm:$0xff]
    %v4005 = vld [vmem:[%s15 + $0x100] sm:$0xff]
    %v4006 = vld [vmem:[%s15 + $0x108] sm:$0xff]
    %v4007 = vld [vmem:[%s15 + $0x110] sm:$0xff]
    %v4008 = vld [vmem:[%s15 + $0x118] sm:$0xff]
    %v4009 = vld [vmem:[%s15 + $0x120] sm:$0xff]
    %v4010 = vld [vmem:[%s15 + $0x128] sm:$0xff]
    %v4011 = vld [vmem:[%s15 + $0x130] sm:$0xff]
    %v4012 = vld [vmem:[%s15 + $0x138] sm:$0xff]
    %v4013 = vld [vmem:[%s15 + $0x140] sm:$0xff]
    %v4014 = vld [vmem:[%s15 + $0x148] sm:$0xff]
    %v4015 = vld [vmem:[%s15 + $0x150] sm:$0xff]
    %v4016 = vld [vmem:[%s15 + $0x158] sm:$0xff]
    %v4017 = vld [vmem:[%s15 + $0x160] sm:$0xff]
    %v4018 = vld [vmem:[%s15 + $0x168] sm:$0xff]
    %v4019 = vld [vmem:[%s15 + $0x170] sm:$0xff]
    %v4020 = vld [vmem:[%s15 + $0x178] sm:$0xff]
    %v4021 = vld [vmem:[%s15 + $0x180] sm:$0xff]
    %v4022 = vld [vmem:[%s15 + $0x188] sm:$0xff]
    %v4023 = vld [vmem:[%s15 + $0x190] sm:$0xff]
    %v4024 = vld [vmem:[%s15 + $0x198] sm:$0xff]
    %v4025 = vld [vmem:[%s15 + $0x1a0] sm:$0xff]
    %v4026 = vld [vmem:[%s15 + $0x1a8] sm:$0xff]
    %v4027 = vld [vmem:[%s15 + $0x1b0] sm:$0xff]
    %v4028 = vld [vmem:[%s15 + $0x1b8] sm:$0xff]
    %v4029 = vld [vmem:[%s15 + $0x1c0] sm:$0xff]
    %v4030 = vld [vmem:[%s15 + $0x1c8] sm:$0xff]
    %v4031 = vld [vmem:[%s15 + $0x1d0] sm:$0xff]
    %v4032 = vld [vmem:[%s15 + $0x1d8] sm:$0xff]
    %v4033 = vld [vmem:[%s15 + $0x1e0] sm:$0xff]
    %v4034 = vld [vmem:[%s15 + $0x1e8] sm:$0xff]
    %v4035 = vld [vmem:[%s15 + $0x1f0] sm:$0xff]
    %v4036 = vld [vmem:[%s15 + $0x1f8] sm:$0xff]
    %v4037 = vld [vmem:[%s16] sm:$0xf]
    %v4039 = vlaneseq
    %v4040 = vshrl.u32 %v4039, 7
    %v4041 = vsub.s32 0, %v4040
    %v4042 = vrot.slane %v4037, %v4041
    %v4043 = vlaneseq
    %v4044 = vshrl.u32 %v4043, 7
    %v4045 = vsub.s32 1, %v4044
    %v4046 = vrot.slane %v4037, %v4045
    %v4047 = vlaneseq
    %v4048 = vshrl.u32 %v4047, 7
    %v4049 = vsub.s32 2, %v4048
    %v4050 = vrot.slane %v4037, %v4049
    %v4051 = vlaneseq
    %v4052 = vshrl.u32 %v4051, 7
    %v4053 = vsub.s32 3, %v4052
    %v4054 = vrot.slane %v4037, %v4053
    %v4123 = vunpack.c.l.b16 %v3973
    %v4124 = vunpack.c.h.b16 %v3973
    %v4125 = vunpack.c.l.b16 %v3974
    %v4126 = vunpack.c.h.b16 %v3974
    %v4127 = vunpack.c.l.b16 %v3975
    %v4128 = vunpack.c.h.b16 %v3975
    %v4129 = vunpack.c.l.b16 %v3976
    %v4130 = vunpack.c.h.b16 %v3976
    %v4131 = vunpack.c.l.b16 %v3977
    %v4132 = vunpack.c.h.b16 %v3977
    %v4133 = vunpack.c.l.b16 %v3978
    %v4134 = vunpack.c.h.b16 %v3978
    %v4135 = vunpack.c.l.b16 %v3979
    %v4136 = vunpack.c.h.b16 %v3979
    %v4137 = vunpack.c.l.b16 %v3980
    %v4138 = vunpack.c.h.b16 %v3980
    %v4139 = vunpack.c.l.b16 %v3981
    %v4140 = vunpack.c.h.b16 %v3981
    %v4141 = vunpack.c.l.b16 %v3982
    %v4142 = vunpack.c.h.b16 %v3982
    %v4143 = vunpack.c.l.b16 %v3983
    %v4144 = vunpack.c.h.b16 %v3983
    %v4145 = vunpack.c.l.b16 %v3984
    %v4146 = vunpack.c.h.b16 %v3984
    %v4147 = vunpack.c.l.b16 %v3985
    %v4148 = vunpack.c.h.b16 %v3985
    %v4149 = vunpack.c.l.b16 %v3986
    %v4150 = vunpack.c.h.b16 %v3986
    %v4151 = vunpack.c.l.b16 %v3987
    %v4152 = vunpack.c.h.b16 %v3987
    %v4153 = vunpack.c.l.b16 %v3988
    %v4154 = vunpack.c.h.b16 %v3988
    %v4155 = vunpack.c.l.b16 %v3989
    %v4156 = vunpack.c.h.b16 %v3989
    %v4157 = vunpack.c.l.b16 %v3990
    %v4158 = vunpack.c.h.b16 %v3990
    %v4159 = vunpack.c.l.b16 %v3991
    %v4160 = vunpack.c.h.b16 %v3991
    %v4161 = vunpack.c.l.b16 %v3992
    %v4162 = vunpack.c.h.b16 %v3992
    %v4163 = vunpack.c.l.b16 %v3993
    %v4164 = vunpack.c.h.b16 %v3993
    %v4165 = vunpack.c.l.b16 %v3994
    %v4166 = vunpack.c.h.b16 %v3994
    %v4167 = vunpack.c.l.b16 %v3995
    %v4168 = vunpack.c.h.b16 %v3995
    %v4169 = vunpack.c.l.b16 %v3996
    %v4170 = vunpack.c.h.b16 %v3996
    %v4171 = vunpack.c.l.b16 %v3997
    %v4172 = vunpack.c.h.b16 %v3997
    %v4173 = vunpack.c.l.b16 %v3998
    %v4174 = vunpack.c.h.b16 %v3998
    %v4175 = vunpack.c.l.b16 %v3999
    %v4176 = vunpack.c.h.b16 %v3999
    %v4177 = vunpack.c.l.b16 %v4000
    %v4178 = vunpack.c.h.b16 %v4000
    %v4179 = vunpack.c.l.b16 %v4001
    %v4180 = vunpack.c.h.b16 %v4001
    %v4181 = vunpack.c.l.b16 %v4002
    %v4182 = vunpack.c.h.b16 %v4002
    %v4183 = vunpack.c.l.b16 %v4003
    %v4184 = vunpack.c.h.b16 %v4003
    %v4185 = vunpack.c.l.b16 %v4004
    %v4186 = vunpack.c.h.b16 %v4004
    %v4187 = vunpack.c.l.b16 %v4005
    %v4188 = vunpack.c.h.b16 %v4005
    %v4189 = vunpack.c.l.b16 %v4006
    %v4190 = vunpack.c.h.b16 %v4006
    %v4191 = vunpack.c.l.b16 %v4007
    %v4192 = vunpack.c.h.b16 %v4007
    %v4193 = vunpack.c.l.b16 %v4008
    %v4194 = vunpack.c.h.b16 %v4008
    %v4195 = vunpack.c.l.b16 %v4009
    %v4196 = vunpack.c.h.b16 %v4009
    %v4197 = vunpack.c.l.b16 %v4010
    %v4198 = vunpack.c.h.b16 %v4010
    %v4199 = vunpack.c.l.b16 %v4011
    %v4200 = vunpack.c.h.b16 %v4011
    %v4201 = vunpack.c.l.b16 %v4012
    %v4202 = vunpack.c.h.b16 %v4012
    %v4203 = vunpack.c.l.b16 %v4013
    %v4204 = vunpack.c.h.b16 %v4013
    %v4205 = vunpack.c.l.b16 %v4014
    %v4206 = vunpack.c.h.b16 %v4014
    %v4207 = vunpack.c.l.b16 %v4015
    %v4208 = vunpack.c.h.b16 %v4015
    %v4209 = vunpack.c.l.b16 %v4016
    %v4210 = vunpack.c.h.b16 %v4016
    %v4211 = vunpack.c.l.b16 %v4017
    %v4212 = vunpack.c.h.b16 %v4017
    %v4213 = vunpack.c.l.b16 %v4018
    %v4214 = vunpack.c.h.b16 %v4018
    %v4215 = vunpack.c.l.b16 %v4019
    %v4216 = vunpack.c.h.b16 %v4019
    %v4217 = vunpack.c.l.b16 %v4020
    %v4218 = vunpack.c.h.b16 %v4020
    %v4219 = vunpack.c.l.b16 %v4021
    %v4220 = vunpack.c.h.b16 %v4021
    %v4221 = vunpack.c.l.b16 %v4022
    %v4222 = vunpack.c.h.b16 %v4022
    %v4223 = vunpack.c.l.b16 %v4023
    %v4224 = vunpack.c.h.b16 %v4023
    %v4225 = vunpack.c.l.b16 %v4024
    %v4226 = vunpack.c.h.b16 %v4024
    %v4227 = vunpack.c.l.b16 %v4025
    %v4228 = vunpack.c.h.b16 %v4025
    %v4229 = vunpack.c.l.b16 %v4026
    %v4230 = vunpack.c.h.b16 %v4026
    %v4231 = vunpack.c.l.b16 %v4027
    %v4232 = vunpack.c.h.b16 %v4027
    %v4233 = vunpack.c.l.b16 %v4028
    %v4234 = vunpack.c.h.b16 %v4028
    %v4235 = vunpack.c.l.b16 %v4029
    %v4236 = vunpack.c.h.b16 %v4029
    %v4237 = vunpack.c.l.b16 %v4030
    %v4238 = vunpack.c.h.b16 %v4030
    %v4239 = vunpack.c.l.b16 %v4031
    %v4240 = vunpack.c.h.b16 %v4031
    %v4241 = vunpack.c.l.b16 %v4032
    %v4242 = vunpack.c.h.b16 %v4032
    %v4243 = vunpack.c.l.b16 %v4033
    %v4244 = vunpack.c.h.b16 %v4033
    %v4245 = vunpack.c.l.b16 %v4034
    %v4246 = vunpack.c.h.b16 %v4034
    %v4247 = vunpack.c.l.b16 %v4035
    %v4248 = vunpack.c.h.b16 %v4035
    %v4249 = vunpack.c.l.b16 %v4036
    %v4250 = vunpack.c.h.b16 %v4036
    %v4251 = vpack.c.b16 %v4127, %v4123
    %v4252 = vpack.c.b16 %v4128, %v4124
    %v4253 = vpack.c.b16 %v4129, %v4125
    %v4254 = vpack.c.b16 %v4130, %v4126
    %v4255 = vpack.c.b16 %v4135, %v4131
    %v4256 = vpack.c.b16 %v4136, %v4132
    %v4257 = vpack.c.b16 %v4137, %v4133
    %v4258 = vpack.c.b16 %v4138, %v4134
    %v4259 = vpack.c.b16 %v4143, %v4139
    %v4260 = vpack.c.b16 %v4144, %v4140
    %v4261 = vpack.c.b16 %v4145, %v4141
    %v4262 = vpack.c.b16 %v4146, %v4142
    %v4263 = vpack.c.b16 %v4151, %v4147
    %v4264 = vpack.c.b16 %v4152, %v4148
    %v4265 = vpack.c.b16 %v4153, %v4149
    %v4266 = vpack.c.b16 %v4154, %v4150
    %v4267 = vpack.c.b16 %v4159, %v4155
    %v4268 = vpack.c.b16 %v4160, %v4156
    %v4269 = vpack.c.b16 %v4161, %v4157
    %v4270 = vpack.c.b16 %v4162, %v4158
    %v4271 = vpack.c.b16 %v4167, %v4163
    %v4272 = vpack.c.b16 %v4168, %v4164
    %v4273 = vpack.c.b16 %v4169, %v4165
    %v4274 = vpack.c.b16 %v4170, %v4166
    %v4275 = vpack.c.b16 %v4175, %v4171
    %v4276 = vpack.c.b16 %v4176, %v4172
    %v4277 = vpack.c.b16 %v4177, %v4173
    %v4278 = vpack.c.b16 %v4178, %v4174
    %v4279 = vpack.c.b16 %v4183, %v4179
    %v4280 = vpack.c.b16 %v4184, %v4180
    %v4281 = vpack.c.b16 %v4185, %v4181
    %v4282 = vpack.c.b16 %v4186, %v4182
    %v4283 = vpack.c.b16 %v4191, %v4187
    %v4284 = vpack.c.b16 %v4192, %v4188
    %v4285 = vpack.c.b16 %v4193, %v4189
    %v4286 = vpack.c.b16 %v4194, %v4190
    %v4287 = vpack.c.b16 %v4199, %v4195
    %v4288 = vpack.c.b16 %v4200, %v4196
    %v4289 = vpack.c.b16 %v4201, %v4197
    %v4290 = vpack.c.b16 %v4202, %v4198
    %v4291 = vpack.c.b16 %v4207, %v4203
    %v4292 = vpack.c.b16 %v4208, %v4204
    %v4293 = vpack.c.b16 %v4209, %v4205
    %v4294 = vpack.c.b16 %v4210, %v4206
    %v4295 = vpack.c.b16 %v4215, %v4211
    %v4296 = vpack.c.b16 %v4216, %v4212
    %v4297 = vpack.c.b16 %v4217, %v4213
    %v4298 = vpack.c.b16 %v4218, %v4214
    %v4299 = vpack.c.b16 %v4223, %v4219
    %v4300 = vpack.c.b16 %v4224, %v4220
    %v4301 = vpack.c.b16 %v4225, %v4221
    %v4302 = vpack.c.b16 %v4226, %v4222
    %v4303 = vpack.c.b16 %v4231, %v4227
    %v4304 = vpack.c.b16 %v4232, %v4228
    %v4305 = vpack.c.b16 %v4233, %v4229
    %v4306 = vpack.c.b16 %v4234, %v4230
    %v4307 = vpack.c.b16 %v4239, %v4235
    %v4308 = vpack.c.b16 %v4240, %v4236
    %v4309 = vpack.c.b16 %v4241, %v4237
    %v4310 = vpack.c.b16 %v4242, %v4238
    %v4311 = vpack.c.b16 %v4247, %v4243
    %v4312 = vpack.c.b16 %v4248, %v4244
    %v4313 = vpack.c.b16 %v4249, %v4245
    %v4314 = vpack.c.b16 %v4250, %v4246
    %4379 = vmatprep.subr.bf16.mxu0 %v4252
    %4380 = vmatpush1.bf16.msra.mxu0 %v4251
    %4381 = vmatprep.subr.bf16.mxu0 %v4256
    %4382 = vmatpush1.bf16.msra.mxu0 %v4255
    %4383 = vmatprep.subr.bf16.mxu0 %v4260
    %4384 = vmatpush1.bf16.msra.mxu0 %v4259
    %4385 = vmatprep.subr.bf16.mxu0 %v4264
    %4386 = vmatpush1.bf16.msra.mxu0 %v4263
    %4387 = vmatprep.subr.bf16.mxu0 %v4268
    %4388 = vmatpush1.bf16.msra.mxu0 %v4267
    %4389 = vmatprep.subr.bf16.mxu0 %v4272
    %4390 = vmatpush1.bf16.msra.mxu0 %v4271
    %4391 = vmatprep.subr.bf16.mxu0 %v4276
    %4392 = vmatpush1.bf16.msra.mxu0 %v4275
    %4393 = vmatprep.subr.bf16.mxu0 %v4280
    %4394 = vmatpush1.bf16.msra.mxu0 %v4279
    %4395 = vmatprep.subr.bf16.mxu0 %v4284
    %4396 = vmatpush1.bf16.msra.mxu0 %v4283
    %4397 = vmatprep.subr.bf16.mxu0 %v4288
    %4398 = vmatpush1.bf16.msra.mxu0 %v4287
    %4399 = vmatprep.subr.bf16.mxu0 %v4292
    %4400 = vmatpush1.bf16.msra.mxu0 %v4291
    %4401 = vmatprep.subr.bf16.mxu0 %v4296
    %4402 = vmatpush1.bf16.msra.mxu0 %v4295
    %4403 = vmatprep.subr.bf16.mxu0 %v4300
    %4404 = vmatpush1.bf16.msra.mxu0 %v4299
    %4405 = vmatprep.subr.bf16.mxu0 %v4304
    %4406 = vmatpush1.bf16.msra.mxu0 %v4303
    %4407 = vmatprep.subr.bf16.mxu0 %v4308
    %4408 = vmatpush1.bf16.msra.mxu0 %v4307
    %4409 = vmatprep.subr.bf16.mxu0 %v4312
    %4410 = vmatpush1.bf16.msra.mxu0 %v4311
    %4411 = vmatprep.mubr.bf16.mxu0 %v3972
    %4412 = vmatmul.mubr.bf16.gmra.mrb[0].mxu0 %v3971
    %v4413 = vpop.f32.mrb[0].mxu0
    %v4414 = vadd.f32 %v4042, %v4413
    %v4415 = vpop.f32.mrb[0].mxu0
    %v4416 = vadd.f32 %v4046, %v4415
    %v4417 = vpop.f32.mrb[0].mxu0
    %v4418 = vpop.f32.mrb[0].mxu0
    %4419 = vdwg.mxu0
    %4420 = vmatprep.subr.bf16.mxu0 %v4254
    %4421 = vmatpush1.bf16.msra.mxu0 %v4253
    %4422 = vmatprep.subr.bf16.mxu0 %v4258
    %4423 = vmatpush1.bf16.msra.mxu0 %v4257
    %4424 = vmatprep.subr.bf16.mxu0 %v4262
    %4425 = vmatpush1.bf16.msra.mxu0 %v4261
    %4426 = vmatprep.subr.bf16.mxu0 %v4266
    %4427 = vmatpush1.bf16.msra.mxu0 %v4265
    %4428 = vmatprep.subr.bf16.mxu0 %v4270
    %4429 = vmatpush1.bf16.msra.mxu0 %v4269
    %4430 = vmatprep.subr.bf16.mxu0 %v4274
    %4431 = vmatpush1.bf16.msra.mxu0 %v4273
    %4432 = vmatprep.subr.bf16.mxu0 %v4278
    %4433 = vmatpush1.bf16.msra.mxu0 %v4277
    %4434 = vmatprep.subr.bf16.mxu0 %v4282
    %4435 = vmatpush1.bf16.msra.mxu0 %v4281
    %4436 = vmatprep.subr.bf16.mxu0 %v4286
    %4437 = vmatpush1.bf16.msra.mxu0 %v4285
    %4438 = vmatprep.subr.bf16.mxu0 %v4290
    %4439 = vmatpush1.bf16.msra.mxu0 %v4289
    %4440 = vmatprep.subr.bf16.mxu0 %v4294
    %4441 = vmatpush1.bf16.msra.mxu0 %v4293
    %4442 = vmatprep.subr.bf16.mxu0 %v4298
    %4443 = vmatpush1.bf16.msra.mxu0 %v4297
    %4444 = vmatprep.subr.bf16.mxu0 %v4302
    %4445 = vmatpush1.bf16.msra.mxu0 %v4301
    %4446 = vmatprep.subr.bf16.mxu0 %v4306
    %4447 = vmatpush1.bf16.msra.mxu0 %v4305
    %4448 = vmatprep.subr.bf16.mxu0 %v4310
    %4449 = vmatpush1.bf16.msra.mxu0 %v4309
    %4450 = vmatprep.subr.bf16.mxu0 %v4314
    %4451 = vmatpush1.bf16.msra.mxu0 %v4313
    %4452 = vmatprep.mubr.bf16.mxu0 %v3972
    %4453 = vmatmul.mubr.bf16.gmra.mrb[0].mxu0 %v3971
    %v4454 = vpop.f32.mrb[0].mxu0
    %v4455 = vadd.f32 %v4050, %v4454
    %v4456 = vpop.f32.mrb[0].mxu0
    %v4457 = vadd.f32 %v4054, %v4456
    %v4458 = vpop.f32.mrb[0].mxu0
    %v4459 = vpop.f32.mrb[0].mxu0
    %4460 = vdwg.mxu0
    %v4461 = vmax.f32 %v4414, 0.0
    %v4462 = vmax.f32 %v4416, 0.0
    %v4463 = vmax.f32 %v4455, 0.0
    %v4464 = vmax.f32 %v4457, 0.0
    %v4465 = vpack.c.bf16 %v4461, %v4461
    %v4466 = vpack.c.bf16 %v4462, %v4462
    %v4467 = vpack.c.bf16 %v4463, %v4463
    %v4468 = vpack.c.bf16 %v4464, %v4464
    %v4469 = vld [vmem:[#allocation24] sm:$0xff]
    %v4470 = vld [vmem:[#allocation24 + $0x8] sm:$0xff]
    %v4471 = vld [vmem:[#allocation24 + $0x10] sm:$0xff]
    %v4472 = vld [vmem:[#allocation24 + $0x18] sm:$0xff]
    %v4473 = vld [vmem:[#allocation24 + $0x20] sm:$0xff]
    %v4474 = vld [vmem:[#allocation24 + $0x28] sm:$0xff]
    %v4475 = vld [vmem:[#allocation24 + $0x30] sm:$0xff]
    %v4476 = vld [vmem:[#allocation24 + $0x38] sm:$0xff]
    %v4477 = vld [vmem:[#allocation24 + $0x40] sm:$0xff]
    %v4478 = vld [vmem:[#allocation24 + $0x48] sm:$0xff]
    %v4479 = vld [vmem:[#allocation24 + $0x50] sm:$0xff]
    %v4480 = vld [vmem:[#allocation24 + $0x58] sm:$0xff]
    %v4481 = vld [vmem:[#allocation24 + $0x60] sm:$0xff]
    %v4482 = vld [vmem:[#allocation24 + $0x68] sm:$0xff]
    %v4483 = vld [vmem:[#allocation24 + $0x70] sm:$0xff]
    %v4484 = vld [vmem:[#allocation24 + $0x78] sm:$0xff]
    %v4485 = vld [vmem:[#allocation24 + $0x80] sm:$0xff]
    %v4486 = vld [vmem:[#allocation24 + $0x88] sm:$0xff]
    %v4487 = vld [vmem:[#allocation24 + $0x90] sm:$0xff]
    %v4488 = vld [vmem:[#allocation24 + $0x98] sm:$0xff]
    %v4489 = vld [vmem:[#allocation24 + $0xa0] sm:$0xff]
    %v4490 = vld [vmem:[#allocation24 + $0xa8] sm:$0xff]
    %v4491 = vld [vmem:[#allocation24 + $0xb0] sm:$0xff]
    %v4492 = vld [vmem:[#allocation24 + $0xb8] sm:$0xff]
    %v4493 = vld [vmem:[#allocation24 + $0xc0] sm:$0xff]
    %v4494 = vld [vmem:[#allocation24 + $0xc8] sm:$0xff]
    %v4495 = vld [vmem:[#allocation24 + $0xd0] sm:$0xff]
    %v4496 = vld [vmem:[#allocation24 + $0xd8] sm:$0xff]
    %v4497 = vld [vmem:[#allocation24 + $0xe0] sm:$0xff]
    %v4498 = vld [vmem:[#allocation24 + $0xe8] sm:$0xff]
    %v4499 = vld [vmem:[#allocation24 + $0xf0] sm:$0xff]
    %v4500 = vld [vmem:[#allocation24 + $0xf8] sm:$0xff]
    %v4501 = vld [vmem:[#allocation24 + $0x100] sm:$0xff]
    %v4502 = vld [vmem:[#allocation24 + $0x108] sm:$0xff]
    %v4503 = vld [vmem:[#allocation24 + $0x110] sm:$0xff]
    %v4504 = vld [vmem:[#allocation24 + $0x118] sm:$0xff]
    %v4505 = vld [vmem:[#allocation24 + $0x120] sm:$0xff]
    %v4506 = vld [vmem:[#allocation24 + $0x128] sm:$0xff]
    %v4507 = vld [vmem:[#allocation24 + $0x130] sm:$0xff]
    %v4508 = vld [vmem:[#allocation24 + $0x138] sm:$0xff]
    %v4509 = vld [vmem:[#allocation24 + $0x140] sm:$0xff]
    %v4510 = vld [vmem:[#allocation24 + $0x148] sm:$0xff]
    %v4511 = vld [vmem:[#allocation24 + $0x150] sm:$0xff]
    %v4512 = vld [vmem:[#allocation24 + $0x158] sm:$0xff]
    %v4513 = vld [vmem:[#allocation24 + $0x160] sm:$0xff]
    %v4514 = vld [vmem:[#allocation24 + $0x168] sm:$0xff]
    %v4515 = vld [vmem:[#allocation24 + $0x170] sm:$0xff]
    %v4516 = vld [vmem:[#allocation24 + $0x178] sm:$0xff]
    %v4517 = vld [vmem:[#allocation24 + $0x180] sm:$0xff]
    %v4518 = vld [vmem:[#allocation24 + $0x188] sm:$0xff]
    %v4519 = vld [vmem:[#allocation24 + $0x190] sm:$0xff]
    %v4520 = vld [vmem:[#allocation24 + $0x198] sm:$0xff]
    %v4521 = vld [vmem:[#allocation24 + $0x1a0] sm:$0xff]
    %v4522 = vld [vmem:[#allocation24 + $0x1a8] sm:$0xff]
    %v4523 = vld [vmem:[#allocation24 + $0x1b0] sm:$0xff]
    %v4524 = vld [vmem:[#allocation24 + $0x1b8] sm:$0xff]
    %v4525 = vld [vmem:[#allocation24 + $0x1c0] sm:$0xff]
    %v4526 = vld [vmem:[#allocation24 + $0x1c8] sm:$0xff]
    %v4527 = vld [vmem:[#allocation24 + $0x1d0] sm:$0xff]
    %v4528 = vld [vmem:[#allocation24 + $0x1d8] sm:$0xff]
    %v4529 = vld [vmem:[#allocation24 + $0x1e0] sm:$0xff]
    %v4530 = vld [vmem:[#allocation24 + $0x1e8] sm:$0xff]
    %v4531 = vld [vmem:[#allocation24 + $0x1f0] sm:$0xff]
    %v4532 = vld [vmem:[#allocation24 + $0x1f8] sm:$0xff]
    %v4533 = vld [vmem:[#allocation24 + $0x200] sm:$0xff]
    %v4534 = vld [vmem:[#allocation24 + $0x208] sm:$0xff]
    %v4535 = vld [vmem:[#allocation24 + $0x210] sm:$0xff]
    %v4536 = vld [vmem:[#allocation24 + $0x218] sm:$0xff]
    %v4537 = vld [vmem:[#allocation24 + $0x220] sm:$0xff]
    %v4538 = vld [vmem:[#allocation24 + $0x228] sm:$0xff]
    %v4539 = vld [vmem:[#allocation24 + $0x230] sm:$0xff]
    %v4540 = vld [vmem:[#allocation24 + $0x238] sm:$0xff]
    %v4541 = vld [vmem:[#allocation24 + $0x240] sm:$0xff]
    %v4542 = vld [vmem:[#allocation24 + $0x248] sm:$0xff]
    %v4543 = vld [vmem:[#allocation24 + $0x250] sm:$0xff]
    %v4544 = vld [vmem:[#allocation24 + $0x258] sm:$0xff]
    %v4545 = vld [vmem:[#allocation24 + $0x260] sm:$0xff]
    %v4546 = vld [vmem:[#allocation24 + $0x268] sm:$0xff]
    %v4547 = vld [vmem:[#allocation24 + $0x270] sm:$0xff]
    %v4548 = vld [vmem:[#allocation24 + $0x278] sm:$0xff]
    %v4549 = vld [vmem:[#allocation24 + $0x280] sm:$0xff]
    %v4550 = vld [vmem:[#allocation24 + $0x288] sm:$0xff]
    %v4551 = vld [vmem:[#allocation24 + $0x290] sm:$0xff]
    %v4552 = vld [vmem:[#allocation24 + $0x298] sm:$0xff]
    %v4553 = vld [vmem:[#allocation24 + $0x2a0] sm:$0xff]
    %v4554 = vld [vmem:[#allocation24 + $0x2a8] sm:$0xff]
    %v4555 = vld [vmem:[#allocation24 + $0x2b0] sm:$0xff]
    %v4556 = vld [vmem:[#allocation24 + $0x2b8] sm:$0xff]
    %v4557 = vld [vmem:[#allocation24 + $0x2c0] sm:$0xff]
    %v4558 = vld [vmem:[#allocation24 + $0x2c8] sm:$0xff]
    %v4559 = vld [vmem:[#allocation24 + $0x2d0] sm:$0xff]
    %v4560 = vld [vmem:[#allocation24 + $0x2d8] sm:$0xff]
    %v4561 = vld [vmem:[#allocation24 + $0x2e0] sm:$0xff]
    %v4562 = vld [vmem:[#allocation24 + $0x2e8] sm:$0xff]
    %v4563 = vld [vmem:[#allocation24 + $0x2f0] sm:$0xff]
    %v4564 = vld [vmem:[#allocation24 + $0x2f8] sm:$0xff]
    %v4565 = vld [vmem:[#allocation24 + $0x300] sm:$0xff]
    %v4566 = vld [vmem:[#allocation24 + $0x308] sm:$0xff]
    %v4567 = vld [vmem:[#allocation24 + $0x310] sm:$0xff]
    %v4568 = vld [vmem:[#allocation24 + $0x318] sm:$0xff]
    %v4569 = vld [vmem:[#allocation24 + $0x320] sm:$0xff]
    %v4570 = vld [vmem:[#allocation24 + $0x328] sm:$0xff]
    %v4571 = vld [vmem:[#allocation24 + $0x330] sm:$0xff]
    %v4572 = vld [vmem:[#allocation24 + $0x338] sm:$0xff]
    %v4573 = vld [vmem:[#allocation24 + $0x340] sm:$0xff]
    %v4574 = vld [vmem:[#allocation24 + $0x348] sm:$0xff]
    %v4575 = vld [vmem:[#allocation24 + $0x350] sm:$0xff]
    %v4576 = vld [vmem:[#allocation24 + $0x358] sm:$0xff]
    %v4577 = vld [vmem:[#allocation24 + $0x360] sm:$0xff]
    %v4578 = vld [vmem:[#allocation24 + $0x368] sm:$0xff]
    %v4579 = vld [vmem:[#allocation24 + $0x370] sm:$0xff]
    %v4580 = vld [vmem:[#allocation24 + $0x378] sm:$0xff]
    %v4581 = vld [vmem:[#allocation24 + $0x380] sm:$0xff]
    %v4582 = vld [vmem:[#allocation24 + $0x388] sm:$0xff]
    %v4583 = vld [vmem:[#allocation24 + $0x390] sm:$0xff]
    %v4584 = vld [vmem:[#allocation24 + $0x398] sm:$0xff]
    %v4585 = vld [vmem:[#allocation24 + $0x3a0] sm:$0xff]
    %v4586 = vld [vmem:[#allocation24 + $0x3a8] sm:$0xff]
    %v4587 = vld [vmem:[#allocation24 + $0x3b0] sm:$0xff]
    %v4588 = vld [vmem:[#allocation24 + $0x3b8] sm:$0xff]
    %v4589 = vld [vmem:[#allocation24 + $0x3c0] sm:$0xff]
    %v4590 = vld [vmem:[#allocation24 + $0x3c8] sm:$0xff]
    %v4591 = vld [vmem:[#allocation24 + $0x3d0] sm:$0xff]
    %v4592 = vld [vmem:[#allocation24 + $0x3d8] sm:$0xff]
    %v4593 = vld [vmem:[#allocation24 + $0x3e0] sm:$0xff]
    %v4594 = vld [vmem:[#allocation24 + $0x3e8] sm:$0xff]
    %v4595 = vld [vmem:[#allocation24 + $0x3f0] sm:$0xff]
    %v4596 = vld [vmem:[#allocation24 + $0x3f8] sm:$0xff]
    %v4597 = vld [vmem:[%s18] sm:$0xf]
    %v4599 = vlaneseq
    %v4600 = vshrl.u32 %v4599, 7
    %v4601 = vsub.s32 0, %v4600
    %v4602 = vrot.slane %v4597, %v4601
    %v4603 = vlaneseq
    %v4604 = vshrl.u32 %v4603, 7
    %v4605 = vsub.s32 1, %v4604
    %v4606 = vrot.slane %v4597, %v4605
    %v4607 = vlaneseq
    %v4608 = vshrl.u32 %v4607, 7
    %v4609 = vsub.s32 2, %v4608
    %v4610 = vrot.slane %v4597, %v4609
    %v4611 = vlaneseq
    %v4612 = vshrl.u32 %v4611, 7
    %v4613 = vsub.s32 3, %v4612
    %v4614 = vrot.slane %v4597, %v4613
    %v4747 = vunpack.c.l.b16 %v4469
    %v4748 = vunpack.c.h.b16 %v4469
    %v4749 = vunpack.c.l.b16 %v4470
    %v4750 = vunpack.c.h.b16 %v4470
    %v4751 = vunpack.c.l.b16 %v4471
    %v4752 = vunpack.c.h.b16 %v4471
    %v4753 = vunpack.c.l.b16 %v4472
    %v4754 = vunpack.c.h.b16 %v4472
    %v4755 = vunpack.c.l.b16 %v4473
    %v4756 = vunpack.c.h.b16 %v4473
    %v4757 = vunpack.c.l.b16 %v4474
    %v4758 = vunpack.c.h.b16 %v4474
    %v4759 = vunpack.c.l.b16 %v4475
    %v4760 = vunpack.c.h.b16 %v4475
    %v4761 = vunpack.c.l.b16 %v4476
    %v4762 = vunpack.c.h.b16 %v4476
    %v4763 = vunpack.c.l.b16 %v4477
    %v4764 = vunpack.c.h.b16 %v4477
    %v4765 = vunpack.c.l.b16 %v4478
    %v4766 = vunpack.c.h.b16 %v4478
    %v4767 = vunpack.c.l.b16 %v4479
    %v4768 = vunpack.c.h.b16 %v4479
    %v4769 = vunpack.c.l.b16 %v4480
    %v4770 = vunpack.c.h.b16 %v4480
    %v4771 = vunpack.c.l.b16 %v4481
    %v4772 = vunpack.c.h.b16 %v4481
    %v4773 = vunpack.c.l.b16 %v4482
    %v4774 = vunpack.c.h.b16 %v4482
    %v4775 = vunpack.c.l.b16 %v4483
    %v4776 = vunpack.c.h.b16 %v4483
    %v4777 = vunpack.c.l.b16 %v4484
    %v4778 = vunpack.c.h.b16 %v4484
    %v4779 = vunpack.c.l.b16 %v4485
    %v4780 = vunpack.c.h.b16 %v4485
    %v4781 = vunpack.c.l.b16 %v4486
    %v4782 = vunpack.c.h.b16 %v4486
    %v4783 = vunpack.c.l.b16 %v4487
    %v4784 = vunpack.c.h.b16 %v4487
    %v4785 = vunpack.c.l.b16 %v4488
    %v4786 = vunpack.c.h.b16 %v4488
    %v4787 = vunpack.c.l.b16 %v4489
    %v4788 = vunpack.c.h.b16 %v4489
    %v4789 = vunpack.c.l.b16 %v4490
    %v4790 = vunpack.c.h.b16 %v4490
    %v4791 = vunpack.c.l.b16 %v4491
    %v4792 = vunpack.c.h.b16 %v4491
    %v4793 = vunpack.c.l.b16 %v4492
    %v4794 = vunpack.c.h.b16 %v4492
    %v4795 = vunpack.c.l.b16 %v4493
    %v4796 = vunpack.c.h.b16 %v4493
    %v4797 = vunpack.c.l.b16 %v4494
    %v4798 = vunpack.c.h.b16 %v4494
    %v4799 = vunpack.c.l.b16 %v4495
    %v4800 = vunpack.c.h.b16 %v4495
    %v4801 = vunpack.c.l.b16 %v4496
    %v4802 = vunpack.c.h.b16 %v4496
    %v4803 = vunpack.c.l.b16 %v4497
    %v4804 = vunpack.c.h.b16 %v4497
    %v4805 = vunpack.c.l.b16 %v4498
    %v4806 = vunpack.c.h.b16 %v4498
    %v4807 = vunpack.c.l.b16 %v4499
    %v4808 = vunpack.c.h.b16 %v4499
    %v4809 = vunpack.c.l.b16 %v4500
    %v4810 = vunpack.c.h.b16 %v4500
    %v4811 = vunpack.c.l.b16 %v4501
    %v4812 = vunpack.c.h.b16 %v4501
    %v4813 = vunpack.c.l.b16 %v4502
    %v4814 = vunpack.c.h.b16 %v4502
    %v4815 = vunpack.c.l.b16 %v4503
    %v4816 = vunpack.c.h.b16 %v4503
    %v4817 = vunpack.c.l.b16 %v4504
    %v4818 = vunpack.c.h.b16 %v4504
    %v4819 = vunpack.c.l.b16 %v4505
    %v4820 = vunpack.c.h.b16 %v4505
    %v4821 = vunpack.c.l.b16 %v4506
    %v4822 = vunpack.c.h.b16 %v4506
    %v4823 = vunpack.c.l.b16 %v4507
    %v4824 = vunpack.c.h.b16 %v4507
    %v4825 = vunpack.c.l.b16 %v4508
    %v4826 = vunpack.c.h.b16 %v4508
    %v4827 = vunpack.c.l.b16 %v4509
    %v4828 = vunpack.c.h.b16 %v4509
    %v4829 = vunpack.c.l.b16 %v4510
    %v4830 = vunpack.c.h.b16 %v4510
    %v4831 = vunpack.c.l.b16 %v4511
    %v4832 = vunpack.c.h.b16 %v4511
    %v4833 = vunpack.c.l.b16 %v4512
    %v4834 = vunpack.c.h.b16 %v4512
    %v4835 = vunpack.c.l.b16 %v4513
    %v4836 = vunpack.c.h.b16 %v4513
    %v4837 = vunpack.c.l.b16 %v4514
    %v4838 = vunpack.c.h.b16 %v4514
    %v4839 = vunpack.c.l.b16 %v4515
    %v4840 = vunpack.c.h.b16 %v4515
    %v4841 = vunpack.c.l.b16 %v4516
    %v4842 = vunpack.c.h.b16 %v4516
    %v4843 = vunpack.c.l.b16 %v4517
    %v4844 = vunpack.c.h.b16 %v4517
    %v4845 = vunpack.c.l.b16 %v4518
    %v4846 = vunpack.c.h.b16 %v4518
    %v4847 = vunpack.c.l.b16 %v4519
    %v4848 = vunpack.c.h.b16 %v4519
    %v4849 = vunpack.c.l.b16 %v4520
    %v4850 = vunpack.c.h.b16 %v4520
    %v4851 = vunpack.c.l.b16 %v4521
    %v4852 = vunpack.c.h.b16 %v4521
    %v4853 = vunpack.c.l.b16 %v4522
    %v4854 = vunpack.c.h.b16 %v4522
    %v4855 = vunpack.c.l.b16 %v4523
    %v4856 = vunpack.c.h.b16 %v4523
    %v4857 = vunpack.c.l.b16 %v4524
    %v4858 = vunpack.c.h.b16 %v4524
    %v4859 = vunpack.c.l.b16 %v4525
    %v4860 = vunpack.c.h.b16 %v4525
    %v4861 = vunpack.c.l.b16 %v4526
    %v4862 = vunpack.c.h.b16 %v4526
    %v4863 = vunpack.c.l.b16 %v4527
    %v4864 = vunpack.c.h.b16 %v4527
    %v4865 = vunpack.c.l.b16 %v4528
    %v4866 = vunpack.c.h.b16 %v4528
    %v4867 = vunpack.c.l.b16 %v4529
    %v4868 = vunpack.c.h.b16 %v4529
    %v4869 = vunpack.c.l.b16 %v4530
    %v4870 = vunpack.c.h.b16 %v4530
    %v4871 = vunpack.c.l.b16 %v4531
    %v4872 = vunpack.c.h.b16 %v4531
    %v4873 = vunpack.c.l.b16 %v4532
    %v4874 = vunpack.c.h.b16 %v4532
    %v4875 = vunpack.c.l.b16 %v4533
    %v4876 = vunpack.c.h.b16 %v4533
    %v4877 = vunpack.c.l.b16 %v4534
    %v4878 = vunpack.c.h.b16 %v4534
    %v4879 = vunpack.c.l.b16 %v4535
    %v4880 = vunpack.c.h.b16 %v4535
    %v4881 = vunpack.c.l.b16 %v4536
    %v4882 = vunpack.c.h.b16 %v4536
    %v4883 = vunpack.c.l.b16 %v4537
    %v4884 = vunpack.c.h.b16 %v4537
    %v4885 = vunpack.c.l.b16 %v4538
    %v4886 = vunpack.c.h.b16 %v4538
    %v4887 = vunpack.c.l.b16 %v4539
    %v4888 = vunpack.c.h.b16 %v4539
    %v4889 = vunpack.c.l.b16 %v4540
    %v4890 = vunpack.c.h.b16 %v4540
    %v4891 = vunpack.c.l.b16 %v4541
    %v4892 = vunpack.c.h.b16 %v4541
    %v4893 = vunpack.c.l.b16 %v4542
    %v4894 = vunpack.c.h.b16 %v4542
    %v4895 = vunpack.c.l.b16 %v4543
    %v4896 = vunpack.c.h.b16 %v4543
    %v4897 = vunpack.c.l.b16 %v4544
    %v4898 = vunpack.c.h.b16 %v4544
    %v4899 = vunpack.c.l.b16 %v4545
    %v4900 = vunpack.c.h.b16 %v4545
    %v4901 = vunpack.c.l.b16 %v4546
    %v4902 = vunpack.c.h.b16 %v4546
    %v4903 = vunpack.c.l.b16 %v4547
    %v4904 = vunpack.c.h.b16 %v4547
    %v4905 = vunpack.c.l.b16 %v4548
    %v4906 = vunpack.c.h.b16 %v4548
    %v4907 = vunpack.c.l.b16 %v4549
    %v4908 = vunpack.c.h.b16 %v4549
    %v4909 = vunpack.c.l.b16 %v4550
    %v4910 = vunpack.c.h.b16 %v4550
    %v4911 = vunpack.c.l.b16 %v4551
    %v4912 = vunpack.c.h.b16 %v4551
    %v4913 = vunpack.c.l.b16 %v4552
    %v4914 = vunpack.c.h.b16 %v4552
    %v4915 = vunpack.c.l.b16 %v4553
    %v4916 = vunpack.c.h.b16 %v4553
    %v4917 = vunpack.c.l.b16 %v4554
    %v4918 = vunpack.c.h.b16 %v4554
    %v4919 = vunpack.c.l.b16 %v4555
    %v4920 = vunpack.c.h.b16 %v4555
    %v4921 = vunpack.c.l.b16 %v4556
    %v4922 = vunpack.c.h.b16 %v4556
    %v4923 = vunpack.c.l.b16 %v4557
    %v4924 = vunpack.c.h.b16 %v4557
    %v4925 = vunpack.c.l.b16 %v4558
    %v4926 = vunpack.c.h.b16 %v4558
    %v4927 = vunpack.c.l.b16 %v4559
    %v4928 = vunpack.c.h.b16 %v4559
    %v4929 = vunpack.c.l.b16 %v4560
    %v4930 = vunpack.c.h.b16 %v4560
    %v4931 = vunpack.c.l.b16 %v4561
    %v4932 = vunpack.c.h.b16 %v4561
    %v4933 = vunpack.c.l.b16 %v4562
    %v4934 = vunpack.c.h.b16 %v4562
    %v4935 = vunpack.c.l.b16 %v4563
    %v4936 = vunpack.c.h.b16 %v4563
    %v4937 = vunpack.c.l.b16 %v4564
    %v4938 = vunpack.c.h.b16 %v4564
    %v4939 = vunpack.c.l.b16 %v4565
    %v4940 = vunpack.c.h.b16 %v4565
    %v4941 = vunpack.c.l.b16 %v4566
    %v4942 = vunpack.c.h.b16 %v4566
    %v4943 = vunpack.c.l.b16 %v4567
    %v4944 = vunpack.c.h.b16 %v4567
    %v4945 = vunpack.c.l.b16 %v4568
    %v4946 = vunpack.c.h.b16 %v4568
    %v4947 = vunpack.c.l.b16 %v4569
    %v4948 = vunpack.c.h.b16 %v4569
    %v4949 = vunpack.c.l.b16 %v4570
    %v4950 = vunpack.c.h.b16 %v4570
    %v4951 = vunpack.c.l.b16 %v4571
    %v4952 = vunpack.c.h.b16 %v4571
    %v4953 = vunpack.c.l.b16 %v4572
    %v4954 = vunpack.c.h.b16 %v4572
    %v4955 = vunpack.c.l.b16 %v4573
    %v4956 = vunpack.c.h.b16 %v4573
    %v4957 = vunpack.c.l.b16 %v4574
    %v4958 = vunpack.c.h.b16 %v4574
    %v4959 = vunpack.c.l.b16 %v4575
    %v4960 = vunpack.c.h.b16 %v4575
    %v4961 = vunpack.c.l.b16 %v4576
    %v4962 = vunpack.c.h.b16 %v4576
    %v4963 = vunpack.c.l.b16 %v4577
    %v4964 = vunpack.c.h.b16 %v4577
    %v4965 = vunpack.c.l.b16 %v4578
    %v4966 = vunpack.c.h.b16 %v4578
    %v4967 = vunpack.c.l.b16 %v4579
    %v4968 = vunpack.c.h.b16 %v4579
    %v4969 = vunpack.c.l.b16 %v4580
    %v4970 = vunpack.c.h.b16 %v4580
    %v4971 = vunpack.c.l.b16 %v4581
    %v4972 = vunpack.c.h.b16 %v4581
    %v4973 = vunpack.c.l.b16 %v4582
    %v4974 = vunpack.c.h.b16 %v4582
    %v4975 = vunpack.c.l.b16 %v4583
    %v4976 = vunpack.c.h.b16 %v4583
    %v4977 = vunpack.c.l.b16 %v4584
    %v4978 = vunpack.c.h.b16 %v4584
    %v4979 = vunpack.c.l.b16 %v4585
    %v4980 = vunpack.c.h.b16 %v4585
    %v4981 = vunpack.c.l.b16 %v4586
    %v4982 = vunpack.c.h.b16 %v4586
    %v4983 = vunpack.c.l.b16 %v4587
    %v4984 = vunpack.c.h.b16 %v4587
    %v4985 = vunpack.c.l.b16 %v4588
    %v4986 = vunpack.c.h.b16 %v4588
    %v4987 = vunpack.c.l.b16 %v4589
    %v4988 = vunpack.c.h.b16 %v4589
    %v4989 = vunpack.c.l.b16 %v4590
    %v4990 = vunpack.c.h.b16 %v4590
    %v4991 = vunpack.c.l.b16 %v4591
    %v4992 = vunpack.c.h.b16 %v4591
    %v4993 = vunpack.c.l.b16 %v4592
    %v4994 = vunpack.c.h.b16 %v4592
    %v4995 = vunpack.c.l.b16 %v4593
    %v4996 = vunpack.c.h.b16 %v4593
    %v4997 = vunpack.c.l.b16 %v4594
    %v4998 = vunpack.c.h.b16 %v4594
    %v4999 = vunpack.c.l.b16 %v4595
    %v5000 = vunpack.c.h.b16 %v4595
    %v5001 = vunpack.c.l.b16 %v4596
    %v5002 = vunpack.c.h.b16 %v4596
    %v5003 = vpack.c.b16 %v4751, %v4747
    %v5004 = vpack.c.b16 %v4752, %v4748
    %v5005 = vpack.c.b16 %v4753, %v4749
    %v5006 = vpack.c.b16 %v4754, %v4750
    %v5007 = vpack.c.b16 %v4759, %v4755
    %v5008 = vpack.c.b16 %v4760, %v4756
    %v5009 = vpack.c.b16 %v4761, %v4757
    %v5010 = vpack.c.b16 %v4762, %v4758
    %v5011 = vpack.c.b16 %v4767, %v4763
    %v5012 = vpack.c.b16 %v4768, %v4764
    %v5013 = vpack.c.b16 %v4769, %v4765
    %v5014 = vpack.c.b16 %v4770, %v4766
    %v5015 = vpack.c.b16 %v4775, %v4771
    %v5016 = vpack.c.b16 %v4776, %v4772
    %v5017 = vpack.c.b16 %v4777, %v4773
    %v5018 = vpack.c.b16 %v4778, %v4774
    %v5019 = vpack.c.b16 %v4783, %v4779
    %v5020 = vpack.c.b16 %v4784, %v4780
    %v5021 = vpack.c.b16 %v4785, %v4781
    %v5022 = vpack.c.b16 %v4786, %v4782
    %v5023 = vpack.c.b16 %v4791, %v4787
    %v5024 = vpack.c.b16 %v4792, %v4788
    %v5025 = vpack.c.b16 %v4793, %v4789
    %v5026 = vpack.c.b16 %v4794, %v4790
    %v5027 = vpack.c.b16 %v4799, %v4795
    %v5028 = vpack.c.b16 %v4800, %v4796
    %v5029 = vpack.c.b16 %v4801, %v4797
    %v5030 = vpack.c.b16 %v4802, %v4798
    %v5031 = vpack.c.b16 %v4807, %v4803
    %v5032 = vpack.c.b16 %v4808, %v4804
    %v5033 = vpack.c.b16 %v4809, %v4805
    %v5034 = vpack.c.b16 %v4810, %v4806
    %v5035 = vpack.c.b16 %v4815, %v4811
    %v5036 = vpack.c.b16 %v4816, %v4812
    %v5037 = vpack.c.b16 %v4817, %v4813
    %v5038 = vpack.c.b16 %v4818, %v4814
    %v5039 = vpack.c.b16 %v4823, %v4819
    %v5040 = vpack.c.b16 %v4824, %v4820
    %v5041 = vpack.c.b16 %v4825, %v4821
    %v5042 = vpack.c.b16 %v4826, %v4822
    %v5043 = vpack.c.b16 %v4831, %v4827
    %v5044 = vpack.c.b16 %v4832, %v4828
    %v5045 = vpack.c.b16 %v4833, %v4829
    %v5046 = vpack.c.b16 %v4834, %v4830
    %v5047 = vpack.c.b16 %v4839, %v4835
    %v5048 = vpack.c.b16 %v4840, %v4836
    %v5049 = vpack.c.b16 %v4841, %v4837
    %v5050 = vpack.c.b16 %v4842, %v4838
    %v5051 = vpack.c.b16 %v4847, %v4843
    %v5052 = vpack.c.b16 %v4848, %v4844
    %v5053 = vpack.c.b16 %v4849, %v4845
    %v5054 = vpack.c.b16 %v4850, %v4846
    %v5055 = vpack.c.b16 %v4855, %v4851
    %v5056 = vpack.c.b16 %v4856, %v4852
    %v5057 = vpack.c.b16 %v4857, %v4853
    %v5058 = vpack.c.b16 %v4858, %v4854
    %v5059 = vpack.c.b16 %v4863, %v4859
    %v5060 = vpack.c.b16 %v4864, %v4860
    %v5061 = vpack.c.b16 %v4865, %v4861
    %v5062 = vpack.c.b16 %v4866, %v4862
    %v5063 = vpack.c.b16 %v4871, %v4867
    %v5064 = vpack.c.b16 %v4872, %v4868
    %v5065 = vpack.c.b16 %v4873, %v4869
    %v5066 = vpack.c.b16 %v4874, %v4870
    %v5067 = vpack.c.b16 %v4879, %v4875
    %v5068 = vpack.c.b16 %v4880, %v4876
    %v5069 = vpack.c.b16 %v4881, %v4877
    %v5070 = vpack.c.b16 %v4882, %v4878
    %v5071 = vpack.c.b16 %v4887, %v4883
    %v5072 = vpack.c.b16 %v4888, %v4884
    %v5073 = vpack.c.b16 %v4889, %v4885
    %v5074 = vpack.c.b16 %v4890, %v4886
    %v5075 = vpack.c.b16 %v4895, %v4891
    %v5076 = vpack.c.b16 %v4896, %v4892
    %v5077 = vpack.c.b16 %v4897, %v4893
    %v5078 = vpack.c.b16 %v4898, %v4894
    %v5079 = vpack.c.b16 %v4903, %v4899
    %v5080 = vpack.c.b16 %v4904, %v4900
    %v5081 = vpack.c.b16 %v4905, %v4901
    %v5082 = vpack.c.b16 %v4906, %v4902
    %v5083 = vpack.c.b16 %v4911, %v4907
    %v5084 = vpack.c.b16 %v4912, %v4908
    %v5085 = vpack.c.b16 %v4913, %v4909
    %v5086 = vpack.c.b16 %v4914, %v4910
    %v5087 = vpack.c.b16 %v4919, %v4915
    %v5088 = vpack.c.b16 %v4920, %v4916
    %v5089 = vpack.c.b16 %v4921, %v4917
    %v5090 = vpack.c.b16 %v4922, %v4918
    %v5091 = vpack.c.b16 %v4927, %v4923
    %v5092 = vpack.c.b16 %v4928, %v4924
    %v5093 = vpack.c.b16 %v4929, %v4925
    %v5094 = vpack.c.b16 %v4930, %v4926
    %v5095 = vpack.c.b16 %v4935, %v4931
    %v5096 = vpack.c.b16 %v4936, %v4932
    %v5097 = vpack.c.b16 %v4937, %v4933
    %v5098 = vpack.c.b16 %v4938, %v4934
    %v5099 = vpack.c.b16 %v4943, %v4939
    %v5100 = vpack.c.b16 %v4944, %v4940
    %v5101 = vpack.c.b16 %v4945, %v4941
    %v5102 = vpack.c.b16 %v4946, %v4942
    %v5103 = vpack.c.b16 %v4951, %v4947
    %v5104 = vpack.c.b16 %v4952, %v4948
    %v5105 = vpack.c.b16 %v4953, %v4949
    %v5106 = vpack.c.b16 %v4954, %v4950
    %v5107 = vpack.c.b16 %v4959, %v4955
    %v5108 = vpack.c.b16 %v4960, %v4956
    %v5109 = vpack.c.b16 %v4961, %v4957
    %v5110 = vpack.c.b16 %v4962, %v4958
    %v5111 = vpack.c.b16 %v4967, %v4963
    %v5112 = vpack.c.b16 %v4968, %v4964
    %v5113 = vpack.c.b16 %v4969, %v4965
    %v5114 = vpack.c.b16 %v4970, %v4966
    %v5115 = vpack.c.b16 %v4975, %v4971
    %v5116 = vpack.c.b16 %v4976, %v4972
    %v5117 = vpack.c.b16 %v4977, %v4973
    %v5118 = vpack.c.b16 %v4978, %v4974
    %v5119 = vpack.c.b16 %v4983, %v4979
    %v5120 = vpack.c.b16 %v4984, %v4980
    %v5121 = vpack.c.b16 %v4985, %v4981
    %v5122 = vpack.c.b16 %v4986, %v4982
    %v5123 = vpack.c.b16 %v4991, %v4987
    %v5124 = vpack.c.b16 %v4992, %v4988
    %v5125 = vpack.c.b16 %v4993, %v4989
    %v5126 = vpack.c.b16 %v4994, %v4990
    %v5127 = vpack.c.b16 %v4999, %v4995
    %v5128 = vpack.c.b16 %v5000, %v4996
    %v5129 = vpack.c.b16 %v5001, %v4997
    %v5130 = vpack.c.b16 %v5002, %v4998
    %5259 = vmatprep.subr.bf16.mxu0 %v5004
    %5260 = vmatpush1.bf16.msra.mxu0 %v5003
    %5261 = vmatprep.subr.bf16.mxu0 %v5008
    %5262 = vmatpush1.bf16.msra.mxu0 %v5007
    %5263 = vmatprep.subr.bf16.mxu0 %v5012
    %5264 = vmatpush1.bf16.msra.mxu0 %v5011
    %5265 = vmatprep.subr.bf16.mxu0 %v5016
    %5266 = vmatpush1.bf16.msra.mxu0 %v5015
    %5267 = vmatprep.subr.bf16.mxu0 %v5020
    %5268 = vmatpush1.bf16.msra.mxu0 %v5019
    %5269 = vmatprep.subr.bf16.mxu0 %v5024
    %5270 = vmatpush1.bf16.msra.mxu0 %v5023
    %5271 = vmatprep.subr.bf16.mxu0 %v5028
    %5272 = vmatpush1.bf16.msra.mxu0 %v5027
    %5273 = vmatprep.subr.bf16.mxu0 %v5032
    %5274 = vmatpush1.bf16.msra.mxu0 %v5031
    %5275 = vmatprep.subr.bf16.mxu0 %v5036
    %5276 = vmatpush1.bf16.msra.mxu0 %v5035
    %5277 = vmatprep.subr.bf16.mxu0 %v5040
    %5278 = vmatpush1.bf16.msra.mxu0 %v5039
    %5279 = vmatprep.subr.bf16.mxu0 %v5044
    %5280 = vmatpush1.bf16.msra.mxu0 %v5043
    %5281 = vmatprep.subr.bf16.mxu0 %v5048
    %5282 = vmatpush1.bf16.msra.mxu0 %v5047
    %5283 = vmatprep.subr.bf16.mxu0 %v5052
    %5284 = vmatpush1.bf16.msra.mxu0 %v5051
    %5285 = vmatprep.subr.bf16.mxu0 %v5056
    %5286 = vmatpush1.bf16.msra.mxu0 %v5055
    %5287 = vmatprep.subr.bf16.mxu0 %v5060
    %5288 = vmatpush1.bf16.msra.mxu0 %v5059
    %5289 = vmatprep.subr.bf16.mxu0 %v5064
    %5290 = vmatpush1.bf16.msra.mxu0 %v5063
    %5291 = vmatprep.mubr.bf16.mxu0 %v4466
    %5292 = vmatmul.mubr.bf16.gmra.mrb[0].mxu0 %v4465
    %v5293 = vpop.f32.mrb[0].mxu0
    %v5294 = vadd.f32 %v4602, %v5293
    %v5295 = vpop.f32.mrb[0].mxu0
    %v5296 = vadd.f32 %v4606, %v5295
    %v5297 = vpop.f32.mrb[0].mxu0
    %v5298 = vpop.f32.mrb[0].mxu0
    %5299 = vdwg.mxu0
    %5300 = vmatprep.subr.bf16.mxu0 %v5068
    %5301 = vmatpush1.bf16.msra.mxu0 %v5067
    %5302 = vmatprep.subr.bf16.mxu0 %v5072
    %5303 = vmatpush1.bf16.msra.mxu0 %v5071
    %5304 = vmatprep.subr.bf16.mxu0 %v5076
    %5305 = vmatpush1.bf16.msra.mxu0 %v5075
    %5306 = vmatprep.subr.bf16.mxu0 %v5080
    %5307 = vmatpush1.bf16.msra.mxu0 %v5079
    %5308 = vmatprep.subr.bf16.mxu0 %v5084
    %5309 = vmatpush1.bf16.msra.mxu0 %v5083
    %5310 = vmatprep.subr.bf16.mxu0 %v5088
    %5311 = vmatpush1.bf16.msra.mxu0 %v5087
    %5312 = vmatprep.subr.bf16.mxu0 %v5092
    %5313 = vmatpush1.bf16.msra.mxu0 %v5091
    %5314 = vmatprep.subr.bf16.mxu0 %v5096
    %5315 = vmatpush1.bf16.msra.mxu0 %v5095
    %5316 = vmatprep.subr.bf16.mxu0 %v5100
    %5317 = vmatpush1.bf16.msra.mxu0 %v5099
    %5318 = vmatprep.subr.bf16.mxu0 %v5104
    %5319 = vmatpush1.bf16.msra.mxu0 %v5103
    %5320 = vmatprep.subr.bf16.mxu0 %v5108
    %5321 = vmatpush1.bf16.msra.mxu0 %v5107
    %5322 = vmatprep.subr.bf16.mxu0 %v5112
    %5323 = vmatpush1.bf16.msra.mxu0 %v5111
    %5324 = vmatprep.subr.bf16.mxu0 %v5116
    %5325 = vmatpush1.bf16.msra.mxu0 %v5115
    %5326 = vmatprep.subr.bf16.mxu0 %v5120
    %5327 = vmatpush1.bf16.msra.mxu0 %v5119
    %5328 = vmatprep.subr.bf16.mxu0 %v5124
    %5329 = vmatpush1.bf16.msra.mxu0 %v5123
    %5330 = vmatprep.subr.bf16.mxu0 %v5128
    %5331 = vmatpush1.bf16.msra.mxu0 %v5127
    %5332 = vmatprep.mubr.bf16.mxu0 %v4468
    %5333 = vmatmul.mubr.bf16.gmra.mrb[0].mxu0 %v4467
    %v5334 = vpop.f32.mrb[0].mxu0
    %v5335 = vadd.f32 %v5294, %v5334
    %v5336 = vpop.f32.mrb[0].mxu0
    %v5337 = vadd.f32 %v5296, %v5336
    %v5338 = vpop.f32.mrb[0].mxu0
    %v5339 = vpop.f32.mrb[0].mxu0
    %5340 = vdwg.mxu0
    %5341 = vmatprep.subr.bf16.mxu0 %v5006
    %5342 = vmatpush1.bf16.msra.mxu0 %v5005
    %5343 = vmatprep.subr.bf16.mxu0 %v5010
    %5344 = vmatpush1.bf16.msra.mxu0 %v5009
    %5345 = vmatprep.subr.bf16.mxu0 %v5014
    %5346 = vmatpush1.bf16.msra.mxu0 %v5013
    %5347 = vmatprep.subr.bf16.mxu0 %v5018
    %5348 = vmatpush1.bf16.msra.mxu0 %v5017
    %5349 = vmatprep.subr.bf16.mxu0 %v5022
    %5350 = vmatpush1.bf16.msra.mxu0 %v5021
    %5351 = vmatprep.subr.bf16.mxu0 %v5026
    %5352 = vmatpush1.bf16.msra.mxu0 %v5025
    %5353 = vmatprep.subr.bf16.mxu0 %v5030
    %5354 = vmatpush1.bf16.msra.mxu0 %v5029
    %5355 = vmatprep.subr.bf16.mxu0 %v5034
    %5356 = vmatpush1.bf16.msra.mxu0 %v5033
    %5357 = vmatprep.subr.bf16.mxu0 %v5038
    %5358 = vmatpush1.bf16.msra.mxu0 %v5037
    %5359 = vmatprep.subr.bf16.mxu0 %v5042
    %5360 = vmatpush1.bf16.msra.mxu0 %v5041
    %5361 = vmatprep.subr.bf16.mxu0 %v5046
    %5362 = vmatpush1.bf16.msra.mxu0 %v5045
    %5363 = vmatprep.subr.bf16.mxu0 %v5050
    %5364 = vmatpush1.bf16.msra.mxu0 %v5049
    %5365 = vmatprep.subr.bf16.mxu0 %v5054
    %5366 = vmatpush1.bf16.msra.mxu0 %v5053
    %5367 = vmatprep.subr.bf16.mxu0 %v5058
    %5368 = vmatpush1.bf16.msra.mxu0 %v5057
    %5369 = vmatprep.subr.bf16.mxu0 %v5062
    %5370 = vmatpush1.bf16.msra.mxu0 %v5061
    %5371 = vmatprep.subr.bf16.mxu0 %v5066
    %5372 = vmatpush1.bf16.msra.mxu0 %v5065
    %5373 = vmatprep.mubr.bf16.mxu0 %v4466
    %5374 = vmatmul.mubr.bf16.gmra.mrb[0].mxu0 %v4465
    %v5375 = vpop.f32.mrb[0].mxu0
    %v5376 = vadd.f32 %v4610, %v5375
    %v5377 = vpop.f32.mrb[0].mxu0
    %v5378 = vadd.f32 %v4614, %v5377
    %v5379 = vpop.f32.mrb[0].mxu0
    %v5380 = vpop.f32.mrb[0].mxu0
    %5381 = vdwg.mxu0
    %5382 = vmatprep.subr.bf16.mxu0 %v5070
    %5383 = vmatpush1.bf16.msra.mxu0 %v5069
    %5384 = vmatprep.subr.bf16.mxu0 %v5074
    %5385 = vmatpush1.bf16.msra.mxu0 %v5073
    %5386 = vmatprep.subr.bf16.mxu0 %v5078
    %5387 = vmatpush1.bf16.msra.mxu0 %v5077
    %5388 = vmatprep.subr.bf16.mxu0 %v5082
    %5389 = vmatpush1.bf16.msra.mxu0 %v5081
    %5390 = vmatprep.subr.bf16.mxu0 %v5086
    %5391 = vmatpush1.bf16.msra.mxu0 %v5085
    %5392 = vmatprep.subr.bf16.mxu0 %v5090
    %5393 = vmatpush1.bf16.msra.mxu0 %v5089
    %5394 = vmatprep.subr.bf16.mxu0 %v5094
    %5395 = vmatpush1.bf16.msra.mxu0 %v5093
    %5396 = vmatprep.subr.bf16.mxu0 %v5098
    %5397 = vmatpush1.bf16.msra.mxu0 %v5097
    %5398 = vmatprep.subr.bf16.mxu0 %v5102
    %5399 = vmatpush1.bf16.msra.mxu0 %v5101
    %5400 = vmatprep.subr.bf16.mxu0 %v5106
    %5401 = vmatpush1.bf16.msra.mxu0 %v5105
    %5402 = vmatprep.subr.bf16.mxu0 %v5110
    %5403 = vmatpush1.bf16.msra.mxu0 %v5109
    %5404 = vmatprep.subr.bf16.mxu0 %v5114
    %5405 = vmatpush1.bf16.msra.mxu0 %v5113
    %5406 = vmatprep.subr.bf16.mxu0 %v5118
    %5407 = vmatpush1.bf16.msra.mxu0 %v5117
    %5408 = vmatprep.subr.bf16.mxu0 %v5122
    %5409 = vmatpush1.bf16.msra.mxu0 %v5121
    %5410 = vmatprep.subr.bf16.mxu0 %v5126
    %5411 = vmatpush1.bf16.msra.mxu0 %v5125
    %5412 = vmatprep.subr.bf16.mxu0 %v5130
    %5413 = vmatpush1.bf16.msra.mxu0 %v5129
    %5414 = vmatprep.mubr.bf16.mxu0 %v4468
    %5415 = vmatmul.mubr.bf16.gmra.mrb[0].mxu0 %v4467
    %v5416 = vpop.f32.mrb[0].mxu0
    %v5417 = vadd.f32 %v5376, %v5416
    %v5418 = vpop.f32.mrb[0].mxu0
    %v5419 = vadd.f32 %v5378, %v5418
    %v5420 = vpop.f32.mrb[0].mxu0
    %v5421 = vpop.f32.mrb[0].mxu0
    %5422 = vdwg.mxu0
    %v5423 = vmax.f32 %v5335, 0.0
    %v5424 = vmax.f32 %v5337, 0.0
    %v5425 = vmax.f32 %v5417, 0.0
    %v5426 = vmax.f32 %v5419, 0.0
    %v5427 = vpack.c.bf16 %v5423, %v5423
    %v5428 = vpack.c.bf16 %v5424, %v5424
    %v5429 = vpack.c.bf16 %v5425, %v5425
    %v5430 = vpack.c.bf16 %v5426, %v5426
    %v5431 = vld [vmem:[%s19] sm:$0xf]
    %v5432 = vld [vmem:[%s19 + $0x4] sm:$0xf]
    %v5433 = vld [vmem:[%s19 + $0x8] sm:$0xf]
    %v5434 = vld [vmem:[%s19 + $0xc] sm:$0xf]
    %v5435 = vld [vmem:[%s19 + $0x10] sm:$0xf]
    %v5436 = vld [vmem:[%s19 + $0x14] sm:$0xf]
    %v5437 = vld [vmem:[%s19 + $0x18] sm:$0xf]
    %v5438 = vld [vmem:[%s19 + $0x1c] sm:$0xf]
    %v5439 = vld [vmem:[%s19 + $0x20] sm:$0xf]
    %v5440 = vld [vmem:[%s19 + $0x24] sm:$0xf]
    %v5441 = vld [vmem:[%s19 + $0x28] sm:$0xf]
    %v5442 = vld [vmem:[%s19 + $0x2c] sm:$0xf]
    %v5443 = vld [vmem:[%s19 + $0x30] sm:$0xf]
    %v5444 = vld [vmem:[%s19 + $0x34] sm:$0xf]
    %v5445 = vld [vmem:[%s19 + $0x38] sm:$0xf]
    %v5446 = vld [vmem:[%s19 + $0x3c] sm:$0xf]
    %v5447 = vld [vmem:[%s19 + $0x40] sm:$0xf]
    %v5448 = vld [vmem:[%s19 + $0x44] sm:$0xf]
    %v5449 = vld [vmem:[%s19 + $0x48] sm:$0xf]
    %v5450 = vld [vmem:[%s19 + $0x4c] sm:$0xf]
    %v5451 = vld [vmem:[%s19 + $0x50] sm:$0xf]
    %v5452 = vld [vmem:[%s19 + $0x54] sm:$0xf]
    %v5453 = vld [vmem:[%s19 + $0x58] sm:$0xf]
    %v5454 = vld [vmem:[%s19 + $0x5c] sm:$0xf]
    %v5455 = vld [vmem:[%s19 + $0x60] sm:$0xf]
    %v5456 = vld [vmem:[%s19 + $0x64] sm:$0xf]
    %v5457 = vld [vmem:[%s19 + $0x68] sm:$0xf]
    %v5458 = vld [vmem:[%s19 + $0x6c] sm:$0xf]
    %v5459 = vld [vmem:[%s19 + $0x70] sm:$0xf]
    %v5460 = vld [vmem:[%s19 + $0x74] sm:$0xf]
    %v5461 = vld [vmem:[%s19 + $0x78] sm:$0xf]
    %v5462 = vld [vmem:[%s19 + $0x7c] sm:$0xf]
    %v5463 = vld [vmem:[%s19 + $0x80] sm:$0xf]
    %v5464 = vld [vmem:[%s19 + $0x84] sm:$0xf]
    %v5465 = vld [vmem:[%s19 + $0x88] sm:$0xf]
    %v5466 = vld [vmem:[%s19 + $0x8c] sm:$0xf]
    %v5467 = vld [vmem:[%s19 + $0x90] sm:$0xf]
    %v5468 = vld [vmem:[%s19 + $0x94] sm:$0xf]
    %v5469 = vld [vmem:[%s19 + $0x98] sm:$0xf]
    %v5470 = vld [vmem:[%s19 + $0x9c] sm:$0xf]
    %v5471 = vld [vmem:[%s19 + $0xa0] sm:$0xf]
    %v5472 = vld [vmem:[%s19 + $0xa4] sm:$0xf]
    %v5473 = vld [vmem:[%s19 + $0xa8] sm:$0xf]
    %v5474 = vld [vmem:[%s19 + $0xac] sm:$0xf]
    %v5475 = vld [vmem:[%s19 + $0xb0] sm:$0xf]
    %v5476 = vld [vmem:[%s19 + $0xb4] sm:$0xf]
    %v5477 = vld [vmem:[%s19 + $0xb8] sm:$0xf]
    %v5478 = vld [vmem:[%s19 + $0xbc] sm:$0xf]
    %v5479 = vld [vmem:[%s19 + $0xc0] sm:$0xf]
    %v5480 = vld [vmem:[%s19 + $0xc4] sm:$0xf]
    %v5481 = vld [vmem:[%s19 + $0xc8] sm:$0xf]
    %v5482 = vld [vmem:[%s19 + $0xcc] sm:$0xf]
    %v5483 = vld [vmem:[%s19 + $0xd0] sm:$0xf]
    %v5484 = vld [vmem:[%s19 + $0xd4] sm:$0xf]
    %v5485 = vld [vmem:[%s19 + $0xd8] sm:$0xf]
    %v5486 = vld [vmem:[%s19 + $0xdc] sm:$0xf]
    %v5487 = vld [vmem:[%s19 + $0xe0] sm:$0xf]
    %v5488 = vld [vmem:[%s19 + $0xe4] sm:$0xf]
    %v5489 = vld [vmem:[%s19 + $0xe8] sm:$0xf]
    %v5490 = vld [vmem:[%s19 + $0xec] sm:$0xf]
    %v5491 = vld [vmem:[%s19 + $0xf0] sm:$0xf]
    %v5492 = vld [vmem:[%s19 + $0xf4] sm:$0xf]
    %v5493 = vld [vmem:[%s19 + $0xf8] sm:$0xf]
    %v5494 = vld [vmem:[%s19 + $0xfc] sm:$0xf]
    %v5495 = vld [vmem:[%s20] sm:$0x1]
    %v5497 = vlaneseq
    %v5498 = vshrl.u32 %v5497, 7
    %v5499 = vsub.s32 0, %v5498
    %v5500 = vrot.slane %v5495, %v5499
    %v5566 = vunpack.c.l.b16 %v5431
    %v5567 = vunpack.c.l.b16 %v5432
    %v5568 = vunpack.c.l.b16 %v5433
    %v5569 = vunpack.c.l.b16 %v5434
    %v5570 = vunpack.c.l.b16 %v5435
    %v5571 = vunpack.c.l.b16 %v5436
    %v5572 = vunpack.c.l.b16 %v5437
    %v5573 = vunpack.c.l.b16 %v5438
    %v5574 = vunpack.c.l.b16 %v5439
    %v5575 = vunpack.c.l.b16 %v5440
    %v5576 = vunpack.c.l.b16 %v5441
    %v5577 = vunpack.c.l.b16 %v5442
    %v5578 = vunpack.c.l.b16 %v5443
    %v5579 = vunpack.c.l.b16 %v5444
    %v5580 = vunpack.c.l.b16 %v5445
    %v5581 = vunpack.c.l.b16 %v5446
    %v5582 = vunpack.c.l.b16 %v5447
    %v5583 = vunpack.c.l.b16 %v5448
    %v5584 = vunpack.c.l.b16 %v5449
    %v5585 = vunpack.c.l.b16 %v5450
    %v5586 = vunpack.c.l.b16 %v5451
    %v5587 = vunpack.c.l.b16 %v5452
    %v5588 = vunpack.c.l.b16 %v5453
    %v5589 = vunpack.c.l.b16 %v5454
    %v5590 = vunpack.c.l.b16 %v5455
    %v5591 = vunpack.c.l.b16 %v5456
    %v5592 = vunpack.c.l.b16 %v5457
    %v5593 = vunpack.c.l.b16 %v5458
    %v5594 = vunpack.c.l.b16 %v5459
    %v5595 = vunpack.c.l.b16 %v5460
    %v5596 = vunpack.c.l.b16 %v5461
    %v5597 = vunpack.c.l.b16 %v5462
    %v5598 = vunpack.c.l.b16 %v5463
    %v5599 = vunpack.c.l.b16 %v5464
    %v5600 = vunpack.c.l.b16 %v5465
    %v5601 = vunpack.c.l.b16 %v5466
    %v5602 = vunpack.c.l.b16 %v5467
    %v5603 = vunpack.c.l.b16 %v5468
    %v5604 = vunpack.c.l.b16 %v5469
    %v5605 = vunpack.c.l.b16 %v5470
    %v5606 = vunpack.c.l.b16 %v5471
    %v5607 = vunpack.c.l.b16 %v5472
    %v5608 = vunpack.c.l.b16 %v5473
    %v5609 = vunpack.c.l.b16 %v5474
    %v5610 = vunpack.c.l.b16 %v5475
    %v5611 = vunpack.c.l.b16 %v5476
    %v5612 = vunpack.c.l.b16 %v5477
    %v5613 = vunpack.c.l.b16 %v5478
    %v5614 = vunpack.c.l.b16 %v5479
    %v5615 = vunpack.c.l.b16 %v5480
    %v5616 = vunpack.c.l.b16 %v5481
    %v5617 = vunpack.c.l.b16 %v5482
    %v5618 = vunpack.c.l.b16 %v5483
    %v5619 = vunpack.c.l.b16 %v5484
    %v5620 = vunpack.c.l.b16 %v5485
    %v5621 = vunpack.c.l.b16 %v5486
    %v5622 = vunpack.c.l.b16 %v5487
    %v5623 = vunpack.c.l.b16 %v5488
    %v5624 = vunpack.c.l.b16 %v5489
    %v5625 = vunpack.c.l.b16 %v5490
    %v5626 = vunpack.c.l.b16 %v5491
    %v5627 = vunpack.c.l.b16 %v5492
    %v5628 = vunpack.c.l.b16 %v5493
    %v5629 = vunpack.c.l.b16 %v5494
    %v5630 = vpack.c.b16 %v5567, %v5566
    %v5631 = vpack.c.b16 %v5569, %v5568
    %v5632 = vpack.c.b16 %v5571, %v5570
    %v5633 = vpack.c.b16 %v5573, %v5572
    %v5634 = vpack.c.b16 %v5575, %v5574
    %v5635 = vpack.c.b16 %v5577, %v5576
    %v5636 = vpack.c.b16 %v5579, %v5578
    %v5637 = vpack.c.b16 %v5581, %v5580
    %v5638 = vpack.c.b16 %v5583, %v5582
    %v5639 = vpack.c.b16 %v5585, %v5584
    %v5640 = vpack.c.b16 %v5587, %v5586
    %v5641 = vpack.c.b16 %v5589, %v5588
    %v5642 = vpack.c.b16 %v5591, %v5590
    %v5643 = vpack.c.b16 %v5593, %v5592
    %v5644 = vpack.c.b16 %v5595, %v5594
    %v5645 = vpack.c.b16 %v5597, %v5596
    %v5646 = vpack.c.b16 %v5599, %v5598
    %v5647 = vpack.c.b16 %v5601, %v5600
    %v5648 = vpack.c.b16 %v5603, %v5602
    %v5649 = vpack.c.b16 %v5605, %v5604
    %v5650 = vpack.c.b16 %v5607, %v5606
    %v5651 = vpack.c.b16 %v5609, %v5608
    %v5652 = vpack.c.b16 %v5611, %v5610
    %v5653 = vpack.c.b16 %v5613, %v5612
    %v5654 = vpack.c.b16 %v5615, %v5614
    %v5655 = vpack.c.b16 %v5617, %v5616
    %v5656 = vpack.c.b16 %v5619, %v5618
    %v5657 = vpack.c.b16 %v5621, %v5620
    %v5658 = vpack.c.b16 %v5623, %v5622
    %v5659 = vpack.c.b16 %v5625, %v5624
    %v5660 = vpack.c.b16 %v5627, %v5626
    %v5661 = vpack.c.b16 %v5629, %v5628
    %5694 = vmatprep.subr.bf16.mxu0 0
    %5695 = vmatpush1.bf16.msra.mxu0 %v5630
    %5696 = vmatprep.subr.bf16.mxu0 0
    %5697 = vmatpush1.bf16.msra.mxu0 %v5631
    %5698 = vmatprep.subr.bf16.mxu0 0
    %5699 = vmatpush1.bf16.msra.mxu0 %v5632
    %5700 = vmatprep.subr.bf16.mxu0 0
    %5701 = vmatpush1.bf16.msra.mxu0 %v5633
    %5702 = vmatprep.subr.bf16.mxu0 0
    %5703 = vmatpush1.bf16.msra.mxu0 %v5634
    %5704 = vmatprep.subr.bf16.mxu0 0
    %5705 = vmatpush1.bf16.msra.mxu0 %v5635
    %5706 = vmatprep.subr.bf16.mxu0 0
    %5707 = vmatpush1.bf16.msra.mxu0 %v5636
    %5708 = vmatprep.subr.bf16.mxu0 0
    %5709 = vmatpush1.bf16.msra.mxu0 %v5637
    %5710 = vmatprep.subr.bf16.mxu0 0
    %5711 = vmatpush1.bf16.msra.mxu0 %v5638
    %5712 = vmatprep.subr.bf16.mxu0 0
    %5713 = vmatpush1.bf16.msra.mxu0 %v5639
    %5714 = vmatprep.subr.bf16.mxu0 0
    %5715 = vmatpush1.bf16.msra.mxu0 %v5640
    %5716 = vmatprep.subr.bf16.mxu0 0
    %5717 = vmatpush1.bf16.msra.mxu0 %v5641
    %5718 = vmatprep.subr.bf16.mxu0 0
    %5719 = vmatpush1.bf16.msra.mxu0 %v5642
    %5720 = vmatprep.subr.bf16.mxu0 0
    %5721 = vmatpush1.bf16.msra.mxu0 %v5643
    %5722 = vmatprep.subr.bf16.mxu0 0
    %5723 = vmatpush1.bf16.msra.mxu0 %v5644
    %5724 = vmatprep.subr.bf16.mxu0 0
    %5725 = vmatpush1.bf16.msra.mxu0 %v5645
    %5726 = vmatprep.mubr.bf16.mxu0 %v5428
    %5727 = vmatmul.mubr.bf16.gmra.mrb[0].mxu0 %v5427
    %v5728 = vpop.f32.mrb[0].mxu0
    %v5729 = vadd.f32 %v5500, %v5728
    %v5730 = vpop.f32.mrb[0].mxu0
    %v5731 = vpop.f32.mrb[0].mxu0
    %v5732 = vpop.f32.mrb[0].mxu0
    %5733 = vdwg.mxu0
    %5734 = vmatprep.subr.bf16.mxu0 0
    %5735 = vmatpush1.bf16.msra.mxu0 %v5646
    %5736 = vmatprep.subr.bf16.mxu0 0
    %5737 = vmatpush1.bf16.msra.mxu0 %v5647
    %5738 = vmatprep.subr.bf16.mxu0 0
    %5739 = vmatpush1.bf16.msra.mxu0 %v5648
    %5740 = vmatprep.subr.bf16.mxu0 0
    %5741 = vmatpush1.bf16.msra.mxu0 %v5649
    %5742 = vmatprep.subr.bf16.mxu0 0
    %5743 = vmatpush1.bf16.msra.mxu0 %v5650
    %5744 = vmatprep.subr.bf16.mxu0 0
    %5745 = vmatpush1.bf16.msra.mxu0 %v5651
    %5746 = vmatprep.subr.bf16.mxu0 0
    %5747 = vmatpush1.bf16.msra.mxu0 %v5652
    %5748 = vmatprep.subr.bf16.mxu0 0
    %5749 = vmatpush1.bf16.msra.mxu0 %v5653
    %5750 = vmatprep.subr.bf16.mxu0 0
    %5751 = vmatpush1.bf16.msra.mxu0 %v5654
    %5752 = vmatprep.subr.bf16.mxu0 0
    %5753 = vmatpush1.bf16.msra.mxu0 %v5655
    %5754 = vmatprep.subr.bf16.mxu0 0
    %5755 = vmatpush1.bf16.msra.mxu0 %v5656
    %5756 = vmatprep.subr.bf16.mxu0 0
    %5757 = vmatpush1.bf16.msra.mxu0 %v5657
    %5758 = vmatprep.subr.bf16.mxu0 0
    %5759 = vmatpush1.bf16.msra.mxu0 %v5658
    %5760 = vmatprep.subr.bf16.mxu0 0
    %5761 = vmatpush1.bf16.msra.mxu0 %v5659
    %5762 = vmatprep.subr.bf16.mxu0 0
    %5763 = vmatpush1.bf16.msra.mxu0 %v5660
    %5764 = vmatprep.subr.bf16.mxu0 0
    %5765 = vmatpush1.bf16.msra.mxu0 %v5661
    %5766 = vmatprep.mubr.bf16.mxu0 %v5430
    %5767 = vmatmul.mubr.bf16.gmra.mrb[0].mxu0 %v5429
    %v5768 = vpop.f32.mrb[0].mxu0
    %v5769 = vadd.f32 %v5729, %v5768
    %v5770 = vpop.f32.mrb[0].mxu0
    %v5771 = vpop.f32.mrb[0].mxu0
    %v5772 = vpop.f32.mrb[0].mxu0
    %5773 = vdwg.mxu0
    %vm5774 = vcmask 115712
    %5775 = vst.msk [vmem:[#allocation26] sm:$0x3] %vm5774, %v5769
    // Predicated region
    $region138: #{tpu_custom_call.1} parent=1 // pred_check
      _
    $region139: #{tpu_custom_call.1} parent=1 // pred_check_branch
      %5777 = sbr.rel (0) target = $region141
    $region140: #{tpu_custom_call.1} parent=1 // pred_region
      %s5779 = ssub.s32 32, 32
      %5780 = vsyncadd [#allocation6], %s5779
      %s5782 = sshll.u32 [#allocation26], 4
      %s5783 = int_to_ptr.vmem [resolvable:$true] %s5782
      %5785 = dma.vmem_to_hbm [thread:$0]  %s5783, 32, %s21, [#allocation6]
    $region141: #{tpu_custom_call.1} parent=1 // pred_fallthru
      _
    // Predicated region
    $region142: #{tpu_custom_call.1} parent=1 // pred_check
      _
    $region143: #{tpu_custom_call.1} parent=1 // pred_check_branch
      %5787 = sbr.rel (0) target = $region145
    $region144: #{tpu_custom_call.1} parent=1 // pred_region
      %5788 = dma.done [#allocation6], 32
    $region145: #{tpu_custom_call.1} parent=1 // pred_fallthru
      _
    %5789 = vsyncpa [#allocation5], 1
    %5790 = vsyncpa [#allocation10], 1
    %5791 = vsyncpa [#allocation13], 1
    %5792 = vsyncpa [#allocation16], 1
    %5793 = vsyncpa [#allocation19], 1
    %5794 = vsyncpa [#allocation22], 1
    %5795 = vsyncpa [#allocation25], 1
    %5796 = vsyncpa [#allocation6], 1
    %5797 = vsyncpa [#allocation7], 1

</llo_original>
